<compile_context>
chip_gen: v6e
topology: v6e:2x2x1
jax: 0.10.0
libtpu: 0.0.40
codegen_flags: <defaults>
</compile_context>

<pallas_src>
import functools

import numpy as np
import jax
import jax.numpy as jnp
from jax import lax
from jax.experimental import pallas as pl
from jax.experimental.pallas import tpu as pltpu


def _lsk_kernel(x_ref, col_ref,
                w0_ref, b0_ref, wsp_ref, bsp_ref,
                w1_ref, b1_ref, w2_ref, b2_ref,
                wsq_ref, bsq_ref, wf_ref, bf_ref,
                out_ref,
                xpad_ref, a1pad_ref, aggpad_ref,
                *, C, H, W, M0, M1, M2):
    C2 = C // 2
    HW = H * W
    f32 = jnp.float32
    hi = jax.lax.Precision.HIGHEST

    # Column index (within a spatial row) for every flattened position.
    # Used to mask taps whose horizontal offset falls outside the image
    # (emulates zero padding in the flattened row-major layout).
    col = col_ref[...]                                      # (1, HW) int32
    _mask_cache = {}

    def col_mask(s):
        if s not in _mask_cache:
            _mask_cache[s] = ((col + s >= 0) & (col + s < W)).astype(f32)
        return _mask_cache[s]

    x0 = x_ref[0]                                           # (C, HW), lane-dense

    # ---- stage x into row-padded scratch for conv0 (depthwise 5x5, pad 2) ----
    xpad_ref[:, :M0 * W] = jnp.zeros((C, M0 * W), f32)
    xpad_ref[:, (M0 + H) * W:] = jnp.zeros((C, M0 * W), f32)
    xpad_ref[:, M0 * W:(M0 + H) * W] = x0

    # ---- conv0: depthwise 5x5, vectorized over channels ----
    w0 = w0_ref[...]                                        # (C, 25)
    attn1 = jnp.zeros((C, HW), f32) + b0_ref[...]
    for kw in range(5):
        s = kw - 2
        inner = jnp.zeros((C, HW), f32)
        for kh in range(5):
            base = (M0 + kh - 2) * W + s
            t = kh * 5 + kw
            inner = inner + xpad_ref[:, base:base + HW] * w0[:, t:t + 1]
        attn1 = attn1 + (inner * col_mask(s) if s != 0 else inner)

    # ---- conv_spatial: depthwise 7x7, dilation 3, pad 9 ----
    a1pad_ref[:, :M1 * W] = jnp.zeros((C, M1 * W), f32)
    a1pad_ref[:, (M1 + H) * W:] = jnp.zeros((C, M1 * W), f32)
    a1pad_ref[:, M1 * W:(M1 + H) * W] = attn1
    wsp = wsp_ref[...]                                      # (C, 49)
    attn2 = jnp.zeros((C, HW), f32) + bsp_ref[...]
    for kw in range(7):
        s = 3 * kw - 9
        inner = jnp.zeros((C, HW), f32)
        for kh in range(7):
            base = (M1 + 3 * kh - 9) * W + s
            t = kh * 7 + kw
            inner = inner + a1pad_ref[:, base:base + HW] * wsp[:, t:t + 1]
        attn2 = attn2 + (inner * col_mask(s) if s != 0 else inner)

    # ---- conv1 / conv2: 1x1 channel mixes on the MXU ----
    a1 = jnp.dot(w1_ref[...], attn1, precision=hi,
                 preferred_element_type=f32) + b1_ref[...]  # (C2, HW)
    a2 = jnp.dot(w2_ref[...], attn2, precision=hi,
                 preferred_element_type=f32) + b2_ref[...]  # (C2, HW)

    # ---- channel mean / max over cat([a1, a2]) (stacked reductions) ----
    avg = (jnp.sum(a1, axis=0, keepdims=True) +
           jnp.sum(a2, axis=0, keepdims=True)) * (1.0 / C)  # (1, HW)
    mx = jnp.maximum(jnp.max(a1, axis=0, keepdims=True),
                     jnp.max(a2, axis=0, keepdims=True))    # (1, HW)

    # ---- conv_squeeze: 2 -> 2, 7x7, pad 3, then sigmoid ----
    aggpad_ref[:, :M2 * W] = jnp.zeros((2, M2 * W), f32)
    aggpad_ref[:, (M2 + H) * W:] = jnp.zeros((2, M2 * W), f32)
    aggpad_ref[0:1, M2 * W:(M2 + H) * W] = avg
    aggpad_ref[1:2, M2 * W:(M2 + H) * W] = mx
    wsq = wsq_ref[...]                                      # (2, 98) = [o, i*49 + kh*7 + kw]
    acc_s = jnp.zeros((2, HW), f32) + bsq_ref[...]
    for kw in range(7):
        s = kw - 3
        inner = jnp.zeros((2, HW), f32)
        for kh in range(7):
            base = (M2 + kh - 3) * W + s
            for i in range(2):
                t = i * 49 + kh * 7 + kw
                inner = inner + aggpad_ref[i:i + 1, base:base + HW] * wsq[:, t:t + 1]
        acc_s = acc_s + (inner * col_mask(s) if s != 0 else inner)
    sig = 1.0 / (1.0 + jnp.exp(-acc_s))                     # (2, HW)

    # ---- selective fuse + final 1x1 conv (MXU) + gate the input ----
    fused = a1 * sig[0:1, :] + a2 * sig[1:2, :]             # (C2, HW)
    attn_out = jnp.dot(wf_ref[...], fused, precision=hi,
                       preferred_element_type=f32) + bf_ref[...]   # (C, HW)
    out_ref[0] = x0 * attn_out                              # single lane-dense store


def lsk_block(x, params):
    B, C, H, W = x.shape
    C2 = C // 2
    HW = H * W
    # Row margins for the flat (row-major) padded scratches.  Each margin must
    # cover the conv's vertical halo plus the horizontal halo that spills into
    # the neighbouring flat row.
    M0 = 2 + (2 + W - 1) // W     # conv0:        5x5, pad 2
    M1 = 9 + (9 + W - 1) // W     # conv_spatial: 7x7, dil 3, pad 9
    M2 = 3 + (3 + W - 1) // W     # conv_squeeze: 7x7, pad 3

    f32 = jnp.float32
    x2 = x.reshape(B, C, HW).astype(f32)                    # free metadata reshape
    col_idx = (jnp.arange(HW, dtype=jnp.int32) % W).reshape(1, HW)

    w0 = params['w0'].reshape(C, 25).astype(f32)
    b0 = params['b0'].reshape(C, 1).astype(f32)
    wsp = params['wsp'].reshape(C, 49).astype(f32)
    bsp = params['bsp'].reshape(C, 1).astype(f32)
    w1 = params['w1'].reshape(C2, C).astype(f32)
    b1 = params['b1'].reshape(C2, 1).astype(f32)
    w2 = params['w2'].reshape(C2, C).astype(f32)
    b2 = params['b2'].reshape(C2, 1).astype(f32)
    wsq = params['wsq'].reshape(2, 2 * 49).astype(f32)
    bsq = params['bsq'].reshape(2, 1).astype(f32)
    wf = params['wf'].reshape(C, C2).astype(f32)
    bf = params['bf'].reshape(C, 1).astype(f32)

    kernel = functools.partial(_lsk_kernel, C=C, H=H, W=W, M0=M0, M1=M1, M2=M2)

    def full(shape):
        return pl.BlockSpec(shape, lambda b: (0,) * len(shape))

    out = pl.pallas_call(
        kernel,
        out_shape=jax.ShapeDtypeStruct((B, C, HW), f32),
        grid=(B,),
        in_specs=[
            pl.BlockSpec((1, C, HW), lambda b: (b, 0, 0)),      # x (read once)
            full((1, HW)),                                      # column indices
            full((C, 25)), full((C, 1)),                        # conv0
            full((C, 49)), full((C, 1)),                        # conv_spatial
            full((C2, C)), full((C2, 1)),                       # conv1
            full((C2, C)), full((C2, 1)),                       # conv2
            full((2, 98)), full((2, 1)),                        # conv_squeeze
            full((C, C2)), full((C, 1)),                        # final conv
        ],
        out_specs=pl.BlockSpec((1, C, HW), lambda b: (b, 0, 0)),
        scratch_shapes=[
            pltpu.VMEM((C, (H + 2 * M0) * W), f32),             # x, row-padded
            pltpu.VMEM((C, (H + 2 * M1) * W), f32),             # attn1, row-padded
            pltpu.VMEM((2, (H + 2 * M2) * W), f32),             # [avg, max], row-padded
        ],
        compiler_params=pltpu.CompilerParams(
            dimension_semantics=("parallel",),                  # batch across TCs (v7x)
            vmem_limit_bytes=32 * 1024 * 1024),
    )(x2, col_idx, w0, b0, wsp, bsp, w1, b1, w2, b2, wsq, bsq, wf, bf)
    return out.reshape(B, C, H, W)


def lsk_ref(x, p):
    """Pure-JAX reference mirroring the PyTorch forward (NCHW / OIHW)."""
    dn = ('NCHW', 'OIHW', 'NCHW')
    C = x.shape[1]
    attn1 = lax.conv_general_dilated(x, p['w0'], (1, 1), ((2, 2), (2, 2)),
                                     feature_group_count=C, dimension_numbers=dn)
    attn1 = attn1 + p['b0'][None, :, None, None]
    attn2 = lax.conv_general_dilated(attn1, p['wsp'], (1, 1), ((9, 9), (9, 9)),
                                     rhs_dilation=(3, 3), feature_group_count=C,
                                     dimension_numbers=dn)
    attn2 = attn2 + p['bsp'][None, :, None, None]
    a1 = lax.conv_general_dilated(attn1, p['w1'], (1, 1), ((0, 0), (0, 0)),
                                  dimension_numbers=dn) + p['b1'][None, :, None, None]
    a2 = lax.conv_general_dilated(attn2, p['w2'], (1, 1), ((0, 0), (0, 0)),
                                  dimension_numbers=dn) + p['b2'][None, :, None, None]
    attn = jnp.concatenate([a1, a2], axis=1)
    avg = jnp.mean(attn, axis=1, keepdims=True)
    mx = jnp.max(attn, axis=1, keepdims=True)
    agg = jnp.concatenate([avg, mx], axis=1)
    sig = lax.conv_general_dilated(agg, p['wsq'], (1, 1), ((3, 3), (3, 3)),
                                   dimension_numbers=dn) + p['bsq'][None, :, None, None]
    sig = jax.nn.sigmoid(sig)
    attn_w = a1 * sig[:, 0:1] + a2 * sig[:, 1:2]
    attn_f = lax.conv_general_dilated(attn_w, p['wf'], (1, 1), ((0, 0), (0, 0)),
                                      dimension_numbers=dn) + p['bf'][None, :, None, None]
    return x * attn_f


if __name__ == "__main__":
    B, C, H, W = 2, 4, 16, 16
    C2 = C // 2

    key = jax.random.PRNGKey(0)
    keys = jax.random.split(key, 13)

    def init(k, shape, scale=0.2):
        return scale * jax.random.normal(k, shape, dtype=jnp.float32)

    params = {
        'w0':  init(keys[0], (C, 1, 5, 5)),
        'b0':  init(keys[1], (C,)),
        'wsp': init(keys[2], (C, 1, 7, 7), 0.1),
        'bsp': init(keys[3], (C,)),
        'w1':  init(keys[4], (C2, C, 1, 1)),
        'b1':  init(keys[5], (C2,)),
        'w2':  init(keys[6], (C2, C, 1, 1)),
        'b2':  init(keys[7], (C2,)),
        'wsq': init(keys[8], (2, 2, 7, 7), 0.1),
        'bsq': init(keys[9], (2,)),
        'wf':  init(keys[10], (C, C2, 1, 1)),
        'bf':  init(keys[11], (C,)),
    }
    x = jax.random.normal(keys[12], (B, C, H, W), dtype=jnp.float32)

    out = jax.block_until_ready(lsk_block(x, params))
    ref = jax.block_until_ready(lsk_ref(x, params))

    assert out.shape == x.shape and out.dtype == jnp.float32
    err = float(np.max(np.abs(np.asarray(out) - np.asarray(ref))))
    if not np.allclose(np.asarray(out), np.asarray(ref), rtol=1e-3, atol=1e-3):
        raise AssertionError(f"Pallas LSKblock mismatch vs reference, max abs err {err:.3e}")
    print("KERNEL_OK")
</pallas_src>

<mosaic_0001>
module attributes {stable_mosaic.version = 11 : i64} {
  func.func @_lsk_kernel(%arg0: i32, %arg1: memref<1x4x256xf32, #tpu.memory_space<vmem>>, %arg2: memref<1x256xi32, #tpu.memory_space<vmem>>, %arg3: memref<4x25xf32, #tpu.memory_space<vmem>>, %arg4: memref<4x1xf32, #tpu.memory_space<vmem>>, %arg5: memref<4x49xf32, #tpu.memory_space<vmem>>, %arg6: memref<4x1xf32, #tpu.memory_space<vmem>>, %arg7: memref<2x4xf32, #tpu.memory_space<vmem>>, %arg8: memref<2x1xf32, #tpu.memory_space<vmem>>, %arg9: memref<2x4xf32, #tpu.memory_space<vmem>>, %arg10: memref<2x1xf32, #tpu.memory_space<vmem>>, %arg11: memref<2x98xf32, #tpu.memory_space<vmem>>, %arg12: memref<2x1xf32, #tpu.memory_space<vmem>>, %arg13: memref<4x2xf32, #tpu.memory_space<vmem>>, %arg14: memref<4x1xf32, #tpu.memory_space<vmem>>, %arg15: memref<1x4x256xf32, #tpu.memory_space<vmem>>, %arg16: memref<4x352xf32, #tpu.memory_space<vmem>>, %arg17: memref<4x576xf32, #tpu.memory_space<vmem>>, %arg18: memref<2x384xf32, #tpu.memory_space<vmem>>) attributes {dimension_semantics = [#tpu.dimension_semantics<parallel>], iteration_bounds = array<i64: 2>, scalar_prefetch = 0 : i64, scratch_operands = 3 : i64, tpu.core_type = #tpu.core_type<tc>, window_params = [{transform_indices = @transform_0, window_bounds = array<i64: 1, 4, 256>}, {pipeline_mode = #tpu.pipeline_mode<synchronous>, transform_indices = @transform_1, window_bounds = array<i64: 1, 256>}, {pipeline_mode = #tpu.pipeline_mode<synchronous>, transform_indices = @transform_2, window_bounds = array<i64: 4, 25>}, {pipeline_mode = #tpu.pipeline_mode<synchronous>, transform_indices = @transform_3, window_bounds = array<i64: 4, 1>}, {pipeline_mode = #tpu.pipeline_mode<synchronous>, transform_indices = @transform_4, window_bounds = array<i64: 4, 49>}, {pipeline_mode = #tpu.pipeline_mode<synchronous>, transform_indices = @transform_5, window_bounds = array<i64: 4, 1>}, {pipeline_mode = #tpu.pipeline_mode<synchronous>, transform_indices = @transform_6, window_bounds = array<i64: 2, 4>}, {pipeline_mode = #tpu.pipeline_mode<synchronous>, transform_indices = @transform_7, window_bounds = array<i64: 2, 1>}, {pipeline_mode = #tpu.pipeline_mode<synchronous>, transform_indices = @transform_8, window_bounds = array<i64: 2, 4>}, {pipeline_mode = #tpu.pipeline_mode<synchronous>, transform_indices = @transform_9, window_bounds = array<i64: 2, 1>}, {pipeline_mode = #tpu.pipeline_mode<synchronous>, transform_indices = @transform_10, window_bounds = array<i64: 2, 98>}, {pipeline_mode = #tpu.pipeline_mode<synchronous>, transform_indices = @transform_11, window_bounds = array<i64: 2, 1>}, {pipeline_mode = #tpu.pipeline_mode<synchronous>, transform_indices = @transform_12, window_bounds = array<i64: 4, 2>}, {pipeline_mode = #tpu.pipeline_mode<synchronous>, transform_indices = @transform_13, window_bounds = array<i64: 4, 1>}, {transform_indices = @transform_14, window_bounds = array<i64: 1, 4, 256>}]} {
    %c0 = arith.constant 0 : index
    %c0_0 = arith.constant 0 : index
    %0 = vector.load %arg2[%c0, %c0_0] : memref<1x256xi32, #tpu.memory_space<vmem>>, vector<1x256xi32>
    %c0_1 = arith.constant 0 : index
    %c0_2 = arith.constant 0 : index
    %c0_3 = arith.constant 0 : index
    %1 = vector.load %arg1[%c0_1, %c0_2, %c0_3] : memref<1x4x256xf32, #tpu.memory_space<vmem>>, vector<1x4x256xf32>
    %2 = vector.shape_cast %1 : vector<1x4x256xf32> to vector<4x256xf32>
    %cst = arith.constant 0.000000e+00 : f32
    %3 = vector.broadcast %cst : f32 to vector<4x48xf32>
    %c0_4 = arith.constant 0 : index
    %c0_5 = arith.constant 0 : index
    %4 = vector.load %arg16[%c0_4, %c0_5] : memref<4x352xf32, #tpu.memory_space<vmem>>, vector<4x48xf32>
    tpu.vector_store %arg16[%c0_4, %c0_5], %3 {strides = array<i32>} : memref<4x352xf32, #tpu.memory_space<vmem>>, vector<4x48xf32>,
    %cst_6 = arith.constant 0.000000e+00 : f32
    %5 = vector.broadcast %cst_6 : f32 to vector<4x48xf32>
    %c0_7 = arith.constant 0 : index
    %c304 = arith.constant 304 : index
    %6 = vector.load %arg16[%c0_7, %c304] : memref<4x352xf32, #tpu.memory_space<vmem>>, vector<4x48xf32>
    tpu.vector_store %arg16[%c0_7, %c304], %5 {strides = array<i32>} : memref<4x352xf32, #tpu.memory_space<vmem>>, vector<4x48xf32>,
    %c0_8 = arith.constant 0 : index
    %c48 = arith.constant 48 : index
    %7 = vector.load %arg16[%c0_8, %c48] : memref<4x352xf32, #tpu.memory_space<vmem>>, vector<4x256xf32>
    tpu.vector_store %arg16[%c0_8, %c48], %2 {strides = array<i32>} : memref<4x352xf32, #tpu.memory_space<vmem>>, vector<4x256xf32>,
    %c0_9 = arith.constant 0 : index
    %c0_10 = arith.constant 0 : index
    %8 = vector.load %arg3[%c0_9, %c0_10] : memref<4x25xf32, #tpu.memory_space<vmem>>, vector<4x25xf32>
    %cst_11 = arith.constant 0.000000e+00 : f32
    %9 = vector.broadcast %cst_11 : f32 to vector<4x256xf32>
    %c0_12 = arith.constant 0 : index
    %c0_13 = arith.constant 0 : index
    %10 = vector.load %arg4[%c0_12, %c0_13] : memref<4x1xf32, #tpu.memory_space<vmem>>, vector<4x1xf32>
    %11 = vector.broadcast %10 : vector<4x1xf32> to vector<4x256xf32>
    %12 = arith.addf %9, %11 : vector<4x256xf32>
    %cst_14 = arith.constant 0.000000e+00 : f32
    %13 = vector.broadcast %cst_14 : f32 to vector<4x256xf32>
    %c0_15 = arith.constant 0 : index
    %c14 = arith.constant 14 : index
    %14 = vector.load %arg16[%c0_15, %c14] : memref<4x352xf32, #tpu.memory_space<vmem>>, vector<4x256xf32>
    %15 = vector.extract_strided_slice %8 {offsets = [0, 0], sizes = [4, 1], strides = [1, 1]} : vector<4x25xf32> to vector<4x1xf32>
    %16 = vector.broadcast %15 : vector<4x1xf32> to vector<4x256xf32>
    %17 = arith.mulf %14, %16 : vector<4x256xf32>
    %18 = arith.addf %13, %17 : vector<4x256xf32>
    %c0_16 = arith.constant 0 : index
    %c30 = arith.constant 30 : index
    %19 = vector.load %arg16[%c0_16, %c30] : memref<4x352xf32, #tpu.memory_space<vmem>>, vector<4x256xf32>
    %20 = vector.extract_strided_slice %8 {offsets = [0, 5], sizes = [4, 1], strides = [1, 1]} : vector<4x25xf32> to vector<4x1xf32>
    %21 = vector.broadcast %20 : vector<4x1xf32> to vector<4x256xf32>
    %22 = arith.mulf %19, %21 : vector<4x256xf32>
    %23 = arith.addf %18, %22 : vector<4x256xf32>
    %c0_17 = arith.constant 0 : index
    %c46 = arith.constant 46 : index
    %24 = vector.load %arg16[%c0_17, %c46] : memref<4x352xf32, #tpu.memory_space<vmem>>, vector<4x256xf32>
    %25 = vector.extract_strided_slice %8 {offsets = [0, 10], sizes = [4, 1], strides = [1, 1]} : vector<4x25xf32> to vector<4x1xf32>
    %26 = vector.broadcast %25 : vector<4x1xf32> to vector<4x256xf32>
    %27 = arith.mulf %24, %26 : vector<4x256xf32>
    %28 = arith.addf %23, %27 : vector<4x256xf32>
    %c0_18 = arith.constant 0 : index
    %c62 = arith.constant 62 : index
    %29 = vector.load %arg16[%c0_18, %c62] : memref<4x352xf32, #tpu.memory_space<vmem>>, vector<4x256xf32>
    %30 = vector.extract_strided_slice %8 {offsets = [0, 15], sizes = [4, 1], strides = [1, 1]} : vector<4x25xf32> to vector<4x1xf32>
    %31 = vector.broadcast %30 : vector<4x1xf32> to vector<4x256xf32>
    %32 = arith.mulf %29, %31 : vector<4x256xf32>
    %33 = arith.addf %28, %32 : vector<4x256xf32>
    %c0_19 = arith.constant 0 : index
    %c78 = arith.constant 78 : index
    %34 = vector.load %arg16[%c0_19, %c78] : memref<4x352xf32, #tpu.memory_space<vmem>>, vector<4x256xf32>
    %35 = vector.extract_strided_slice %8 {offsets = [0, 20], sizes = [4, 1], strides = [1, 1]} : vector<4x25xf32> to vector<4x1xf32>
    %36 = vector.broadcast %35 : vector<4x1xf32> to vector<4x256xf32>
    %37 = arith.mulf %34, %36 : vector<4x256xf32>
    %38 = arith.addf %33, %37 : vector<4x256xf32>
    %c-2_i32 = arith.constant -2 : i32
    %39 = vector.broadcast %c-2_i32 : i32 to vector<1x256xi32>
    %40 = arith.addi %0, %39 : vector<1x256xi32>
    %c0_i32 = arith.constant 0 : i32
    %41 = vector.broadcast %c0_i32 : i32 to vector<1x256xi32>
    %42 = arith.cmpi sge, %40, %41 : vector<1x256xi32>
    %c-2_i32_20 = arith.constant -2 : i32
    %43 = vector.broadcast %c-2_i32_20 : i32 to vector<1x256xi32>
    %44 = arith.addi %0, %43 : vector<1x256xi32>
    %c16_i32 = arith.constant 16 : i32
    %45 = vector.broadcast %c16_i32 : i32 to vector<1x256xi32>
    %46 = arith.cmpi slt, %44, %45 : vector<1x256xi32>
    %47 = arith.andi %42, %46 : vector<1x256xi1>
    %48 = arith.extui %47 : vector<1x256xi1> to vector<1x256xi32>
    %49 = arith.sitofp %48 : vector<1x256xi32> to vector<1x256xf32>
    %50 = vector.broadcast %49 : vector<1x256xf32> to vector<4x256xf32>
    %51 = arith.mulf %38, %50 : vector<4x256xf32>
    %52 = arith.addf %12, %51 : vector<4x256xf32>
    %cst_21 = arith.constant 0.000000e+00 : f32
    %53 = vector.broadcast %cst_21 : f32 to vector<4x256xf32>
    %c0_22 = arith.constant 0 : index
    %c15 = arith.constant 15 : index
    %54 = vector.load %arg16[%c0_22, %c15] : memref<4x352xf32, #tpu.memory_space<vmem>>, vector<4x256xf32>
    %55 = vector.extract_strided_slice %8 {offsets = [0, 1], sizes = [4, 1], strides = [1, 1]} : vector<4x25xf32> to vector<4x1xf32>
    %56 = vector.broadcast %55 : vector<4x1xf32> to vector<4x256xf32>
    %57 = arith.mulf %54, %56 : vector<4x256xf32>
    %58 = arith.addf %53, %57 : vector<4x256xf32>
    %c0_23 = arith.constant 0 : index
    %c31 = arith.constant 31 : index
    %59 = vector.load %arg16[%c0_23, %c31] : memref<4x352xf32, #tpu.memory_space<vmem>>, vector<4x256xf32>
    %60 = vector.extract_strided_slice %8 {offsets = [0, 6], sizes = [4, 1], strides = [1, 1]} : vector<4x25xf32> to vector<4x1xf32>
    %61 = vector.broadcast %60 : vector<4x1xf32> to vector<4x256xf32>
    %62 = arith.mulf %59, %61 : vector<4x256xf32>
    %63 = arith.addf %58, %62 : vector<4x256xf32>
    %c0_24 = arith.constant 0 : index
    %c47 = arith.constant 47 : index
    %64 = vector.load %arg16[%c0_24, %c47] : memref<4x352xf32, #tpu.memory_space<vmem>>, vector<4x256xf32>
    %65 = vector.extract_strided_slice %8 {offsets = [0, 11], sizes = [4, 1], strides = [1, 1]} : vector<4x25xf32> to vector<4x1xf32>
    %66 = vector.broadcast %65 : vector<4x1xf32> to vector<4x256xf32>
    %67 = arith.mulf %64, %66 : vector<4x256xf32>
    %68 = arith.addf %63, %67 : vector<4x256xf32>
    %c0_25 = arith.constant 0 : index
    %c63 = arith.constant 63 : index
    %69 = vector.load %arg16[%c0_25, %c63] : memref<4x352xf32, #tpu.memory_space<vmem>>, vector<4x256xf32>
    %70 = vector.extract_strided_slice %8 {offsets = [0, 16], sizes = [4, 1], strides = [1, 1]} : vector<4x25xf32> to vector<4x1xf32>
    %71 = vector.broadcast %70 : vector<4x1xf32> to vector<4x256xf32>
    %72 = arith.mulf %69, %71 : vector<4x256xf32>
    %73 = arith.addf %68, %72 : vector<4x256xf32>
    %c0_26 = arith.constant 0 : index
    %c79 = arith.constant 79 : index
    %74 = vector.load %arg16[%c0_26, %c79] : memref<4x352xf32, #tpu.memory_space<vmem>>, vector<4x256xf32>
    %75 = vector.extract_strided_slice %8 {offsets = [0, 21], sizes = [4, 1], strides = [1, 1]} : vector<4x25xf32> to vector<4x1xf32>
    %76 = vector.broadcast %75 : vector<4x1xf32> to vector<4x256xf32>
    %77 = arith.mulf %74, %76 : vector<4x256xf32>
    %78 = arith.addf %73, %77 : vector<4x256xf32>
    %c-1_i32 = arith.constant -1 : i32
    %79 = vector.broadcast %c-1_i32 : i32 to vector<1x256xi32>
    %80 = arith.addi %0, %79 : vector<1x256xi32>
    %c0_i32_27 = arith.constant 0 : i32
    %81 = vector.broadcast %c0_i32_27 : i32 to vector<1x256xi32>
    %82 = arith.cmpi sge, %80, %81 : vector<1x256xi32>
    %c-1_i32_28 = arith.constant -1 : i32
    %83 = vector.broadcast %c-1_i32_28 : i32 to vector<1x256xi32>
    %84 = arith.addi %0, %83 : vector<1x256xi32>
    %c16_i32_29 = arith.constant 16 : i32
    %85 = vector.broadcast %c16_i32_29 : i32 to vector<1x256xi32>
    %86 = arith.cmpi slt, %84, %85 : vector<1x256xi32>
    %87 = arith.andi %82, %86 : vector<1x256xi1>
    %88 = arith.extui %87 : vector<1x256xi1> to vector<1x256xi32>
    %89 = arith.sitofp %88 : vector<1x256xi32> to vector<1x256xf32>
    %90 = vector.broadcast %89 : vector<1x256xf32> to vector<4x256xf32>
    %91 = arith.mulf %78, %90 : vector<4x256xf32>
    %92 = arith.addf %52, %91 : vector<4x256xf32>
    %cst_30 = arith.constant 0.000000e+00 : f32
    %93 = vector.broadcast %cst_30 : f32 to vector<4x256xf32>
    %c0_31 = arith.constant 0 : index
    %c16 = arith.constant 16 : index
    %94 = vector.load %arg16[%c0_31, %c16] : memref<4x352xf32, #tpu.memory_space<vmem>>, vector<4x256xf32>
    %95 = vector.extract_strided_slice %8 {offsets = [0, 2], sizes = [4, 1], strides = [1, 1]} : vector<4x25xf32> to vector<4x1xf32>
    %96 = vector.broadcast %95 : vector<4x1xf32> to vector<4x256xf32>
    %97 = arith.mulf %94, %96 : vector<4x256xf32>
    %98 = arith.addf %93, %97 : vector<4x256xf32>
    %c0_32 = arith.constant 0 : index
    %c32 = arith.constant 32 : index
    %99 = vector.load %arg16[%c0_32, %c32] : memref<4x352xf32, #tpu.memory_space<vmem>>, vector<4x256xf32>
    %100 = vector.extract_strided_slice %8 {offsets = [0, 7], sizes = [4, 1], strides = [1, 1]} : vector<4x25xf32> to vector<4x1xf32>
    %101 = vector.broadcast %100 : vector<4x1xf32> to vector<4x256xf32>
    %102 = arith.mulf %99, %101 : vector<4x256xf32>
    %103 = arith.addf %98, %102 : vector<4x256xf32>
    %c0_33 = arith.constant 0 : index
    %c48_34 = arith.constant 48 : index
    %104 = vector.load %arg16[%c0_33, %c48_34] : memref<4x352xf32, #tpu.memory_space<vmem>>, vector<4x256xf32>
    %105 = vector.extract_strided_slice %8 {offsets = [0, 12], sizes = [4, 1], strides = [1, 1]} : vector<4x25xf32> to vector<4x1xf32>
    %106 = vector.broadcast %105 : vector<4x1xf32> to vector<4x256xf32>
    %107 = arith.mulf %104, %106 : vector<4x256xf32>
    %108 = arith.addf %103, %107 : vector<4x256xf32>
    %c0_35 = arith.constant 0 : index
    %c64 = arith.constant 64 : index
    %109 = vector.load %arg16[%c0_35, %c64] : memref<4x352xf32, #tpu.memory_space<vmem>>, vector<4x256xf32>
    %110 = vector.extract_strided_slice %8 {offsets = [0, 17], sizes = [4, 1], strides = [1, 1]} : vector<4x25xf32> to vector<4x1xf32>
    %111 = vector.broadcast %110 : vector<4x1xf32> to vector<4x256xf32>
    %112 = arith.mulf %109, %111 : vector<4x256xf32>
    %113 = arith.addf %108, %112 : vector<4x256xf32>
    %c0_36 = arith.constant 0 : index
    %c80 = arith.constant 80 : index
    %114 = vector.load %arg16[%c0_36, %c80] : memref<4x352xf32, #tpu.memory_space<vmem>>, vector<4x256xf32>
    %115 = vector.extract_strided_slice %8 {offsets = [0, 22], sizes = [4, 1], strides = [1, 1]} : vector<4x25xf32> to vector<4x1xf32>
    %116 = vector.broadcast %115 : vector<4x1xf32> to vector<4x256xf32>
    %117 = arith.mulf %114, %116 : vector<4x256xf32>
    %118 = arith.addf %113, %117 : vector<4x256xf32>
    %119 = arith.addf %92, %118 : vector<4x256xf32>
    %cst_37 = arith.constant 0.000000e+00 : f32
    %120 = vector.broadcast %cst_37 : f32 to vector<4x256xf32>
    %c0_38 = arith.constant 0 : index
    %c17 = arith.constant 17 : index
    %121 = vector.load %arg16[%c0_38, %c17] : memref<4x352xf32, #tpu.memory_space<vmem>>, vector<4x256xf32>
    %122 = vector.extract_strided_slice %8 {offsets = [0, 3], sizes = [4, 1], strides = [1, 1]} : vector<4x25xf32> to vector<4x1xf32>
    %123 = vector.broadcast %122 : vector<4x1xf32> to vector<4x256xf32>
    %124 = arith.mulf %121, %123 : vector<4x256xf32>
    %125 = arith.addf %120, %124 : vector<4x256xf32>
    %c0_39 = arith.constant 0 : index
    %c33 = arith.constant 33 : index
    %126 = vector.load %arg16[%c0_39, %c33] : memref<4x352xf32, #tpu.memory_space<vmem>>, vector<4x256xf32>
    %127 = vector.extract_strided_slice %8 {offsets = [0, 8], sizes = [4, 1], strides = [1, 1]} : vector<4x25xf32> to vector<4x1xf32>
    %128 = vector.broadcast %127 : vector<4x1xf32> to vector<4x256xf32>
    %129 = arith.mulf %126, %128 : vector<4x256xf32>
    %130 = arith.addf %125, %129 : vector<4x256xf32>
    %c0_40 = arith.constant 0 : index
    %c49 = arith.constant 49 : index
    %131 = vector.load %arg16[%c0_40, %c49] : memref<4x352xf32, #tpu.memory_space<vmem>>, vector<4x256xf32>
    %132 = vector.extract_strided_slice %8 {offsets = [0, 13], sizes = [4, 1], strides = [1, 1]} : vector<4x25xf32> to vector<4x1xf32>
    %133 = vector.broadcast %132 : vector<4x1xf32> to vector<4x256xf32>
    %134 = arith.mulf %131, %133 : vector<4x256xf32>
    %135 = arith.addf %130, %134 : vector<4x256xf32>
    %c0_41 = arith.constant 0 : index
    %c65 = arith.constant 65 : index
    %136 = vector.load %arg16[%c0_41, %c65] : memref<4x352xf32, #tpu.memory_space<vmem>>, vector<4x256xf32>
    %137 = vector.extract_strided_slice %8 {offsets = [0, 18], sizes = [4, 1], strides = [1, 1]} : vector<4x25xf32> to vector<4x1xf32>
    %138 = vector.broadcast %137 : vector<4x1xf32> to vector<4x256xf32>
    %139 = arith.mulf %136, %138 : vector<4x256xf32>
    %140 = arith.addf %135, %139 : vector<4x256xf32>
    %c0_42 = arith.constant 0 : index
    %c81 = arith.constant 81 : index
    %141 = vector.load %arg16[%c0_42, %c81] : memref<4x352xf32, #tpu.memory_space<vmem>>, vector<4x256xf32>
    %142 = vector.extract_strided_slice %8 {offsets = [0, 23], sizes = [4, 1], strides = [1, 1]} : vector<4x25xf32> to vector<4x1xf32>
    %143 = vector.broadcast %142 : vector<4x1xf32> to vector<4x256xf32>
    %144 = arith.mulf %141, %143 : vector<4x256xf32>
    %145 = arith.addf %140, %144 : vector<4x256xf32>
    %c1_i32 = arith.constant 1 : i32
    %146 = vector.broadcast %c1_i32 : i32 to vector<1x256xi32>
    %147 = arith.addi %0, %146 : vector<1x256xi32>
    %c0_i32_43 = arith.constant 0 : i32
    %148 = vector.broadcast %c0_i32_43 : i32 to vector<1x256xi32>
    %149 = arith.cmpi sge, %147, %148 : vector<1x256xi32>
    %c1_i32_44 = arith.constant 1 : i32
    %150 = vector.broadcast %c1_i32_44 : i32 to vector<1x256xi32>
    %151 = arith.addi %0, %150 : vector<1x256xi32>
    %c16_i32_45 = arith.constant 16 : i32
    %152 = vector.broadcast %c16_i32_45 : i32 to vector<1x256xi32>
    %153 = arith.cmpi slt, %151, %152 : vector<1x256xi32>
    %154 = arith.andi %149, %153 : vector<1x256xi1>
    %155 = arith.extui %154 : vector<1x256xi1> to vector<1x256xi32>
    %156 = arith.sitofp %155 : vector<1x256xi32> to vector<1x256xf32>
    %157 = vector.broadcast %156 : vector<1x256xf32> to vector<4x256xf32>
    %158 = arith.mulf %145, %157 : vector<4x256xf32>
    %159 = arith.addf %119, %158 : vector<4x256xf32>
    %cst_46 = arith.constant 0.000000e+00 : f32
    %160 = vector.broadcast %cst_46 : f32 to vector<4x256xf32>
    %c0_47 = arith.constant 0 : index
    %c18 = arith.constant 18 : index
    %161 = vector.load %arg16[%c0_47, %c18] : memref<4x352xf32, #tpu.memory_space<vmem>>, vector<4x256xf32>
    %162 = vector.extract_strided_slice %8 {offsets = [0, 4], sizes = [4, 1], strides = [1, 1]} : vector<4x25xf32> to vector<4x1xf32>
    %163 = vector.broadcast %162 : vector<4x1xf32> to vector<4x256xf32>
    %164 = arith.mulf %161, %163 : vector<4x256xf32>
    %165 = arith.addf %160, %164 : vector<4x256xf32>
    %c0_48 = arith.constant 0 : index
    %c34 = arith.constant 34 : index
    %166 = vector.load %arg16[%c0_48, %c34] : memref<4x352xf32, #tpu.memory_space<vmem>>, vector<4x256xf32>
    %167 = vector.extract_strided_slice %8 {offsets = [0, 9], sizes = [4, 1], strides = [1, 1]} : vector<4x25xf32> to vector<4x1xf32>
    %168 = vector.broadcast %167 : vector<4x1xf32> to vector<4x256xf32>
    %169 = arith.mulf %166, %168 : vector<4x256xf32>
    %170 = arith.addf %165, %169 : vector<4x256xf32>
    %c0_49 = arith.constant 0 : index
    %c50 = arith.constant 50 : index
    %171 = vector.load %arg16[%c0_49, %c50] : memref<4x352xf32, #tpu.memory_space<vmem>>, vector<4x256xf32>
    %172 = vector.extract_strided_slice %8 {offsets = [0, 14], sizes = [4, 1], strides = [1, 1]} : vector<4x25xf32> to vector<4x1xf32>
    %173 = vector.broadcast %172 : vector<4x1xf32> to vector<4x256xf32>
    %174 = arith.mulf %171, %173 : vector<4x256xf32>
    %175 = arith.addf %170, %174 : vector<4x256xf32>
    %c0_50 = arith.constant 0 : index
    %c66 = arith.constant 66 : index
    %176 = vector.load %arg16[%c0_50, %c66] : memref<4x352xf32, #tpu.memory_space<vmem>>, vector<4x256xf32>
    %177 = vector.extract_strided_slice %8 {offsets = [0, 19], sizes = [4, 1], strides = [1, 1]} : vector<4x25xf32> to vector<4x1xf32>
    %178 = vector.broadcast %177 : vector<4x1xf32> to vector<4x256xf32>
    %179 = arith.mulf %176, %178 : vector<4x256xf32>
    %180 = arith.addf %175, %179 : vector<4x256xf32>
    %c0_51 = arith.constant 0 : index
    %c82 = arith.constant 82 : index
    %181 = vector.load %arg16[%c0_51, %c82] : memref<4x352xf32, #tpu.memory_space<vmem>>, vector<4x256xf32>
    %182 = vector.extract_strided_slice %8 {offsets = [0, 24], sizes = [4, 1], strides = [1, 1]} : vector<4x25xf32> to vector<4x1xf32>
    %183 = vector.broadcast %182 : vector<4x1xf32> to vector<4x256xf32>
    %184 = arith.mulf %181, %183 : vector<4x256xf32>
    %185 = arith.addf %180, %184 : vector<4x256xf32>
    %c2_i32 = arith.constant 2 : i32
    %186 = vector.broadcast %c2_i32 : i32 to vector<1x256xi32>
    %187 = arith.addi %0, %186 : vector<1x256xi32>
    %c0_i32_52 = arith.constant 0 : i32
    %188 = vector.broadcast %c0_i32_52 : i32 to vector<1x256xi32>
    %189 = arith.cmpi sge, %187, %188 : vector<1x256xi32>
    %c2_i32_53 = arith.constant 2 : i32
    %190 = vector.broadcast %c2_i32_53 : i32 to vector<1x256xi32>
    %191 = arith.addi %0, %190 : vector<1x256xi32>
    %c16_i32_54 = arith.constant 16 : i32
    %192 = vector.broadcast %c16_i32_54 : i32 to vector<1x256xi32>
    %193 = arith.cmpi slt, %191, %192 : vector<1x256xi32>
    %194 = arith.andi %189, %193 : vector<1x256xi1>
    %195 = arith.extui %194 : vector<1x256xi1> to vector<1x256xi32>
    %196 = arith.sitofp %195 : vector<1x256xi32> to vector<1x256xf32>
    %197 = vector.broadcast %196 : vector<1x256xf32> to vector<4x256xf32>
    %198 = arith.mulf %185, %197 : vector<4x256xf32>
    %199 = arith.addf %159, %198 : vector<4x256xf32>
    %cst_55 = arith.constant 0.000000e+00 : f32
    %200 = vector.broadcast %cst_55 : f32 to vector<4x160xf32>
    %c0_56 = arith.constant 0 : index
    %c0_57 = arith.constant 0 : index
    %201 = vector.load %arg17[%c0_56, %c0_57] : memref<4x576xf32, #tpu.memory_space<vmem>>, vector<4x160xf32>
    tpu.vector_store %arg17[%c0_56, %c0_57], %200 {strides = array<i32>} : memref<4x576xf32, #tpu.memory_space<vmem>>, vector<4x160xf32>,
    %cst_58 = arith.constant 0.000000e+00 : f32
    %202 = vector.broadcast %cst_58 : f32 to vector<4x160xf32>
    %c0_59 = arith.constant 0 : index
    %c416 = arith.constant 416 : index
    %203 = vector.load %arg17[%c0_59, %c416] : memref<4x576xf32, #tpu.memory_space<vmem>>, vector<4x160xf32>
    tpu.vector_store %arg17[%c0_59, %c416], %202 {strides = array<i32>} : memref<4x576xf32, #tpu.memory_space<vmem>>, vector<4x160xf32>,
    %c0_60 = arith.constant 0 : index
    %c160 = arith.constant 160 : index
    %204 = vector.load %arg17[%c0_60, %c160] : memref<4x576xf32, #tpu.memory_space<vmem>>, vector<4x256xf32>
    tpu.vector_store %arg17[%c0_60, %c160], %199 {strides = array<i32>} : memref<4x576xf32, #tpu.memory_space<vmem>>, vector<4x256xf32>,
    %c0_61 = arith.constant 0 : index
    %c0_62 = arith.constant 0 : index
    %205 = vector.load %arg5[%c0_61, %c0_62] : memref<4x49xf32, #tpu.memory_space<vmem>>, vector<4x49xf32>
    %cst_63 = arith.constant 0.000000e+00 : f32
    %206 = vector.broadcast %cst_63 : f32 to vector<4x256xf32>
    %c0_64 = arith.constant 0 : index
    %c0_65 = arith.constant 0 : index
    %207 = vector.load %arg6[%c0_64, %c0_65] : memref<4x1xf32, #tpu.memory_space<vmem>>, vector<4x1xf32>
    %208 = vector.broadcast %207 : vector<4x1xf32> to vector<4x256xf32>
    %209 = arith.addf %206, %208 : vector<4x256xf32>
    %cst_66 = arith.constant 0.000000e+00 : f32
    %210 = vector.broadcast %cst_66 : f32 to vector<4x256xf32>
    %c0_67 = arith.constant 0 : index
    %c7 = arith.constant 7 : index
    %211 = vector.load %arg17[%c0_67, %c7] : memref<4x576xf32, #tpu.memory_space<vmem>>, vector<4x256xf32>
    %212 = vector.extract_strided_slice %205 {offsets = [0, 0], sizes = [4, 1], strides = [1, 1]} : vector<4x49xf32> to vector<4x1xf32>
    %213 = vector.broadcast %212 : vector<4x1xf32> to vector<4x256xf32>
    %214 = arith.mulf %211, %213 : vector<4x256xf32>
    %215 = arith.addf %210, %214 : vector<4x256xf32>
    %c0_68 = arith.constant 0 : index
    %c55 = arith.constant 55 : index
    %216 = vector.load %arg17[%c0_68, %c55] : memref<4x576xf32, #tpu.memory_space<vmem>>, vector<4x256xf32>
    %217 = vector.extract_strided_slice %205 {offsets = [0, 7], sizes = [4, 1], strides = [1, 1]} : vector<4x49xf32> to vector<4x1xf32>
    %218 = vector.broadcast %217 : vector<4x1xf32> to vector<4x256xf32>
    %219 = arith.mulf %216, %218 : vector<4x256xf32>
    %220 = arith.addf %215, %219 : vector<4x256xf32>
    %c0_69 = arith.constant 0 : index
    %c103 = arith.constant 103 : index
    %221 = vector.load %arg17[%c0_69, %c103] : memref<4x576xf32, #tpu.memory_space<vmem>>, vector<4x256xf32>
    %222 = vector.extract_strided_slice %205 {offsets = [0, 14], sizes = [4, 1], strides = [1, 1]} : vector<4x49xf32> to vector<4x1xf32>
    %223 = vector.broadcast %222 : vector<4x1xf32> to vector<4x256xf32>
    %224 = arith.mulf %221, %223 : vector<4x256xf32>
    %225 = arith.addf %220, %224 : vector<4x256xf32>
    %c0_70 = arith.constant 0 : index
    %c151 = arith.constant 151 : index
    %226 = vector.load %arg17[%c0_70, %c151] : memref<4x576xf32, #tpu.memory_space<vmem>>, vector<4x256xf32>
    %227 = vector.extract_strided_slice %205 {offsets = [0, 21], sizes = [4, 1], strides = [1, 1]} : vector<4x49xf32> to vector<4x1xf32>
    %228 = vector.broadcast %227 : vector<4x1xf32> to vector<4x256xf32>
    %229 = arith.mulf %226, %228 : vector<4x256xf32>
    %230 = arith.addf %225, %229 : vector<4x256xf32>
    %c0_71 = arith.constant 0 : index
    %c199 = arith.constant 199 : index
    %231 = vector.load %arg17[%c0_71, %c199] : memref<4x576xf32, #tpu.memory_space<vmem>>, vector<4x256xf32>
    %232 = vector.extract_strided_slice %205 {offsets = [0, 28], sizes = [4, 1], strides = [1, 1]} : vector<4x49xf32> to vector<4x1xf32>
    %233 = vector.broadcast %232 : vector<4x1xf32> to vector<4x256xf32>
    %234 = arith.mulf %231, %233 : vector<4x256xf32>
    %235 = arith.addf %230, %234 : vector<4x256xf32>
    %c0_72 = arith.constant 0 : index
    %c247 = arith.constant 247 : index
    %236 = vector.load %arg17[%c0_72, %c247] : memref<4x576xf32, #tpu.memory_space<vmem>>, vector<4x256xf32>
    %237 = vector.extract_strided_slice %205 {offsets = [0, 35], sizes = [4, 1], strides = [1, 1]} : vector<4x49xf32> to vector<4x1xf32>
    %238 = vector.broadcast %237 : vector<4x1xf32> to vector<4x256xf32>
    %239 = arith.mulf %236, %238 : vector<4x256xf32>
    %240 = arith.addf %235, %239 : vector<4x256xf32>
    %c0_73 = arith.constant 0 : index
    %c295 = arith.constant 295 : index
    %241 = vector.load %arg17[%c0_73, %c295] : memref<4x576xf32, #tpu.memory_space<vmem>>, vector<4x256xf32>
    %242 = vector.extract_strided_slice %205 {offsets = [0, 42], sizes = [4, 1], strides = [1, 1]} : vector<4x49xf32> to vector<4x1xf32>
    %243 = vector.broadcast %242 : vector<4x1xf32> to vector<4x256xf32>
    %244 = arith.mulf %241, %243 : vector<4x256xf32>
    %245 = arith.addf %240, %244 : vector<4x256xf32>
    %c-9_i32 = arith.constant -9 : i32
    %246 = vector.broadcast %c-9_i32 : i32 to vector<1x256xi32>
    %247 = arith.addi %0, %246 : vector<1x256xi32>
    %c0_i32_74 = arith.constant 0 : i32
    %248 = vector.broadcast %c0_i32_74 : i32 to vector<1x256xi32>
    %249 = arith.cmpi sge, %247, %248 : vector<1x256xi32>
    %c-9_i32_75 = arith.constant -9 : i32
    %250 = vector.broadcast %c-9_i32_75 : i32 to vector<1x256xi32>
    %251 = arith.addi %0, %250 : vector<1x256xi32>
    %c16_i32_76 = arith.constant 16 : i32
    %252 = vector.broadcast %c16_i32_76 : i32 to vector<1x256xi32>
    %253 = arith.cmpi slt, %251, %252 : vector<1x256xi32>
    %254 = arith.andi %249, %253 : vector<1x256xi1>
    %255 = arith.extui %254 : vector<1x256xi1> to vector<1x256xi32>
    %256 = arith.sitofp %255 : vector<1x256xi32> to vector<1x256xf32>
    %257 = vector.broadcast %256 : vector<1x256xf32> to vector<4x256xf32>
    %258 = arith.mulf %245, %257 : vector<4x256xf32>
    %259 = arith.addf %209, %258 : vector<4x256xf32>
    %cst_77 = arith.constant 0.000000e+00 : f32
    %260 = vector.broadcast %cst_77 : f32 to vector<4x256xf32>
    %c0_78 = arith.constant 0 : index
    %c10 = arith.constant 10 : index
    %261 = vector.load %arg17[%c0_78, %c10] : memref<4x576xf32, #tpu.memory_space<vmem>>, vector<4x256xf32>
    %262 = vector.extract_strided_slice %205 {offsets = [0, 1], sizes = [4, 1], strides = [1, 1]} : vector<4x49xf32> to vector<4x1xf32>
    %263 = vector.broadcast %262 : vector<4x1xf32> to vector<4x256xf32>
    %264 = arith.mulf %261, %263 : vector<4x256xf32>
    %265 = arith.addf %260, %264 : vector<4x256xf32>
    %c0_79 = arith.constant 0 : index
    %c58 = arith.constant 58 : index
    %266 = vector.load %arg17[%c0_79, %c58] : memref<4x576xf32, #tpu.memory_space<vmem>>, vector<4x256xf32>
    %267 = vector.extract_strided_slice %205 {offsets = [0, 8], sizes = [4, 1], strides = [1, 1]} : vector<4x49xf32> to vector<4x1xf32>
    %268 = vector.broadcast %267 : vector<4x1xf32> to vector<4x256xf32>
    %269 = arith.mulf %266, %268 : vector<4x256xf32>
    %270 = arith.addf %265, %269 : vector<4x256xf32>
    %c0_80 = arith.constant 0 : index
    %c106 = arith.constant 106 : index
    %271 = vector.load %arg17[%c0_80, %c106] : memref<4x576xf32, #tpu.memory_space<vmem>>, vector<4x256xf32>
    %272 = vector.extract_strided_slice %205 {offsets = [0, 15], sizes = [4, 1], strides = [1, 1]} : vector<4x49xf32> to vector<4x1xf32>
    %273 = vector.broadcast %272 : vector<4x1xf32> to vector<4x256xf32>
    %274 = arith.mulf %271, %273 : vector<4x256xf32>
    %275 = arith.addf %270, %274 : vector<4x256xf32>
    %c0_81 = arith.constant 0 : index
    %c154 = arith.constant 154 : index
    %276 = vector.load %arg17[%c0_81, %c154] : memref<4x576xf32, #tpu.memory_space<vmem>>, vector<4x256xf32>
    %277 = vector.extract_strided_slice %205 {offsets = [0, 22], sizes = [4, 1], strides = [1, 1]} : vector<4x49xf32> to vector<4x1xf32>
    %278 = vector.broadcast %277 : vector<4x1xf32> to vector<4x256xf32>
    %279 = arith.mulf %276, %278 : vector<4x256xf32>
    %280 = arith.addf %275, %279 : vector<4x256xf32>
    %c0_82 = arith.constant 0 : index
    %c202 = arith.constant 202 : index
    %281 = vector.load %arg17[%c0_82, %c202] : memref<4x576xf32, #tpu.memory_space<vmem>>, vector<4x256xf32>
    %282 = vector.extract_strided_slice %205 {offsets = [0, 29], sizes = [4, 1], strides = [1, 1]} : vector<4x49xf32> to vector<4x1xf32>
    %283 = vector.broadcast %282 : vector<4x1xf32> to vector<4x256xf32>
    %284 = arith.mulf %281, %283 : vector<4x256xf32>
    %285 = arith.addf %280, %284 : vector<4x256xf32>
    %c0_83 = arith.constant 0 : index
    %c250 = arith.constant 250 : index
    %286 = vector.load %arg17[%c0_83, %c250] : memref<4x576xf32, #tpu.memory_space<vmem>>, vector<4x256xf32>
    %287 = vector.extract_strided_slice %205 {offsets = [0, 36], sizes = [4, 1], strides = [1, 1]} : vector<4x49xf32> to vector<4x1xf32>
    %288 = vector.broadcast %287 : vector<4x1xf32> to vector<4x256xf32>
    %289 = arith.mulf %286, %288 : vector<4x256xf32>
    %290 = arith.addf %285, %289 : vector<4x256xf32>
    %c0_84 = arith.constant 0 : index
    %c298 = arith.constant 298 : index
    %291 = vector.load %arg17[%c0_84, %c298] : memref<4x576xf32, #tpu.memory_space<vmem>>, vector<4x256xf32>
    %292 = vector.extract_strided_slice %205 {offsets = [0, 43], sizes = [4, 1], strides = [1, 1]} : vector<4x49xf32> to vector<4x1xf32>
    %293 = vector.broadcast %292 : vector<4x1xf32> to vector<4x256xf32>
    %294 = arith.mulf %291, %293 : vector<4x256xf32>
    %295 = arith.addf %290, %294 : vector<4x256xf32>
    %c-6_i32 = arith.constant -6 : i32
    %296 = vector.broadcast %c-6_i32 : i32 to vector<1x256xi32>
    %297 = arith.addi %0, %296 : vector<1x256xi32>
    %c0_i32_85 = arith.constant 0 : i32
    %298 = vector.broadcast %c0_i32_85 : i32 to vector<1x256xi32>
    %299 = arith.cmpi sge, %297, %298 : vector<1x256xi32>
    %c-6_i32_86 = arith.constant -6 : i32
    %300 = vector.broadcast %c-6_i32_86 : i32 to vector<1x256xi32>
    %301 = arith.addi %0, %300 : vector<1x256xi32>
    %c16_i32_87 = arith.constant 16 : i32
    %302 = vector.broadcast %c16_i32_87 : i32 to vector<1x256xi32>
    %303 = arith.cmpi slt, %301, %302 : vector<1x256xi32>
    %304 = arith.andi %299, %303 : vector<1x256xi1>
    %305 = arith.extui %304 : vector<1x256xi1> to vector<1x256xi32>
    %306 = arith.sitofp %305 : vector<1x256xi32> to vector<1x256xf32>
    %307 = vector.broadcast %306 : vector<1x256xf32> to vector<4x256xf32>
    %308 = arith.mulf %295, %307 : vector<4x256xf32>
    %309 = arith.addf %259, %308 : vector<4x256xf32>
    %cst_88 = arith.constant 0.000000e+00 : f32
    %310 = vector.broadcast %cst_88 : f32 to vector<4x256xf32>
    %c0_89 = arith.constant 0 : index
    %c13 = arith.constant 13 : index
    %311 = vector.load %arg17[%c0_89, %c13] : memref<4x576xf32, #tpu.memory_space<vmem>>, vector<4x256xf32>
    %312 = vector.extract_strided_slice %205 {offsets = [0, 2], sizes = [4, 1], strides = [1, 1]} : vector<4x49xf32> to vector<4x1xf32>
    %313 = vector.broadcast %312 : vector<4x1xf32> to vector<4x256xf32>
    %314 = arith.mulf %311, %313 : vector<4x256xf32>
    %315 = arith.addf %310, %314 : vector<4x256xf32>
    %c0_90 = arith.constant 0 : index
    %c61 = arith.constant 61 : index
    %316 = vector.load %arg17[%c0_90, %c61] : memref<4x576xf32, #tpu.memory_space<vmem>>, vector<4x256xf32>
    %317 = vector.extract_strided_slice %205 {offsets = [0, 9], sizes = [4, 1], strides = [1, 1]} : vector<4x49xf32> to vector<4x1xf32>
    %318 = vector.broadcast %317 : vector<4x1xf32> to vector<4x256xf32>
    %319 = arith.mulf %316, %318 : vector<4x256xf32>
    %320 = arith.addf %315, %319 : vector<4x256xf32>
    %c0_91 = arith.constant 0 : index
    %c109 = arith.constant 109 : index
    %321 = vector.load %arg17[%c0_91, %c109] : memref<4x576xf32, #tpu.memory_space<vmem>>, vector<4x256xf32>
    %322 = vector.extract_strided_slice %205 {offsets = [0, 16], sizes = [4, 1], strides = [1, 1]} : vector<4x49xf32> to vector<4x1xf32>
    %323 = vector.broadcast %322 : vector<4x1xf32> to vector<4x256xf32>
    %324 = arith.mulf %321, %323 : vector<4x256xf32>
    %325 = arith.addf %320, %324 : vector<4x256xf32>
    %c0_92 = arith.constant 0 : index
    %c157 = arith.constant 157 : index
    %326 = vector.load %arg17[%c0_92, %c157] : memref<4x576xf32, #tpu.memory_space<vmem>>, vector<4x256xf32>
    %327 = vector.extract_strided_slice %205 {offsets = [0, 23], sizes = [4, 1], strides = [1, 1]} : vector<4x49xf32> to vector<4x1xf32>
    %328 = vector.broadcast %327 : vector<4x1xf32> to vector<4x256xf32>
    %329 = arith.mulf %326, %328 : vector<4x256xf32>
    %330 = arith.addf %325, %329 : vector<4x256xf32>
    %c0_93 = arith.constant 0 : index
    %c205 = arith.constant 205 : index
    %331 = vector.load %arg17[%c0_93, %c205] : memref<4x576xf32, #tpu.memory_space<vmem>>, vector<4x256xf32>
    %332 = vector.extract_strided_slice %205 {offsets = [0, 30], sizes = [4, 1], strides = [1, 1]} : vector<4x49xf32> to vector<4x1xf32>
    %333 = vector.broadcast %332 : vector<4x1xf32> to vector<4x256xf32>
    %334 = arith.mulf %331, %333 : vector<4x256xf32>
    %335 = arith.addf %330, %334 : vector<4x256xf32>
    %c0_94 = arith.constant 0 : index
    %c253 = arith.constant 253 : index
    %336 = vector.load %arg17[%c0_94, %c253] : memref<4x576xf32, #tpu.memory_space<vmem>>, vector<4x256xf32>
    %337 = vector.extract_strided_slice %205 {offsets = [0, 37], sizes = [4, 1], strides = [1, 1]} : vector<4x49xf32> to vector<4x1xf32>
    %338 = vector.broadcast %337 : vector<4x1xf32> to vector<4x256xf32>
    %339 = arith.mulf %336, %338 : vector<4x256xf32>
    %340 = arith.addf %335, %339 : vector<4x256xf32>
    %c0_95 = arith.constant 0 : index
    %c301 = arith.constant 301 : index
    %341 = vector.load %arg17[%c0_95, %c301] : memref<4x576xf32, #tpu.memory_space<vmem>>, vector<4x256xf32>
    %342 = vector.extract_strided_slice %205 {offsets = [0, 44], sizes = [4, 1], strides = [1, 1]} : vector<4x49xf32> to vector<4x1xf32>
    %343 = vector.broadcast %342 : vector<4x1xf32> to vector<4x256xf32>
    %344 = arith.mulf %341, %343 : vector<4x256xf32>
    %345 = arith.addf %340, %344 : vector<4x256xf32>
    %c-3_i32 = arith.constant -3 : i32
    %346 = vector.broadcast %c-3_i32 : i32 to vector<1x256xi32>
    %347 = arith.addi %0, %346 : vector<1x256xi32>
    %c0_i32_96 = arith.constant 0 : i32
    %348 = vector.broadcast %c0_i32_96 : i32 to vector<1x256xi32>
    %349 = arith.cmpi sge, %347, %348 : vector<1x256xi32>
    %c-3_i32_97 = arith.constant -3 : i32
    %350 = vector.broadcast %c-3_i32_97 : i32 to vector<1x256xi32>
    %351 = arith.addi %0, %350 : vector<1x256xi32>
    %c16_i32_98 = arith.constant 16 : i32
    %352 = vector.broadcast %c16_i32_98 : i32 to vector<1x256xi32>
    %353 = arith.cmpi slt, %351, %352 : vector<1x256xi32>
    %354 = arith.andi %349, %353 : vector<1x256xi1>
    %355 = arith.extui %354 : vector<1x256xi1> to vector<1x256xi32>
    %356 = arith.sitofp %355 : vector<1x256xi32> to vector<1x256xf32>
    %357 = vector.broadcast %356 : vector<1x256xf32> to vector<4x256xf32>
    %358 = arith.mulf %345, %357 : vector<4x256xf32>
    %359 = arith.addf %309, %358 : vector<4x256xf32>
    %cst_99 = arith.constant 0.000000e+00 : f32
    %360 = vector.broadcast %cst_99 : f32 to vector<4x256xf32>
    %c0_100 = arith.constant 0 : index
    %c16_101 = arith.constant 16 : index
    %361 = vector.load %arg17[%c0_100, %c16_101] : memref<4x576xf32, #tpu.memory_space<vmem>>, vector<4x256xf32>
    %362 = vector.extract_strided_slice %205 {offsets = [0, 3], sizes = [4, 1], strides = [1, 1]} : vector<4x49xf32> to vector<4x1xf32>
    %363 = vector.broadcast %362 : vector<4x1xf32> to vector<4x256xf32>
    %364 = arith.mulf %361, %363 : vector<4x256xf32>
    %365 = arith.addf %360, %364 : vector<4x256xf32>
    %c0_102 = arith.constant 0 : index
    %c64_103 = arith.constant 64 : index
    %366 = vector.load %arg17[%c0_102, %c64_103] : memref<4x576xf32, #tpu.memory_space<vmem>>, vector<4x256xf32>
    %367 = vector.extract_strided_slice %205 {offsets = [0, 10], sizes = [4, 1], strides = [1, 1]} : vector<4x49xf32> to vector<4x1xf32>
    %368 = vector.broadcast %367 : vector<4x1xf32> to vector<4x256xf32>
    %369 = arith.mulf %366, %368 : vector<4x256xf32>
    %370 = arith.addf %365, %369 : vector<4x256xf32>
    %c0_104 = arith.constant 0 : index
    %c112 = arith.constant 112 : index
    %371 = vector.load %arg17[%c0_104, %c112] : memref<4x576xf32, #tpu.memory_space<vmem>>, vector<4x256xf32>
    %372 = vector.extract_strided_slice %205 {offsets = [0, 17], sizes = [4, 1], strides = [1, 1]} : vector<4x49xf32> to vector<4x1xf32>
    %373 = vector.broadcast %372 : vector<4x1xf32> to vector<4x256xf32>
    %374 = arith.mulf %371, %373 : vector<4x256xf32>
    %375 = arith.addf %370, %374 : vector<4x256xf32>
    %c0_105 = arith.constant 0 : index
    %c160_106 = arith.constant 160 : index
    %376 = vector.load %arg17[%c0_105, %c160_106] : memref<4x576xf32, #tpu.memory_space<vmem>>, vector<4x256xf32>
    %377 = vector.extract_strided_slice %205 {offsets = [0, 24], sizes = [4, 1], strides = [1, 1]} : vector<4x49xf32> to vector<4x1xf32>
    %378 = vector.broadcast %377 : vector<4x1xf32> to vector<4x256xf32>
    %379 = arith.mulf %376, %378 : vector<4x256xf32>
    %380 = arith.addf %375, %379 : vector<4x256xf32>
    %c0_107 = arith.constant 0 : index
    %c208 = arith.constant 208 : index
    %381 = vector.load %arg17[%c0_107, %c208] : memref<4x576xf32, #tpu.memory_space<vmem>>, vector<4x256xf32>
    %382 = vector.extract_strided_slice %205 {offsets = [0, 31], sizes = [4, 1], strides = [1, 1]} : vector<4x49xf32> to vector<4x1xf32>
    %383 = vector.broadcast %382 : vector<4x1xf32> to vector<4x256xf32>
    %384 = arith.mulf %381, %383 : vector<4x256xf32>
    %385 = arith.addf %380, %384 : vector<4x256xf32>
    %c0_108 = arith.constant 0 : index
    %c256 = arith.constant 256 : index
    %386 = vector.load %arg17[%c0_108, %c256] : memref<4x576xf32, #tpu.memory_space<vmem>>, vector<4x256xf32>
    %387 = vector.extract_strided_slice %205 {offsets = [0, 38], sizes = [4, 1], strides = [1, 1]} : vector<4x49xf32> to vector<4x1xf32>
    %388 = vector.broadcast %387 : vector<4x1xf32> to vector<4x256xf32>
    %389 = arith.mulf %386, %388 : vector<4x256xf32>
    %390 = arith.addf %385, %389 : vector<4x256xf32>
    %c0_109 = arith.constant 0 : index
    %c304_110 = arith.constant 304 : index
    %391 = vector.load %arg17[%c0_109, %c304_110] : memref<4x576xf32, #tpu.memory_space<vmem>>, vector<4x256xf32>
    %392 = vector.extract_strided_slice %205 {offsets = [0, 45], sizes = [4, 1], strides = [1, 1]} : vector<4x49xf32> to vector<4x1xf32>
    %393 = vector.broadcast %392 : vector<4x1xf32> to vector<4x256xf32>
    %394 = arith.mulf %391, %393 : vector<4x256xf32>
    %395 = arith.addf %390, %394 : vector<4x256xf32>
    %396 = arith.addf %359, %395 : vector<4x256xf32>
    %cst_111 = arith.constant 0.000000e+00 : f32
    %397 = vector.broadcast %cst_111 : f32 to vector<4x256xf32>
    %c0_112 = arith.constant 0 : index
    %c19 = arith.constant 19 : index
    %398 = vector.load %arg17[%c0_112, %c19] : memref<4x576xf32, #tpu.memory_space<vmem>>, vector<4x256xf32>
    %399 = vector.extract_strided_slice %205 {offsets = [0, 4], sizes = [4, 1], strides = [1, 1]} : vector<4x49xf32> to vector<4x1xf32>
    %400 = vector.broadcast %399 : vector<4x1xf32> to vector<4x256xf32>
    %401 = arith.mulf %398, %400 : vector<4x256xf32>
    %402 = arith.addf %397, %401 : vector<4x256xf32>
    %c0_113 = arith.constant 0 : index
    %c67 = arith.constant 67 : index
    %403 = vector.load %arg17[%c0_113, %c67] : memref<4x576xf32, #tpu.memory_space<vmem>>, vector<4x256xf32>
    %404 = vector.extract_strided_slice %205 {offsets = [0, 11], sizes = [4, 1], strides = [1, 1]} : vector<4x49xf32> to vector<4x1xf32>
    %405 = vector.broadcast %404 : vector<4x1xf32> to vector<4x256xf32>
    %406 = arith.mulf %403, %405 : vector<4x256xf32>
    %407 = arith.addf %402, %406 : vector<4x256xf32>
    %c0_114 = arith.constant 0 : index
    %c115 = arith.constant 115 : index
    %408 = vector.load %arg17[%c0_114, %c115] : memref<4x576xf32, #tpu.memory_space<vmem>>, vector<4x256xf32>
    %409 = vector.extract_strided_slice %205 {offsets = [0, 18], sizes = [4, 1], strides = [1, 1]} : vector<4x49xf32> to vector<4x1xf32>
    %410 = vector.broadcast %409 : vector<4x1xf32> to vector<4x256xf32>
    %411 = arith.mulf %408, %410 : vector<4x256xf32>
    %412 = arith.addf %407, %411 : vector<4x256xf32>
    %c0_115 = arith.constant 0 : index
    %c163 = arith.constant 163 : index
    %413 = vector.load %arg17[%c0_115, %c163] : memref<4x576xf32, #tpu.memory_space<vmem>>, vector<4x256xf32>
    %414 = vector.extract_strided_slice %205 {offsets = [0, 25], sizes = [4, 1], strides = [1, 1]} : vector<4x49xf32> to vector<4x1xf32>
    %415 = vector.broadcast %414 : vector<4x1xf32> to vector<4x256xf32>
    %416 = arith.mulf %413, %415 : vector<4x256xf32>
    %417 = arith.addf %412, %416 : vector<4x256xf32>
    %c0_116 = arith.constant 0 : index
    %c211 = arith.constant 211 : index
    %418 = vector.load %arg17[%c0_116, %c211] : memref<4x576xf32, #tpu.memory_space<vmem>>, vector<4x256xf32>
    %419 = vector.extract_strided_slice %205 {offsets = [0, 32], sizes = [4, 1], strides = [1, 1]} : vector<4x49xf32> to vector<4x1xf32>
    %420 = vector.broadcast %419 : vector<4x1xf32> to vector<4x256xf32>
    %421 = arith.mulf %418, %420 : vector<4x256xf32>
    %422 = arith.addf %417, %421 : vector<4x256xf32>
    %c0_117 = arith.constant 0 : index
    %c259 = arith.constant 259 : index
    %423 = vector.load %arg17[%c0_117, %c259] : memref<4x576xf32, #tpu.memory_space<vmem>>, vector<4x256xf32>
    %424 = vector.extract_strided_slice %205 {offsets = [0, 39], sizes = [4, 1], strides = [1, 1]} : vector<4x49xf32> to vector<4x1xf32>
    %425 = vector.broadcast %424 : vector<4x1xf32> to vector<4x256xf32>
    %426 = arith.mulf %423, %425 : vector<4x256xf32>
    %427 = arith.addf %422, %426 : vector<4x256xf32>
    %c0_118 = arith.constant 0 : index
    %c307 = arith.constant 307 : index
    %428 = vector.load %arg17[%c0_118, %c307] : memref<4x576xf32, #tpu.memory_space<vmem>>, vector<4x256xf32>
    %429 = vector.extract_strided_slice %205 {offsets = [0, 46], sizes = [4, 1], strides = [1, 1]} : vector<4x49xf32> to vector<4x1xf32>
    %430 = vector.broadcast %429 : vector<4x1xf32> to vector<4x256xf32>
    %431 = arith.mulf %428, %430 : vector<4x256xf32>
    %432 = arith.addf %427, %431 : vector<4x256xf32>
    %c3_i32 = arith.constant 3 : i32
    %433 = vector.broadcast %c3_i32 : i32 to vector<1x256xi32>
    %434 = arith.addi %0, %433 : vector<1x256xi32>
    %c0_i32_119 = arith.constant 0 : i32
    %435 = vector.broadcast %c0_i32_119 : i32 to vector<1x256xi32>
    %436 = arith.cmpi sge, %434, %435 : vector<1x256xi32>
    %c3_i32_120 = arith.constant 3 : i32
    %437 = vector.broadcast %c3_i32_120 : i32 to vector<1x256xi32>
    %438 = arith.addi %0, %437 : vector<1x256xi32>
    %c16_i32_121 = arith.constant 16 : i32
    %439 = vector.broadcast %c16_i32_121 : i32 to vector<1x256xi32>
    %440 = arith.cmpi slt, %438, %439 : vector<1x256xi32>
    %441 = arith.andi %436, %440 : vector<1x256xi1>
    %442 = arith.extui %441 : vector<1x256xi1> to vector<1x256xi32>
    %443 = arith.sitofp %442 : vector<1x256xi32> to vector<1x256xf32>
    %444 = vector.broadcast %443 : vector<1x256xf32> to vector<4x256xf32>
    %445 = arith.mulf %432, %444 : vector<4x256xf32>
    %446 = arith.addf %396, %445 : vector<4x256xf32>
    %cst_122 = arith.constant 0.000000e+00 : f32
    %447 = vector.broadcast %cst_122 : f32 to vector<4x256xf32>
    %c0_123 = arith.constant 0 : index
    %c22 = arith.constant 22 : index
    %448 = vector.load %arg17[%c0_123, %c22] : memref<4x576xf32, #tpu.memory_space<vmem>>, vector<4x256xf32>
    %449 = vector.extract_strided_slice %205 {offsets = [0, 5], sizes = [4, 1], strides = [1, 1]} : vector<4x49xf32> to vector<4x1xf32>
    %450 = vector.broadcast %449 : vector<4x1xf32> to vector<4x256xf32>
    %451 = arith.mulf %448, %450 : vector<4x256xf32>
    %452 = arith.addf %447, %451 : vector<4x256xf32>
    %c0_124 = arith.constant 0 : index
    %c70 = arith.constant 70 : index
    %453 = vector.load %arg17[%c0_124, %c70] : memref<4x576xf32, #tpu.memory_space<vmem>>, vector<4x256xf32>
    %454 = vector.extract_strided_slice %205 {offsets = [0, 12], sizes = [4, 1], strides = [1, 1]} : vector<4x49xf32> to vector<4x1xf32>
    %455 = vector.broadcast %454 : vector<4x1xf32> to vector<4x256xf32>
    %456 = arith.mulf %453, %455 : vector<4x256xf32>
    %457 = arith.addf %452, %456 : vector<4x256xf32>
    %c0_125 = arith.constant 0 : index
    %c118 = arith.constant 118 : index
    %458 = vector.load %arg17[%c0_125, %c118] : memref<4x576xf32, #tpu.memory_space<vmem>>, vector<4x256xf32>
    %459 = vector.extract_strided_slice %205 {offsets = [0, 19], sizes = [4, 1], strides = [1, 1]} : vector<4x49xf32> to vector<4x1xf32>
    %460 = vector.broadcast %459 : vector<4x1xf32> to vector<4x256xf32>
    %461 = arith.mulf %458, %460 : vector<4x256xf32>
    %462 = arith.addf %457, %461 : vector<4x256xf32>
    %c0_126 = arith.constant 0 : index
    %c166 = arith.constant 166 : index
    %463 = vector.load %arg17[%c0_126, %c166] : memref<4x576xf32, #tpu.memory_space<vmem>>, vector<4x256xf32>
    %464 = vector.extract_strided_slice %205 {offsets = [0, 26], sizes = [4, 1], strides = [1, 1]} : vector<4x49xf32> to vector<4x1xf32>
    %465 = vector.broadcast %464 : vector<4x1xf32> to vector<4x256xf32>
    %466 = arith.mulf %463, %465 : vector<4x256xf32>
    %467 = arith.addf %462, %466 : vector<4x256xf32>
    %c0_127 = arith.constant 0 : index
    %c214 = arith.constant 214 : index
    %468 = vector.load %arg17[%c0_127, %c214] : memref<4x576xf32, #tpu.memory_space<vmem>>, vector<4x256xf32>
    %469 = vector.extract_strided_slice %205 {offsets = [0, 33], sizes = [4, 1], strides = [1, 1]} : vector<4x49xf32> to vector<4x1xf32>
    %470 = vector.broadcast %469 : vector<4x1xf32> to vector<4x256xf32>
    %471 = arith.mulf %468, %470 : vector<4x256xf32>
    %472 = arith.addf %467, %471 : vector<4x256xf32>
    %c0_128 = arith.constant 0 : index
    %c262 = arith.constant 262 : index
    %473 = vector.load %arg17[%c0_128, %c262] : memref<4x576xf32, #tpu.memory_space<vmem>>, vector<4x256xf32>
    %474 = vector.extract_strided_slice %205 {offsets = [0, 40], sizes = [4, 1], strides = [1, 1]} : vector<4x49xf32> to vector<4x1xf32>
    %475 = vector.broadcast %474 : vector<4x1xf32> to vector<4x256xf32>
    %476 = arith.mulf %473, %475 : vector<4x256xf32>
    %477 = arith.addf %472, %476 : vector<4x256xf32>
    %c0_129 = arith.constant 0 : index
    %c310 = arith.constant 310 : index
    %478 = vector.load %arg17[%c0_129, %c310] : memref<4x576xf32, #tpu.memory_space<vmem>>, vector<4x256xf32>
    %479 = vector.extract_strided_slice %205 {offsets = [0, 47], sizes = [4, 1], strides = [1, 1]} : vector<4x49xf32> to vector<4x1xf32>
    %480 = vector.broadcast %479 : vector<4x1xf32> to vector<4x256xf32>
    %481 = arith.mulf %478, %480 : vector<4x256xf32>
    %482 = arith.addf %477, %481 : vector<4x256xf32>
    %c6_i32 = arith.constant 6 : i32
    %483 = vector.broadcast %c6_i32 : i32 to vector<1x256xi32>
    %484 = arith.addi %0, %483 : vector<1x256xi32>
    %c0_i32_130 = arith.constant 0 : i32
    %485 = vector.broadcast %c0_i32_130 : i32 to vector<1x256xi32>
    %486 = arith.cmpi sge, %484, %485 : vector<1x256xi32>
    %c6_i32_131 = arith.constant 6 : i32
    %487 = vector.broadcast %c6_i32_131 : i32 to vector<1x256xi32>
    %488 = arith.addi %0, %487 : vector<1x256xi32>
    %c16_i32_132 = arith.constant 16 : i32
    %489 = vector.broadcast %c16_i32_132 : i32 to vector<1x256xi32>
    %490 = arith.cmpi slt, %488, %489 : vector<1x256xi32>
    %491 = arith.andi %486, %490 : vector<1x256xi1>
    %492 = arith.extui %491 : vector<1x256xi1> to vector<1x256xi32>
    %493 = arith.sitofp %492 : vector<1x256xi32> to vector<1x256xf32>
    %494 = vector.broadcast %493 : vector<1x256xf32> to vector<4x256xf32>
    %495 = arith.mulf %482, %494 : vector<4x256xf32>
    %496 = arith.addf %446, %495 : vector<4x256xf32>
    %cst_133 = arith.constant 0.000000e+00 : f32
    %497 = vector.broadcast %cst_133 : f32 to vector<4x256xf32>
    %c0_134 = arith.constant 0 : index
    %c25 = arith.constant 25 : index
    %498 = vector.load %arg17[%c0_134, %c25] : memref<4x576xf32, #tpu.memory_space<vmem>>, vector<4x256xf32>
    %499 = vector.extract_strided_slice %205 {offsets = [0, 6], sizes = [4, 1], strides = [1, 1]} : vector<4x49xf32> to vector<4x1xf32>
    %500 = vector.broadcast %499 : vector<4x1xf32> to vector<4x256xf32>
    %501 = arith.mulf %498, %500 : vector<4x256xf32>
    %502 = arith.addf %497, %501 : vector<4x256xf32>
    %c0_135 = arith.constant 0 : index
    %c73 = arith.constant 73 : index
    %503 = vector.load %arg17[%c0_135, %c73] : memref<4x576xf32, #tpu.memory_space<vmem>>, vector<4x256xf32>
    %504 = vector.extract_strided_slice %205 {offsets = [0, 13], sizes = [4, 1], strides = [1, 1]} : vector<4x49xf32> to vector<4x1xf32>
    %505 = vector.broadcast %504 : vector<4x1xf32> to vector<4x256xf32>
    %506 = arith.mulf %503, %505 : vector<4x256xf32>
    %507 = arith.addf %502, %506 : vector<4x256xf32>
    %c0_136 = arith.constant 0 : index
    %c121 = arith.constant 121 : index
    %508 = vector.load %arg17[%c0_136, %c121] : memref<4x576xf32, #tpu.memory_space<vmem>>, vector<4x256xf32>
    %509 = vector.extract_strided_slice %205 {offsets = [0, 20], sizes = [4, 1], strides = [1, 1]} : vector<4x49xf32> to vector<4x1xf32>
    %510 = vector.broadcast %509 : vector<4x1xf32> to vector<4x256xf32>
    %511 = arith.mulf %508, %510 : vector<4x256xf32>
    %512 = arith.addf %507, %511 : vector<4x256xf32>
    %c0_137 = arith.constant 0 : index
    %c169 = arith.constant 169 : index
    %513 = vector.load %arg17[%c0_137, %c169] : memref<4x576xf32, #tpu.memory_space<vmem>>, vector<4x256xf32>
    %514 = vector.extract_strided_slice %205 {offsets = [0, 27], sizes = [4, 1], strides = [1, 1]} : vector<4x49xf32> to vector<4x1xf32>
    %515 = vector.broadcast %514 : vector<4x1xf32> to vector<4x256xf32>
    %516 = arith.mulf %513, %515 : vector<4x256xf32>
    %517 = arith.addf %512, %516 : vector<4x256xf32>
    %c0_138 = arith.constant 0 : index
    %c217 = arith.constant 217 : index
    %518 = vector.load %arg17[%c0_138, %c217] : memref<4x576xf32, #tpu.memory_space<vmem>>, vector<4x256xf32>
    %519 = vector.extract_strided_slice %205 {offsets = [0, 34], sizes = [4, 1], strides = [1, 1]} : vector<4x49xf32> to vector<4x1xf32>
    %520 = vector.broadcast %519 : vector<4x1xf32> to vector<4x256xf32>
    %521 = arith.mulf %518, %520 : vector<4x256xf32>
    %522 = arith.addf %517, %521 : vector<4x256xf32>
    %c0_139 = arith.constant 0 : index
    %c265 = arith.constant 265 : index
    %523 = vector.load %arg17[%c0_139, %c265] : memref<4x576xf32, #tpu.memory_space<vmem>>, vector<4x256xf32>
    %524 = vector.extract_strided_slice %205 {offsets = [0, 41], sizes = [4, 1], strides = [1, 1]} : vector<4x49xf32> to vector<4x1xf32>
    %525 = vector.broadcast %524 : vector<4x1xf32> to vector<4x256xf32>
    %526 = arith.mulf %523, %525 : vector<4x256xf32>
    %527 = arith.addf %522, %526 : vector<4x256xf32>
    %c0_140 = arith.constant 0 : index
    %c313 = arith.constant 313 : index
    %528 = vector.load %arg17[%c0_140, %c313] : memref<4x576xf32, #tpu.memory_space<vmem>>, vector<4x256xf32>
    %529 = vector.extract_strided_slice %205 {offsets = [0, 48], sizes = [4, 1], strides = [1, 1]} : vector<4x49xf32> to vector<4x1xf32>
    %530 = vector.broadcast %529 : vector<4x1xf32> to vector<4x256xf32>
    %531 = arith.mulf %528, %530 : vector<4x256xf32>
    %532 = arith.addf %527, %531 : vector<4x256xf32>
    %c9_i32 = arith.constant 9 : i32
    %533 = vector.broadcast %c9_i32 : i32 to vector<1x256xi32>
    %534 = arith.addi %0, %533 : vector<1x256xi32>
    %c0_i32_141 = arith.constant 0 : i32
    %535 = vector.broadcast %c0_i32_141 : i32 to vector<1x256xi32>
    %536 = arith.cmpi sge, %534, %535 : vector<1x256xi32>
    %c9_i32_142 = arith.constant 9 : i32
    %537 = vector.broadcast %c9_i32_142 : i32 to vector<1x256xi32>
    %538 = arith.addi %0, %537 : vector<1x256xi32>
    %c16_i32_143 = arith.constant 16 : i32
    %539 = vector.broadcast %c16_i32_143 : i32 to vector<1x256xi32>
    %540 = arith.cmpi slt, %538, %539 : vector<1x256xi32>
    %541 = arith.andi %536, %540 : vector<1x256xi1>
    %542 = arith.extui %541 : vector<1x256xi1> to vector<1x256xi32>
    %543 = arith.sitofp %542 : vector<1x256xi32> to vector<1x256xf32>
    %544 = vector.broadcast %543 : vector<1x256xf32> to vector<4x256xf32>
    %545 = arith.mulf %532, %544 : vector<4x256xf32>
    %546 = arith.addf %496, %545 : vector<4x256xf32>
    %c0_144 = arith.constant 0 : index
    %c0_145 = arith.constant 0 : index
    %547 = vector.load %arg7[%c0_144, %c0_145] : memref<2x4xf32, #tpu.memory_space<vmem>>, vector<2x4xf32>
    %cst_146 = arith.constant dense<0.000000e+00> : vector<2x256xf32>
    %548 = tpu.matmul %547, %199, %cst_146 {dimension_numbers = #tpu.dot_dimension_numbers<[1], [0], [0], [1], [0, 0, 1, 1], [], []>, precision = #tpu.contract_precision<fp32>} : vector<2x4xf32>, vector<4x256xf32>, vector<2x256xf32> -> vector<2x256xf32>
    %c0_147 = arith.constant 0 : index
    %c0_148 = arith.constant 0 : index
    %549 = vector.load %arg8[%c0_147, %c0_148] : memref<2x1xf32, #tpu.memory_space<vmem>>, vector<2x1xf32>
    %550 = vector.broadcast %549 : vector<2x1xf32> to vector<2x256xf32>
    %551 = arith.addf %548, %550 : vector<2x256xf32>
    %c0_149 = arith.constant 0 : index
    %c0_150 = arith.constant 0 : index
    %552 = vector.load %arg9[%c0_149, %c0_150] : memref<2x4xf32, #tpu.memory_space<vmem>>, vector<2x4xf32>
    %cst_151 = arith.constant dense<0.000000e+00> : vector<2x256xf32>
    %553 = tpu.matmul %552, %546, %cst_151 {dimension_numbers = #tpu.dot_dimension_numbers<[1], [0], [0], [1], [0, 0, 1, 1], [], []>, precision = #tpu.contract_precision<fp32>} : vector<2x4xf32>, vector<4x256xf32>, vector<2x256xf32> -> vector<2x256xf32>
    %c0_152 = arith.constant 0 : index
    %c0_153 = arith.constant 0 : index
    %554 = vector.load %arg10[%c0_152, %c0_153] : memref<2x1xf32, #tpu.memory_space<vmem>>, vector<2x1xf32>
    %555 = vector.broadcast %554 : vector<2x1xf32> to vector<2x256xf32>
    %556 = arith.addf %553, %555 : vector<2x256xf32>
    %cst_154 = arith.constant dense<0.000000e+00> : vector<256xf32>
    %557 = vector.multi_reduction <add>, %551, %cst_154 [0] : vector<2x256xf32> to vector<256xf32>
    %558 = vector.shape_cast %557 : vector<256xf32> to vector<1x256xf32>
    %cst_155 = arith.constant dense<0.000000e+00> : vector<256xf32>
    %559 = vector.multi_reduction <add>, %556, %cst_155 [0] : vector<2x256xf32> to vector<256xf32>
    %560 = vector.shape_cast %559 : vector<256xf32> to vector<1x256xf32>
    %561 = arith.addf %558, %560 : vector<1x256xf32>
    %cst_156 = arith.constant 2.500000e-01 : f32
    %562 = vector.broadcast %cst_156 : f32 to vector<1x256xf32>
    %563 = arith.mulf %561, %562 : vector<1x256xf32>
    %cst_157 = arith.constant dense<0xFF800000> : vector<256xf32>
    %564 = vector.multi_reduction <maximumf>, %551, %cst_157 [0] : vector<2x256xf32> to vector<256xf32>
    %565 = vector.shape_cast %564 : vector<256xf32> to vector<1x256xf32>
    %cst_158 = arith.constant dense<0xFF800000> : vector<256xf32>
    %566 = vector.multi_reduction <maximumf>, %556, %cst_158 [0] : vector<2x256xf32> to vector<256xf32>
    %567 = vector.shape_cast %566 : vector<256xf32> to vector<1x256xf32>
    %568 = arith.maximumf %565, %567 : vector<1x256xf32>
    %cst_159 = arith.constant 0.000000e+00 : f32
    %569 = vector.broadcast %cst_159 : f32 to vector<2x64xf32>
    %c0_160 = arith.constant 0 : index
    %c0_161 = arith.constant 0 : index
    %570 = vector.load %arg18[%c0_160, %c0_161] : memref<2x384xf32, #tpu.memory_space<vmem>>, vector<2x64xf32>
    tpu.vector_store %arg18[%c0_160, %c0_161], %569 {strides = array<i32>} : memref<2x384xf32, #tpu.memory_space<vmem>>, vector<2x64xf32>,
    %cst_162 = arith.constant 0.000000e+00 : f32
    %571 = vector.broadcast %cst_162 : f32 to vector<2x64xf32>
    %c0_163 = arith.constant 0 : index
    %c320 = arith.constant 320 : index
    %572 = vector.load %arg18[%c0_163, %c320] : memref<2x384xf32, #tpu.memory_space<vmem>>, vector<2x64xf32>
    tpu.vector_store %arg18[%c0_163, %c320], %571 {strides = array<i32>} : memref<2x384xf32, #tpu.memory_space<vmem>>, vector<2x64xf32>,
    %c0_164 = arith.constant 0 : index
    %c64_165 = arith.constant 64 : index
    %573 = vector.load %arg18[%c0_164, %c64_165] : memref<2x384xf32, #tpu.memory_space<vmem>>, vector<1x256xf32>
    tpu.vector_store %arg18[%c0_164, %c64_165], %563 {strides = array<i32>} : memref<2x384xf32, #tpu.memory_space<vmem>>, vector<1x256xf32>,
    %c1 = arith.constant 1 : index
    %c64_166 = arith.constant 64 : index
    %574 = vector.load %arg18[%c1, %c64_166] : memref<2x384xf32, #tpu.memory_space<vmem>>, vector<1x256xf32>
    tpu.vector_store %arg18[%c1, %c64_166], %568 {strides = array<i32>} : memref<2x384xf32, #tpu.memory_space<vmem>>, vector<1x256xf32>,
    %c0_167 = arith.constant 0 : index
    %c0_168 = arith.constant 0 : index
    %575 = vector.load %arg11[%c0_167, %c0_168] : memref<2x98xf32, #tpu.memory_space<vmem>>, vector<2x98xf32>
    %cst_169 = arith.constant 0.000000e+00 : f32
    %576 = vector.broadcast %cst_169 : f32 to vector<2x256xf32>
    %c0_170 = arith.constant 0 : index
    %c0_171 = arith.constant 0 : index
    %577 = vector.load %arg12[%c0_170, %c0_171] : memref<2x1xf32, #tpu.memory_space<vmem>>, vector<2x1xf32>
    %578 = vector.broadcast %577 : vector<2x1xf32> to vector<2x256xf32>
    %579 = arith.addf %576, %578 : vector<2x256xf32>
    %cst_172 = arith.constant 0.000000e+00 : f32
    %580 = vector.broadcast %cst_172 : f32 to vector<2x256xf32>
    %c0_173 = arith.constant 0 : index
    %c13_174 = arith.constant 13 : index
    %581 = vector.load %arg18[%c0_173, %c13_174] : memref<2x384xf32, #tpu.memory_space<vmem>>, vector<1x256xf32>
    %582 = vector.extract_strided_slice %575 {offsets = [0, 0], sizes = [2, 1], strides = [1, 1]} : vector<2x98xf32> to vector<2x1xf32>
    %583 = vector.broadcast %581 : vector<1x256xf32> to vector<2x256xf32>
    %584 = vector.broadcast %582 : vector<2x1xf32> to vector<2x256xf32>
    %585 = arith.mulf %583, %584 : vector<2x256xf32>
    %586 = arith.addf %580, %585 : vector<2x256xf32>
    %c1_175 = arith.constant 1 : index
    %c13_176 = arith.constant 13 : index
    %587 = vector.load %arg18[%c1_175, %c13_176] : memref<2x384xf32, #tpu.memory_space<vmem>>, vector<1x256xf32>
    %588 = vector.extract_strided_slice %575 {offsets = [0, 49], sizes = [2, 1], strides = [1, 1]} : vector<2x98xf32> to vector<2x1xf32>
    %589 = vector.broadcast %587 : vector<1x256xf32> to vector<2x256xf32>
    %590 = vector.broadcast %588 : vector<2x1xf32> to vector<2x256xf32>
    %591 = arith.mulf %589, %590 : vector<2x256xf32>
    %592 = arith.addf %586, %591 : vector<2x256xf32>
    %c0_177 = arith.constant 0 : index
    %c29 = arith.constant 29 : index
    %593 = vector.load %arg18[%c0_177, %c29] : memref<2x384xf32, #tpu.memory_space<vmem>>, vector<1x256xf32>
    %594 = vector.extract_strided_slice %575 {offsets = [0, 7], sizes = [2, 1], strides = [1, 1]} : vector<2x98xf32> to vector<2x1xf32>
    %595 = vector.broadcast %593 : vector<1x256xf32> to vector<2x256xf32>
    %596 = vector.broadcast %594 : vector<2x1xf32> to vector<2x256xf32>
    %597 = arith.mulf %595, %596 : vector<2x256xf32>
    %598 = arith.addf %592, %597 : vector<2x256xf32>
    %c1_178 = arith.constant 1 : index
    %c29_179 = arith.constant 29 : index
    %599 = vector.load %arg18[%c1_178, %c29_179] : memref<2x384xf32, #tpu.memory_space<vmem>>, vector<1x256xf32>
    %600 = vector.extract_strided_slice %575 {offsets = [0, 56], sizes = [2, 1], strides = [1, 1]} : vector<2x98xf32> to vector<2x1xf32>
    %601 = vector.broadcast %599 : vector<1x256xf32> to vector<2x256xf32>
    %602 = vector.broadcast %600 : vector<2x1xf32> to vector<2x256xf32>
    %603 = arith.mulf %601, %602 : vector<2x256xf32>
    %604 = arith.addf %598, %603 : vector<2x256xf32>
    %c0_180 = arith.constant 0 : index
    %c45 = arith.constant 45 : index
    %605 = vector.load %arg18[%c0_180, %c45] : memref<2x384xf32, #tpu.memory_space<vmem>>, vector<1x256xf32>
    %606 = vector.extract_strided_slice %575 {offsets = [0, 14], sizes = [2, 1], strides = [1, 1]} : vector<2x98xf32> to vector<2x1xf32>
    %607 = vector.broadcast %605 : vector<1x256xf32> to vector<2x256xf32>
    %608 = vector.broadcast %606 : vector<2x1xf32> to vector<2x256xf32>
    %609 = arith.mulf %607, %608 : vector<2x256xf32>
    %610 = arith.addf %604, %609 : vector<2x256xf32>
    %c1_181 = arith.constant 1 : index
    %c45_182 = arith.constant 45 : index
    %611 = vector.load %arg18[%c1_181, %c45_182] : memref<2x384xf32, #tpu.memory_space<vmem>>, vector<1x256xf32>
    %612 = vector.extract_strided_slice %575 {offsets = [0, 63], sizes = [2, 1], strides = [1, 1]} : vector<2x98xf32> to vector<2x1xf32>
    %613 = vector.broadcast %611 : vector<1x256xf32> to vector<2x256xf32>
    %614 = vector.broadcast %612 : vector<2x1xf32> to vector<2x256xf32>
    %615 = arith.mulf %613, %614 : vector<2x256xf32>
    %616 = arith.addf %610, %615 : vector<2x256xf32>
    %c0_183 = arith.constant 0 : index
    %c61_184 = arith.constant 61 : index
    %617 = vector.load %arg18[%c0_183, %c61_184] : memref<2x384xf32, #tpu.memory_space<vmem>>, vector<1x256xf32>
    %618 = vector.extract_strided_slice %575 {offsets = [0, 21], sizes = [2, 1], strides = [1, 1]} : vector<2x98xf32> to vector<2x1xf32>
    %619 = vector.broadcast %617 : vector<1x256xf32> to vector<2x256xf32>
    %620 = vector.broadcast %618 : vector<2x1xf32> to vector<2x256xf32>
    %621 = arith.mulf %619, %620 : vector<2x256xf32>
    %622 = arith.addf %616, %621 : vector<2x256xf32>
    %c1_185 = arith.constant 1 : index
    %c61_186 = arith.constant 61 : index
    %623 = vector.load %arg18[%c1_185, %c61_186] : memref<2x384xf32, #tpu.memory_space<vmem>>, vector<1x256xf32>
    %624 = vector.extract_strided_slice %575 {offsets = [0, 70], sizes = [2, 1], strides = [1, 1]} : vector<2x98xf32> to vector<2x1xf32>
    %625 = vector.broadcast %623 : vector<1x256xf32> to vector<2x256xf32>
    %626 = vector.broadcast %624 : vector<2x1xf32> to vector<2x256xf32>
    %627 = arith.mulf %625, %626 : vector<2x256xf32>
    %628 = arith.addf %622, %627 : vector<2x256xf32>
    %c0_187 = arith.constant 0 : index
    %c77 = arith.constant 77 : index
    %629 = vector.load %arg18[%c0_187, %c77] : memref<2x384xf32, #tpu.memory_space<vmem>>, vector<1x256xf32>
    %630 = vector.extract_strided_slice %575 {offsets = [0, 28], sizes = [2, 1], strides = [1, 1]} : vector<2x98xf32> to vector<2x1xf32>
    %631 = vector.broadcast %629 : vector<1x256xf32> to vector<2x256xf32>
    %632 = vector.broadcast %630 : vector<2x1xf32> to vector<2x256xf32>
    %633 = arith.mulf %631, %632 : vector<2x256xf32>
    %634 = arith.addf %628, %633 : vector<2x256xf32>
    %c1_188 = arith.constant 1 : index
    %c77_189 = arith.constant 77 : index
    %635 = vector.load %arg18[%c1_188, %c77_189] : memref<2x384xf32, #tpu.memory_space<vmem>>, vector<1x256xf32>
    %636 = vector.extract_strided_slice %575 {offsets = [0, 77], sizes = [2, 1], strides = [1, 1]} : vector<2x98xf32> to vector<2x1xf32>
    %637 = vector.broadcast %635 : vector<1x256xf32> to vector<2x256xf32>
    %638 = vector.broadcast %636 : vector<2x1xf32> to vector<2x256xf32>
    %639 = arith.mulf %637, %638 : vector<2x256xf32>
    %640 = arith.addf %634, %639 : vector<2x256xf32>
    %c0_190 = arith.constant 0 : index
    %c93 = arith.constant 93 : index
    %641 = vector.load %arg18[%c0_190, %c93] : memref<2x384xf32, #tpu.memory_space<vmem>>, vector<1x256xf32>
    %642 = vector.extract_strided_slice %575 {offsets = [0, 35], sizes = [2, 1], strides = [1, 1]} : vector<2x98xf32> to vector<2x1xf32>
    %643 = vector.broadcast %641 : vector<1x256xf32> to vector<2x256xf32>
    %644 = vector.broadcast %642 : vector<2x1xf32> to vector<2x256xf32>
    %645 = arith.mulf %643, %644 : vector<2x256xf32>
    %646 = arith.addf %640, %645 : vector<2x256xf32>
    %c1_191 = arith.constant 1 : index
    %c93_192 = arith.constant 93 : index
    %647 = vector.load %arg18[%c1_191, %c93_192] : memref<2x384xf32, #tpu.memory_space<vmem>>, vector<1x256xf32>
    %648 = vector.extract_strided_slice %575 {offsets = [0, 84], sizes = [2, 1], strides = [1, 1]} : vector<2x98xf32> to vector<2x1xf32>
    %649 = vector.broadcast %647 : vector<1x256xf32> to vector<2x256xf32>
    %650 = vector.broadcast %648 : vector<2x1xf32> to vector<2x256xf32>
    %651 = arith.mulf %649, %650 : vector<2x256xf32>
    %652 = arith.addf %646, %651 : vector<2x256xf32>
    %c0_193 = arith.constant 0 : index
    %c109_194 = arith.constant 109 : index
    %653 = vector.load %arg18[%c0_193, %c109_194] : memref<2x384xf32, #tpu.memory_space<vmem>>, vector<1x256xf32>
    %654 = vector.extract_strided_slice %575 {offsets = [0, 42], sizes = [2, 1], strides = [1, 1]} : vector<2x98xf32> to vector<2x1xf32>
    %655 = vector.broadcast %653 : vector<1x256xf32> to vector<2x256xf32>
    %656 = vector.broadcast %654 : vector<2x1xf32> to vector<2x256xf32>
    %657 = arith.mulf %655, %656 : vector<2x256xf32>
    %658 = arith.addf %652, %657 : vector<2x256xf32>
    %c1_195 = arith.constant 1 : index
    %c109_196 = arith.constant 109 : index
    %659 = vector.load %arg18[%c1_195, %c109_196] : memref<2x384xf32, #tpu.memory_space<vmem>>, vector<1x256xf32>
    %660 = vector.extract_strided_slice %575 {offsets = [0, 91], sizes = [2, 1], strides = [1, 1]} : vector<2x98xf32> to vector<2x1xf32>
    %661 = vector.broadcast %659 : vector<1x256xf32> to vector<2x256xf32>
    %662 = vector.broadcast %660 : vector<2x1xf32> to vector<2x256xf32>
    %663 = arith.mulf %661, %662 : vector<2x256xf32>
    %664 = arith.addf %658, %663 : vector<2x256xf32>
    %665 = vector.broadcast %356 : vector<1x256xf32> to vector<2x256xf32>
    %666 = arith.mulf %664, %665 : vector<2x256xf32>
    %667 = arith.addf %579, %666 : vector<2x256xf32>
    %cst_197 = arith.constant 0.000000e+00 : f32
    %668 = vector.broadcast %cst_197 : f32 to vector<2x256xf32>
    %c0_198 = arith.constant 0 : index
    %c14_199 = arith.constant 14 : index
    %669 = vector.load %arg18[%c0_198, %c14_199] : memref<2x384xf32, #tpu.memory_space<vmem>>, vector<1x256xf32>
    %670 = vector.extract_strided_slice %575 {offsets = [0, 1], sizes = [2, 1], strides = [1, 1]} : vector<2x98xf32> to vector<2x1xf32>
    %671 = vector.broadcast %669 : vector<1x256xf32> to vector<2x256xf32>
    %672 = vector.broadcast %670 : vector<2x1xf32> to vector<2x256xf32>
    %673 = arith.mulf %671, %672 : vector<2x256xf32>
    %674 = arith.addf %668, %673 : vector<2x256xf32>
    %c1_200 = arith.constant 1 : index
    %c14_201 = arith.constant 14 : index
    %675 = vector.load %arg18[%c1_200, %c14_201] : memref<2x384xf32, #tpu.memory_space<vmem>>, vector<1x256xf32>
    %676 = vector.extract_strided_slice %575 {offsets = [0, 50], sizes = [2, 1], strides = [1, 1]} : vector<2x98xf32> to vector<2x1xf32>
    %677 = vector.broadcast %675 : vector<1x256xf32> to vector<2x256xf32>
    %678 = vector.broadcast %676 : vector<2x1xf32> to vector<2x256xf32>
    %679 = arith.mulf %677, %678 : vector<2x256xf32>
    %680 = arith.addf %674, %679 : vector<2x256xf32>
    %c0_202 = arith.constant 0 : index
    %c30_203 = arith.constant 30 : index
    %681 = vector.load %arg18[%c0_202, %c30_203] : memref<2x384xf32, #tpu.memory_space<vmem>>, vector<1x256xf32>
    %682 = vector.extract_strided_slice %575 {offsets = [0, 8], sizes = [2, 1], strides = [1, 1]} : vector<2x98xf32> to vector<2x1xf32>
    %683 = vector.broadcast %681 : vector<1x256xf32> to vector<2x256xf32>
    %684 = vector.broadcast %682 : vector<2x1xf32> to vector<2x256xf32>
    %685 = arith.mulf %683, %684 : vector<2x256xf32>
    %686 = arith.addf %680, %685 : vector<2x256xf32>
    %c1_204 = arith.constant 1 : index
    %c30_205 = arith.constant 30 : index
    %687 = vector.load %arg18[%c1_204, %c30_205] : memref<2x384xf32, #tpu.memory_space<vmem>>, vector<1x256xf32>
    %688 = vector.extract_strided_slice %575 {offsets = [0, 57], sizes = [2, 1], strides = [1, 1]} : vector<2x98xf32> to vector<2x1xf32>
    %689 = vector.broadcast %687 : vector<1x256xf32> to vector<2x256xf32>
    %690 = vector.broadcast %688 : vector<2x1xf32> to vector<2x256xf32>
    %691 = arith.mulf %689, %690 : vector<2x256xf32>
    %692 = arith.addf %686, %691 : vector<2x256xf32>
    %c0_206 = arith.constant 0 : index
    %c46_207 = arith.constant 46 : index
    %693 = vector.load %arg18[%c0_206, %c46_207] : memref<2x384xf32, #tpu.memory_space<vmem>>, vector<1x256xf32>
    %694 = vector.extract_strided_slice %575 {offsets = [0, 15], sizes = [2, 1], strides = [1, 1]} : vector<2x98xf32> to vector<2x1xf32>
    %695 = vector.broadcast %693 : vector<1x256xf32> to vector<2x256xf32>
    %696 = vector.broadcast %694 : vector<2x1xf32> to vector<2x256xf32>
    %697 = arith.mulf %695, %696 : vector<2x256xf32>
    %698 = arith.addf %692, %697 : vector<2x256xf32>
    %c1_208 = arith.constant 1 : index
    %c46_209 = arith.constant 46 : index
    %699 = vector.load %arg18[%c1_208, %c46_209] : memref<2x384xf32, #tpu.memory_space<vmem>>, vector<1x256xf32>
    %700 = vector.extract_strided_slice %575 {offsets = [0, 64], sizes = [2, 1], strides = [1, 1]} : vector<2x98xf32> to vector<2x1xf32>
    %701 = vector.broadcast %699 : vector<1x256xf32> to vector<2x256xf32>
    %702 = vector.broadcast %700 : vector<2x1xf32> to vector<2x256xf32>
    %703 = arith.mulf %701, %702 : vector<2x256xf32>
    %704 = arith.addf %698, %703 : vector<2x256xf32>
    %c0_210 = arith.constant 0 : index
    %c62_211 = arith.constant 62 : index
    %705 = vector.load %arg18[%c0_210, %c62_211] : memref<2x384xf32, #tpu.memory_space<vmem>>, vector<1x256xf32>
    %706 = vector.extract_strided_slice %575 {offsets = [0, 22], sizes = [2, 1], strides = [1, 1]} : vector<2x98xf32> to vector<2x1xf32>
    %707 = vector.broadcast %705 : vector<1x256xf32> to vector<2x256xf32>
    %708 = vector.broadcast %706 : vector<2x1xf32> to vector<2x256xf32>
    %709 = arith.mulf %707, %708 : vector<2x256xf32>
    %710 = arith.addf %704, %709 : vector<2x256xf32>
    %c1_212 = arith.constant 1 : index
    %c62_213 = arith.constant 62 : index
    %711 = vector.load %arg18[%c1_212, %c62_213] : memref<2x384xf32, #tpu.memory_space<vmem>>, vector<1x256xf32>
    %712 = vector.extract_strided_slice %575 {offsets = [0, 71], sizes = [2, 1], strides = [1, 1]} : vector<2x98xf32> to vector<2x1xf32>
    %713 = vector.broadcast %711 : vector<1x256xf32> to vector<2x256xf32>
    %714 = vector.broadcast %712 : vector<2x1xf32> to vector<2x256xf32>
    %715 = arith.mulf %713, %714 : vector<2x256xf32>
    %716 = arith.addf %710, %715 : vector<2x256xf32>
    %c0_214 = arith.constant 0 : index
    %c78_215 = arith.constant 78 : index
    %717 = vector.load %arg18[%c0_214, %c78_215] : memref<2x384xf32, #tpu.memory_space<vmem>>, vector<1x256xf32>
    %718 = vector.extract_strided_slice %575 {offsets = [0, 29], sizes = [2, 1], strides = [1, 1]} : vector<2x98xf32> to vector<2x1xf32>
    %719 = vector.broadcast %717 : vector<1x256xf32> to vector<2x256xf32>
    %720 = vector.broadcast %718 : vector<2x1xf32> to vector<2x256xf32>
    %721 = arith.mulf %719, %720 : vector<2x256xf32>
    %722 = arith.addf %716, %721 : vector<2x256xf32>
    %c1_216 = arith.constant 1 : index
    %c78_217 = arith.constant 78 : index
    %723 = vector.load %arg18[%c1_216, %c78_217] : memref<2x384xf32, #tpu.memory_space<vmem>>, vector<1x256xf32>
    %724 = vector.extract_strided_slice %575 {offsets = [0, 78], sizes = [2, 1], strides = [1, 1]} : vector<2x98xf32> to vector<2x1xf32>
    %725 = vector.broadcast %723 : vector<1x256xf32> to vector<2x256xf32>
    %726 = vector.broadcast %724 : vector<2x1xf32> to vector<2x256xf32>
    %727 = arith.mulf %725, %726 : vector<2x256xf32>
    %728 = arith.addf %722, %727 : vector<2x256xf32>
    %c0_218 = arith.constant 0 : index
    %c94 = arith.constant 94 : index
    %729 = vector.load %arg18[%c0_218, %c94] : memref<2x384xf32, #tpu.memory_space<vmem>>, vector<1x256xf32>
    %730 = vector.extract_strided_slice %575 {offsets = [0, 36], sizes = [2, 1], strides = [1, 1]} : vector<2x98xf32> to vector<2x1xf32>
    %731 = vector.broadcast %729 : vector<1x256xf32> to vector<2x256xf32>
    %732 = vector.broadcast %730 : vector<2x1xf32> to vector<2x256xf32>
    %733 = arith.mulf %731, %732 : vector<2x256xf32>
    %734 = arith.addf %728, %733 : vector<2x256xf32>
    %c1_219 = arith.constant 1 : index
    %c94_220 = arith.constant 94 : index
    %735 = vector.load %arg18[%c1_219, %c94_220] : memref<2x384xf32, #tpu.memory_space<vmem>>, vector<1x256xf32>
    %736 = vector.extract_strided_slice %575 {offsets = [0, 85], sizes = [2, 1], strides = [1, 1]} : vector<2x98xf32> to vector<2x1xf32>
    %737 = vector.broadcast %735 : vector<1x256xf32> to vector<2x256xf32>
    %738 = vector.broadcast %736 : vector<2x1xf32> to vector<2x256xf32>
    %739 = arith.mulf %737, %738 : vector<2x256xf32>
    %740 = arith.addf %734, %739 : vector<2x256xf32>
    %c0_221 = arith.constant 0 : index
    %c110 = arith.constant 110 : index
    %741 = vector.load %arg18[%c0_221, %c110] : memref<2x384xf32, #tpu.memory_space<vmem>>, vector<1x256xf32>
    %742 = vector.extract_strided_slice %575 {offsets = [0, 43], sizes = [2, 1], strides = [1, 1]} : vector<2x98xf32> to vector<2x1xf32>
    %743 = vector.broadcast %741 : vector<1x256xf32> to vector<2x256xf32>
    %744 = vector.broadcast %742 : vector<2x1xf32> to vector<2x256xf32>
    %745 = arith.mulf %743, %744 : vector<2x256xf32>
    %746 = arith.addf %740, %745 : vector<2x256xf32>
    %c1_222 = arith.constant 1 : index
    %c110_223 = arith.constant 110 : index
    %747 = vector.load %arg18[%c1_222, %c110_223] : memref<2x384xf32, #tpu.memory_space<vmem>>, vector<1x256xf32>
    %748 = vector.extract_strided_slice %575 {offsets = [0, 92], sizes = [2, 1], strides = [1, 1]} : vector<2x98xf32> to vector<2x1xf32>
    %749 = vector.broadcast %747 : vector<1x256xf32> to vector<2x256xf32>
    %750 = vector.broadcast %748 : vector<2x1xf32> to vector<2x256xf32>
    %751 = arith.mulf %749, %750 : vector<2x256xf32>
    %752 = arith.addf %746, %751 : vector<2x256xf32>
    %753 = vector.broadcast %49 : vector<1x256xf32> to vector<2x256xf32>
    %754 = arith.mulf %752, %753 : vector<2x256xf32>
    %755 = arith.addf %667, %754 : vector<2x256xf32>
    %cst_224 = arith.constant 0.000000e+00 : f32
    %756 = vector.broadcast %cst_224 : f32 to vector<2x256xf32>
    %c0_225 = arith.constant 0 : index
    %c15_226 = arith.constant 15 : index
    %757 = vector.load %arg18[%c0_225, %c15_226] : memref<2x384xf32, #tpu.memory_space<vmem>>, vector<1x256xf32>
    %758 = vector.extract_strided_slice %575 {offsets = [0, 2], sizes = [2, 1], strides = [1, 1]} : vector<2x98xf32> to vector<2x1xf32>
    %759 = vector.broadcast %757 : vector<1x256xf32> to vector<2x256xf32>
    %760 = vector.broadcast %758 : vector<2x1xf32> to vector<2x256xf32>
    %761 = arith.mulf %759, %760 : vector<2x256xf32>
    %762 = arith.addf %756, %761 : vector<2x256xf32>
    %c1_227 = arith.constant 1 : index
    %c15_228 = arith.constant 15 : index
    %763 = vector.load %arg18[%c1_227, %c15_228] : memref<2x384xf32, #tpu.memory_space<vmem>>, vector<1x256xf32>
    %764 = vector.extract_strided_slice %575 {offsets = [0, 51], sizes = [2, 1], strides = [1, 1]} : vector<2x98xf32> to vector<2x1xf32>
    %765 = vector.broadcast %763 : vector<1x256xf32> to vector<2x256xf32>
    %766 = vector.broadcast %764 : vector<2x1xf32> to vector<2x256xf32>
    %767 = arith.mulf %765, %766 : vector<2x256xf32>
    %768 = arith.addf %762, %767 : vector<2x256xf32>
    %c0_229 = arith.constant 0 : index
    %c31_230 = arith.constant 31 : index
    %769 = vector.load %arg18[%c0_229, %c31_230] : memref<2x384xf32, #tpu.memory_space<vmem>>, vector<1x256xf32>
    %770 = vector.extract_strided_slice %575 {offsets = [0, 9], sizes = [2, 1], strides = [1, 1]} : vector<2x98xf32> to vector<2x1xf32>
    %771 = vector.broadcast %769 : vector<1x256xf32> to vector<2x256xf32>
    %772 = vector.broadcast %770 : vector<2x1xf32> to vector<2x256xf32>
    %773 = arith.mulf %771, %772 : vector<2x256xf32>
    %774 = arith.addf %768, %773 : vector<2x256xf32>
    %c1_231 = arith.constant 1 : index
    %c31_232 = arith.constant 31 : index
    %775 = vector.load %arg18[%c1_231, %c31_232] : memref<2x384xf32, #tpu.memory_space<vmem>>, vector<1x256xf32>
    %776 = vector.extract_strided_slice %575 {offsets = [0, 58], sizes = [2, 1], strides = [1, 1]} : vector<2x98xf32> to vector<2x1xf32>
    %777 = vector.broadcast %775 : vector<1x256xf32> to vector<2x256xf32>
    %778 = vector.broadcast %776 : vector<2x1xf32> to vector<2x256xf32>
    %779 = arith.mulf %777, %778 : vector<2x256xf32>
    %780 = arith.addf %774, %779 : vector<2x256xf32>
    %c0_233 = arith.constant 0 : index
    %c47_234 = arith.constant 47 : index
    %781 = vector.load %arg18[%c0_233, %c47_234] : memref<2x384xf32, #tpu.memory_space<vmem>>, vector<1x256xf32>
    %782 = vector.extract_strided_slice %575 {offsets = [0, 16], sizes = [2, 1], strides = [1, 1]} : vector<2x98xf32> to vector<2x1xf32>
    %783 = vector.broadcast %781 : vector<1x256xf32> to vector<2x256xf32>
    %784 = vector.broadcast %782 : vector<2x1xf32> to vector<2x256xf32>
    %785 = arith.mulf %783, %784 : vector<2x256xf32>
    %786 = arith.addf %780, %785 : vector<2x256xf32>
    %c1_235 = arith.constant 1 : index
    %c47_236 = arith.constant 47 : index
    %787 = vector.load %arg18[%c1_235, %c47_236] : memref<2x384xf32, #tpu.memory_space<vmem>>, vector<1x256xf32>
    %788 = vector.extract_strided_slice %575 {offsets = [0, 65], sizes = [2, 1], strides = [1, 1]} : vector<2x98xf32> to vector<2x1xf32>
    %789 = vector.broadcast %787 : vector<1x256xf32> to vector<2x256xf32>
    %790 = vector.broadcast %788 : vector<2x1xf32> to vector<2x256xf32>
    %791 = arith.mulf %789, %790 : vector<2x256xf32>
    %792 = arith.addf %786, %791 : vector<2x256xf32>
    %c0_237 = arith.constant 0 : index
    %c63_238 = arith.constant 63 : index
    %793 = vector.load %arg18[%c0_237, %c63_238] : memref<2x384xf32, #tpu.memory_space<vmem>>, vector<1x256xf32>
    %794 = vector.extract_strided_slice %575 {offsets = [0, 23], sizes = [2, 1], strides = [1, 1]} : vector<2x98xf32> to vector<2x1xf32>
    %795 = vector.broadcast %793 : vector<1x256xf32> to vector<2x256xf32>
    %796 = vector.broadcast %794 : vector<2x1xf32> to vector<2x256xf32>
    %797 = arith.mulf %795, %796 : vector<2x256xf32>
    %798 = arith.addf %792, %797 : vector<2x256xf32>
    %c1_239 = arith.constant 1 : index
    %c63_240 = arith.constant 63 : index
    %799 = vector.load %arg18[%c1_239, %c63_240] : memref<2x384xf32, #tpu.memory_space<vmem>>, vector<1x256xf32>
    %800 = vector.extract_strided_slice %575 {offsets = [0, 72], sizes = [2, 1], strides = [1, 1]} : vector<2x98xf32> to vector<2x1xf32>
    %801 = vector.broadcast %799 : vector<1x256xf32> to vector<2x256xf32>
    %802 = vector.broadcast %800 : vector<2x1xf32> to vector<2x256xf32>
    %803 = arith.mulf %801, %802 : vector<2x256xf32>
    %804 = arith.addf %798, %803 : vector<2x256xf32>
    %c0_241 = arith.constant 0 : index
    %c79_242 = arith.constant 79 : index
    %805 = vector.load %arg18[%c0_241, %c79_242] : memref<2x384xf32, #tpu.memory_space<vmem>>, vector<1x256xf32>
    %806 = vector.extract_strided_slice %575 {offsets = [0, 30], sizes = [2, 1], strides = [1, 1]} : vector<2x98xf32> to vector<2x1xf32>
    %807 = vector.broadcast %805 : vector<1x256xf32> to vector<2x256xf32>
    %808 = vector.broadcast %806 : vector<2x1xf32> to vector<2x256xf32>
    %809 = arith.mulf %807, %808 : vector<2x256xf32>
    %810 = arith.addf %804, %809 : vector<2x256xf32>
    %c1_243 = arith.constant 1 : index
    %c79_244 = arith.constant 79 : index
    %811 = vector.load %arg18[%c1_243, %c79_244] : memref<2x384xf32, #tpu.memory_space<vmem>>, vector<1x256xf32>
    %812 = vector.extract_strided_slice %575 {offsets = [0, 79], sizes = [2, 1], strides = [1, 1]} : vector<2x98xf32> to vector<2x1xf32>
    %813 = vector.broadcast %811 : vector<1x256xf32> to vector<2x256xf32>
    %814 = vector.broadcast %812 : vector<2x1xf32> to vector<2x256xf32>
    %815 = arith.mulf %813, %814 : vector<2x256xf32>
    %816 = arith.addf %810, %815 : vector<2x256xf32>
    %c0_245 = arith.constant 0 : index
    %c95 = arith.constant 95 : index
    %817 = vector.load %arg18[%c0_245, %c95] : memref<2x384xf32, #tpu.memory_space<vmem>>, vector<1x256xf32>
    %818 = vector.extract_strided_slice %575 {offsets = [0, 37], sizes = [2, 1], strides = [1, 1]} : vector<2x98xf32> to vector<2x1xf32>
    %819 = vector.broadcast %817 : vector<1x256xf32> to vector<2x256xf32>
    %820 = vector.broadcast %818 : vector<2x1xf32> to vector<2x256xf32>
    %821 = arith.mulf %819, %820 : vector<2x256xf32>
    %822 = arith.addf %816, %821 : vector<2x256xf32>
    %c1_246 = arith.constant 1 : index
    %c95_247 = arith.constant 95 : index
    %823 = vector.load %arg18[%c1_246, %c95_247] : memref<2x384xf32, #tpu.memory_space<vmem>>, vector<1x256xf32>
    %824 = vector.extract_strided_slice %575 {offsets = [0, 86], sizes = [2, 1], strides = [1, 1]} : vector<2x98xf32> to vector<2x1xf32>
    %825 = vector.broadcast %823 : vector<1x256xf32> to vector<2x256xf32>
    %826 = vector.broadcast %824 : vector<2x1xf32> to vector<2x256xf32>
    %827 = arith.mulf %825, %826 : vector<2x256xf32>
    %828 = arith.addf %822, %827 : vector<2x256xf32>
    %c0_248 = arith.constant 0 : index
    %c111 = arith.constant 111 : index
    %829 = vector.load %arg18[%c0_248, %c111] : memref<2x384xf32, #tpu.memory_space<vmem>>, vector<1x256xf32>
    %830 = vector.extract_strided_slice %575 {offsets = [0, 44], sizes = [2, 1], strides = [1, 1]} : vector<2x98xf32> to vector<2x1xf32>
    %831 = vector.broadcast %829 : vector<1x256xf32> to vector<2x256xf32>
    %832 = vector.broadcast %830 : vector<2x1xf32> to vector<2x256xf32>
    %833 = arith.mulf %831, %832 : vector<2x256xf32>
    %834 = arith.addf %828, %833 : vector<2x256xf32>
    %c1_249 = arith.constant 1 : index
    %c111_250 = arith.constant 111 : index
    %835 = vector.load %arg18[%c1_249, %c111_250] : memref<2x384xf32, #tpu.memory_space<vmem>>, vector<1x256xf32>
    %836 = vector.extract_strided_slice %575 {offsets = [0, 93], sizes = [2, 1], strides = [1, 1]} : vector<2x98xf32> to vector<2x1xf32>
    %837 = vector.broadcast %835 : vector<1x256xf32> to vector<2x256xf32>
    %838 = vector.broadcast %836 : vector<2x1xf32> to vector<2x256xf32>
    %839 = arith.mulf %837, %838 : vector<2x256xf32>
    %840 = arith.addf %834, %839 : vector<2x256xf32>
    %841 = vector.broadcast %89 : vector<1x256xf32> to vector<2x256xf32>
    %842 = arith.mulf %840, %841 : vector<2x256xf32>
    %843 = arith.addf %755, %842 : vector<2x256xf32>
    %cst_251 = arith.constant 0.000000e+00 : f32
    %844 = vector.broadcast %cst_251 : f32 to vector<2x256xf32>
    %c0_252 = arith.constant 0 : index
    %c16_253 = arith.constant 16 : index
    %845 = vector.load %arg18[%c0_252, %c16_253] : memref<2x384xf32, #tpu.memory_space<vmem>>, vector<1x256xf32>
    %846 = vector.extract_strided_slice %575 {offsets = [0, 3], sizes = [2, 1], strides = [1, 1]} : vector<2x98xf32> to vector<2x1xf32>
    %847 = vector.broadcast %845 : vector<1x256xf32> to vector<2x256xf32>
    %848 = vector.broadcast %846 : vector<2x1xf32> to vector<2x256xf32>
    %849 = arith.mulf %847, %848 : vector<2x256xf32>
    %850 = arith.addf %844, %849 : vector<2x256xf32>
    %c1_254 = arith.constant 1 : index
    %c16_255 = arith.constant 16 : index
    %851 = vector.load %arg18[%c1_254, %c16_255] : memref<2x384xf32, #tpu.memory_space<vmem>>, vector<1x256xf32>
    %852 = vector.extract_strided_slice %575 {offsets = [0, 52], sizes = [2, 1], strides = [1, 1]} : vector<2x98xf32> to vector<2x1xf32>
    %853 = vector.broadcast %851 : vector<1x256xf32> to vector<2x256xf32>
    %854 = vector.broadcast %852 : vector<2x1xf32> to vector<2x256xf32>
    %855 = arith.mulf %853, %854 : vector<2x256xf32>
    %856 = arith.addf %850, %855 : vector<2x256xf32>
    %c0_256 = arith.constant 0 : index
    %c32_257 = arith.constant 32 : index
    %857 = vector.load %arg18[%c0_256, %c32_257] : memref<2x384xf32, #tpu.memory_space<vmem>>, vector<1x256xf32>
    %858 = vector.extract_strided_slice %575 {offsets = [0, 10], sizes = [2, 1], strides = [1, 1]} : vector<2x98xf32> to vector<2x1xf32>
    %859 = vector.broadcast %857 : vector<1x256xf32> to vector<2x256xf32>
    %860 = vector.broadcast %858 : vector<2x1xf32> to vector<2x256xf32>
    %861 = arith.mulf %859, %860 : vector<2x256xf32>
    %862 = arith.addf %856, %861 : vector<2x256xf32>
    %c1_258 = arith.constant 1 : index
    %c32_259 = arith.constant 32 : index
    %863 = vector.load %arg18[%c1_258, %c32_259] : memref<2x384xf32, #tpu.memory_space<vmem>>, vector<1x256xf32>
    %864 = vector.extract_strided_slice %575 {offsets = [0, 59], sizes = [2, 1], strides = [1, 1]} : vector<2x98xf32> to vector<2x1xf32>
    %865 = vector.broadcast %863 : vector<1x256xf32> to vector<2x256xf32>
    %866 = vector.broadcast %864 : vector<2x1xf32> to vector<2x256xf32>
    %867 = arith.mulf %865, %866 : vector<2x256xf32>
    %868 = arith.addf %862, %867 : vector<2x256xf32>
    %c0_260 = arith.constant 0 : index
    %c48_261 = arith.constant 48 : index
    %869 = vector.load %arg18[%c0_260, %c48_261] : memref<2x384xf32, #tpu.memory_space<vmem>>, vector<1x256xf32>
    %870 = vector.extract_strided_slice %575 {offsets = [0, 17], sizes = [2, 1], strides = [1, 1]} : vector<2x98xf32> to vector<2x1xf32>
    %871 = vector.broadcast %869 : vector<1x256xf32> to vector<2x256xf32>
    %872 = vector.broadcast %870 : vector<2x1xf32> to vector<2x256xf32>
    %873 = arith.mulf %871, %872 : vector<2x256xf32>
    %874 = arith.addf %868, %873 : vector<2x256xf32>
    %c1_262 = arith.constant 1 : index
    %c48_263 = arith.constant 48 : index
    %875 = vector.load %arg18[%c1_262, %c48_263] : memref<2x384xf32, #tpu.memory_space<vmem>>, vector<1x256xf32>
    %876 = vector.extract_strided_slice %575 {offsets = [0, 66], sizes = [2, 1], strides = [1, 1]} : vector<2x98xf32> to vector<2x1xf32>
    %877 = vector.broadcast %875 : vector<1x256xf32> to vector<2x256xf32>
    %878 = vector.broadcast %876 : vector<2x1xf32> to vector<2x256xf32>
    %879 = arith.mulf %877, %878 : vector<2x256xf32>
    %880 = arith.addf %874, %879 : vector<2x256xf32>
    %c0_264 = arith.constant 0 : index
    %c64_265 = arith.constant 64 : index
    %881 = vector.load %arg18[%c0_264, %c64_265] : memref<2x384xf32, #tpu.memory_space<vmem>>, vector<1x256xf32>
    %882 = vector.extract_strided_slice %575 {offsets = [0, 24], sizes = [2, 1], strides = [1, 1]} : vector<2x98xf32> to vector<2x1xf32>
    %883 = vector.broadcast %881 : vector<1x256xf32> to vector<2x256xf32>
    %884 = vector.broadcast %882 : vector<2x1xf32> to vector<2x256xf32>
    %885 = arith.mulf %883, %884 : vector<2x256xf32>
    %886 = arith.addf %880, %885 : vector<2x256xf32>
    %c1_266 = arith.constant 1 : index
    %c64_267 = arith.constant 64 : index
    %887 = vector.load %arg18[%c1_266, %c64_267] : memref<2x384xf32, #tpu.memory_space<vmem>>, vector<1x256xf32>
    %888 = vector.extract_strided_slice %575 {offsets = [0, 73], sizes = [2, 1], strides = [1, 1]} : vector<2x98xf32> to vector<2x1xf32>
    %889 = vector.broadcast %887 : vector<1x256xf32> to vector<2x256xf32>
    %890 = vector.broadcast %888 : vector<2x1xf32> to vector<2x256xf32>
    %891 = arith.mulf %889, %890 : vector<2x256xf32>
    %892 = arith.addf %886, %891 : vector<2x256xf32>
    %c0_268 = arith.constant 0 : index
    %c80_269 = arith.constant 80 : index
    %893 = vector.load %arg18[%c0_268, %c80_269] : memref<2x384xf32, #tpu.memory_space<vmem>>, vector<1x256xf32>
    %894 = vector.extract_strided_slice %575 {offsets = [0, 31], sizes = [2, 1], strides = [1, 1]} : vector<2x98xf32> to vector<2x1xf32>
    %895 = vector.broadcast %893 : vector<1x256xf32> to vector<2x256xf32>
    %896 = vector.broadcast %894 : vector<2x1xf32> to vector<2x256xf32>
    %897 = arith.mulf %895, %896 : vector<2x256xf32>
    %898 = arith.addf %892, %897 : vector<2x256xf32>
    %c1_270 = arith.constant 1 : index
    %c80_271 = arith.constant 80 : index
    %899 = vector.load %arg18[%c1_270, %c80_271] : memref<2x384xf32, #tpu.memory_space<vmem>>, vector<1x256xf32>
    %900 = vector.extract_strided_slice %575 {offsets = [0, 80], sizes = [2, 1], strides = [1, 1]} : vector<2x98xf32> to vector<2x1xf32>
    %901 = vector.broadcast %899 : vector<1x256xf32> to vector<2x256xf32>
    %902 = vector.broadcast %900 : vector<2x1xf32> to vector<2x256xf32>
    %903 = arith.mulf %901, %902 : vector<2x256xf32>
    %904 = arith.addf %898, %903 : vector<2x256xf32>
    %c0_272 = arith.constant 0 : index
    %c96 = arith.constant 96 : index
    %905 = vector.load %arg18[%c0_272, %c96] : memref<2x384xf32, #tpu.memory_space<vmem>>, vector<1x256xf32>
    %906 = vector.extract_strided_slice %575 {offsets = [0, 38], sizes = [2, 1], strides = [1, 1]} : vector<2x98xf32> to vector<2x1xf32>
    %907 = vector.broadcast %905 : vector<1x256xf32> to vector<2x256xf32>
    %908 = vector.broadcast %906 : vector<2x1xf32> to vector<2x256xf32>
    %909 = arith.mulf %907, %908 : vector<2x256xf32>
    %910 = arith.addf %904, %909 : vector<2x256xf32>
    %c1_273 = arith.constant 1 : index
    %c96_274 = arith.constant 96 : index
    %911 = vector.load %arg18[%c1_273, %c96_274] : memref<2x384xf32, #tpu.memory_space<vmem>>, vector<1x256xf32>
    %912 = vector.extract_strided_slice %575 {offsets = [0, 87], sizes = [2, 1], strides = [1, 1]} : vector<2x98xf32> to vector<2x1xf32>
    %913 = vector.broadcast %911 : vector<1x256xf32> to vector<2x256xf32>
    %914 = vector.broadcast %912 : vector<2x1xf32> to vector<2x256xf32>
    %915 = arith.mulf %913, %914 : vector<2x256xf32>
    %916 = arith.addf %910, %915 : vector<2x256xf32>
    %c0_275 = arith.constant 0 : index
    %c112_276 = arith.constant 112 : index
    %917 = vector.load %arg18[%c0_275, %c112_276] : memref<2x384xf32, #tpu.memory_space<vmem>>, vector<1x256xf32>
    %918 = vector.extract_strided_slice %575 {offsets = [0, 45], sizes = [2, 1], strides = [1, 1]} : vector<2x98xf32> to vector<2x1xf32>
    %919 = vector.broadcast %917 : vector<1x256xf32> to vector<2x256xf32>
    %920 = vector.broadcast %918 : vector<2x1xf32> to vector<2x256xf32>
    %921 = arith.mulf %919, %920 : vector<2x256xf32>
    %922 = arith.addf %916, %921 : vector<2x256xf32>
    %c1_277 = arith.constant 1 : index
    %c112_278 = arith.constant 112 : index
    %923 = vector.load %arg18[%c1_277, %c112_278] : memref<2x384xf32, #tpu.memory_space<vmem>>, vector<1x256xf32>
    %924 = vector.extract_strided_slice %575 {offsets = [0, 94], sizes = [2, 1], strides = [1, 1]} : vector<2x98xf32> to vector<2x1xf32>
    %925 = vector.broadcast %923 : vector<1x256xf32> to vector<2x256xf32>
    %926 = vector.broadcast %924 : vector<2x1xf32> to vector<2x256xf32>
    %927 = arith.mulf %925, %926 : vector<2x256xf32>
    %928 = arith.addf %922, %927 : vector<2x256xf32>
    %929 = arith.addf %843, %928 : vector<2x256xf32>
    %cst_279 = arith.constant 0.000000e+00 : f32
    %930 = vector.broadcast %cst_279 : f32 to vector<2x256xf32>
    %c0_280 = arith.constant 0 : index
    %c17_281 = arith.constant 17 : index
    %931 = vector.load %arg18[%c0_280, %c17_281] : memref<2x384xf32, #tpu.memory_space<vmem>>, vector<1x256xf32>
    %932 = vector.extract_strided_slice %575 {offsets = [0, 4], sizes = [2, 1], strides = [1, 1]} : vector<2x98xf32> to vector<2x1xf32>
    %933 = vector.broadcast %931 : vector<1x256xf32> to vector<2x256xf32>
    %934 = vector.broadcast %932 : vector<2x1xf32> to vector<2x256xf32>
    %935 = arith.mulf %933, %934 : vector<2x256xf32>
    %936 = arith.addf %930, %935 : vector<2x256xf32>
    %c1_282 = arith.constant 1 : index
    %c17_283 = arith.constant 17 : index
    %937 = vector.load %arg18[%c1_282, %c17_283] : memref<2x384xf32, #tpu.memory_space<vmem>>, vector<1x256xf32>
    %938 = vector.extract_strided_slice %575 {offsets = [0, 53], sizes = [2, 1], strides = [1, 1]} : vector<2x98xf32> to vector<2x1xf32>
    %939 = vector.broadcast %937 : vector<1x256xf32> to vector<2x256xf32>
    %940 = vector.broadcast %938 : vector<2x1xf32> to vector<2x256xf32>
    %941 = arith.mulf %939, %940 : vector<2x256xf32>
    %942 = arith.addf %936, %941 : vector<2x256xf32>
    %c0_284 = arith.constant 0 : index
    %c33_285 = arith.constant 33 : index
    %943 = vector.load %arg18[%c0_284, %c33_285] : memref<2x384xf32, #tpu.memory_space<vmem>>, vector<1x256xf32>
    %944 = vector.extract_strided_slice %575 {offsets = [0, 11], sizes = [2, 1], strides = [1, 1]} : vector<2x98xf32> to vector<2x1xf32>
    %945 = vector.broadcast %943 : vector<1x256xf32> to vector<2x256xf32>
    %946 = vector.broadcast %944 : vector<2x1xf32> to vector<2x256xf32>
    %947 = arith.mulf %945, %946 : vector<2x256xf32>
    %948 = arith.addf %942, %947 : vector<2x256xf32>
    %c1_286 = arith.constant 1 : index
    %c33_287 = arith.constant 33 : index
    %949 = vector.load %arg18[%c1_286, %c33_287] : memref<2x384xf32, #tpu.memory_space<vmem>>, vector<1x256xf32>
    %950 = vector.extract_strided_slice %575 {offsets = [0, 60], sizes = [2, 1], strides = [1, 1]} : vector<2x98xf32> to vector<2x1xf32>
    %951 = vector.broadcast %949 : vector<1x256xf32> to vector<2x256xf32>
    %952 = vector.broadcast %950 : vector<2x1xf32> to vector<2x256xf32>
    %953 = arith.mulf %951, %952 : vector<2x256xf32>
    %954 = arith.addf %948, %953 : vector<2x256xf32>
    %c0_288 = arith.constant 0 : index
    %c49_289 = arith.constant 49 : index
    %955 = vector.load %arg18[%c0_288, %c49_289] : memref<2x384xf32, #tpu.memory_space<vmem>>, vector<1x256xf32>
    %956 = vector.extract_strided_slice %575 {offsets = [0, 18], sizes = [2, 1], strides = [1, 1]} : vector<2x98xf32> to vector<2x1xf32>
    %957 = vector.broadcast %955 : vector<1x256xf32> to vector<2x256xf32>
    %958 = vector.broadcast %956 : vector<2x1xf32> to vector<2x256xf32>
    %959 = arith.mulf %957, %958 : vector<2x256xf32>
    %960 = arith.addf %954, %959 : vector<2x256xf32>
    %c1_290 = arith.constant 1 : index
    %c49_291 = arith.constant 49 : index
    %961 = vector.load %arg18[%c1_290, %c49_291] : memref<2x384xf32, #tpu.memory_space<vmem>>, vector<1x256xf32>
    %962 = vector.extract_strided_slice %575 {offsets = [0, 67], sizes = [2, 1], strides = [1, 1]} : vector<2x98xf32> to vector<2x1xf32>
    %963 = vector.broadcast %961 : vector<1x256xf32> to vector<2x256xf32>
    %964 = vector.broadcast %962 : vector<2x1xf32> to vector<2x256xf32>
    %965 = arith.mulf %963, %964 : vector<2x256xf32>
    %966 = arith.addf %960, %965 : vector<2x256xf32>
    %c0_292 = arith.constant 0 : index
    %c65_293 = arith.constant 65 : index
    %967 = vector.load %arg18[%c0_292, %c65_293] : memref<2x384xf32, #tpu.memory_space<vmem>>, vector<1x256xf32>
    %968 = vector.extract_strided_slice %575 {offsets = [0, 25], sizes = [2, 1], strides = [1, 1]} : vector<2x98xf32> to vector<2x1xf32>
    %969 = vector.broadcast %967 : vector<1x256xf32> to vector<2x256xf32>
    %970 = vector.broadcast %968 : vector<2x1xf32> to vector<2x256xf32>
    %971 = arith.mulf %969, %970 : vector<2x256xf32>
    %972 = arith.addf %966, %971 : vector<2x256xf32>
    %c1_294 = arith.constant 1 : index
    %c65_295 = arith.constant 65 : index
    %973 = vector.load %arg18[%c1_294, %c65_295] : memref<2x384xf32, #tpu.memory_space<vmem>>, vector<1x256xf32>
    %974 = vector.extract_strided_slice %575 {offsets = [0, 74], sizes = [2, 1], strides = [1, 1]} : vector<2x98xf32> to vector<2x1xf32>
    %975 = vector.broadcast %973 : vector<1x256xf32> to vector<2x256xf32>
    %976 = vector.broadcast %974 : vector<2x1xf32> to vector<2x256xf32>
    %977 = arith.mulf %975, %976 : vector<2x256xf32>
    %978 = arith.addf %972, %977 : vector<2x256xf32>
    %c0_296 = arith.constant 0 : index
    %c81_297 = arith.constant 81 : index
    %979 = vector.load %arg18[%c0_296, %c81_297] : memref<2x384xf32, #tpu.memory_space<vmem>>, vector<1x256xf32>
    %980 = vector.extract_strided_slice %575 {offsets = [0, 32], sizes = [2, 1], strides = [1, 1]} : vector<2x98xf32> to vector<2x1xf32>
    %981 = vector.broadcast %979 : vector<1x256xf32> to vector<2x256xf32>
    %982 = vector.broadcast %980 : vector<2x1xf32> to vector<2x256xf32>
    %983 = arith.mulf %981, %982 : vector<2x256xf32>
    %984 = arith.addf %978, %983 : vector<2x256xf32>
    %c1_298 = arith.constant 1 : index
    %c81_299 = arith.constant 81 : index
    %985 = vector.load %arg18[%c1_298, %c81_299] : memref<2x384xf32, #tpu.memory_space<vmem>>, vector<1x256xf32>
    %986 = vector.extract_strided_slice %575 {offsets = [0, 81], sizes = [2, 1], strides = [1, 1]} : vector<2x98xf32> to vector<2x1xf32>
    %987 = vector.broadcast %985 : vector<1x256xf32> to vector<2x256xf32>
    %988 = vector.broadcast %986 : vector<2x1xf32> to vector<2x256xf32>
    %989 = arith.mulf %987, %988 : vector<2x256xf32>
    %990 = arith.addf %984, %989 : vector<2x256xf32>
    %c0_300 = arith.constant 0 : index
    %c97 = arith.constant 97 : index
    %991 = vector.load %arg18[%c0_300, %c97] : memref<2x384xf32, #tpu.memory_space<vmem>>, vector<1x256xf32>
    %992 = vector.extract_strided_slice %575 {offsets = [0, 39], sizes = [2, 1], strides = [1, 1]} : vector<2x98xf32> to vector<2x1xf32>
    %993 = vector.broadcast %991 : vector<1x256xf32> to vector<2x256xf32>
    %994 = vector.broadcast %992 : vector<2x1xf32> to vector<2x256xf32>
    %995 = arith.mulf %993, %994 : vector<2x256xf32>
    %996 = arith.addf %990, %995 : vector<2x256xf32>
    %c1_301 = arith.constant 1 : index
    %c97_302 = arith.constant 97 : index
    %997 = vector.load %arg18[%c1_301, %c97_302] : memref<2x384xf32, #tpu.memory_space<vmem>>, vector<1x256xf32>
    %998 = vector.extract_strided_slice %575 {offsets = [0, 88], sizes = [2, 1], strides = [1, 1]} : vector<2x98xf32> to vector<2x1xf32>
    %999 = vector.broadcast %997 : vector<1x256xf32> to vector<2x256xf32>
    %1000 = vector.broadcast %998 : vector<2x1xf32> to vector<2x256xf32>
    %1001 = arith.mulf %999, %1000 : vector<2x256xf32>
    %1002 = arith.addf %996, %1001 : vector<2x256xf32>
    %c0_303 = arith.constant 0 : index
    %c113 = arith.constant 113 : index
    %1003 = vector.load %arg18[%c0_303, %c113] : memref<2x384xf32, #tpu.memory_space<vmem>>, vector<1x256xf32>
    %1004 = vector.extract_strided_slice %575 {offsets = [0, 46], sizes = [2, 1], strides = [1, 1]} : vector<2x98xf32> to vector<2x1xf32>
    %1005 = vector.broadcast %1003 : vector<1x256xf32> to vector<2x256xf32>
    %1006 = vector.broadcast %1004 : vector<2x1xf32> to vector<2x256xf32>
    %1007 = arith.mulf %1005, %1006 : vector<2x256xf32>
    %1008 = arith.addf %1002, %1007 : vector<2x256xf32>
    %c1_304 = arith.constant 1 : index
    %c113_305 = arith.constant 113 : index
    %1009 = vector.load %arg18[%c1_304, %c113_305] : memref<2x384xf32, #tpu.memory_space<vmem>>, vector<1x256xf32>
    %1010 = vector.extract_strided_slice %575 {offsets = [0, 95], sizes = [2, 1], strides = [1, 1]} : vector<2x98xf32> to vector<2x1xf32>
    %1011 = vector.broadcast %1009 : vector<1x256xf32> to vector<2x256xf32>
    %1012 = vector.broadcast %1010 : vector<2x1xf32> to vector<2x256xf32>
    %1013 = arith.mulf %1011, %1012 : vector<2x256xf32>
    %1014 = arith.addf %1008, %1013 : vector<2x256xf32>
    %1015 = vector.broadcast %156 : vector<1x256xf32> to vector<2x256xf32>
    %1016 = arith.mulf %1014, %1015 : vector<2x256xf32>
    %1017 = arith.addf %929, %1016 : vector<2x256xf32>
    %cst_306 = arith.constant 0.000000e+00 : f32
    %1018 = vector.broadcast %cst_306 : f32 to vector<2x256xf32>
    %c0_307 = arith.constant 0 : index
    %c18_308 = arith.constant 18 : index
    %1019 = vector.load %arg18[%c0_307, %c18_308] : memref<2x384xf32, #tpu.memory_space<vmem>>, vector<1x256xf32>
    %1020 = vector.extract_strided_slice %575 {offsets = [0, 5], sizes = [2, 1], strides = [1, 1]} : vector<2x98xf32> to vector<2x1xf32>
    %1021 = vector.broadcast %1019 : vector<1x256xf32> to vector<2x256xf32>
    %1022 = vector.broadcast %1020 : vector<2x1xf32> to vector<2x256xf32>
    %1023 = arith.mulf %1021, %1022 : vector<2x256xf32>
    %1024 = arith.addf %1018, %1023 : vector<2x256xf32>
    %c1_309 = arith.constant 1 : index
    %c18_310 = arith.constant 18 : index
    %1025 = vector.load %arg18[%c1_309, %c18_310] : memref<2x384xf32, #tpu.memory_space<vmem>>, vector<1x256xf32>
    %1026 = vector.extract_strided_slice %575 {offsets = [0, 54], sizes = [2, 1], strides = [1, 1]} : vector<2x98xf32> to vector<2x1xf32>
    %1027 = vector.broadcast %1025 : vector<1x256xf32> to vector<2x256xf32>
    %1028 = vector.broadcast %1026 : vector<2x1xf32> to vector<2x256xf32>
    %1029 = arith.mulf %1027, %1028 : vector<2x256xf32>
    %1030 = arith.addf %1024, %1029 : vector<2x256xf32>
    %c0_311 = arith.constant 0 : index
    %c34_312 = arith.constant 34 : index
    %1031 = vector.load %arg18[%c0_311, %c34_312] : memref<2x384xf32, #tpu.memory_space<vmem>>, vector<1x256xf32>
    %1032 = vector.extract_strided_slice %575 {offsets = [0, 12], sizes = [2, 1], strides = [1, 1]} : vector<2x98xf32> to vector<2x1xf32>
    %1033 = vector.broadcast %1031 : vector<1x256xf32> to vector<2x256xf32>
    %1034 = vector.broadcast %1032 : vector<2x1xf32> to vector<2x256xf32>
    %1035 = arith.mulf %1033, %1034 : vector<2x256xf32>
    %1036 = arith.addf %1030, %1035 : vector<2x256xf32>
    %c1_313 = arith.constant 1 : index
    %c34_314 = arith.constant 34 : index
    %1037 = vector.load %arg18[%c1_313, %c34_314] : memref<2x384xf32, #tpu.memory_space<vmem>>, vector<1x256xf32>
    %1038 = vector.extract_strided_slice %575 {offsets = [0, 61], sizes = [2, 1], strides = [1, 1]} : vector<2x98xf32> to vector<2x1xf32>
    %1039 = vector.broadcast %1037 : vector<1x256xf32> to vector<2x256xf32>
    %1040 = vector.broadcast %1038 : vector<2x1xf32> to vector<2x256xf32>
    %1041 = arith.mulf %1039, %1040 : vector<2x256xf32>
    %1042 = arith.addf %1036, %1041 : vector<2x256xf32>
    %c0_315 = arith.constant 0 : index
    %c50_316 = arith.constant 50 : index
    %1043 = vector.load %arg18[%c0_315, %c50_316] : memref<2x384xf32, #tpu.memory_space<vmem>>, vector<1x256xf32>
    %1044 = vector.extract_strided_slice %575 {offsets = [0, 19], sizes = [2, 1], strides = [1, 1]} : vector<2x98xf32> to vector<2x1xf32>
    %1045 = vector.broadcast %1043 : vector<1x256xf32> to vector<2x256xf32>
    %1046 = vector.broadcast %1044 : vector<2x1xf32> to vector<2x256xf32>
    %1047 = arith.mulf %1045, %1046 : vector<2x256xf32>
    %1048 = arith.addf %1042, %1047 : vector<2x256xf32>
    %c1_317 = arith.constant 1 : index
    %c50_318 = arith.constant 50 : index
    %1049 = vector.load %arg18[%c1_317, %c50_318] : memref<2x384xf32, #tpu.memory_space<vmem>>, vector<1x256xf32>
    %1050 = vector.extract_strided_slice %575 {offsets = [0, 68], sizes = [2, 1], strides = [1, 1]} : vector<2x98xf32> to vector<2x1xf32>
    %1051 = vector.broadcast %1049 : vector<1x256xf32> to vector<2x256xf32>
    %1052 = vector.broadcast %1050 : vector<2x1xf32> to vector<2x256xf32>
    %1053 = arith.mulf %1051, %1052 : vector<2x256xf32>
    %1054 = arith.addf %1048, %1053 : vector<2x256xf32>
    %c0_319 = arith.constant 0 : index
    %c66_320 = arith.constant 66 : index
    %1055 = vector.load %arg18[%c0_319, %c66_320] : memref<2x384xf32, #tpu.memory_space<vmem>>, vector<1x256xf32>
    %1056 = vector.extract_strided_slice %575 {offsets = [0, 26], sizes = [2, 1], strides = [1, 1]} : vector<2x98xf32> to vector<2x1xf32>
    %1057 = vector.broadcast %1055 : vector<1x256xf32> to vector<2x256xf32>
    %1058 = vector.broadcast %1056 : vector<2x1xf32> to vector<2x256xf32>
    %1059 = arith.mulf %1057, %1058 : vector<2x256xf32>
    %1060 = arith.addf %1054, %1059 : vector<2x256xf32>
    %c1_321 = arith.constant 1 : index
    %c66_322 = arith.constant 66 : index
    %1061 = vector.load %arg18[%c1_321, %c66_322] : memref<2x384xf32, #tpu.memory_space<vmem>>, vector<1x256xf32>
    %1062 = vector.extract_strided_slice %575 {offsets = [0, 75], sizes = [2, 1], strides = [1, 1]} : vector<2x98xf32> to vector<2x1xf32>
    %1063 = vector.broadcast %1061 : vector<1x256xf32> to vector<2x256xf32>
    %1064 = vector.broadcast %1062 : vector<2x1xf32> to vector<2x256xf32>
    %1065 = arith.mulf %1063, %1064 : vector<2x256xf32>
    %1066 = arith.addf %1060, %1065 : vector<2x256xf32>
    %c0_323 = arith.constant 0 : index
    %c82_324 = arith.constant 82 : index
    %1067 = vector.load %arg18[%c0_323, %c82_324] : memref<2x384xf32, #tpu.memory_space<vmem>>, vector<1x256xf32>
    %1068 = vector.extract_strided_slice %575 {offsets = [0, 33], sizes = [2, 1], strides = [1, 1]} : vector<2x98xf32> to vector<2x1xf32>
    %1069 = vector.broadcast %1067 : vector<1x256xf32> to vector<2x256xf32>
    %1070 = vector.broadcast %1068 : vector<2x1xf32> to vector<2x256xf32>
    %1071 = arith.mulf %1069, %1070 : vector<2x256xf32>
    %1072 = arith.addf %1066, %1071 : vector<2x256xf32>
    %c1_325 = arith.constant 1 : index
    %c82_326 = arith.constant 82 : index
    %1073 = vector.load %arg18[%c1_325, %c82_326] : memref<2x384xf32, #tpu.memory_space<vmem>>, vector<1x256xf32>
    %1074 = vector.extract_strided_slice %575 {offsets = [0, 82], sizes = [2, 1], strides = [1, 1]} : vector<2x98xf32> to vector<2x1xf32>
    %1075 = vector.broadcast %1073 : vector<1x256xf32> to vector<2x256xf32>
    %1076 = vector.broadcast %1074 : vector<2x1xf32> to vector<2x256xf32>
    %1077 = arith.mulf %1075, %1076 : vector<2x256xf32>
    %1078 = arith.addf %1072, %1077 : vector<2x256xf32>
    %c0_327 = arith.constant 0 : index
    %c98 = arith.constant 98 : index
    %1079 = vector.load %arg18[%c0_327, %c98] : memref<2x384xf32, #tpu.memory_space<vmem>>, vector<1x256xf32>
    %1080 = vector.extract_strided_slice %575 {offsets = [0, 40], sizes = [2, 1], strides = [1, 1]} : vector<2x98xf32> to vector<2x1xf32>
    %1081 = vector.broadcast %1079 : vector<1x256xf32> to vector<2x256xf32>
    %1082 = vector.broadcast %1080 : vector<2x1xf32> to vector<2x256xf32>
    %1083 = arith.mulf %1081, %1082 : vector<2x256xf32>
    %1084 = arith.addf %1078, %1083 : vector<2x256xf32>
    %c1_328 = arith.constant 1 : index
    %c98_329 = arith.constant 98 : index
    %1085 = vector.load %arg18[%c1_328, %c98_329] : memref<2x384xf32, #tpu.memory_space<vmem>>, vector<1x256xf32>
    %1086 = vector.extract_strided_slice %575 {offsets = [0, 89], sizes = [2, 1], strides = [1, 1]} : vector<2x98xf32> to vector<2x1xf32>
    %1087 = vector.broadcast %1085 : vector<1x256xf32> to vector<2x256xf32>
    %1088 = vector.broadcast %1086 : vector<2x1xf32> to vector<2x256xf32>
    %1089 = arith.mulf %1087, %1088 : vector<2x256xf32>
    %1090 = arith.addf %1084, %1089 : vector<2x256xf32>
    %c0_330 = arith.constant 0 : index
    %c114 = arith.constant 114 : index
    %1091 = vector.load %arg18[%c0_330, %c114] : memref<2x384xf32, #tpu.memory_space<vmem>>, vector<1x256xf32>
    %1092 = vector.extract_strided_slice %575 {offsets = [0, 47], sizes = [2, 1], strides = [1, 1]} : vector<2x98xf32> to vector<2x1xf32>
    %1093 = vector.broadcast %1091 : vector<1x256xf32> to vector<2x256xf32>
    %1094 = vector.broadcast %1092 : vector<2x1xf32> to vector<2x256xf32>
    %1095 = arith.mulf %1093, %1094 : vector<2x256xf32>
    %1096 = arith.addf %1090, %1095 : vector<2x256xf32>
    %c1_331 = arith.constant 1 : index
    %c114_332 = arith.constant 114 : index
    %1097 = vector.load %arg18[%c1_331, %c114_332] : memref<2x384xf32, #tpu.memory_space<vmem>>, vector<1x256xf32>
    %1098 = vector.extract_strided_slice %575 {offsets = [0, 96], sizes = [2, 1], strides = [1, 1]} : vector<2x98xf32> to vector<2x1xf32>
    %1099 = vector.broadcast %1097 : vector<1x256xf32> to vector<2x256xf32>
    %1100 = vector.broadcast %1098 : vector<2x1xf32> to vector<2x256xf32>
    %1101 = arith.mulf %1099, %1100 : vector<2x256xf32>
    %1102 = arith.addf %1096, %1101 : vector<2x256xf32>
    %1103 = vector.broadcast %196 : vector<1x256xf32> to vector<2x256xf32>
    %1104 = arith.mulf %1102, %1103 : vector<2x256xf32>
    %1105 = arith.addf %1017, %1104 : vector<2x256xf32>
    %cst_333 = arith.constant 0.000000e+00 : f32
    %1106 = vector.broadcast %cst_333 : f32 to vector<2x256xf32>
    %c0_334 = arith.constant 0 : index
    %c19_335 = arith.constant 19 : index
    %1107 = vector.load %arg18[%c0_334, %c19_335] : memref<2x384xf32, #tpu.memory_space<vmem>>, vector<1x256xf32>
    %1108 = vector.extract_strided_slice %575 {offsets = [0, 6], sizes = [2, 1], strides = [1, 1]} : vector<2x98xf32> to vector<2x1xf32>
    %1109 = vector.broadcast %1107 : vector<1x256xf32> to vector<2x256xf32>
    %1110 = vector.broadcast %1108 : vector<2x1xf32> to vector<2x256xf32>
    %1111 = arith.mulf %1109, %1110 : vector<2x256xf32>
    %1112 = arith.addf %1106, %1111 : vector<2x256xf32>
    %c1_336 = arith.constant 1 : index
    %c19_337 = arith.constant 19 : index
    %1113 = vector.load %arg18[%c1_336, %c19_337] : memref<2x384xf32, #tpu.memory_space<vmem>>, vector<1x256xf32>
    %1114 = vector.extract_strided_slice %575 {offsets = [0, 55], sizes = [2, 1], strides = [1, 1]} : vector<2x98xf32> to vector<2x1xf32>
    %1115 = vector.broadcast %1113 : vector<1x256xf32> to vector<2x256xf32>
    %1116 = vector.broadcast %1114 : vector<2x1xf32> to vector<2x256xf32>
    %1117 = arith.mulf %1115, %1116 : vector<2x256xf32>
    %1118 = arith.addf %1112, %1117 : vector<2x256xf32>
    %c0_338 = arith.constant 0 : index
    %c35 = arith.constant 35 : index
    %1119 = vector.load %arg18[%c0_338, %c35] : memref<2x384xf32, #tpu.memory_space<vmem>>, vector<1x256xf32>
    %1120 = vector.extract_strided_slice %575 {offsets = [0, 13], sizes = [2, 1], strides = [1, 1]} : vector<2x98xf32> to vector<2x1xf32>
    %1121 = vector.broadcast %1119 : vector<1x256xf32> to vector<2x256xf32>
    %1122 = vector.broadcast %1120 : vector<2x1xf32> to vector<2x256xf32>
    %1123 = arith.mulf %1121, %1122 : vector<2x256xf32>
    %1124 = arith.addf %1118, %1123 : vector<2x256xf32>
    %c1_339 = arith.constant 1 : index
    %c35_340 = arith.constant 35 : index
    %1125 = vector.load %arg18[%c1_339, %c35_340] : memref<2x384xf32, #tpu.memory_space<vmem>>, vector<1x256xf32>
    %1126 = vector.extract_strided_slice %575 {offsets = [0, 62], sizes = [2, 1], strides = [1, 1]} : vector<2x98xf32> to vector<2x1xf32>
    %1127 = vector.broadcast %1125 : vector<1x256xf32> to vector<2x256xf32>
    %1128 = vector.broadcast %1126 : vector<2x1xf32> to vector<2x256xf32>
    %1129 = arith.mulf %1127, %1128 : vector<2x256xf32>
    %1130 = arith.addf %1124, %1129 : vector<2x256xf32>
    %c0_341 = arith.constant 0 : index
    %c51 = arith.constant 51 : index
    %1131 = vector.load %arg18[%c0_341, %c51] : memref<2x384xf32, #tpu.memory_space<vmem>>, vector<1x256xf32>
    %1132 = vector.extract_strided_slice %575 {offsets = [0, 20], sizes = [2, 1], strides = [1, 1]} : vector<2x98xf32> to vector<2x1xf32>
    %1133 = vector.broadcast %1131 : vector<1x256xf32> to vector<2x256xf32>
    %1134 = vector.broadcast %1132 : vector<2x1xf32> to vector<2x256xf32>
    %1135 = arith.mulf %1133, %1134 : vector<2x256xf32>
    %1136 = arith.addf %1130, %1135 : vector<2x256xf32>
    %c1_342 = arith.constant 1 : index
    %c51_343 = arith.constant 51 : index
    %1137 = vector.load %arg18[%c1_342, %c51_343] : memref<2x384xf32, #tpu.memory_space<vmem>>, vector<1x256xf32>
    %1138 = vector.extract_strided_slice %575 {offsets = [0, 69], sizes = [2, 1], strides = [1, 1]} : vector<2x98xf32> to vector<2x1xf32>
    %1139 = vector.broadcast %1137 : vector<1x256xf32> to vector<2x256xf32>
    %1140 = vector.broadcast %1138 : vector<2x1xf32> to vector<2x256xf32>
    %1141 = arith.mulf %1139, %1140 : vector<2x256xf32>
    %1142 = arith.addf %1136, %1141 : vector<2x256xf32>
    %c0_344 = arith.constant 0 : index
    %c67_345 = arith.constant 67 : index
    %1143 = vector.load %arg18[%c0_344, %c67_345] : memref<2x384xf32, #tpu.memory_space<vmem>>, vector<1x256xf32>
    %1144 = vector.extract_strided_slice %575 {offsets = [0, 27], sizes = [2, 1], strides = [1, 1]} : vector<2x98xf32> to vector<2x1xf32>
    %1145 = vector.broadcast %1143 : vector<1x256xf32> to vector<2x256xf32>
    %1146 = vector.broadcast %1144 : vector<2x1xf32> to vector<2x256xf32>
    %1147 = arith.mulf %1145, %1146 : vector<2x256xf32>
    %1148 = arith.addf %1142, %1147 : vector<2x256xf32>
    %c1_346 = arith.constant 1 : index
    %c67_347 = arith.constant 67 : index
    %1149 = vector.load %arg18[%c1_346, %c67_347] : memref<2x384xf32, #tpu.memory_space<vmem>>, vector<1x256xf32>
    %1150 = vector.extract_strided_slice %575 {offsets = [0, 76], sizes = [2, 1], strides = [1, 1]} : vector<2x98xf32> to vector<2x1xf32>
    %1151 = vector.broadcast %1149 : vector<1x256xf32> to vector<2x256xf32>
    %1152 = vector.broadcast %1150 : vector<2x1xf32> to vector<2x256xf32>
    %1153 = arith.mulf %1151, %1152 : vector<2x256xf32>
    %1154 = arith.addf %1148, %1153 : vector<2x256xf32>
    %c0_348 = arith.constant 0 : index
    %c83 = arith.constant 83 : index
    %1155 = vector.load %arg18[%c0_348, %c83] : memref<2x384xf32, #tpu.memory_space<vmem>>, vector<1x256xf32>
    %1156 = vector.extract_strided_slice %575 {offsets = [0, 34], sizes = [2, 1], strides = [1, 1]} : vector<2x98xf32> to vector<2x1xf32>
    %1157 = vector.broadcast %1155 : vector<1x256xf32> to vector<2x256xf32>
    %1158 = vector.broadcast %1156 : vector<2x1xf32> to vector<2x256xf32>
    %1159 = arith.mulf %1157, %1158 : vector<2x256xf32>
    %1160 = arith.addf %1154, %1159 : vector<2x256xf32>
    %c1_349 = arith.constant 1 : index
    %c83_350 = arith.constant 83 : index
    %1161 = vector.load %arg18[%c1_349, %c83_350] : memref<2x384xf32, #tpu.memory_space<vmem>>, vector<1x256xf32>
    %1162 = vector.extract_strided_slice %575 {offsets = [0, 83], sizes = [2, 1], strides = [1, 1]} : vector<2x98xf32> to vector<2x1xf32>
    %1163 = vector.broadcast %1161 : vector<1x256xf32> to vector<2x256xf32>
    %1164 = vector.broadcast %1162 : vector<2x1xf32> to vector<2x256xf32>
    %1165 = arith.mulf %1163, %1164 : vector<2x256xf32>
    %1166 = arith.addf %1160, %1165 : vector<2x256xf32>
    %c0_351 = arith.constant 0 : index
    %c99 = arith.constant 99 : index
    %1167 = vector.load %arg18[%c0_351, %c99] : memref<2x384xf32, #tpu.memory_space<vmem>>, vector<1x256xf32>
    %1168 = vector.extract_strided_slice %575 {offsets = [0, 41], sizes = [2, 1], strides = [1, 1]} : vector<2x98xf32> to vector<2x1xf32>
    %1169 = vector.broadcast %1167 : vector<1x256xf32> to vector<2x256xf32>
    %1170 = vector.broadcast %1168 : vector<2x1xf32> to vector<2x256xf32>
    %1171 = arith.mulf %1169, %1170 : vector<2x256xf32>
    %1172 = arith.addf %1166, %1171 : vector<2x256xf32>
    %c1_352 = arith.constant 1 : index
    %c99_353 = arith.constant 99 : index
    %1173 = vector.load %arg18[%c1_352, %c99_353] : memref<2x384xf32, #tpu.memory_space<vmem>>, vector<1x256xf32>
    %1174 = vector.extract_strided_slice %575 {offsets = [0, 90], sizes = [2, 1], strides = [1, 1]} : vector<2x98xf32> to vector<2x1xf32>
    %1175 = vector.broadcast %1173 : vector<1x256xf32> to vector<2x256xf32>
    %1176 = vector.broadcast %1174 : vector<2x1xf32> to vector<2x256xf32>
    %1177 = arith.mulf %1175, %1176 : vector<2x256xf32>
    %1178 = arith.addf %1172, %1177 : vector<2x256xf32>
    %c0_354 = arith.constant 0 : index
    %c115_355 = arith.constant 115 : index
    %1179 = vector.load %arg18[%c0_354, %c115_355] : memref<2x384xf32, #tpu.memory_space<vmem>>, vector<1x256xf32>
    %1180 = vector.extract_strided_slice %575 {offsets = [0, 48], sizes = [2, 1], strides = [1, 1]} : vector<2x98xf32> to vector<2x1xf32>
    %1181 = vector.broadcast %1179 : vector<1x256xf32> to vector<2x256xf32>
    %1182 = vector.broadcast %1180 : vector<2x1xf32> to vector<2x256xf32>
    %1183 = arith.mulf %1181, %1182 : vector<2x256xf32>
    %1184 = arith.addf %1178, %1183 : vector<2x256xf32>
    %c1_356 = arith.constant 1 : index
    %c115_357 = arith.constant 115 : index
    %1185 = vector.load %arg18[%c1_356, %c115_357] : memref<2x384xf32, #tpu.memory_space<vmem>>, vector<1x256xf32>
    %1186 = vector.extract_strided_slice %575 {offsets = [0, 97], sizes = [2, 1], strides = [1, 1]} : vector<2x98xf32> to vector<2x1xf32>
    %1187 = vector.broadcast %1185 : vector<1x256xf32> to vector<2x256xf32>
    %1188 = vector.broadcast %1186 : vector<2x1xf32> to vector<2x256xf32>
    %1189 = arith.mulf %1187, %1188 : vector<2x256xf32>
    %1190 = arith.addf %1184, %1189 : vector<2x256xf32>
    %1191 = vector.broadcast %443 : vector<1x256xf32> to vector<2x256xf32>
    %1192 = arith.mulf %1190, %1191 : vector<2x256xf32>
    %1193 = arith.addf %1105, %1192 : vector<2x256xf32>
    %cst_358 = arith.constant 0.000000e+00 : f32
    %1194 = vector.broadcast %cst_358 : f32 to vector<2x256xf32>
    %1195 = arith.subf %1194, %1193 : vector<2x256xf32>
    %1196 = math.exp %1195 : vector<2x256xf32>
    %cst_359 = arith.constant 1.000000e+00 : f32
    %1197 = vector.broadcast %cst_359 : f32 to vector<2x256xf32>
    %1198 = arith.addf %1197, %1196 : vector<2x256xf32>
    %cst_360 = arith.constant 1.000000e+00 : f32
    %1199 = vector.broadcast %cst_360 : f32 to vector<2x256xf32>
    %1200 = arith.divf %1199, %1198 : vector<2x256xf32>
    %1201 = vector.extract_strided_slice %1200 {offsets = [0, 0], sizes = [1, 256], strides = [1, 1]} : vector<2x256xf32> to vector<1x256xf32>
    %1202 = vector.broadcast %1201 : vector<1x256xf32> to vector<2x256xf32>
    %1203 = arith.mulf %551, %1202 : vector<2x256xf32>
    %1204 = vector.extract_strided_slice %1200 {offsets = [1, 0], sizes = [1, 256], strides = [1, 1]} : vector<2x256xf32> to vector<1x256xf32>
    %1205 = vector.broadcast %1204 : vector<1x256xf32> to vector<2x256xf32>
    %1206 = arith.mulf %556, %1205 : vector<2x256xf32>
    %1207 = arith.addf %1203, %1206 : vector<2x256xf32>
    %c0_361 = arith.constant 0 : index
    %c0_362 = arith.constant 0 : index
    %1208 = vector.load %arg13[%c0_361, %c0_362] : memref<4x2xf32, #tpu.memory_space<vmem>>, vector<4x2xf32>
    %cst_363 = arith.constant dense<0.000000e+00> : vector<4x256xf32>
    %1209 = tpu.matmul %1208, %1207, %cst_363 {dimension_numbers = #tpu.dot_dimension_numbers<[1], [0], [0], [1], [0, 0, 1, 1], [], []>, precision = #tpu.contract_precision<fp32>} : vector<4x2xf32>, vector<2x256xf32>, vector<4x256xf32> -> vector<4x256xf32>
    %c0_364 = arith.constant 0 : index
    %c0_365 = arith.constant 0 : index
    %1210 = vector.load %arg14[%c0_364, %c0_365] : memref<4x1xf32, #tpu.memory_space<vmem>>, vector<4x1xf32>
    %1211 = vector.broadcast %1210 : vector<4x1xf32> to vector<4x256xf32>
    %1212 = arith.addf %1209, %1211 : vector<4x256xf32>
    %1213 = arith.mulf %2, %1212 : vector<4x256xf32>
    %c0_366 = arith.constant 0 : index
    %c0_367 = arith.constant 0 : index
    %c0_368 = arith.constant 0 : index
    %1214 = vector.load %arg15[%c0_366, %c0_367, %c0_368] : memref<1x4x256xf32, #tpu.memory_space<vmem>>, vector<1x4x256xf32>
    %1215 = vector.shape_cast %1214 : vector<1x4x256xf32> to vector<4x256xf32>
    %1216 = vector.shape_cast %1213 : vector<4x256xf32> to vector<1x4x256xf32>
    tpu.vector_store %arg15[%c0_366, %c0_367, %c0_368], %1216 {strides = array<i32>} : memref<1x4x256xf32, #tpu.memory_space<vmem>>, vector<1x4x256xf32>,
    return
  }
  func.func @transform_0(%arg0: i32) -> (i32, i32, i32) {
    %c0_i32 = arith.constant 0 : i32
    %c0_i32_0 = arith.constant 0 : i32
    %c0_i32_1 = arith.constant 0 : i32
    return %arg0, %c0_i32, %c0_i32_0 : i32, i32, i32
  }
  func.func @transform_1(%arg0: i32) -> (i32, i32) {
    %c0_i32 = arith.constant 0 : i32
    %c0_i32_0 = arith.constant 0 : i32
    %c0_i32_1 = arith.constant 0 : i32
    return %c0_i32, %c0_i32_0 : i32, i32
  }
  func.func @transform_2(%arg0: i32) -> (i32, i32) {
    %c0_i32 = arith.constant 0 : i32
    %c0_i32_0 = arith.constant 0 : i32
    %c0_i32_1 = arith.constant 0 : i32
    return %c0_i32, %c0_i32_0 : i32, i32
  }
  func.func @transform_3(%arg0: i32) -> (i32, i32) {
    %c0_i32 = arith.constant 0 : i32
    %c0_i32_0 = arith.constant 0 : i32
    %c0_i32_1 = arith.constant 0 : i32
    return %c0_i32, %c0_i32_0 : i32, i32
  }
  func.func @transform_4(%arg0: i32) -> (i32, i32) {
    %c0_i32 = arith.constant 0 : i32
    %c0_i32_0 = arith.constant 0 : i32
    %c0_i32_1 = arith.constant 0 : i32
    return %c0_i32, %c0_i32_0 : i32, i32
  }
  func.func @transform_5(%arg0: i32) -> (i32, i32) {
    %c0_i32 = arith.constant 0 : i32
    %c0_i32_0 = arith.constant 0 : i32
    %c0_i32_1 = arith.constant 0 : i32
    return %c0_i32, %c0_i32_0 : i32, i32
  }
  func.func @transform_6(%arg0: i32) -> (i32, i32) {
    %c0_i32 = arith.constant 0 : i32
    %c0_i32_0 = arith.constant 0 : i32
    %c0_i32_1 = arith.constant 0 : i32
    return %c0_i32, %c0_i32_0 : i32, i32
  }
  func.func @transform_7(%arg0: i32) -> (i32, i32) {
    %c0_i32 = arith.constant 0 : i32
    %c0_i32_0 = arith.constant 0 : i32
    %c0_i32_1 = arith.constant 0 : i32
    return %c0_i32, %c0_i32_0 : i32, i32
  }
  func.func @transform_8(%arg0: i32) -> (i32, i32) {
    %c0_i32 = arith.constant 0 : i32
    %c0_i32_0 = arith.constant 0 : i32
    %c0_i32_1 = arith.constant 0 : i32
    return %c0_i32, %c0_i32_0 : i32, i32
  }
  func.func @transform_9(%arg0: i32) -> (i32, i32) {
    %c0_i32 = arith.constant 0 : i32
    %c0_i32_0 = arith.constant 0 : i32
    %c0_i32_1 = arith.constant 0 : i32
    return %c0_i32, %c0_i32_0 : i32, i32
  }
  func.func @transform_10(%arg0: i32) -> (i32, i32) {
    %c0_i32 = arith.constant 0 : i32
    %c0_i32_0 = arith.constant 0 : i32
    %c0_i32_1 = arith.constant 0 : i32
    return %c0_i32, %c0_i32_0 : i32, i32
  }
  func.func @transform_11(%arg0: i32) -> (i32, i32) {
    %c0_i32 = arith.constant 0 : i32
    %c0_i32_0 = arith.constant 0 : i32
    %c0_i32_1 = arith.constant 0 : i32
    return %c0_i32, %c0_i32_0 : i32, i32
  }
  func.func @transform_12(%arg0: i32) -> (i32, i32) {
    %c0_i32 = arith.constant 0 : i32
    %c0_i32_0 = arith.constant 0 : i32
    %c0_i32_1 = arith.constant 0 : i32
    return %c0_i32, %c0_i32_0 : i32, i32
  }
  func.func @transform_13(%arg0: i32) -> (i32, i32) {
    %c0_i32 = arith.constant 0 : i32
    %c0_i32_0 = arith.constant 0 : i32
    %c0_i32_1 = arith.constant 0 : i32
    return %c0_i32, %c0_i32_0 : i32, i32
  }
  func.func @transform_14(%arg0: i32) -> (i32, i32, i32) {
    %c0_i32 = arith.constant 0 : i32
    %c0_i32_0 = arith.constant 0 : i32
    %c0_i32_1 = arith.constant 0 : i32
    return %arg0, %c0_i32, %c0_i32_0 : i32, i32, i32
  }
}

</mosaic_0001>

<llo_original>
// kernel: tpu_custom_call.1
$region0: #{tpu_custom_call.1}
  #allocation0 [shape = 'u32[]', space=smem, size = 0x4, offset = 0x4, fixed_abs, tag = 'smem constant byte address 0x4 - core index']
  #allocation1 [shape = 'u32[144,128]{1,0:T(1,128)}', space=vmem, size = 0x12000, scoped, tag = 'internal scratch']
  #allocation2 [shape = 'f32[4,352]{1,0:T(4,128)}', space=vmem, size = 0x1800, scoped, tag = 'scratch operand']
  #allocation3 [shape = 'f32[4,576]{1,0:T(4,128)}', space=vmem, size = 0x2800, scoped, tag = 'scratch operand']
  #allocation4 [shape = 'f32[2,384]{1,0:T(2,128)}', space=vmem, size = 0xc00, scoped, tag = 'scratch operand']
  %s0 = inlined_call_operand.vmem [shape: f32[2,4,256], index: 0, kind: input, shape index: {}]
  %s1 = inlined_call_operand.vmem [shape: s32[1,256], index: 1, kind: input, shape index: {}]
  %s2 = inlined_call_operand.vmem [shape: f32[4,25], index: 2, kind: input, shape index: {}]
  %s3 = inlined_call_operand.vmem [shape: f32[4,1], index: 3, kind: input, shape index: {}]
  %s4 = inlined_call_operand.vmem [shape: f32[4,49], index: 4, kind: input, shape index: {}]
  %s5 = inlined_call_operand.vmem [shape: f32[4,1], index: 5, kind: input, shape index: {}]
  %s6 = inlined_call_operand.vmem [shape: f32[2,4], index: 6, kind: input, shape index: {}]
  %s7 = inlined_call_operand.vmem [shape: f32[2,1], index: 7, kind: input, shape index: {}]
  %s8 = inlined_call_operand.vmem [shape: f32[2,4], index: 8, kind: input, shape index: {}]
  %s9 = inlined_call_operand.vmem [shape: f32[2,1], index: 9, kind: input, shape index: {}]
  %s10 = inlined_call_operand.vmem [shape: f32[2,98], index: 10, kind: input, shape index: {}]
  %s11 = inlined_call_operand.vmem [shape: f32[2,1], index: 11, kind: input, shape index: {}]
  %s12 = inlined_call_operand.vmem [shape: f32[4,2], index: 12, kind: input, shape index: {}]
  %s13 = inlined_call_operand.vmem [shape: f32[4,1], index: 13, kind: input, shape index: {}]
  %s14 = inlined_call_operand.hbm [shape: f32[2,4,256], index: 14, kind: output, shape index: {}]
  %s15 = sld [smem:[#allocation0]]
  $region89: #{tpu_custom_call.1} parent=0
    _
  %s17 = ssub.s32 1, %s15
  %s18 = scalar_select 0, %s17, %s15
  $region1: #{tpu_custom_call.1} parent=0
    #allocation5 [shape = 'u8[8192]{0}', space=vmem, size = 0x2000, scoped, tag = 'output window, operand 0']
    #allocation6 [shape = 's32[2]{0}', space=sflag, size = 0x8, scoped, tag = 'scoped memory for tpu_custom_call.1']
    %19 = vsyncpa [#allocation6], 0
    %s20 = scalar_lea.sflag [#allocation6], 1
    %21 = vsyncpa %s20, 0
    loop: start=0, step=1, limit=4
    $region2: #{tpu_custom_call.1} parent=1 // loop_pre_header
      _
    $region3: #{tpu_custom_call.1} parent=1 // loop_header
      %s23 = sphi 0, %s27
      %p24 = scmp.ge.s32.totalorder %s23, 4
      %s33 = sphi 0, %s35
      %s36 = sphi 0, %s33
      %s37 = sphi 0, %s36
      %s53 = sphi 0, %s37
      %s57 = sphi 0, %s57
      %s59 = sphi 0, %s57
      %s60 = sphi 0, %s59
      %s74 = sphi 0, %s60
      %s78 = sphi 0, %s78
      %s80 = sphi 0, %s78
      %s81 = sphi 0, %s80
      %s95 = sphi 0, %s81
      %s99 = sphi 0, %s99
      %s101 = sphi 0, %s99
      %s102 = sphi 0, %s101
      %s116 = sphi 0, %s102
      %s120 = sphi 0, %s120
      %s122 = sphi 0, %s120
      %s123 = sphi 0, %s122
      %s137 = sphi 0, %s123
      %s141 = sphi 0, %s141
      %s143 = sphi 0, %s141
      %s144 = sphi 0, %s143
      %s158 = sphi 0, %s144
      %s162 = sphi 0, %s162
      %s164 = sphi 0, %s162
      %s165 = sphi 0, %s164
      %s179 = sphi 0, %s165
      %s183 = sphi 0, %s183
      %s185 = sphi 0, %s183
      %s186 = sphi 0, %s185
      %s200 = sphi 0, %s186
      %s204 = sphi 0, %s204
      %s206 = sphi 0, %s204
      %s207 = sphi 0, %s206
      %s221 = sphi 0, %s207
      %s225 = sphi 0, %s225
      %s227 = sphi 0, %s225
      %s228 = sphi 0, %s227
      %s242 = sphi 0, %s228
      %s246 = sphi 0, %s246
      %s248 = sphi 0, %s246
      %s249 = sphi 0, %s248
      %s263 = sphi 0, %s249
      %s267 = sphi 0, %s267
      %s269 = sphi 0, %s267
      %s270 = sphi 0, %s269
      %s284 = sphi 0, %s270
      %s288 = sphi 0, %s288
      %s290 = sphi 0, %s288
      %s291 = sphi 0, %s290
      %s305 = sphi 0, %s291
      %s309 = sphi 0, %s309
      %s311 = sphi 0, %s309
      %s312 = sphi 0, %s311
      %s326 = sphi 0, %s312
      %s332 = sphi 0, %s334
      %s335 = sphi 0, %s332
      %s336 = sphi 0, %s335
      %s352 = sphi 0, %s336
    $region4: #{tpu_custom_call.1} parent=1 // loop_header_branch
      %26 = sbr.rel (%p24) target = $region8
    $region5: #{tpu_custom_call.1} parent=1 // loop_body
      %s28 = ssub.s32 %s23, 1
      %s29 = ssub.s32 %s23, 2
      %s30 = sadd.s32 %s23, 1
      %s31 = ssub.s32 %s23, %s30
      %p32 = scmp.eq.s32.totalorder %s31, 0
      %s34 = sadd.s32 %s33, 1
      %s35 = scalar_select %p32, %s33, %s34
      %p38 = pneg %p32
      %p39 = scmp.eq.s32.totalorder %s23, 1
      %p40 = por %p38, %p39
      %p41 = scmp.ne.s32.totalorder %s33, %s36
      %p42 = scmp.eq.s32.totalorder %s23, 0
      %p43 = por %p41, %p42
      %p44 = scmp.ne.s32.totalorder %s33, %s36
      %p45 = scmp.eq.s32.totalorder %s28, 1
      %p46 = por %p44, %p45
      %p47 = scmp.ne.s32.totalorder %s36, %s37
      %p48 = scmp.eq.s32.totalorder %s28, 0
      %p49 = por %p47, %p48
      %p50 = scmp.ne.s32.totalorder %s36, %s37
      %p51 = scmp.eq.s32.totalorder %s29, 1
      %p52 = por %p50, %p51
      %p54 = scmp.ne.s32.totalorder %s37, %s53
      %p55 = scmp.eq.s32.totalorder %s29, 0
      %p56 = por %p54, %p55
      %s58 = sadd.s32 %s57, 1
      %p61 = scmp.eq.s32.totalorder %s23, 1
      %p62 = scmp.ne.s32.totalorder %s57, %s59
      %p63 = scmp.eq.s32.totalorder %s23, 0
      %p64 = por %p62, %p63
      %p65 = scmp.ne.s32.totalorder %s57, %s59
      %p66 = scmp.eq.s32.totalorder %s28, 1
      %p67 = por %p65, %p66
      %p68 = scmp.ne.s32.totalorder %s59, %s60
      %p69 = scmp.eq.s32.totalorder %s28, 0
      %p70 = por %p68, %p69
      %p71 = scmp.ne.s32.totalorder %s59, %s60
      %p72 = scmp.eq.s32.totalorder %s29, 1
      %p73 = por %p71, %p72
      %p75 = scmp.ne.s32.totalorder %s60, %s74
      %p76 = scmp.eq.s32.totalorder %s29, 0
      %p77 = por %p75, %p76
      %s79 = sadd.s32 %s78, 1
      %p82 = scmp.eq.s32.totalorder %s23, 1
      %p83 = scmp.ne.s32.totalorder %s78, %s80
      %p84 = scmp.eq.s32.totalorder %s23, 0
      %p85 = por %p83, %p84
      %p86 = scmp.ne.s32.totalorder %s78, %s80
      %p87 = scmp.eq.s32.totalorder %s28, 1
      %p88 = por %p86, %p87
      %p89 = scmp.ne.s32.totalorder %s80, %s81
      %p90 = scmp.eq.s32.totalorder %s28, 0
      %p91 = por %p89, %p90
      %p92 = scmp.ne.s32.totalorder %s80, %s81
      %p93 = scmp.eq.s32.totalorder %s29, 1
      %p94 = por %p92, %p93
      %p96 = scmp.ne.s32.totalorder %s81, %s95
      %p97 = scmp.eq.s32.totalorder %s29, 0
      %p98 = por %p96, %p97
      %s100 = sadd.s32 %s99, 1
      %p103 = scmp.eq.s32.totalorder %s23, 1
      %p104 = scmp.ne.s32.totalorder %s99, %s101
      %p105 = scmp.eq.s32.totalorder %s23, 0
      %p106 = por %p104, %p105
      %p107 = scmp.ne.s32.totalorder %s99, %s101
      %p108 = scmp.eq.s32.totalorder %s28, 1
      %p109 = por %p107, %p108
      %p110 = scmp.ne.s32.totalorder %s101, %s102
      %p111 = scmp.eq.s32.totalorder %s28, 0
      %p112 = por %p110, %p111
      %p113 = scmp.ne.s32.totalorder %s101, %s102
      %p114 = scmp.eq.s32.totalorder %s29, 1
      %p115 = por %p113, %p114
      %p117 = scmp.ne.s32.totalorder %s102, %s116
      %p118 = scmp.eq.s32.totalorder %s29, 0
      %p119 = por %p117, %p118
      %s121 = sadd.s32 %s120, 1
      %p124 = scmp.eq.s32.totalorder %s23, 1
      %p125 = scmp.ne.s32.totalorder %s120, %s122
      %p126 = scmp.eq.s32.totalorder %s23, 0
      %p127 = por %p125, %p126
      %p128 = scmp.ne.s32.totalorder %s120, %s122
      %p129 = scmp.eq.s32.totalorder %s28, 1
      %p130 = por %p128, %p129
      %p131 = scmp.ne.s32.totalorder %s122, %s123
      %p132 = scmp.eq.s32.totalorder %s28, 0
      %p133 = por %p131, %p132
      %p134 = scmp.ne.s32.totalorder %s122, %s123
      %p135 = scmp.eq.s32.totalorder %s29, 1
      %p136 = por %p134, %p135
      %p138 = scmp.ne.s32.totalorder %s123, %s137
      %p139 = scmp.eq.s32.totalorder %s29, 0
      %p140 = por %p138, %p139
      %s142 = sadd.s32 %s141, 1
      %p145 = scmp.eq.s32.totalorder %s23, 1
      %p146 = scmp.ne.s32.totalorder %s141, %s143
      %p147 = scmp.eq.s32.totalorder %s23, 0
      %p148 = por %p146, %p147
      %p149 = scmp.ne.s32.totalorder %s141, %s143
      %p150 = scmp.eq.s32.totalorder %s28, 1
      %p151 = por %p149, %p150
      %p152 = scmp.ne.s32.totalorder %s143, %s144
      %p153 = scmp.eq.s32.totalorder %s28, 0
      %p154 = por %p152, %p153
      %p155 = scmp.ne.s32.totalorder %s143, %s144
      %p156 = scmp.eq.s32.totalorder %s29, 1
      %p157 = por %p155, %p156
      %p159 = scmp.ne.s32.totalorder %s144, %s158
      %p160 = scmp.eq.s32.totalorder %s29, 0
      %p161 = por %p159, %p160
      %s163 = sadd.s32 %s162, 1
      %p166 = scmp.eq.s32.totalorder %s23, 1
      %p167 = scmp.ne.s32.totalorder %s162, %s164
      %p168 = scmp.eq.s32.totalorder %s23, 0
      %p169 = por %p167, %p168
      %p170 = scmp.ne.s32.totalorder %s162, %s164
      %p171 = scmp.eq.s32.totalorder %s28, 1
      %p172 = por %p170, %p171
      %p173 = scmp.ne.s32.totalorder %s164, %s165
      %p174 = scmp.eq.s32.totalorder %s28, 0
      %p175 = por %p173, %p174
      %p176 = scmp.ne.s32.totalorder %s164, %s165
      %p177 = scmp.eq.s32.totalorder %s29, 1
      %p178 = por %p176, %p177
      %p180 = scmp.ne.s32.totalorder %s165, %s179
      %p181 = scmp.eq.s32.totalorder %s29, 0
      %p182 = por %p180, %p181
      %s184 = sadd.s32 %s183, 1
      %p187 = scmp.eq.s32.totalorder %s23, 1
      %p188 = scmp.ne.s32.totalorder %s183, %s185
      %p189 = scmp.eq.s32.totalorder %s23, 0
      %p190 = por %p188, %p189
      %p191 = scmp.ne.s32.totalorder %s183, %s185
      %p192 = scmp.eq.s32.totalorder %s28, 1
      %p193 = por %p191, %p192
      %p194 = scmp.ne.s32.totalorder %s185, %s186
      %p195 = scmp.eq.s32.totalorder %s28, 0
      %p196 = por %p194, %p195
      %p197 = scmp.ne.s32.totalorder %s185, %s186
      %p198 = scmp.eq.s32.totalorder %s29, 1
      %p199 = por %p197, %p198
      %p201 = scmp.ne.s32.totalorder %s186, %s200
      %p202 = scmp.eq.s32.totalorder %s29, 0
      %p203 = por %p201, %p202
      %s205 = sadd.s32 %s204, 1
      %p208 = scmp.eq.s32.totalorder %s23, 1
      %p209 = scmp.ne.s32.totalorder %s204, %s206
      %p210 = scmp.eq.s32.totalorder %s23, 0
      %p211 = por %p209, %p210
      %p212 = scmp.ne.s32.totalorder %s204, %s206
      %p213 = scmp.eq.s32.totalorder %s28, 1
      %p214 = por %p212, %p213
      %p215 = scmp.ne.s32.totalorder %s206, %s207
      %p216 = scmp.eq.s32.totalorder %s28, 0
      %p217 = por %p215, %p216
      %p218 = scmp.ne.s32.totalorder %s206, %s207
      %p219 = scmp.eq.s32.totalorder %s29, 1
      %p220 = por %p218, %p219
      %p222 = scmp.ne.s32.totalorder %s207, %s221
      %p223 = scmp.eq.s32.totalorder %s29, 0
      %p224 = por %p222, %p223
      %s226 = sadd.s32 %s225, 1
      %p229 = scmp.eq.s32.totalorder %s23, 1
      %p230 = scmp.ne.s32.totalorder %s225, %s227
      %p231 = scmp.eq.s32.totalorder %s23, 0
      %p232 = por %p230, %p231
      %p233 = scmp.ne.s32.totalorder %s225, %s227
      %p234 = scmp.eq.s32.totalorder %s28, 1
      %p235 = por %p233, %p234
      %p236 = scmp.ne.s32.totalorder %s227, %s228
      %p237 = scmp.eq.s32.totalorder %s28, 0
      %p238 = por %p236, %p237
      %p239 = scmp.ne.s32.totalorder %s227, %s228
      %p240 = scmp.eq.s32.totalorder %s29, 1
      %p241 = por %p239, %p240
      %p243 = scmp.ne.s32.totalorder %s228, %s242
      %p244 = scmp.eq.s32.totalorder %s29, 0
      %p245 = por %p243, %p244
      %s247 = sadd.s32 %s246, 1
      %p250 = scmp.eq.s32.totalorder %s23, 1
      %p251 = scmp.ne.s32.totalorder %s246, %s248
      %p252 = scmp.eq.s32.totalorder %s23, 0
      %p253 = por %p251, %p252
      %p254 = scmp.ne.s32.totalorder %s246, %s248
      %p255 = scmp.eq.s32.totalorder %s28, 1
      %p256 = por %p254, %p255
      %p257 = scmp.ne.s32.totalorder %s248, %s249
      %p258 = scmp.eq.s32.totalorder %s28, 0
      %p259 = por %p257, %p258
      %p260 = scmp.ne.s32.totalorder %s248, %s249
      %p261 = scmp.eq.s32.totalorder %s29, 1
      %p262 = por %p260, %p261
      %p264 = scmp.ne.s32.totalorder %s249, %s263
      %p265 = scmp.eq.s32.totalorder %s29, 0
      %p266 = por %p264, %p265
      %s268 = sadd.s32 %s267, 1
      %p271 = scmp.eq.s32.totalorder %s23, 1
      %p272 = scmp.ne.s32.totalorder %s267, %s269
      %p273 = scmp.eq.s32.totalorder %s23, 0
      %p274 = por %p272, %p273
      %p275 = scmp.ne.s32.totalorder %s267, %s269
      %p276 = scmp.eq.s32.totalorder %s28, 1
      %p277 = por %p275, %p276
      %p278 = scmp.ne.s32.totalorder %s269, %s270
      %p279 = scmp.eq.s32.totalorder %s28, 0
      %p280 = por %p278, %p279
      %p281 = scmp.ne.s32.totalorder %s269, %s270
      %p282 = scmp.eq.s32.totalorder %s29, 1
      %p283 = por %p281, %p282
      %p285 = scmp.ne.s32.totalorder %s270, %s284
      %p286 = scmp.eq.s32.totalorder %s29, 0
      %p287 = por %p285, %p286
      %s289 = sadd.s32 %s288, 1
      %p292 = scmp.eq.s32.totalorder %s23, 1
      %p293 = scmp.ne.s32.totalorder %s288, %s290
      %p294 = scmp.eq.s32.totalorder %s23, 0
      %p295 = por %p293, %p294
      %p296 = scmp.ne.s32.totalorder %s288, %s290
      %p297 = scmp.eq.s32.totalorder %s28, 1
      %p298 = por %p296, %p297
      %p299 = scmp.ne.s32.totalorder %s290, %s291
      %p300 = scmp.eq.s32.totalorder %s28, 0
      %p301 = por %p299, %p300
      %p302 = scmp.ne.s32.totalorder %s290, %s291
      %p303 = scmp.eq.s32.totalorder %s29, 1
      %p304 = por %p302, %p303
      %p306 = scmp.ne.s32.totalorder %s291, %s305
      %p307 = scmp.eq.s32.totalorder %s29, 0
      %p308 = por %p306, %p307
      %s310 = sadd.s32 %s309, 1
      %p313 = scmp.eq.s32.totalorder %s23, 1
      %p314 = scmp.ne.s32.totalorder %s309, %s311
      %p315 = scmp.eq.s32.totalorder %s23, 0
      %p316 = por %p314, %p315
      %p317 = scmp.ne.s32.totalorder %s309, %s311
      %p318 = scmp.eq.s32.totalorder %s28, 1
      %p319 = por %p317, %p318
      %p320 = scmp.ne.s32.totalorder %s311, %s312
      %p321 = scmp.eq.s32.totalorder %s28, 0
      %p322 = por %p320, %p321
      %p323 = scmp.ne.s32.totalorder %s311, %s312
      %p324 = scmp.eq.s32.totalorder %s29, 1
      %p325 = por %p323, %p324
      %p327 = scmp.ne.s32.totalorder %s312, %s326
      %p328 = scmp.eq.s32.totalorder %s29, 0
      %p329 = por %p327, %p328
      %s330 = ssub.s32 %s23, %s30
      %p331 = scmp.eq.s32.totalorder %s330, 0
      %s333 = sadd.s32 %s332, 1
      %s334 = scalar_select %p331, %s332, %s333
      %p337 = pneg %p331
      %p338 = scmp.eq.s32.totalorder %s23, 1
      %p339 = por %p337, %p338
      %p340 = scmp.ne.s32.totalorder %s332, %s335
      %p341 = scmp.eq.s32.totalorder %s23, 0
      %p342 = por %p340, %p341
      %p343 = scmp.ne.s32.totalorder %s332, %s335
      %p344 = scmp.eq.s32.totalorder %s28, 1
      %p345 = por %p343, %p344
      %p346 = scmp.ne.s32.totalorder %s335, %s336
      %p347 = scmp.eq.s32.totalorder %s28, 0
      %p348 = por %p346, %p347
      %p349 = scmp.ne.s32.totalorder %s335, %s336
      %p350 = scmp.eq.s32.totalorder %s29, 1
      %p351 = por %p349, %p350
      %p353 = scmp.ne.s32.totalorder %s336, %s352
      %p354 = scmp.eq.s32.totalorder %s29, 0
      %p355 = por %p353, %p354
      %p356 = scmp.le.s32.totalorder 1, %s23
      %p357 = scmp.lt.s32.totalorder %s23, 3
      %p358 = pnand %p356, %p357
      %p359 = pneg %p358
      // Predicated region
      $region9: #{tpu_custom_call.1} parent=5 // pred_check
        _
      $region10: #{tpu_custom_call.1} parent=5 // pred_check_branch
        %361 = sbr.rel (%p358) target = $region12
      $region11: #{tpu_custom_call.1} parent=5 // pred_region
        %s362 = ssub.s32 %s23, 1
        // Predicated region
        $region13: #{tpu_custom_call.1} parent=11 // pred_check
          %p363 = pneg %p70
        $region14: #{tpu_custom_call.1} parent=11 // pred_check_branch
          %365 = sbr.rel (%p363) target = $region16
        $region15: #{tpu_custom_call.1} parent=11 // pred_region
          _
        $region16: #{tpu_custom_call.1} parent=11 // pred_fallthru
          _
        // Predicated region
        $region17: #{tpu_custom_call.1} parent=11 // pred_check
          %p366 = pneg %p91
        $region18: #{tpu_custom_call.1} parent=11 // pred_check_branch
          %368 = sbr.rel (%p366) target = $region20
        $region19: #{tpu_custom_call.1} parent=11 // pred_region
          _
        $region20: #{tpu_custom_call.1} parent=11 // pred_fallthru
          _
        // Predicated region
        $region21: #{tpu_custom_call.1} parent=11 // pred_check
          %p369 = pneg %p112
        $region22: #{tpu_custom_call.1} parent=11 // pred_check_branch
          %371 = sbr.rel (%p369) target = $region24
        $region23: #{tpu_custom_call.1} parent=11 // pred_region
          _
        $region24: #{tpu_custom_call.1} parent=11 // pred_fallthru
          _
        // Predicated region
        $region25: #{tpu_custom_call.1} parent=11 // pred_check
          %p372 = pneg %p133
        $region26: #{tpu_custom_call.1} parent=11 // pred_check_branch
          %374 = sbr.rel (%p372) target = $region28
        $region27: #{tpu_custom_call.1} parent=11 // pred_region
          _
        $region28: #{tpu_custom_call.1} parent=11 // pred_fallthru
          _
        // Predicated region
        $region29: #{tpu_custom_call.1} parent=11 // pred_check
          %p375 = pneg %p154
        $region30: #{tpu_custom_call.1} parent=11 // pred_check_branch
          %377 = sbr.rel (%p375) target = $region32
        $region31: #{tpu_custom_call.1} parent=11 // pred_region
          _
        $region32: #{tpu_custom_call.1} parent=11 // pred_fallthru
          _
        // Predicated region
        $region33: #{tpu_custom_call.1} parent=11 // pred_check
          %p378 = pneg %p175
        $region34: #{tpu_custom_call.1} parent=11 // pred_check_branch
          %380 = sbr.rel (%p378) target = $region36
        $region35: #{tpu_custom_call.1} parent=11 // pred_region
          _
        $region36: #{tpu_custom_call.1} parent=11 // pred_fallthru
          _
        // Predicated region
        $region37: #{tpu_custom_call.1} parent=11 // pred_check
          %p381 = pneg %p196
        $region38: #{tpu_custom_call.1} parent=11 // pred_check_branch
          %383 = sbr.rel (%p381) target = $region40
        $region39: #{tpu_custom_call.1} parent=11 // pred_region
          _
        $region40: #{tpu_custom_call.1} parent=11 // pred_fallthru
          _
        // Predicated region
        $region41: #{tpu_custom_call.1} parent=11 // pred_check
          %p384 = pneg %p217
        $region42: #{tpu_custom_call.1} parent=11 // pred_check_branch
          %386 = sbr.rel (%p384) target = $region44
        $region43: #{tpu_custom_call.1} parent=11 // pred_region
          _
        $region44: #{tpu_custom_call.1} parent=11 // pred_fallthru
          _
        // Predicated region
        $region45: #{tpu_custom_call.1} parent=11 // pred_check
          %p387 = pneg %p238
        $region46: #{tpu_custom_call.1} parent=11 // pred_check_branch
          %389 = sbr.rel (%p387) target = $region48
        $region47: #{tpu_custom_call.1} parent=11 // pred_region
          _
        $region48: #{tpu_custom_call.1} parent=11 // pred_fallthru
          _
        // Predicated region
        $region49: #{tpu_custom_call.1} parent=11 // pred_check
          %p390 = pneg %p259
        $region50: #{tpu_custom_call.1} parent=11 // pred_check_branch
          %392 = sbr.rel (%p390) target = $region52
        $region51: #{tpu_custom_call.1} parent=11 // pred_region
          _
        $region52: #{tpu_custom_call.1} parent=11 // pred_fallthru
          _
        // Predicated region
        $region53: #{tpu_custom_call.1} parent=11 // pred_check
          %p393 = pneg %p280
        $region54: #{tpu_custom_call.1} parent=11 // pred_check_branch
          %395 = sbr.rel (%p393) target = $region56
        $region55: #{tpu_custom_call.1} parent=11 // pred_region
          _
        $region56: #{tpu_custom_call.1} parent=11 // pred_fallthru
          _
        // Predicated region
        $region57: #{tpu_custom_call.1} parent=11 // pred_check
          %p396 = pneg %p301
        $region58: #{tpu_custom_call.1} parent=11 // pred_check_branch
          %398 = sbr.rel (%p396) target = $region60
        $region59: #{tpu_custom_call.1} parent=11 // pred_region
          _
        $region60: #{tpu_custom_call.1} parent=11 // pred_fallthru
          _
        // Predicated region
        $region61: #{tpu_custom_call.1} parent=11 // pred_check
          %p399 = pneg %p322
        $region62: #{tpu_custom_call.1} parent=11 // pred_check_branch
          %401 = sbr.rel (%p399) target = $region64
        $region63: #{tpu_custom_call.1} parent=11 // pred_region
          _
        $region64: #{tpu_custom_call.1} parent=11 // pred_fallthru
          _
      $region12: #{tpu_custom_call.1} parent=5 // pred_fallthru
        _
      %p402 = scmp.lt.s32.totalorder %s23, 2
      // Predicated region
      $region65: #{tpu_custom_call.1} parent=5 // pred_check
        %p403 = pneg %p402
      $region66: #{tpu_custom_call.1} parent=5 // pred_check_branch
        %405 = sbr.rel (%p403) target = $region68
      $region67: #{tpu_custom_call.1} parent=5 // pred_region
        // Predicated region
        $region69: #{tpu_custom_call.1} parent=67 // pred_check
          %p406 = pneg %p43
        $region70: #{tpu_custom_call.1} parent=67 // pred_check_branch
          %408 = sbr.rel (%p406) target = $region72
        $region71: #{tpu_custom_call.1} parent=67 // pred_region
          %p409 = scmp.lt.s32.totalorder %s23, 1
          %s410 = scalar_select %p409, %s23, 1
          %s411 = smul.addr %s410, 2
          %s412 = smul.addr %s411, 4
          %s413 = scalar_lea.vmem %s0, %s412
        $region72: #{tpu_custom_call.1} parent=67 // pred_fallthru
          _
      $region68: #{tpu_custom_call.1} parent=5 // pred_fallthru
        _
      %p414 = scmp.le.s32.totalorder 1, %s23
      %p415 = scmp.lt.s32.totalorder %s23, 3
      %p416 = pnand %p414, %p415
      %p417 = pneg %p416
      // Predicated region
      $region73: #{tpu_custom_call.1} parent=5 // pred_check
        _
      $region74: #{tpu_custom_call.1} parent=5 // pred_check_branch
        %419 = sbr.rel (%p416) target = $region76
      $region75: #{tpu_custom_call.1} parent=5 // pred_region
        %s420 = ssub.s32 %s23, 1
        %p421 = scmp.lt.s32.totalorder %s28, 1
        %s422 = scalar_select %p421, %s28, 1
        %s423 = smul.addr %s422, 2
        %s424 = smul.addr %s423, 4
        %s425 = scalar_lea.vmem %s0, %s424
        %p426 = pneg %p49
        %p427 = pneg %p46
        %p428 = pneg %p70
        %p429 = pneg %p67
        %p430 = pneg %p91
        %p431 = pneg %p88
        %p432 = pneg %p112
        %p433 = pneg %p109
        %p434 = pneg %p133
        %p435 = pneg %p130
        %p436 = pneg %p154
        %p437 = pneg %p151
        %p438 = pneg %p175
        %p439 = pneg %p172
        %p440 = pneg %p196
        %p441 = pneg %p193
        %p442 = pneg %p217
        %p443 = pneg %p214
        %p444 = pneg %p238
        %p445 = pneg %p235
        %p446 = pneg %p259
        %p447 = pneg %p256
        %p448 = pneg %p280
        %p449 = pneg %p277
        %p450 = pneg %p301
        %p451 = pneg %p298
        %p452 = pneg %p322
        %p453 = pneg %p319
        %p454 = pneg %p348
        %p455 = pneg %p345
        %s456 = sand.u32 %s335, 1
        %s457 = scalar_lea.sflag [#allocation6], %s456
        %s458 = sand.u32 %s335, 1
        %s459 = smul.addr %s458, 8
        %s460 = scalar_lea.vmem [#allocation5], %s459
        %p461 = scmp.lt.s32.totalorder %s28, 1
        %s462 = scalar_select %p461, %s28, 1
        %s463 = smul.addr %s462, 2
        %s464 = smul.addr %s463, 4
        %s465 = scalar_lea.vmem %s0, %s464
        %v466 = vld [vmem:[%s1] sm:$0x3]
        %v467 = vld [vmem:[%s465] sm:$0xff]
        %vm468 = vcmask 388096
        %469 = vst.msk [vmem:[#allocation2] sm:$0xf] %vm468, 0.0
        %vm470 = vcmask 781696
        %471 = vst.msk [vmem:[#allocation2 + $0x8] sm:$0xf] %vm470, 0.0
        %473 = vrot.lane.b32.xlu0 %v467, 48
        %v474 = vpop.permute.xlu0 %473
        %v475 = vrot.slane %v474, 4
        %vm476 = vcmask 392192
        %v477 = vsel %vm476, %v475, %v474
        %vm480 = vcmask 1043840
        %vm481 = vcmask 1047556
        %vm482 = vmor %vm481, %vm480
        %483 = vst.msk [vmem:[#allocation2] sm:$0xff] %vm482, %v477
        %484 = vst.msk [vmem:[#allocation2 + $0x8] sm:$0xf] %vm468, %v475
        %v485 = vld [vmem:[%s2] sm:$0xf]
        %v486 = vld [vmem:[%s3] sm:$0xf]
        %488 = vset.pattern.permute.xlu0 0
        %489 = vperm.xlu0 %488, %v486
        %v490 = vpop.permute.xlu0 %489
        %v492 = vadd.f32 %v490, 0.0
        %v493 = vld [vmem:[#allocation2] sm:$0xff]
        %v494 = vld [vmem:[#allocation2 + $0x8] sm:$0xf]
        %496 = vset.pattern.permute.xlu0 0
        %497 = vperm.xlu0 %496, %v485
        %v498 = vpop.permute.xlu0 %497
        %v500 = vunpack.c.l.s4 839922192
        %v501 = vunpack.c.0.s8 %v500
        %v502 = vlaneseq
        %v503 = vshrl.u32 %v502, 7
        %v504 = vsub.s32 %v501, %v503
        %v505 = vrot.slane %v498, %v504
        %v507 = vmul.f32 %v493, %v505
        %v508 = vmul.f32 %v494, %v505
        %v509 = vadd.f32 %v507, 0.0
        %v510 = vadd.f32 %v508, 0.0
        %511 = vset.pattern.permute.xlu0 5
        %512 = vperm.xlu0 %511, %v485
        %v513 = vpop.permute.xlu0 %512
        %v515 = vunpack.c.l.s4 839922192
        %v516 = vunpack.c.0.s8 %v515
        %v517 = vlaneseq
        %v518 = vshrl.u32 %v517, 7
        %v519 = vsub.s32 %v516, %v518
        %v520 = vrot.slane %v513, %v519
        %v522 = vmul.f32 %v493, %v520
        %v523 = vmul.f32 %v494, %v520
        %526 = vrot.lane.b32.xlu0 %v522, 112
        %v527 = vpop.permute.xlu0 %526
        %528 = vrot.lane.b32.xlu0 %v523, 112
        %v529 = vpop.permute.xlu0 %528
        %v530 = vrot.slane %v527, 4
        %v531 = vrot.slane %v529, 4
        %vm532 = vcmask 1043456
        %v533 = vsel %vm532, %v530, %v531
        %vm534 = vcmask 916480
        %v535 = vsel %vm534, %v527, %v533
        %v538 = vadd.f32 %v509, %v535
        %v539 = vadd.f32 %v510, %v529
        %540 = vset.pattern.permute.xlu0 10
        %541 = vperm.xlu0 %540, %v485
        %v542 = vpop.permute.xlu0 %541
        %v544 = vunpack.c.l.s4 839922192
        %v545 = vunpack.c.0.s8 %v544
        %v546 = vlaneseq
        %v547 = vshrl.u32 %v546, 7
        %v548 = vsub.s32 %v545, %v547
        %v549 = vrot.slane %v542, %v548
        %v551 = vmul.f32 %v493, %v549
        %v552 = vmul.f32 %v494, %v549
        %555 = vrot.lane.b32.xlu0 %v551, 96
        %v556 = vpop.permute.xlu0 %555
        %557 = vrot.lane.b32.xlu0 %v552, 96
        %v558 = vpop.permute.xlu0 %557
        %v559 = vrot.slane %v556, 4
        %v560 = vrot.slane %v558, 4
        %v561 = vsel %vm532, %v559, %v560
        %vm562 = vcmask 785408
        %v563 = vsel %vm562, %v556, %v561
        %v566 = vadd.f32 %v538, %v563
        %v567 = vadd.f32 %v539, %v558
        %568 = vset.pattern.permute.xlu0 15
        %569 = vperm.xlu0 %568, %v485
        %v570 = vpop.permute.xlu0 %569
        %v572 = vunpack.c.l.s4 839922192
        %v573 = vunpack.c.0.s8 %v572
        %v574 = vlaneseq
        %v575 = vshrl.u32 %v574, 7
        %v576 = vsub.s32 %v573, %v575
        %v577 = vrot.slane %v570, %v576
        %v579 = vmul.f32 %v493, %v577
        %v580 = vmul.f32 %v494, %v577
        %583 = vrot.lane.b32.xlu0 %v579, 80
        %v584 = vpop.permute.xlu0 %583
        %585 = vrot.lane.b32.xlu0 %v580, 80
        %v586 = vpop.permute.xlu0 %585
        %v587 = vrot.slane %v584, 4
        %v588 = vrot.slane %v586, 4
        %v589 = vsel %vm532, %v587, %v588
        %vm590 = vcmask 654336
        %v591 = vsel %vm590, %v584, %v589
        %v594 = vadd.f32 %v566, %v591
        %v595 = vadd.f32 %v567, %v586
        %596 = vset.pattern.permute.xlu0 20
        %597 = vperm.xlu0 %596, %v485
        %v598 = vpop.permute.xlu0 %597
        %v600 = vunpack.c.l.s4 839922192
        %v601 = vunpack.c.0.s8 %v600
        %v602 = vlaneseq
        %v603 = vshrl.u32 %v602, 7
        %v604 = vsub.s32 %v601, %v603
        %v605 = vrot.slane %v598, %v604
        %v607 = vmul.f32 %v493, %v605
        %v608 = vmul.f32 %v494, %v605
        %611 = vrot.lane.b32.xlu0 %v607, 64
        %v612 = vpop.permute.xlu0 %611
        %613 = vrot.lane.b32.xlu0 %v608, 64
        %v614 = vpop.permute.xlu0 %613
        %v615 = vrot.slane %v612, 4
        %v616 = vrot.slane %v614, 4
        %v617 = vsel %vm532, %v615, %v616
        %vm618 = vcmask 523264
        %v619 = vsel %vm618, %v612, %v617
        %v622 = vadd.f32 %v594, %v619
        %v623 = vadd.f32 %v595, %v614
        %v624 = vadd.s32 %v466, 4294967294
        %vm625 = vcmp.ge.s32.totalorder %v624, 0
        %vm626 = vcmp.lt.s32.totalorder %v624, 16
        %vm627 = vmand %vm625, %vm626
        %v628 = vsel %vm627, 1, 0
        %v629 = vcvt.s32.f32 %v628
        %v631 = vlaneseq
        %v632 = vshrl.u32 %v631, 7
        %v633 = vsub.s32 0, %v632
        %v634 = vrot.slane %v629, %v633
        %v635 = vlaneseq
        %v636 = vshrl.u32 %v635, 7
        %v637 = vsub.s32 1, %v636
        %v638 = vrot.slane %v629, %v637
        %v639 = vcombine.low %v634, %v638
        %640 = vrot.lane.b32.xlu0 %v639, 14
        %v641 = vpop.permute.xlu0 %640
        %v642 = vrot.slane %v641, 4
        %vm643 = vcmask 113664
        %v644 = vsel %vm643, %v642, %v641
        %v647 = vmul.f32 %v622, %v644
        %v648 = vmul.f32 %v623, %v642
        %v651 = vcombine.high %v647, %v647
        %652 = vrot.lane.b32.xlu0 %v647, 114
        %v653 = vpop.permute.xlu0 %652
        %654 = vrot.lane.b32.xlu0 %v651, 114
        %v655 = vpop.permute.xlu0 %654
        %656 = vrot.lane.b32.xlu0 %v648, 114
        %v657 = vpop.permute.xlu0 %656
        %vm658 = vcmask 932864
        %v659 = vsel %vm658, %v653, %v655
        %v660 = vsel %vm658, %v655, %v657
        %v663 = vadd.f32 %v492, %v659
        %v664 = vadd.f32 %v492, %v660
        %v665 = vld [vmem:[#allocation2] sm:$0xff]
        %v666 = vld [vmem:[#allocation2 + $0x8] sm:$0xf]
        %667 = vset.pattern.permute.xlu0 1
        %668 = vperm.xlu0 %667, %v485
        %v669 = vpop.permute.xlu0 %668
        %v671 = vunpack.c.l.s4 839922192
        %v672 = vunpack.c.0.s8 %v671
        %v673 = vlaneseq
        %v674 = vshrl.u32 %v673, 7
        %v675 = vsub.s32 %v672, %v674
        %v676 = vrot.slane %v669, %v675
        %v678 = vmul.f32 %v665, %v676
        %v679 = vmul.f32 %v666, %v676
        %v680 = vadd.f32 %v678, 0.0
        %v681 = vadd.f32 %v679, 0.0
        %682 = vset.pattern.permute.xlu0 6
        %683 = vperm.xlu0 %682, %v485
        %v684 = vpop.permute.xlu0 %683
        %v686 = vunpack.c.l.s4 839922192
        %v687 = vunpack.c.0.s8 %v686
        %v688 = vlaneseq
        %v689 = vshrl.u32 %v688, 7
        %v690 = vsub.s32 %v687, %v689
        %v691 = vrot.slane %v684, %v690
        %v693 = vmul.f32 %v665, %v691
        %v694 = vmul.f32 %v666, %v691
        %697 = vrot.lane.b32.xlu0 %v693, 112
        %v698 = vpop.permute.xlu0 %697
        %699 = vrot.lane.b32.xlu0 %v694, 112
        %v700 = vpop.permute.xlu0 %699
        %v701 = vrot.slane %v698, 4
        %v702 = vrot.slane %v700, 4
        %v703 = vsel %vm532, %v701, %v702
        %v704 = vsel %vm534, %v698, %v703
        %v707 = vadd.f32 %v680, %v704
        %v708 = vadd.f32 %v681, %v700
        %709 = vset.pattern.permute.xlu0 11
        %710 = vperm.xlu0 %709, %v485
        %v711 = vpop.permute.xlu0 %710
        %v713 = vunpack.c.l.s4 839922192
        %v714 = vunpack.c.0.s8 %v713
        %v715 = vlaneseq
        %v716 = vshrl.u32 %v715, 7
        %v717 = vsub.s32 %v714, %v716
        %v718 = vrot.slane %v711, %v717
        %v720 = vmul.f32 %v665, %v718
        %v721 = vmul.f32 %v666, %v718
        %724 = vrot.lane.b32.xlu0 %v720, 96
        %v725 = vpop.permute.xlu0 %724
        %726 = vrot.lane.b32.xlu0 %v721, 96
        %v727 = vpop.permute.xlu0 %726
        %v728 = vrot.slane %v725, 4
        %v729 = vrot.slane %v727, 4
        %v730 = vsel %vm532, %v728, %v729
        %v731 = vsel %vm562, %v725, %v730
        %v734 = vadd.f32 %v707, %v731
        %v735 = vadd.f32 %v708, %v727
        %736 = vset.pattern.permute.xlu0 16
        %737 = vperm.xlu0 %736, %v485
        %v738 = vpop.permute.xlu0 %737
        %v740 = vunpack.c.l.s4 839922192
        %v741 = vunpack.c.0.s8 %v740
        %v742 = vlaneseq
        %v743 = vshrl.u32 %v742, 7
        %v744 = vsub.s32 %v741, %v743
        %v745 = vrot.slane %v738, %v744
        %v747 = vmul.f32 %v665, %v745
        %v748 = vmul.f32 %v666, %v745
        %751 = vrot.lane.b32.xlu0 %v747, 80
        %v752 = vpop.permute.xlu0 %751
        %753 = vrot.lane.b32.xlu0 %v748, 80
        %v754 = vpop.permute.xlu0 %753
        %v755 = vrot.slane %v752, 4
        %v756 = vrot.slane %v754, 4
        %v757 = vsel %vm532, %v755, %v756
        %v758 = vsel %vm590, %v752, %v757
        %v761 = vadd.f32 %v734, %v758
        %v762 = vadd.f32 %v735, %v754
        %763 = vset.pattern.permute.xlu0 21
        %764 = vperm.xlu0 %763, %v485
        %v765 = vpop.permute.xlu0 %764
        %v767 = vunpack.c.l.s4 839922192
        %v768 = vunpack.c.0.s8 %v767
        %v769 = vlaneseq
        %v770 = vshrl.u32 %v769, 7
        %v771 = vsub.s32 %v768, %v770
        %v772 = vrot.slane %v765, %v771
        %v774 = vmul.f32 %v665, %v772
        %v775 = vmul.f32 %v666, %v772
        %778 = vrot.lane.b32.xlu0 %v774, 64
        %v779 = vpop.permute.xlu0 %778
        %780 = vrot.lane.b32.xlu0 %v775, 64
        %v781 = vpop.permute.xlu0 %780
        %v782 = vrot.slane %v779, 4
        %v783 = vrot.slane %v781, 4
        %v784 = vsel %vm532, %v782, %v783
        %v785 = vsel %vm618, %v779, %v784
        %v788 = vadd.f32 %v761, %v785
        %v789 = vadd.f32 %v762, %v781
        %v790 = vadd.s32 %v466, 4294967295
        %vm791 = vcmp.ge.s32.totalorder %v790, 0
        %vm792 = vcmp.lt.s32.totalorder %v790, 16
        %vm793 = vmand %vm791, %vm792
        %v794 = vsel %vm793, 1, 0
        %v795 = vcvt.s32.f32 %v794
        %v797 = vlaneseq
        %v798 = vshrl.u32 %v797, 7
        %v799 = vsub.s32 0, %v798
        %v800 = vrot.slane %v795, %v799
        %v801 = vlaneseq
        %v802 = vshrl.u32 %v801, 7
        %v803 = vsub.s32 1, %v802
        %v804 = vrot.slane %v795, %v803
        %v805 = vcombine.low %v800, %v804
        %806 = vrot.lane.b32.xlu0 %v805, 15
        %v807 = vpop.permute.xlu0 %806
        %v808 = vrot.slane %v807, 4
        %vm809 = vcmask 121856
        %v810 = vsel %vm809, %v808, %v807
        %v813 = vmul.f32 %v788, %v810
        %v814 = vmul.f32 %v789, %v808
        %v817 = vcombine.high %v813, %v813
        %818 = vrot.lane.b32.xlu0 %v813, 113
        %v819 = vpop.permute.xlu0 %818
        %820 = vrot.lane.b32.xlu0 %v817, 113
        %v821 = vpop.permute.xlu0 %820
        %822 = vrot.lane.b32.xlu0 %v814, 113
        %v823 = vpop.permute.xlu0 %822
        %vm824 = vcmask 924672
        %v825 = vsel %vm824, %v819, %v821
        %v826 = vsel %vm824, %v821, %v823
        %v829 = vadd.f32 %v663, %v825
        %v830 = vadd.f32 %v664, %v826
        %v831 = vld [vmem:[#allocation2] sm:$0xff]
        %v832 = vld [vmem:[#allocation2 + $0x8] sm:$0xf]
        %833 = vset.pattern.permute.xlu0 2
        %834 = vperm.xlu0 %833, %v485
        %v835 = vpop.permute.xlu0 %834
        %v837 = vunpack.c.l.s4 839922192
        %v838 = vunpack.c.0.s8 %v837
        %v839 = vlaneseq
        %v840 = vshrl.u32 %v839, 7
        %v841 = vsub.s32 %v838, %v840
        %v842 = vrot.slane %v835, %v841
        %v844 = vmul.f32 %v831, %v842
        %v845 = vmul.f32 %v832, %v842
        %v846 = vadd.f32 %v844, 0.0
        %v847 = vadd.f32 %v845, 0.0
        %848 = vset.pattern.permute.xlu0 7
        %849 = vperm.xlu0 %848, %v485
        %v850 = vpop.permute.xlu0 %849
        %v852 = vunpack.c.l.s4 839922192
        %v853 = vunpack.c.0.s8 %v852
        %v854 = vlaneseq
        %v855 = vshrl.u32 %v854, 7
        %v856 = vsub.s32 %v853, %v855
        %v857 = vrot.slane %v850, %v856
        %v859 = vmul.f32 %v831, %v857
        %v860 = vmul.f32 %v832, %v857
        %863 = vrot.lane.b32.xlu0 %v859, 112
        %v864 = vpop.permute.xlu0 %863
        %865 = vrot.lane.b32.xlu0 %v860, 112
        %v866 = vpop.permute.xlu0 %865
        %v867 = vrot.slane %v864, 4
        %v868 = vrot.slane %v866, 4
        %v869 = vsel %vm532, %v867, %v868
        %v870 = vsel %vm534, %v864, %v869
        %v873 = vadd.f32 %v846, %v870
        %v874 = vadd.f32 %v847, %v866
        %875 = vset.pattern.permute.xlu0 12
        %876 = vperm.xlu0 %875, %v485
        %v877 = vpop.permute.xlu0 %876
        %v879 = vunpack.c.l.s4 839922192
        %v880 = vunpack.c.0.s8 %v879
        %v881 = vlaneseq
        %v882 = vshrl.u32 %v881, 7
        %v883 = vsub.s32 %v880, %v882
        %v884 = vrot.slane %v877, %v883
        %v886 = vmul.f32 %v831, %v884
        %v887 = vmul.f32 %v832, %v884
        %890 = vrot.lane.b32.xlu0 %v886, 96
        %v891 = vpop.permute.xlu0 %890
        %892 = vrot.lane.b32.xlu0 %v887, 96
        %v893 = vpop.permute.xlu0 %892
        %v894 = vrot.slane %v891, 4
        %v895 = vrot.slane %v893, 4
        %v896 = vsel %vm532, %v894, %v895
        %v897 = vsel %vm562, %v891, %v896
        %v900 = vadd.f32 %v873, %v897
        %v901 = vadd.f32 %v874, %v893
        %902 = vset.pattern.permute.xlu0 17
        %903 = vperm.xlu0 %902, %v485
        %v904 = vpop.permute.xlu0 %903
        %v906 = vunpack.c.l.s4 839922192
        %v907 = vunpack.c.0.s8 %v906
        %v908 = vlaneseq
        %v909 = vshrl.u32 %v908, 7
        %v910 = vsub.s32 %v907, %v909
        %v911 = vrot.slane %v904, %v910
        %v913 = vmul.f32 %v831, %v911
        %v914 = vmul.f32 %v832, %v911
        %917 = vrot.lane.b32.xlu0 %v913, 80
        %v918 = vpop.permute.xlu0 %917
        %919 = vrot.lane.b32.xlu0 %v914, 80
        %v920 = vpop.permute.xlu0 %919
        %v921 = vrot.slane %v918, 4
        %v922 = vrot.slane %v920, 4
        %v923 = vsel %vm532, %v921, %v922
        %v924 = vsel %vm590, %v918, %v923
        %v927 = vadd.f32 %v900, %v924
        %v928 = vadd.f32 %v901, %v920
        %929 = vset.pattern.permute.xlu0 22
        %930 = vperm.xlu0 %929, %v485
        %v931 = vpop.permute.xlu0 %930
        %v933 = vunpack.c.l.s4 839922192
        %v934 = vunpack.c.0.s8 %v933
        %v935 = vlaneseq
        %v936 = vshrl.u32 %v935, 7
        %v937 = vsub.s32 %v934, %v936
        %v938 = vrot.slane %v931, %v937
        %v940 = vmul.f32 %v831, %v938
        %v941 = vmul.f32 %v832, %v938
        %944 = vrot.lane.b32.xlu0 %v940, 64
        %v945 = vpop.permute.xlu0 %944
        %946 = vrot.lane.b32.xlu0 %v941, 64
        %v947 = vpop.permute.xlu0 %946
        %v948 = vrot.slane %v945, 4
        %v949 = vrot.slane %v947, 4
        %v950 = vsel %vm532, %v948, %v949
        %v951 = vsel %vm618, %v945, %v950
        %v954 = vadd.f32 %v927, %v951
        %v955 = vadd.f32 %v928, %v947
        %v958 = vcombine.high %v954, %v954
        %959 = vrot.lane.b32.xlu0 %v954, 112
        %v960 = vpop.permute.xlu0 %959
        %961 = vrot.lane.b32.xlu0 %v958, 112
        %v962 = vpop.permute.xlu0 %961
        %963 = vrot.lane.b32.xlu0 %v955, 112
        %v964 = vpop.permute.xlu0 %963
        %v965 = vsel %vm534, %v960, %v962
        %v966 = vsel %vm534, %v962, %v964
        %v969 = vadd.f32 %v829, %v965
        %v970 = vadd.f32 %v830, %v966
        %v971 = vld [vmem:[#allocation2] sm:$0xff]
        %v972 = vld [vmem:[#allocation2 + $0x8] sm:$0xf]
        %973 = vset.pattern.permute.xlu0 3
        %974 = vperm.xlu0 %973, %v485
        %v975 = vpop.permute.xlu0 %974
        %v977 = vunpack.c.l.s4 839922192
        %v978 = vunpack.c.0.s8 %v977
        %v979 = vlaneseq
        %v980 = vshrl.u32 %v979, 7
        %v981 = vsub.s32 %v978, %v980
        %v982 = vrot.slane %v975, %v981
        %v984 = vmul.f32 %v971, %v982
        %v985 = vmul.f32 %v972, %v982
        %v986 = vadd.f32 %v984, 0.0
        %v987 = vadd.f32 %v985, 0.0
        %988 = vset.pattern.permute.xlu0 8
        %989 = vperm.xlu0 %988, %v485
        %v990 = vpop.permute.xlu0 %989
        %v992 = vunpack.c.l.s4 839922192
        %v993 = vunpack.c.0.s8 %v992
        %v994 = vlaneseq
        %v995 = vshrl.u32 %v994, 7
        %v996 = vsub.s32 %v993, %v995
        %v997 = vrot.slane %v990, %v996
        %v999 = vmul.f32 %v971, %v997
        %v1000 = vmul.f32 %v972, %v997
        %1003 = vrot.lane.b32.xlu0 %v999, 112
        %v1004 = vpop.permute.xlu0 %1003
        %1005 = vrot.lane.b32.xlu0 %v1000, 112
        %v1006 = vpop.permute.xlu0 %1005
        %v1007 = vrot.slane %v1004, 4
        %v1008 = vrot.slane %v1006, 4
        %v1009 = vsel %vm532, %v1007, %v1008
        %v1010 = vsel %vm534, %v1004, %v1009
        %v1013 = vadd.f32 %v986, %v1010
        %v1014 = vadd.f32 %v987, %v1006
        %1015 = vset.pattern.permute.xlu0 13
        %1016 = vperm.xlu0 %1015, %v485
        %v1017 = vpop.permute.xlu0 %1016
        %v1019 = vunpack.c.l.s4 839922192
        %v1020 = vunpack.c.0.s8 %v1019
        %v1021 = vlaneseq
        %v1022 = vshrl.u32 %v1021, 7
        %v1023 = vsub.s32 %v1020, %v1022
        %v1024 = vrot.slane %v1017, %v1023
        %v1026 = vmul.f32 %v971, %v1024
        %v1027 = vmul.f32 %v972, %v1024
        %1030 = vrot.lane.b32.xlu0 %v1026, 96
        %v1031 = vpop.permute.xlu0 %1030
        %1032 = vrot.lane.b32.xlu0 %v1027, 96
        %v1033 = vpop.permute.xlu0 %1032
        %v1034 = vrot.slane %v1031, 4
        %v1035 = vrot.slane %v1033, 4
        %v1036 = vsel %vm532, %v1034, %v1035
        %v1037 = vsel %vm562, %v1031, %v1036
        %v1040 = vadd.f32 %v1013, %v1037
        %v1041 = vadd.f32 %v1014, %v1033
        %1042 = vset.pattern.permute.xlu0 18
        %1043 = vperm.xlu0 %1042, %v485
        %v1044 = vpop.permute.xlu0 %1043
        %v1046 = vunpack.c.l.s4 839922192
        %v1047 = vunpack.c.0.s8 %v1046
        %v1048 = vlaneseq
        %v1049 = vshrl.u32 %v1048, 7
        %v1050 = vsub.s32 %v1047, %v1049
        %v1051 = vrot.slane %v1044, %v1050
        %v1053 = vmul.f32 %v971, %v1051
        %v1054 = vmul.f32 %v972, %v1051
        %1057 = vrot.lane.b32.xlu0 %v1053, 80
        %v1058 = vpop.permute.xlu0 %1057
        %1059 = vrot.lane.b32.xlu0 %v1054, 80
        %v1060 = vpop.permute.xlu0 %1059
        %v1061 = vrot.slane %v1058, 4
        %v1062 = vrot.slane %v1060, 4
        %v1063 = vsel %vm532, %v1061, %v1062
        %v1064 = vsel %vm590, %v1058, %v1063
        %v1067 = vadd.f32 %v1040, %v1064
        %v1068 = vadd.f32 %v1041, %v1060
        %1069 = vset.pattern.permute.xlu0 23
        %1070 = vperm.xlu0 %1069, %v485
        %v1071 = vpop.permute.xlu0 %1070
        %v1073 = vunpack.c.l.s4 839922192
        %v1074 = vunpack.c.0.s8 %v1073
        %v1075 = vlaneseq
        %v1076 = vshrl.u32 %v1075, 7
        %v1077 = vsub.s32 %v1074, %v1076
        %v1078 = vrot.slane %v1071, %v1077
        %v1080 = vmul.f32 %v971, %v1078
        %v1081 = vmul.f32 %v972, %v1078
        %1084 = vrot.lane.b32.xlu0 %v1080, 64
        %v1085 = vpop.permute.xlu0 %1084
        %1086 = vrot.lane.b32.xlu0 %v1081, 64
        %v1087 = vpop.permute.xlu0 %1086
        %v1088 = vrot.slane %v1085, 4
        %v1089 = vrot.slane %v1087, 4
        %v1090 = vsel %vm532, %v1088, %v1089
        %v1091 = vsel %vm618, %v1085, %v1090
        %v1094 = vadd.f32 %v1067, %v1091
        %v1095 = vadd.f32 %v1068, %v1087
        %v1096 = vadd.s32 %v466, 1
        %vm1097 = vcmp.ge.s32.totalorder %v1096, 0
        %vm1098 = vcmp.lt.s32.totalorder %v1096, 16
        %vm1099 = vmand %vm1097, %vm1098
        %v1100 = vsel %vm1099, 1, 0
        %v1101 = vcvt.s32.f32 %v1100
        %v1103 = vlaneseq
        %v1104 = vshrl.u32 %v1103, 7
        %v1105 = vsub.s32 0, %v1104
        %v1106 = vrot.slane %v1101, %v1105
        %v1107 = vlaneseq
        %v1108 = vshrl.u32 %v1107, 7
        %v1109 = vsub.s32 1, %v1108
        %v1110 = vrot.slane %v1101, %v1109
        %v1111 = vcombine.low %v1106, %v1110
        %1112 = vrot.lane.b32.xlu0 %v1111, 17
        %v1113 = vpop.permute.xlu0 %1112
        %v1114 = vrot.slane %v1113, 4
        %vm1115 = vcmask 138240
        %v1116 = vsel %vm1115, %v1114, %v1113
        %v1119 = vmul.f32 %v1094, %v1116
        %v1120 = vmul.f32 %v1095, %v1114
        %v1123 = vcombine.high %v1119, %v1119
        %1124 = vrot.lane.b32.xlu0 %v1119, 111
        %v1125 = vpop.permute.xlu0 %1124
        %1126 = vrot.lane.b32.xlu0 %v1123, 111
        %v1127 = vpop.permute.xlu0 %1126
        %1128 = vrot.lane.b32.xlu0 %v1120, 111
        %v1129 = vpop.permute.xlu0 %1128
        %vm1130 = vcmask 908288
        %v1131 = vsel %vm1130, %v1125, %v1127
        %v1132 = vsel %vm1130, %v1127, %v1129
        %v1135 = vadd.f32 %v969, %v1131
        %v1136 = vadd.f32 %v970, %v1132
        %v1137 = vld [vmem:[#allocation2] sm:$0xff]
        %v1138 = vld [vmem:[#allocation2 + $0x8] sm:$0xf]
        %1139 = vset.pattern.permute.xlu0 4
        %1140 = vperm.xlu0 %1139, %v485
        %v1141 = vpop.permute.xlu0 %1140
        %v1143 = vunpack.c.l.s4 839922192
        %v1144 = vunpack.c.0.s8 %v1143
        %v1145 = vlaneseq
        %v1146 = vshrl.u32 %v1145, 7
        %v1147 = vsub.s32 %v1144, %v1146
        %v1148 = vrot.slane %v1141, %v1147
        %v1150 = vmul.f32 %v1137, %v1148
        %v1151 = vmul.f32 %v1138, %v1148
        %v1152 = vadd.f32 %v1150, 0.0
        %v1153 = vadd.f32 %v1151, 0.0
        %1154 = vset.pattern.permute.xlu0 9
        %1155 = vperm.xlu0 %1154, %v485
        %v1156 = vpop.permute.xlu0 %1155
        %v1158 = vunpack.c.l.s4 839922192
        %v1159 = vunpack.c.0.s8 %v1158
        %v1160 = vlaneseq
        %v1161 = vshrl.u32 %v1160, 7
        %v1162 = vsub.s32 %v1159, %v1161
        %v1163 = vrot.slane %v1156, %v1162
        %v1165 = vmul.f32 %v1137, %v1163
        %v1166 = vmul.f32 %v1138, %v1163
        %1169 = vrot.lane.b32.xlu0 %v1165, 112
        %v1170 = vpop.permute.xlu0 %1169
        %1171 = vrot.lane.b32.xlu0 %v1166, 112
        %v1172 = vpop.permute.xlu0 %1171
        %v1173 = vrot.slane %v1170, 4
        %v1174 = vrot.slane %v1172, 4
        %v1175 = vsel %vm532, %v1173, %v1174
        %v1176 = vsel %vm534, %v1170, %v1175
        %v1179 = vadd.f32 %v1152, %v1176
        %v1180 = vadd.f32 %v1153, %v1172
        %1181 = vset.pattern.permute.xlu0 14
        %1182 = vperm.xlu0 %1181, %v485
        %v1183 = vpop.permute.xlu0 %1182
        %v1185 = vunpack.c.l.s4 839922192
        %v1186 = vunpack.c.0.s8 %v1185
        %v1187 = vlaneseq
        %v1188 = vshrl.u32 %v1187, 7
        %v1189 = vsub.s32 %v1186, %v1188
        %v1190 = vrot.slane %v1183, %v1189
        %v1192 = vmul.f32 %v1137, %v1190
        %v1193 = vmul.f32 %v1138, %v1190
        %1196 = vrot.lane.b32.xlu0 %v1192, 96
        %v1197 = vpop.permute.xlu0 %1196
        %1198 = vrot.lane.b32.xlu0 %v1193, 96
        %v1199 = vpop.permute.xlu0 %1198
        %v1200 = vrot.slane %v1197, 4
        %v1201 = vrot.slane %v1199, 4
        %v1202 = vsel %vm532, %v1200, %v1201
        %v1203 = vsel %vm562, %v1197, %v1202
        %v1206 = vadd.f32 %v1179, %v1203
        %v1207 = vadd.f32 %v1180, %v1199
        %1208 = vset.pattern.permute.xlu0 19
        %1209 = vperm.xlu0 %1208, %v485
        %v1210 = vpop.permute.xlu0 %1209
        %v1212 = vunpack.c.l.s4 839922192
        %v1213 = vunpack.c.0.s8 %v1212
        %v1214 = vlaneseq
        %v1215 = vshrl.u32 %v1214, 7
        %v1216 = vsub.s32 %v1213, %v1215
        %v1217 = vrot.slane %v1210, %v1216
        %v1219 = vmul.f32 %v1137, %v1217
        %v1220 = vmul.f32 %v1138, %v1217
        %1223 = vrot.lane.b32.xlu0 %v1219, 80
        %v1224 = vpop.permute.xlu0 %1223
        %1225 = vrot.lane.b32.xlu0 %v1220, 80
        %v1226 = vpop.permute.xlu0 %1225
        %v1227 = vrot.slane %v1224, 4
        %v1228 = vrot.slane %v1226, 4
        %v1229 = vsel %vm532, %v1227, %v1228
        %v1230 = vsel %vm590, %v1224, %v1229
        %v1233 = vadd.f32 %v1206, %v1230
        %v1234 = vadd.f32 %v1207, %v1226
        %1235 = vset.pattern.permute.xlu0 24
        %1236 = vperm.xlu0 %1235, %v485
        %v1237 = vpop.permute.xlu0 %1236
        %v1239 = vunpack.c.l.s4 839922192
        %v1240 = vunpack.c.0.s8 %v1239
        %v1241 = vlaneseq
        %v1242 = vshrl.u32 %v1241, 7
        %v1243 = vsub.s32 %v1240, %v1242
        %v1244 = vrot.slane %v1237, %v1243
        %v1246 = vmul.f32 %v1137, %v1244
        %v1247 = vmul.f32 %v1138, %v1244
        %1250 = vrot.lane.b32.xlu0 %v1246, 64
        %v1251 = vpop.permute.xlu0 %1250
        %1252 = vrot.lane.b32.xlu0 %v1247, 64
        %v1253 = vpop.permute.xlu0 %1252
        %v1254 = vrot.slane %v1251, 4
        %v1255 = vrot.slane %v1253, 4
        %v1256 = vsel %vm532, %v1254, %v1255
        %v1257 = vsel %vm618, %v1251, %v1256
        %v1260 = vadd.f32 %v1233, %v1257
        %v1261 = vadd.f32 %v1234, %v1253
        %v1262 = vadd.s32 %v466, 2
        %vm1263 = vcmp.ge.s32.totalorder %v1262, 0
        %vm1264 = vcmp.lt.s32.totalorder %v1262, 16
        %vm1265 = vmand %vm1263, %vm1264
        %v1266 = vsel %vm1265, 1, 0
        %v1267 = vcvt.s32.f32 %v1266
        %v1269 = vlaneseq
        %v1270 = vshrl.u32 %v1269, 7
        %v1271 = vsub.s32 0, %v1270
        %v1272 = vrot.slane %v1267, %v1271
        %v1273 = vlaneseq
        %v1274 = vshrl.u32 %v1273, 7
        %v1275 = vsub.s32 1, %v1274
        %v1276 = vrot.slane %v1267, %v1275
        %v1277 = vcombine.low %v1272, %v1276
        %1278 = vrot.lane.b32.xlu0 %v1277, 18
        %v1279 = vpop.permute.xlu0 %1278
        %v1280 = vrot.slane %v1279, 4
        %vm1281 = vcmask 146432
        %v1282 = vsel %vm1281, %v1280, %v1279
        %v1285 = vmul.f32 %v1260, %v1282
        %v1286 = vmul.f32 %v1261, %v1280
        %v1289 = vcombine.high %v1285, %v1285
        %1290 = vrot.lane.b32.xlu0 %v1285, 110
        %v1291 = vpop.permute.xlu0 %1290
        %1292 = vrot.lane.b32.xlu0 %v1289, 110
        %v1293 = vpop.permute.xlu0 %1292
        %1294 = vrot.lane.b32.xlu0 %v1286, 110
        %v1295 = vpop.permute.xlu0 %1294
        %vm1296 = vcmask 900096
        %v1297 = vsel %vm1296, %v1291, %v1293
        %v1298 = vsel %vm1296, %v1293, %v1295
        %v1301 = vadd.f32 %v1135, %v1297
        %v1302 = vadd.f32 %v1136, %v1298
        %vm1303 = vcmask 261124
        %vm1304 = vmor %vm1303, %vm532
        %1305 = vst.msk [vmem:[#allocation3] sm:$0xff] %vm1304, 0.0
        %vm1306 = vcmask 1043712
        %vm1307 = vcmask 523268
        %vm1308 = vmor %vm1307, %vm1306
        %1309 = vst.msk [vmem:[#allocation3 + $0xc] sm:$0xff] %vm1308, 0.0
        %v1312 = vcombine.low %v1301, %v1302
        %1313 = vrot.lane.b32.xlu0 %v1312, 32
        %v1314 = vpop.permute.xlu0 %1313
        %v1315 = vrot.slane %v1314, 4
        %vm1316 = vcmask 261120
        %v1317 = vsel %vm1316, %v1315, %v1314
        %vm1320 = vmor %vm481, %vm1306
        %1321 = vst.msk [vmem:[#allocation3 + $0x4] sm:$0xff] %vm1320, %v1317
        %vm1322 = vcmask 257024
        %1323 = vst.msk [vmem:[#allocation3 + $0xc] sm:$0xf] %vm1322, %v1315
        %v1324 = vld [vmem:[%s4] sm:$0xf]
        %v1325 = vld [vmem:[%s5] sm:$0xf]
        %1327 = vset.pattern.permute.xlu0 0
        %1328 = vperm.xlu0 %1327, %v1325
        %v1329 = vpop.permute.xlu0 %1328
        %v1331 = vadd.f32 %v1329, 0.0
        %v1332 = vld [vmem:[#allocation3] sm:$0xff]
        %v1333 = vld [vmem:[#allocation3 + $0x8] sm:$0xf]
        %1335 = vset.pattern.permute.xlu0 0
        %1336 = vperm.xlu0 %1335, %v1324
        %v1337 = vpop.permute.xlu0 %1336
        %v1339 = vunpack.c.l.s4 839922192
        %v1340 = vunpack.c.0.s8 %v1339
        %v1341 = vlaneseq
        %v1342 = vshrl.u32 %v1341, 7
        %v1343 = vsub.s32 %v1340, %v1342
        %v1344 = vrot.slane %v1337, %v1343
        %v1346 = vmul.f32 %v1332, %v1344
        %v1347 = vmul.f32 %v1333, %v1344
        %v1348 = vadd.f32 %v1346, 0.0
        %v1349 = vadd.f32 %v1347, 0.0
        %1350 = vset.pattern.permute.xlu0 7
        %1351 = vperm.xlu0 %1350, %v1324
        %v1352 = vpop.permute.xlu0 %1351
        %v1354 = vunpack.c.l.s4 839922192
        %v1355 = vunpack.c.0.s8 %v1354
        %v1356 = vlaneseq
        %v1357 = vshrl.u32 %v1356, 7
        %v1358 = vsub.s32 %v1355, %v1357
        %v1359 = vrot.slane %v1352, %v1358
        %v1361 = vmul.f32 %v1332, %v1359
        %v1362 = vmul.f32 %v1333, %v1359
        %1365 = vrot.lane.b32.xlu0 %v1361, 80
        %v1366 = vpop.permute.xlu0 %1365
        %1367 = vrot.lane.b32.xlu0 %v1362, 80
        %v1368 = vpop.permute.xlu0 %1367
        %v1369 = vrot.slane %v1366, 4
        %v1370 = vrot.slane %v1368, 4
        %v1371 = vsel %vm532, %v1369, %v1370
        %v1372 = vsel %vm590, %v1366, %v1371
        %v1375 = vadd.f32 %v1348, %v1372
        %v1376 = vadd.f32 %v1349, %v1368
        %1377 = vset.pattern.permute.xlu0 14
        %1378 = vperm.xlu0 %1377, %v1324
        %v1379 = vpop.permute.xlu0 %1378
        %v1381 = vunpack.c.l.s4 839922192
        %v1382 = vunpack.c.0.s8 %v1381
        %v1383 = vlaneseq
        %v1384 = vshrl.u32 %v1383, 7
        %v1385 = vsub.s32 %v1382, %v1384
        %v1386 = vrot.slane %v1379, %v1385
        %v1388 = vmul.f32 %v1332, %v1386
        %v1389 = vmul.f32 %v1333, %v1386
        %1392 = vrot.lane.b32.xlu0 %v1388, 32
        %v1393 = vpop.permute.xlu0 %1392
        %1394 = vrot.lane.b32.xlu0 %v1389, 32
        %v1395 = vpop.permute.xlu0 %1394
        %v1396 = vrot.slane %v1393, 4
        %v1397 = vrot.slane %v1395, 4
        %v1398 = vsel %vm532, %v1396, %v1397
        %v1399 = vsel %vm1316, %v1393, %v1398
        %v1402 = vadd.f32 %v1375, %v1399
        %v1403 = vadd.f32 %v1376, %v1395
        %v1404 = vld [vmem:[#allocation3 + $0x4] sm:$0xff]
        %v1405 = vld [vmem:[#allocation3 + $0xc] sm:$0xf]
        %1406 = vset.pattern.permute.xlu0 21
        %1407 = vperm.xlu0 %1406, %v1324
        %v1408 = vpop.permute.xlu0 %1407
        %v1410 = vunpack.c.l.s4 839922192
        %v1411 = vunpack.c.0.s8 %v1410
        %v1412 = vlaneseq
        %v1413 = vshrl.u32 %v1412, 7
        %v1414 = vsub.s32 %v1411, %v1413
        %v1415 = vrot.slane %v1408, %v1414
        %v1417 = vmul.f32 %v1404, %v1415
        %v1418 = vmul.f32 %v1405, %v1415
        %1421 = vrot.lane.b32.xlu0 %v1417, 112
        %v1422 = vpop.permute.xlu0 %1421
        %1423 = vrot.lane.b32.xlu0 %v1418, 112
        %v1424 = vpop.permute.xlu0 %1423
        %v1425 = vrot.slane %v1422, 4
        %v1426 = vrot.slane %v1424, 4
        %v1427 = vsel %vm532, %v1425, %v1426
        %v1428 = vsel %vm534, %v1422, %v1427
        %v1431 = vadd.f32 %v1402, %v1428
        %v1432 = vadd.f32 %v1403, %v1424
        %1433 = vset.pattern.permute.xlu0 28
        %1434 = vperm.xlu0 %1433, %v1324
        %v1435 = vpop.permute.xlu0 %1434
        %v1437 = vunpack.c.l.s4 839922192
        %v1438 = vunpack.c.0.s8 %v1437
        %v1439 = vlaneseq
        %v1440 = vshrl.u32 %v1439, 7
        %v1441 = vsub.s32 %v1438, %v1440
        %v1442 = vrot.slane %v1435, %v1441
        %v1444 = vmul.f32 %v1404, %v1442
        %v1445 = vmul.f32 %v1405, %v1442
        %1448 = vrot.lane.b32.xlu0 %v1444, 64
        %v1449 = vpop.permute.xlu0 %1448
        %1450 = vrot.lane.b32.xlu0 %v1445, 64
        %v1451 = vpop.permute.xlu0 %1450
        %v1452 = vrot.slane %v1449, 4
        %v1453 = vrot.slane %v1451, 4
        %v1454 = vsel %vm532, %v1452, %v1453
        %v1455 = vsel %vm618, %v1449, %v1454
        %v1458 = vadd.f32 %v1431, %v1455
        %v1459 = vadd.f32 %v1432, %v1451
        %1460 = vset.pattern.permute.xlu0 35
        %1461 = vperm.xlu0 %1460, %v1324
        %v1462 = vpop.permute.xlu0 %1461
        %v1464 = vunpack.c.l.s4 839922192
        %v1465 = vunpack.c.0.s8 %v1464
        %v1466 = vlaneseq
        %v1467 = vshrl.u32 %v1466, 7
        %v1468 = vsub.s32 %v1465, %v1467
        %v1469 = vrot.slane %v1462, %v1468
        %v1471 = vmul.f32 %v1404, %v1469
        %v1472 = vmul.f32 %v1405, %v1469
        %1475 = vrot.lane.b32.xlu0 %v1471, 16
        %v1476 = vpop.permute.xlu0 %1475
        %1477 = vrot.lane.b32.xlu0 %v1472, 16
        %v1478 = vpop.permute.xlu0 %1477
        %v1479 = vrot.slane %v1476, 4
        %v1480 = vrot.slane %v1478, 4
        %v1481 = vsel %vm532, %v1479, %v1480
        %vm1482 = vcmask 130048
        %v1483 = vsel %vm1482, %v1476, %v1481
        %v1486 = vadd.f32 %v1458, %v1483
        %v1487 = vadd.f32 %v1459, %v1478
        %v1488 = vld [vmem:[#allocation3 + $0x8] sm:$0xff]
        %v1489 = vld [vmem:[#allocation3 + $0x10] sm:$0xf]
        %1490 = vset.pattern.permute.xlu0 42
        %1491 = vperm.xlu0 %1490, %v1324
        %v1492 = vpop.permute.xlu0 %1491
        %v1494 = vunpack.c.l.s4 839922192
        %v1495 = vunpack.c.0.s8 %v1494
        %v1496 = vlaneseq
        %v1497 = vshrl.u32 %v1496, 7
        %v1498 = vsub.s32 %v1495, %v1497
        %v1499 = vrot.slane %v1492, %v1498
        %v1501 = vmul.f32 %v1488, %v1499
        %v1502 = vmul.f32 %v1489, %v1499
        %1505 = vrot.lane.b32.xlu0 %v1501, 96
        %v1506 = vpop.permute.xlu0 %1505
        %1507 = vrot.lane.b32.xlu0 %v1502, 96
        %v1508 = vpop.permute.xlu0 %1507
        %v1509 = vrot.slane %v1506, 4
        %v1510 = vrot.slane %v1508, 4
        %v1511 = vsel %vm532, %v1509, %v1510
        %v1512 = vsel %vm562, %v1506, %v1511
        %v1515 = vadd.f32 %v1486, %v1512
        %v1516 = vadd.f32 %v1487, %v1508
        %v1517 = vadd.s32 %v466, 4294967287
        %vm1518 = vcmp.ge.s32.totalorder %v1517, 0
        %vm1519 = vcmp.lt.s32.totalorder %v1517, 16
        %vm1520 = vmand %vm1518, %vm1519
        %v1521 = vsel %vm1520, 1, 0
        %v1522 = vcvt.s32.f32 %v1521
        %v1524 = vlaneseq
        %v1525 = vshrl.u32 %v1524, 7
        %v1526 = vsub.s32 0, %v1525
        %v1527 = vrot.slane %v1522, %v1526
        %v1528 = vlaneseq
        %v1529 = vshrl.u32 %v1528, 7
        %v1530 = vsub.s32 1, %v1529
        %v1531 = vrot.slane %v1522, %v1530
        %v1532 = vcombine.low %v1527, %v1531
        %1533 = vrot.lane.b32.xlu0 %v1532, 7
        %v1534 = vpop.permute.xlu0 %1533
        %v1535 = vrot.slane %v1534, 4
        %vm1536 = vcmask 56320
        %v1537 = vsel %vm1536, %v1535, %v1534
        %v1540 = vmul.f32 %v1515, %v1537
        %v1541 = vmul.f32 %v1516, %v1535
        %v1544 = vcombine.high %v1540, %v1540
        %1545 = vrot.lane.b32.xlu0 %v1540, 121
        %v1546 = vpop.permute.xlu0 %1545
        %1547 = vrot.lane.b32.xlu0 %v1544, 121
        %v1548 = vpop.permute.xlu0 %1547
        %1549 = vrot.lane.b32.xlu0 %v1541, 121
        %v1550 = vpop.permute.xlu0 %1549
        %vm1551 = vcmask 990208
        %v1552 = vsel %vm1551, %v1546, %v1548
        %v1553 = vsel %vm1551, %v1548, %v1550
        %v1556 = vadd.f32 %v1331, %v1552
        %v1557 = vadd.f32 %v1331, %v1553
        %v1558 = vld [vmem:[#allocation3] sm:$0xff]
        %v1559 = vld [vmem:[#allocation3 + $0x8] sm:$0xf]
        %1560 = vset.pattern.permute.xlu0 1
        %1561 = vperm.xlu0 %1560, %v1324
        %v1562 = vpop.permute.xlu0 %1561
        %v1564 = vunpack.c.l.s4 839922192
        %v1565 = vunpack.c.0.s8 %v1564
        %v1566 = vlaneseq
        %v1567 = vshrl.u32 %v1566, 7
        %v1568 = vsub.s32 %v1565, %v1567
        %v1569 = vrot.slane %v1562, %v1568
        %v1571 = vmul.f32 %v1558, %v1569
        %v1572 = vmul.f32 %v1559, %v1569
        %v1573 = vadd.f32 %v1571, 0.0
        %v1574 = vadd.f32 %v1572, 0.0
        %1575 = vset.pattern.permute.xlu0 8
        %1576 = vperm.xlu0 %1575, %v1324
        %v1577 = vpop.permute.xlu0 %1576
        %v1579 = vunpack.c.l.s4 839922192
        %v1580 = vunpack.c.0.s8 %v1579
        %v1581 = vlaneseq
        %v1582 = vshrl.u32 %v1581, 7
        %v1583 = vsub.s32 %v1580, %v1582
        %v1584 = vrot.slane %v1577, %v1583
        %v1586 = vmul.f32 %v1558, %v1584
        %v1587 = vmul.f32 %v1559, %v1584
        %1590 = vrot.lane.b32.xlu0 %v1586, 80
        %v1591 = vpop.permute.xlu0 %1590
        %1592 = vrot.lane.b32.xlu0 %v1587, 80
        %v1593 = vpop.permute.xlu0 %1592
        %v1594 = vrot.slane %v1591, 4
        %v1595 = vrot.slane %v1593, 4
        %v1596 = vsel %vm532, %v1594, %v1595
        %v1597 = vsel %vm590, %v1591, %v1596
        %v1600 = vadd.f32 %v1573, %v1597
        %v1601 = vadd.f32 %v1574, %v1593
        %1602 = vset.pattern.permute.xlu0 15
        %1603 = vperm.xlu0 %1602, %v1324
        %v1604 = vpop.permute.xlu0 %1603
        %v1606 = vunpack.c.l.s4 839922192
        %v1607 = vunpack.c.0.s8 %v1606
        %v1608 = vlaneseq
        %v1609 = vshrl.u32 %v1608, 7
        %v1610 = vsub.s32 %v1607, %v1609
        %v1611 = vrot.slane %v1604, %v1610
        %v1613 = vmul.f32 %v1558, %v1611
        %v1614 = vmul.f32 %v1559, %v1611
        %1617 = vrot.lane.b32.xlu0 %v1613, 32
        %v1618 = vpop.permute.xlu0 %1617
        %1619 = vrot.lane.b32.xlu0 %v1614, 32
        %v1620 = vpop.permute.xlu0 %1619
        %v1621 = vrot.slane %v1618, 4
        %v1622 = vrot.slane %v1620, 4
        %v1623 = vsel %vm532, %v1621, %v1622
        %v1624 = vsel %vm1316, %v1618, %v1623
        %v1627 = vadd.f32 %v1600, %v1624
        %v1628 = vadd.f32 %v1601, %v1620
        %v1629 = vld [vmem:[#allocation3 + $0x4] sm:$0xff]
        %v1630 = vld [vmem:[#allocation3 + $0xc] sm:$0xf]
        %1631 = vset.pattern.permute.xlu0 22
        %1632 = vperm.xlu0 %1631, %v1324
        %v1633 = vpop.permute.xlu0 %1632
        %v1635 = vunpack.c.l.s4 839922192
        %v1636 = vunpack.c.0.s8 %v1635
        %v1637 = vlaneseq
        %v1638 = vshrl.u32 %v1637, 7
        %v1639 = vsub.s32 %v1636, %v1638
        %v1640 = vrot.slane %v1633, %v1639
        %v1642 = vmul.f32 %v1629, %v1640
        %v1643 = vmul.f32 %v1630, %v1640
        %1646 = vrot.lane.b32.xlu0 %v1642, 112
        %v1647 = vpop.permute.xlu0 %1646
        %1648 = vrot.lane.b32.xlu0 %v1643, 112
        %v1649 = vpop.permute.xlu0 %1648
        %v1650 = vrot.slane %v1647, 4
        %v1651 = vrot.slane %v1649, 4
        %v1652 = vsel %vm532, %v1650, %v1651
        %v1653 = vsel %vm534, %v1647, %v1652
        %v1656 = vadd.f32 %v1627, %v1653
        %v1657 = vadd.f32 %v1628, %v1649
        %1658 = vset.pattern.permute.xlu0 29
        %1659 = vperm.xlu0 %1658, %v1324
        %v1660 = vpop.permute.xlu0 %1659
        %v1662 = vunpack.c.l.s4 839922192
        %v1663 = vunpack.c.0.s8 %v1662
        %v1664 = vlaneseq
        %v1665 = vshrl.u32 %v1664, 7
        %v1666 = vsub.s32 %v1663, %v1665
        %v1667 = vrot.slane %v1660, %v1666
        %v1669 = vmul.f32 %v1629, %v1667
        %v1670 = vmul.f32 %v1630, %v1667
        %1673 = vrot.lane.b32.xlu0 %v1669, 64
        %v1674 = vpop.permute.xlu0 %1673
        %1675 = vrot.lane.b32.xlu0 %v1670, 64
        %v1676 = vpop.permute.xlu0 %1675
        %v1677 = vrot.slane %v1674, 4
        %v1678 = vrot.slane %v1676, 4
        %v1679 = vsel %vm532, %v1677, %v1678
        %v1680 = vsel %vm618, %v1674, %v1679
        %v1683 = vadd.f32 %v1656, %v1680
        %v1684 = vadd.f32 %v1657, %v1676
        %1685 = vset.pattern.permute.xlu0 36
        %1686 = vperm.xlu0 %1685, %v1324
        %v1687 = vpop.permute.xlu0 %1686
        %v1689 = vunpack.c.l.s4 839922192
        %v1690 = vunpack.c.0.s8 %v1689
        %v1691 = vlaneseq
        %v1692 = vshrl.u32 %v1691, 7
        %v1693 = vsub.s32 %v1690, %v1692
        %v1694 = vrot.slane %v1687, %v1693
        %v1696 = vmul.f32 %v1629, %v1694
        %v1697 = vmul.f32 %v1630, %v1694
        %1700 = vrot.lane.b32.xlu0 %v1696, 16
        %v1701 = vpop.permute.xlu0 %1700
        %1702 = vrot.lane.b32.xlu0 %v1697, 16
        %v1703 = vpop.permute.xlu0 %1702
        %v1704 = vrot.slane %v1701, 4
        %v1705 = vrot.slane %v1703, 4
        %v1706 = vsel %vm532, %v1704, %v1705
        %v1707 = vsel %vm1482, %v1701, %v1706
        %v1710 = vadd.f32 %v1683, %v1707
        %v1711 = vadd.f32 %v1684, %v1703
        %v1712 = vld [vmem:[#allocation3 + $0x8] sm:$0xff]
        %v1713 = vld [vmem:[#allocation3 + $0x10] sm:$0xf]
        %1714 = vset.pattern.permute.xlu0 43
        %1715 = vperm.xlu0 %1714, %v1324
        %v1716 = vpop.permute.xlu0 %1715
        %v1718 = vunpack.c.l.s4 839922192
        %v1719 = vunpack.c.0.s8 %v1718
        %v1720 = vlaneseq
        %v1721 = vshrl.u32 %v1720, 7
        %v1722 = vsub.s32 %v1719, %v1721
        %v1723 = vrot.slane %v1716, %v1722
        %v1725 = vmul.f32 %v1712, %v1723
        %v1726 = vmul.f32 %v1713, %v1723
        %1729 = vrot.lane.b32.xlu0 %v1725, 96
        %v1730 = vpop.permute.xlu0 %1729
        %1731 = vrot.lane.b32.xlu0 %v1726, 96
        %v1732 = vpop.permute.xlu0 %1731
        %v1733 = vrot.slane %v1730, 4
        %v1734 = vrot.slane %v1732, 4
        %v1735 = vsel %vm532, %v1733, %v1734
        %v1736 = vsel %vm562, %v1730, %v1735
        %v1739 = vadd.f32 %v1710, %v1736
        %v1740 = vadd.f32 %v1711, %v1732
        %v1741 = vadd.s32 %v466, 4294967290
        %vm1742 = vcmp.ge.s32.totalorder %v1741, 0
        %vm1743 = vcmp.lt.s32.totalorder %v1741, 16
        %vm1744 = vmand %vm1742, %vm1743
        %v1745 = vsel %vm1744, 1, 0
        %v1746 = vcvt.s32.f32 %v1745
        %v1748 = vlaneseq
        %v1749 = vshrl.u32 %v1748, 7
        %v1750 = vsub.s32 0, %v1749
        %v1751 = vrot.slane %v1746, %v1750
        %v1752 = vlaneseq
        %v1753 = vshrl.u32 %v1752, 7
        %v1754 = vsub.s32 1, %v1753
        %v1755 = vrot.slane %v1746, %v1754
        %v1756 = vcombine.low %v1751, %v1755
        %1757 = vrot.lane.b32.xlu0 %v1756, 10
        %v1758 = vpop.permute.xlu0 %1757
        %v1759 = vrot.slane %v1758, 4
        %vm1760 = vcmask 80896
        %v1761 = vsel %vm1760, %v1759, %v1758
        %v1764 = vmul.f32 %v1739, %v1761
        %v1765 = vmul.f32 %v1740, %v1759
        %v1768 = vcombine.high %v1764, %v1764
        %1769 = vrot.lane.b32.xlu0 %v1764, 118
        %v1770 = vpop.permute.xlu0 %1769
        %1771 = vrot.lane.b32.xlu0 %v1768, 118
        %v1772 = vpop.permute.xlu0 %1771
        %1773 = vrot.lane.b32.xlu0 %v1765, 118
        %v1774 = vpop.permute.xlu0 %1773
        %vm1775 = vcmask 965632
        %v1776 = vsel %vm1775, %v1770, %v1772
        %v1777 = vsel %vm1775, %v1772, %v1774
        %v1780 = vadd.f32 %v1556, %v1776
        %v1781 = vadd.f32 %v1557, %v1777
        %v1782 = vld [vmem:[#allocation3] sm:$0xff]
        %v1783 = vld [vmem:[#allocation3 + $0x8] sm:$0xf]
        %1784 = vset.pattern.permute.xlu0 2
        %1785 = vperm.xlu0 %1784, %v1324
        %v1786 = vpop.permute.xlu0 %1785
        %v1788 = vunpack.c.l.s4 839922192
        %v1789 = vunpack.c.0.s8 %v1788
        %v1790 = vlaneseq
        %v1791 = vshrl.u32 %v1790, 7
        %v1792 = vsub.s32 %v1789, %v1791
        %v1793 = vrot.slane %v1786, %v1792
        %v1795 = vmul.f32 %v1782, %v1793
        %v1796 = vmul.f32 %v1783, %v1793
        %v1797 = vadd.f32 %v1795, 0.0
        %v1798 = vadd.f32 %v1796, 0.0
        %1799 = vset.pattern.permute.xlu0 9
        %1800 = vperm.xlu0 %1799, %v1324
        %v1801 = vpop.permute.xlu0 %1800
        %v1803 = vunpack.c.l.s4 839922192
        %v1804 = vunpack.c.0.s8 %v1803
        %v1805 = vlaneseq
        %v1806 = vshrl.u32 %v1805, 7
        %v1807 = vsub.s32 %v1804, %v1806
        %v1808 = vrot.slane %v1801, %v1807
        %v1810 = vmul.f32 %v1782, %v1808
        %v1811 = vmul.f32 %v1783, %v1808
        %1814 = vrot.lane.b32.xlu0 %v1810, 80
        %v1815 = vpop.permute.xlu0 %1814
        %1816 = vrot.lane.b32.xlu0 %v1811, 80
        %v1817 = vpop.permute.xlu0 %1816
        %v1818 = vrot.slane %v1815, 4
        %v1819 = vrot.slane %v1817, 4
        %v1820 = vsel %vm532, %v1818, %v1819
        %v1821 = vsel %vm590, %v1815, %v1820
        %v1824 = vadd.f32 %v1797, %v1821
        %v1825 = vadd.f32 %v1798, %v1817
        %1826 = vset.pattern.permute.xlu0 16
        %1827 = vperm.xlu0 %1826, %v1324
        %v1828 = vpop.permute.xlu0 %1827
        %v1830 = vunpack.c.l.s4 839922192
        %v1831 = vunpack.c.0.s8 %v1830
        %v1832 = vlaneseq
        %v1833 = vshrl.u32 %v1832, 7
        %v1834 = vsub.s32 %v1831, %v1833
        %v1835 = vrot.slane %v1828, %v1834
        %v1837 = vmul.f32 %v1782, %v1835
        %v1838 = vmul.f32 %v1783, %v1835
        %1841 = vrot.lane.b32.xlu0 %v1837, 32
        %v1842 = vpop.permute.xlu0 %1841
        %1843 = vrot.lane.b32.xlu0 %v1838, 32
        %v1844 = vpop.permute.xlu0 %1843
        %v1845 = vrot.slane %v1842, 4
        %v1846 = vrot.slane %v1844, 4
        %v1847 = vsel %vm532, %v1845, %v1846
        %v1848 = vsel %vm1316, %v1842, %v1847
        %v1851 = vadd.f32 %v1824, %v1848
        %v1852 = vadd.f32 %v1825, %v1844
        %v1853 = vld [vmem:[#allocation3 + $0x4] sm:$0xff]
        %v1854 = vld [vmem:[#allocation3 + $0xc] sm:$0xf]
        %1855 = vset.pattern.permute.xlu0 23
        %1856 = vperm.xlu0 %1855, %v1324
        %v1857 = vpop.permute.xlu0 %1856
        %v1859 = vunpack.c.l.s4 839922192
        %v1860 = vunpack.c.0.s8 %v1859
        %v1861 = vlaneseq
        %v1862 = vshrl.u32 %v1861, 7
        %v1863 = vsub.s32 %v1860, %v1862
        %v1864 = vrot.slane %v1857, %v1863
        %v1866 = vmul.f32 %v1853, %v1864
        %v1867 = vmul.f32 %v1854, %v1864
        %1870 = vrot.lane.b32.xlu0 %v1866, 112
        %v1871 = vpop.permute.xlu0 %1870
        %1872 = vrot.lane.b32.xlu0 %v1867, 112
        %v1873 = vpop.permute.xlu0 %1872
        %v1874 = vrot.slane %v1871, 4
        %v1875 = vrot.slane %v1873, 4
        %v1876 = vsel %vm532, %v1874, %v1875
        %v1877 = vsel %vm534, %v1871, %v1876
        %v1880 = vadd.f32 %v1851, %v1877
        %v1881 = vadd.f32 %v1852, %v1873
        %1882 = vset.pattern.permute.xlu0 30
        %1883 = vperm.xlu0 %1882, %v1324
        %v1884 = vpop.permute.xlu0 %1883
        %v1886 = vunpack.c.l.s4 839922192
        %v1887 = vunpack.c.0.s8 %v1886
        %v1888 = vlaneseq
        %v1889 = vshrl.u32 %v1888, 7
        %v1890 = vsub.s32 %v1887, %v1889
        %v1891 = vrot.slane %v1884, %v1890
        %v1893 = vmul.f32 %v1853, %v1891
        %v1894 = vmul.f32 %v1854, %v1891
        %1897 = vrot.lane.b32.xlu0 %v1893, 64
        %v1898 = vpop.permute.xlu0 %1897
        %1899 = vrot.lane.b32.xlu0 %v1894, 64
        %v1900 = vpop.permute.xlu0 %1899
        %v1901 = vrot.slane %v1898, 4
        %v1902 = vrot.slane %v1900, 4
        %v1903 = vsel %vm532, %v1901, %v1902
        %v1904 = vsel %vm618, %v1898, %v1903
        %v1907 = vadd.f32 %v1880, %v1904
        %v1908 = vadd.f32 %v1881, %v1900
        %1909 = vset.pattern.permute.xlu0 37
        %1910 = vperm.xlu0 %1909, %v1324
        %v1911 = vpop.permute.xlu0 %1910
        %v1913 = vunpack.c.l.s4 839922192
        %v1914 = vunpack.c.0.s8 %v1913
        %v1915 = vlaneseq
        %v1916 = vshrl.u32 %v1915, 7
        %v1917 = vsub.s32 %v1914, %v1916
        %v1918 = vrot.slane %v1911, %v1917
        %v1920 = vmul.f32 %v1853, %v1918
        %v1921 = vmul.f32 %v1854, %v1918
        %1924 = vrot.lane.b32.xlu0 %v1920, 16
        %v1925 = vpop.permute.xlu0 %1924
        %1926 = vrot.lane.b32.xlu0 %v1921, 16
        %v1927 = vpop.permute.xlu0 %1926
        %v1928 = vrot.slane %v1925, 4
        %v1929 = vrot.slane %v1927, 4
        %v1930 = vsel %vm532, %v1928, %v1929
        %v1931 = vsel %vm1482, %v1925, %v1930
        %v1934 = vadd.f32 %v1907, %v1931
        %v1935 = vadd.f32 %v1908, %v1927
        %v1936 = vld [vmem:[#allocation3 + $0x8] sm:$0xff]
        %v1937 = vld [vmem:[#allocation3 + $0x10] sm:$0xf]
        %1938 = vset.pattern.permute.xlu0 44
        %1939 = vperm.xlu0 %1938, %v1324
        %v1940 = vpop.permute.xlu0 %1939
        %v1942 = vunpack.c.l.s4 839922192
        %v1943 = vunpack.c.0.s8 %v1942
        %v1944 = vlaneseq
        %v1945 = vshrl.u32 %v1944, 7
        %v1946 = vsub.s32 %v1943, %v1945
        %v1947 = vrot.slane %v1940, %v1946
        %v1949 = vmul.f32 %v1936, %v1947
        %v1950 = vmul.f32 %v1937, %v1947
        %1953 = vrot.lane.b32.xlu0 %v1949, 96
        %v1954 = vpop.permute.xlu0 %1953
        %1955 = vrot.lane.b32.xlu0 %v1950, 96
        %v1956 = vpop.permute.xlu0 %1955
        %v1957 = vrot.slane %v1954, 4
        %v1958 = vrot.slane %v1956, 4
        %v1959 = vsel %vm532, %v1957, %v1958
        %v1960 = vsel %vm562, %v1954, %v1959
        %v1963 = vadd.f32 %v1934, %v1960
        %v1964 = vadd.f32 %v1935, %v1956
        %v1965 = vadd.s32 %v466, 4294967293
        %vm1966 = vcmp.ge.s32.totalorder %v1965, 0
        %vm1967 = vcmp.lt.s32.totalorder %v1965, 16
        %vm1968 = vmand %vm1966, %vm1967
        %v1969 = vsel %vm1968, 1, 0
        %v1970 = vcvt.s32.f32 %v1969
        %v1972 = vlaneseq
        %v1973 = vshrl.u32 %v1972, 7
        %v1974 = vsub.s32 0, %v1973
        %v1975 = vrot.slane %v1970, %v1974
        %v1976 = vlaneseq
        %v1977 = vshrl.u32 %v1976, 7
        %v1978 = vsub.s32 1, %v1977
        %v1979 = vrot.slane %v1970, %v1978
        %v1980 = vcombine.low %v1975, %v1979
        %1981 = vrot.lane.b32.xlu0 %v1980, 13
        %v1982 = vpop.permute.xlu0 %1981
        %v1983 = vrot.slane %v1982, 4
        %vm1984 = vcmask 105472
        %v1985 = vsel %vm1984, %v1983, %v1982
        %v1988 = vmul.f32 %v1963, %v1985
        %v1989 = vmul.f32 %v1964, %v1983
        %v1992 = vcombine.high %v1988, %v1988
        %1993 = vrot.lane.b32.xlu0 %v1988, 115
        %v1994 = vpop.permute.xlu0 %1993
        %1995 = vrot.lane.b32.xlu0 %v1992, 115
        %v1996 = vpop.permute.xlu0 %1995
        %1997 = vrot.lane.b32.xlu0 %v1989, 115
        %v1998 = vpop.permute.xlu0 %1997
        %vm1999 = vcmask 941056
        %v2000 = vsel %vm1999, %v1994, %v1996
        %v2001 = vsel %vm1999, %v1996, %v1998
        %v2004 = vadd.f32 %v1780, %v2000
        %v2005 = vadd.f32 %v1781, %v2001
        %v2006 = vld [vmem:[#allocation3] sm:$0xff]
        %v2007 = vld [vmem:[#allocation3 + $0x8] sm:$0xf]
        %2008 = vset.pattern.permute.xlu0 3
        %2009 = vperm.xlu0 %2008, %v1324
        %v2010 = vpop.permute.xlu0 %2009
        %v2012 = vunpack.c.l.s4 839922192
        %v2013 = vunpack.c.0.s8 %v2012
        %v2014 = vlaneseq
        %v2015 = vshrl.u32 %v2014, 7
        %v2016 = vsub.s32 %v2013, %v2015
        %v2017 = vrot.slane %v2010, %v2016
        %v2019 = vmul.f32 %v2006, %v2017
        %v2020 = vmul.f32 %v2007, %v2017
        %v2021 = vadd.f32 %v2019, 0.0
        %v2022 = vadd.f32 %v2020, 0.0
        %2023 = vset.pattern.permute.xlu0 10
        %2024 = vperm.xlu0 %2023, %v1324
        %v2025 = vpop.permute.xlu0 %2024
        %v2027 = vunpack.c.l.s4 839922192
        %v2028 = vunpack.c.0.s8 %v2027
        %v2029 = vlaneseq
        %v2030 = vshrl.u32 %v2029, 7
        %v2031 = vsub.s32 %v2028, %v2030
        %v2032 = vrot.slane %v2025, %v2031
        %v2034 = vmul.f32 %v2006, %v2032
        %v2035 = vmul.f32 %v2007, %v2032
        %2038 = vrot.lane.b32.xlu0 %v2034, 80
        %v2039 = vpop.permute.xlu0 %2038
        %2040 = vrot.lane.b32.xlu0 %v2035, 80
        %v2041 = vpop.permute.xlu0 %2040
        %v2042 = vrot.slane %v2039, 4
        %v2043 = vrot.slane %v2041, 4
        %v2044 = vsel %vm532, %v2042, %v2043
        %v2045 = vsel %vm590, %v2039, %v2044
        %v2048 = vadd.f32 %v2021, %v2045
        %v2049 = vadd.f32 %v2022, %v2041
        %2050 = vset.pattern.permute.xlu0 17
        %2051 = vperm.xlu0 %2050, %v1324
        %v2052 = vpop.permute.xlu0 %2051
        %v2054 = vunpack.c.l.s4 839922192
        %v2055 = vunpack.c.0.s8 %v2054
        %v2056 = vlaneseq
        %v2057 = vshrl.u32 %v2056, 7
        %v2058 = vsub.s32 %v2055, %v2057
        %v2059 = vrot.slane %v2052, %v2058
        %v2061 = vmul.f32 %v2006, %v2059
        %v2062 = vmul.f32 %v2007, %v2059
        %2065 = vrot.lane.b32.xlu0 %v2061, 32
        %v2066 = vpop.permute.xlu0 %2065
        %2067 = vrot.lane.b32.xlu0 %v2062, 32
        %v2068 = vpop.permute.xlu0 %2067
        %v2069 = vrot.slane %v2066, 4
        %v2070 = vrot.slane %v2068, 4
        %v2071 = vsel %vm532, %v2069, %v2070
        %v2072 = vsel %vm1316, %v2066, %v2071
        %v2075 = vadd.f32 %v2048, %v2072
        %v2076 = vadd.f32 %v2049, %v2068
        %v2077 = vld [vmem:[#allocation3 + $0x4] sm:$0xff]
        %v2078 = vld [vmem:[#allocation3 + $0xc] sm:$0xf]
        %2079 = vset.pattern.permute.xlu0 24
        %2080 = vperm.xlu0 %2079, %v1324
        %v2081 = vpop.permute.xlu0 %2080
        %v2083 = vunpack.c.l.s4 839922192
        %v2084 = vunpack.c.0.s8 %v2083
        %v2085 = vlaneseq
        %v2086 = vshrl.u32 %v2085, 7
        %v2087 = vsub.s32 %v2084, %v2086
        %v2088 = vrot.slane %v2081, %v2087
        %v2090 = vmul.f32 %v2077, %v2088
        %v2091 = vmul.f32 %v2078, %v2088
        %2094 = vrot.lane.b32.xlu0 %v2090, 112
        %v2095 = vpop.permute.xlu0 %2094
        %2096 = vrot.lane.b32.xlu0 %v2091, 112
        %v2097 = vpop.permute.xlu0 %2096
        %v2098 = vrot.slane %v2095, 4
        %v2099 = vrot.slane %v2097, 4
        %v2100 = vsel %vm532, %v2098, %v2099
        %v2101 = vsel %vm534, %v2095, %v2100
        %v2104 = vadd.f32 %v2075, %v2101
        %v2105 = vadd.f32 %v2076, %v2097
        %2106 = vset.pattern.permute.xlu0 31
        %2107 = vperm.xlu0 %2106, %v1324
        %v2108 = vpop.permute.xlu0 %2107
        %v2110 = vunpack.c.l.s4 839922192
        %v2111 = vunpack.c.0.s8 %v2110
        %v2112 = vlaneseq
        %v2113 = vshrl.u32 %v2112, 7
        %v2114 = vsub.s32 %v2111, %v2113
        %v2115 = vrot.slane %v2108, %v2114
        %v2117 = vmul.f32 %v2077, %v2115
        %v2118 = vmul.f32 %v2078, %v2115
        %2121 = vrot.lane.b32.xlu0 %v2117, 64
        %v2122 = vpop.permute.xlu0 %2121
        %2123 = vrot.lane.b32.xlu0 %v2118, 64
        %v2124 = vpop.permute.xlu0 %2123
        %v2125 = vrot.slane %v2122, 4
        %v2126 = vrot.slane %v2124, 4
        %v2127 = vsel %vm532, %v2125, %v2126
        %v2128 = vsel %vm618, %v2122, %v2127
        %v2131 = vadd.f32 %v2104, %v2128
        %v2132 = vadd.f32 %v2105, %v2124
        %v2133 = vld [vmem:[#allocation3 + $0x8] sm:$0xff]
        %2134 = vset.pattern.permute.xlu0 38
        %2135 = vperm.xlu0 %2134, %v1324
        %v2136 = vpop.permute.xlu0 %2135
        %v2138 = vunpack.c.l.s4 839922192
        %v2139 = vunpack.c.0.s8 %v2138
        %v2140 = vlaneseq
        %v2141 = vshrl.u32 %v2140, 7
        %v2142 = vsub.s32 %v2139, %v2141
        %v2143 = vrot.slane %v2136, %v2142
        %v2145 = vmul.f32 %v2133, %v2143
        %2147 = vrot.lane.b32.xlu0 %v2145, 16
        %v2148 = vpop.permute.xlu0 %2147
        %v2149 = vrot.slane %v2148, 4
        %v2150 = vsel %vm1482, %v2149, %v2148
        %v2153 = vadd.f32 %v2131, %v2150
        %v2154 = vadd.f32 %v2132, %v2149
        %v2155 = vld [vmem:[#allocation3 + $0x8] sm:$0xff]
        %v2156 = vld [vmem:[#allocation3 + $0x10] sm:$0xf]
        %2157 = vset.pattern.permute.xlu0 45
        %2158 = vperm.xlu0 %2157, %v1324
        %v2159 = vpop.permute.xlu0 %2158
        %v2161 = vunpack.c.l.s4 839922192
        %v2162 = vunpack.c.0.s8 %v2161
        %v2163 = vlaneseq
        %v2164 = vshrl.u32 %v2163, 7
        %v2165 = vsub.s32 %v2162, %v2164
        %v2166 = vrot.slane %v2159, %v2165
        %v2168 = vmul.f32 %v2155, %v2166
        %v2169 = vmul.f32 %v2156, %v2166
        %2172 = vrot.lane.b32.xlu0 %v2168, 96
        %v2173 = vpop.permute.xlu0 %2172
        %2174 = vrot.lane.b32.xlu0 %v2169, 96
        %v2175 = vpop.permute.xlu0 %2174
        %v2176 = vrot.slane %v2173, 4
        %v2177 = vrot.slane %v2175, 4
        %v2178 = vsel %vm532, %v2176, %v2177
        %v2179 = vsel %vm562, %v2173, %v2178
        %v2182 = vadd.f32 %v2153, %v2179
        %v2183 = vadd.f32 %v2154, %v2175
        %v2186 = vcombine.high %v2182, %v2182
        %2187 = vrot.lane.b32.xlu0 %v2182, 112
        %v2188 = vpop.permute.xlu0 %2187
        %2189 = vrot.lane.b32.xlu0 %v2186, 112
        %v2190 = vpop.permute.xlu0 %2189
        %2191 = vrot.lane.b32.xlu0 %v2183, 112
        %v2192 = vpop.permute.xlu0 %2191
        %v2193 = vsel %vm534, %v2188, %v2190
        %v2194 = vsel %vm534, %v2190, %v2192
        %v2197 = vadd.f32 %v2004, %v2193
        %v2198 = vadd.f32 %v2005, %v2194
        %v2199 = vld [vmem:[#allocation3] sm:$0xff]
        %v2200 = vld [vmem:[#allocation3 + $0x8] sm:$0xf]
        %2201 = vset.pattern.permute.xlu0 4
        %2202 = vperm.xlu0 %2201, %v1324
        %v2203 = vpop.permute.xlu0 %2202
        %v2205 = vunpack.c.l.s4 839922192
        %v2206 = vunpack.c.0.s8 %v2205
        %v2207 = vlaneseq
        %v2208 = vshrl.u32 %v2207, 7
        %v2209 = vsub.s32 %v2206, %v2208
        %v2210 = vrot.slane %v2203, %v2209
        %v2212 = vmul.f32 %v2199, %v2210
        %v2213 = vmul.f32 %v2200, %v2210
        %v2214 = vadd.f32 %v2212, 0.0
        %v2215 = vadd.f32 %v2213, 0.0
        %2216 = vset.pattern.permute.xlu0 11
        %2217 = vperm.xlu0 %2216, %v1324
        %v2218 = vpop.permute.xlu0 %2217
        %v2220 = vunpack.c.l.s4 839922192
        %v2221 = vunpack.c.0.s8 %v2220
        %v2222 = vlaneseq
        %v2223 = vshrl.u32 %v2222, 7
        %v2224 = vsub.s32 %v2221, %v2223
        %v2225 = vrot.slane %v2218, %v2224
        %v2227 = vmul.f32 %v2199, %v2225
        %v2228 = vmul.f32 %v2200, %v2225
        %2231 = vrot.lane.b32.xlu0 %v2227, 80
        %v2232 = vpop.permute.xlu0 %2231
        %2233 = vrot.lane.b32.xlu0 %v2228, 80
        %v2234 = vpop.permute.xlu0 %2233
        %v2235 = vrot.slane %v2232, 4
        %v2236 = vrot.slane %v2234, 4
        %v2237 = vsel %vm532, %v2235, %v2236
        %v2238 = vsel %vm590, %v2232, %v2237
        %v2241 = vadd.f32 %v2214, %v2238
        %v2242 = vadd.f32 %v2215, %v2234
        %2243 = vset.pattern.permute.xlu0 18
        %2244 = vperm.xlu0 %2243, %v1324
        %v2245 = vpop.permute.xlu0 %2244
        %v2247 = vunpack.c.l.s4 839922192
        %v2248 = vunpack.c.0.s8 %v2247
        %v2249 = vlaneseq
        %v2250 = vshrl.u32 %v2249, 7
        %v2251 = vsub.s32 %v2248, %v2250
        %v2252 = vrot.slane %v2245, %v2251
        %v2254 = vmul.f32 %v2199, %v2252
        %v2255 = vmul.f32 %v2200, %v2252
        %2258 = vrot.lane.b32.xlu0 %v2254, 32
        %v2259 = vpop.permute.xlu0 %2258
        %2260 = vrot.lane.b32.xlu0 %v2255, 32
        %v2261 = vpop.permute.xlu0 %2260
        %v2262 = vrot.slane %v2259, 4
        %v2263 = vrot.slane %v2261, 4
        %v2264 = vsel %vm532, %v2262, %v2263
        %v2265 = vsel %vm1316, %v2259, %v2264
        %v2268 = vadd.f32 %v2241, %v2265
        %v2269 = vadd.f32 %v2242, %v2261
        %v2270 = vld [vmem:[#allocation3 + $0x4] sm:$0xff]
        %v2271 = vld [vmem:[#allocation3 + $0xc] sm:$0xf]
        %2272 = vset.pattern.permute.xlu0 25
        %2273 = vperm.xlu0 %2272, %v1324
        %v2274 = vpop.permute.xlu0 %2273
        %v2276 = vunpack.c.l.s4 839922192
        %v2277 = vunpack.c.0.s8 %v2276
        %v2278 = vlaneseq
        %v2279 = vshrl.u32 %v2278, 7
        %v2280 = vsub.s32 %v2277, %v2279
        %v2281 = vrot.slane %v2274, %v2280
        %v2283 = vmul.f32 %v2270, %v2281
        %v2284 = vmul.f32 %v2271, %v2281
        %2287 = vrot.lane.b32.xlu0 %v2283, 112
        %v2288 = vpop.permute.xlu0 %2287
        %2289 = vrot.lane.b32.xlu0 %v2284, 112
        %v2290 = vpop.permute.xlu0 %2289
        %v2291 = vrot.slane %v2288, 4
        %v2292 = vrot.slane %v2290, 4
        %v2293 = vsel %vm532, %v2291, %v2292
        %v2294 = vsel %vm534, %v2288, %v2293
        %v2297 = vadd.f32 %v2268, %v2294
        %v2298 = vadd.f32 %v2269, %v2290
        %2299 = vset.pattern.permute.xlu0 32
        %2300 = vperm.xlu0 %2299, %v1324
        %v2301 = vpop.permute.xlu0 %2300
        %v2303 = vunpack.c.l.s4 839922192
        %v2304 = vunpack.c.0.s8 %v2303
        %v2305 = vlaneseq
        %v2306 = vshrl.u32 %v2305, 7
        %v2307 = vsub.s32 %v2304, %v2306
        %v2308 = vrot.slane %v2301, %v2307
        %v2310 = vmul.f32 %v2270, %v2308
        %v2311 = vmul.f32 %v2271, %v2308
        %2314 = vrot.lane.b32.xlu0 %v2310, 64
        %v2315 = vpop.permute.xlu0 %2314
        %2316 = vrot.lane.b32.xlu0 %v2311, 64
        %v2317 = vpop.permute.xlu0 %2316
        %v2318 = vrot.slane %v2315, 4
        %v2319 = vrot.slane %v2317, 4
        %v2320 = vsel %vm532, %v2318, %v2319
        %v2321 = vsel %vm618, %v2315, %v2320
        %v2324 = vadd.f32 %v2297, %v2321
        %v2325 = vadd.f32 %v2298, %v2317
        %v2326 = vld [vmem:[#allocation3 + $0x8] sm:$0xff]
        %v2327 = vld [vmem:[#allocation3 + $0x10] sm:$0xf]
        %2328 = vset.pattern.permute.xlu0 39
        %2329 = vperm.xlu0 %2328, %v1324
        %v2330 = vpop.permute.xlu0 %2329
        %v2332 = vunpack.c.l.s4 839922192
        %v2333 = vunpack.c.0.s8 %v2332
        %v2334 = vlaneseq
        %v2335 = vshrl.u32 %v2334, 7
        %v2336 = vsub.s32 %v2333, %v2335
        %v2337 = vrot.slane %v2330, %v2336
        %v2339 = vmul.f32 %v2326, %v2337
        %v2340 = vmul.f32 %v2327, %v2337
        %2343 = vrot.lane.b32.xlu0 %v2339, 16
        %v2344 = vpop.permute.xlu0 %2343
        %2345 = vrot.lane.b32.xlu0 %v2340, 16
        %v2346 = vpop.permute.xlu0 %2345
        %v2347 = vrot.slane %v2344, 4
        %v2348 = vsel %vm1482, %v2347, %v2344
        %v2349 = vsel %vm1482, %v2347, %v2346
        %v2352 = vadd.f32 %v2324, %v2348
        %v2353 = vadd.f32 %v2325, %v2349
        %2354 = vset.pattern.permute.xlu0 46
        %2355 = vperm.xlu0 %2354, %v1324
        %v2356 = vpop.permute.xlu0 %2355
        %v2358 = vunpack.c.l.s4 839922192
        %v2359 = vunpack.c.0.s8 %v2358
        %v2360 = vlaneseq
        %v2361 = vshrl.u32 %v2360, 7
        %v2362 = vsub.s32 %v2359, %v2361
        %v2363 = vrot.slane %v2356, %v2362
        %v2365 = vmul.f32 %v2326, %v2363
        %v2366 = vmul.f32 %v2327, %v2363
        %2369 = vrot.lane.b32.xlu0 %v2365, 96
        %v2370 = vpop.permute.xlu0 %2369
        %2371 = vrot.lane.b32.xlu0 %v2366, 96
        %v2372 = vpop.permute.xlu0 %2371
        %v2373 = vrot.slane %v2370, 4
        %v2374 = vrot.slane %v2372, 4
        %v2375 = vsel %vm532, %v2373, %v2374
        %v2376 = vsel %vm562, %v2370, %v2375
        %v2379 = vadd.f32 %v2352, %v2376
        %v2380 = vadd.f32 %v2353, %v2372
        %v2381 = vadd.s32 %v466, 3
        %vm2382 = vcmp.ge.s32.totalorder %v2381, 0
        %vm2383 = vcmp.lt.s32.totalorder %v2381, 16
        %vm2384 = vmand %vm2382, %vm2383
        %v2385 = vsel %vm2384, 1, 0
        %v2386 = vcvt.s32.f32 %v2385
        %v2388 = vlaneseq
        %v2389 = vshrl.u32 %v2388, 7
        %v2390 = vsub.s32 0, %v2389
        %v2391 = vrot.slane %v2386, %v2390
        %v2392 = vlaneseq
        %v2393 = vshrl.u32 %v2392, 7
        %v2394 = vsub.s32 1, %v2393
        %v2395 = vrot.slane %v2386, %v2394
        %v2396 = vcombine.low %v2391, %v2395
        %2397 = vrot.lane.b32.xlu0 %v2396, 19
        %v2398 = vpop.permute.xlu0 %2397
        %v2399 = vrot.slane %v2398, 4
        %vm2400 = vcmask 154624
        %v2401 = vsel %vm2400, %v2399, %v2398
        %v2404 = vmul.f32 %v2379, %v2401
        %v2405 = vmul.f32 %v2380, %v2399
        %v2408 = vcombine.high %v2404, %v2404
        %2409 = vrot.lane.b32.xlu0 %v2404, 109
        %v2410 = vpop.permute.xlu0 %2409
        %2411 = vrot.lane.b32.xlu0 %v2408, 109
        %v2412 = vpop.permute.xlu0 %2411
        %2413 = vrot.lane.b32.xlu0 %v2405, 109
        %v2414 = vpop.permute.xlu0 %2413
        %vm2415 = vcmask 891904
        %v2416 = vsel %vm2415, %v2410, %v2412
        %v2417 = vsel %vm2415, %v2412, %v2414
        %v2420 = vadd.f32 %v2197, %v2416
        %v2421 = vadd.f32 %v2198, %v2417
        %v2422 = vld [vmem:[#allocation3] sm:$0xff]
        %v2423 = vld [vmem:[#allocation3 + $0x8] sm:$0xf]
        %2424 = vset.pattern.permute.xlu0 5
        %2425 = vperm.xlu0 %2424, %v1324
        %v2426 = vpop.permute.xlu0 %2425
        %v2428 = vunpack.c.l.s4 839922192
        %v2429 = vunpack.c.0.s8 %v2428
        %v2430 = vlaneseq
        %v2431 = vshrl.u32 %v2430, 7
        %v2432 = vsub.s32 %v2429, %v2431
        %v2433 = vrot.slane %v2426, %v2432
        %v2435 = vmul.f32 %v2422, %v2433
        %v2436 = vmul.f32 %v2423, %v2433
        %v2437 = vadd.f32 %v2435, 0.0
        %v2438 = vadd.f32 %v2436, 0.0
        %2439 = vset.pattern.permute.xlu0 12
        %2440 = vperm.xlu0 %2439, %v1324
        %v2441 = vpop.permute.xlu0 %2440
        %v2443 = vunpack.c.l.s4 839922192
        %v2444 = vunpack.c.0.s8 %v2443
        %v2445 = vlaneseq
        %v2446 = vshrl.u32 %v2445, 7
        %v2447 = vsub.s32 %v2444, %v2446
        %v2448 = vrot.slane %v2441, %v2447
        %v2450 = vmul.f32 %v2422, %v2448
        %v2451 = vmul.f32 %v2423, %v2448
        %2454 = vrot.lane.b32.xlu0 %v2450, 80
        %v2455 = vpop.permute.xlu0 %2454
        %2456 = vrot.lane.b32.xlu0 %v2451, 80
        %v2457 = vpop.permute.xlu0 %2456
        %v2458 = vrot.slane %v2455, 4
        %v2459 = vrot.slane %v2457, 4
        %v2460 = vsel %vm532, %v2458, %v2459
        %v2461 = vsel %vm590, %v2455, %v2460
        %v2464 = vadd.f32 %v2437, %v2461
        %v2465 = vadd.f32 %v2438, %v2457
        %2466 = vset.pattern.permute.xlu0 19
        %2467 = vperm.xlu0 %2466, %v1324
        %v2468 = vpop.permute.xlu0 %2467
        %v2470 = vunpack.c.l.s4 839922192
        %v2471 = vunpack.c.0.s8 %v2470
        %v2472 = vlaneseq
        %v2473 = vshrl.u32 %v2472, 7
        %v2474 = vsub.s32 %v2471, %v2473
        %v2475 = vrot.slane %v2468, %v2474
        %v2477 = vmul.f32 %v2422, %v2475
        %v2478 = vmul.f32 %v2423, %v2475
        %2481 = vrot.lane.b32.xlu0 %v2477, 32
        %v2482 = vpop.permute.xlu0 %2481
        %2483 = vrot.lane.b32.xlu0 %v2478, 32
        %v2484 = vpop.permute.xlu0 %2483
        %v2485 = vrot.slane %v2482, 4
        %v2486 = vrot.slane %v2484, 4
        %v2487 = vsel %vm532, %v2485, %v2486
        %v2488 = vsel %vm1316, %v2482, %v2487
        %v2491 = vadd.f32 %v2464, %v2488
        %v2492 = vadd.f32 %v2465, %v2484
        %v2493 = vld [vmem:[#allocation3 + $0x4] sm:$0xff]
        %v2494 = vld [vmem:[#allocation3 + $0xc] sm:$0xf]
        %2495 = vset.pattern.permute.xlu0 26
        %2496 = vperm.xlu0 %2495, %v1324
        %v2497 = vpop.permute.xlu0 %2496
        %v2499 = vunpack.c.l.s4 839922192
        %v2500 = vunpack.c.0.s8 %v2499
        %v2501 = vlaneseq
        %v2502 = vshrl.u32 %v2501, 7
        %v2503 = vsub.s32 %v2500, %v2502
        %v2504 = vrot.slane %v2497, %v2503
        %v2506 = vmul.f32 %v2493, %v2504
        %v2507 = vmul.f32 %v2494, %v2504
        %2510 = vrot.lane.b32.xlu0 %v2506, 112
        %v2511 = vpop.permute.xlu0 %2510
        %2512 = vrot.lane.b32.xlu0 %v2507, 112
        %v2513 = vpop.permute.xlu0 %2512
        %v2514 = vrot.slane %v2511, 4
        %v2515 = vrot.slane %v2513, 4
        %v2516 = vsel %vm532, %v2514, %v2515
        %v2517 = vsel %vm534, %v2511, %v2516
        %v2520 = vadd.f32 %v2491, %v2517
        %v2521 = vadd.f32 %v2492, %v2513
        %2522 = vset.pattern.permute.xlu0 33
        %2523 = vperm.xlu0 %2522, %v1324
        %v2524 = vpop.permute.xlu0 %2523
        %v2526 = vunpack.c.l.s4 839922192
        %v2527 = vunpack.c.0.s8 %v2526
        %v2528 = vlaneseq
        %v2529 = vshrl.u32 %v2528, 7
        %v2530 = vsub.s32 %v2527, %v2529
        %v2531 = vrot.slane %v2524, %v2530
        %v2533 = vmul.f32 %v2493, %v2531
        %v2534 = vmul.f32 %v2494, %v2531
        %2537 = vrot.lane.b32.xlu0 %v2533, 64
        %v2538 = vpop.permute.xlu0 %2537
        %2539 = vrot.lane.b32.xlu0 %v2534, 64
        %v2540 = vpop.permute.xlu0 %2539
        %v2541 = vrot.slane %v2538, 4
        %v2542 = vrot.slane %v2540, 4
        %v2543 = vsel %vm532, %v2541, %v2542
        %v2544 = vsel %vm618, %v2538, %v2543
        %v2547 = vadd.f32 %v2520, %v2544
        %v2548 = vadd.f32 %v2521, %v2540
        %v2549 = vld [vmem:[#allocation3 + $0x8] sm:$0xff]
        %v2550 = vld [vmem:[#allocation3 + $0x10] sm:$0xf]
        %2551 = vset.pattern.permute.xlu0 40
        %2552 = vperm.xlu0 %2551, %v1324
        %v2553 = vpop.permute.xlu0 %2552
        %v2555 = vunpack.c.l.s4 839922192
        %v2556 = vunpack.c.0.s8 %v2555
        %v2557 = vlaneseq
        %v2558 = vshrl.u32 %v2557, 7
        %v2559 = vsub.s32 %v2556, %v2558
        %v2560 = vrot.slane %v2553, %v2559
        %v2562 = vmul.f32 %v2549, %v2560
        %v2563 = vmul.f32 %v2550, %v2560
        %2566 = vrot.lane.b32.xlu0 %v2562, 16
        %v2567 = vpop.permute.xlu0 %2566
        %2568 = vrot.lane.b32.xlu0 %v2563, 16
        %v2569 = vpop.permute.xlu0 %2568
        %v2570 = vrot.slane %v2567, 4
        %v2571 = vsel %vm1482, %v2570, %v2567
        %v2572 = vsel %vm1482, %v2570, %v2569
        %v2575 = vadd.f32 %v2547, %v2571
        %v2576 = vadd.f32 %v2548, %v2572
        %2577 = vset.pattern.permute.xlu0 47
        %2578 = vperm.xlu0 %2577, %v1324
        %v2579 = vpop.permute.xlu0 %2578
        %v2581 = vunpack.c.l.s4 839922192
        %v2582 = vunpack.c.0.s8 %v2581
        %v2583 = vlaneseq
        %v2584 = vshrl.u32 %v2583, 7
        %v2585 = vsub.s32 %v2582, %v2584
        %v2586 = vrot.slane %v2579, %v2585
        %v2588 = vmul.f32 %v2549, %v2586
        %v2589 = vmul.f32 %v2550, %v2586
        %2592 = vrot.lane.b32.xlu0 %v2588, 96
        %v2593 = vpop.permute.xlu0 %2592
        %2594 = vrot.lane.b32.xlu0 %v2589, 96
        %v2595 = vpop.permute.xlu0 %2594
        %v2596 = vrot.slane %v2593, 4
        %v2597 = vrot.slane %v2595, 4
        %v2598 = vsel %vm532, %v2596, %v2597
        %v2599 = vsel %vm562, %v2593, %v2598
        %v2602 = vadd.f32 %v2575, %v2599
        %v2603 = vadd.f32 %v2576, %v2595
        %v2604 = vadd.s32 %v466, 6
        %vm2605 = vcmp.ge.s32.totalorder %v2604, 0
        %vm2606 = vcmp.lt.s32.totalorder %v2604, 16
        %vm2607 = vmand %vm2605, %vm2606
        %v2608 = vsel %vm2607, 1, 0
        %v2609 = vcvt.s32.f32 %v2608
        %v2611 = vlaneseq
        %v2612 = vshrl.u32 %v2611, 7
        %v2613 = vsub.s32 0, %v2612
        %v2614 = vrot.slane %v2609, %v2613
        %v2615 = vlaneseq
        %v2616 = vshrl.u32 %v2615, 7
        %v2617 = vsub.s32 1, %v2616
        %v2618 = vrot.slane %v2609, %v2617
        %v2619 = vcombine.low %v2614, %v2618
        %2620 = vrot.lane.b32.xlu0 %v2619, 22
        %v2621 = vpop.permute.xlu0 %2620
        %v2622 = vrot.slane %v2621, 4
        %vm2623 = vcmask 179200
        %v2624 = vsel %vm2623, %v2622, %v2621
        %v2627 = vmul.f32 %v2602, %v2624
        %v2628 = vmul.f32 %v2603, %v2622
        %v2631 = vcombine.high %v2627, %v2627
        %2632 = vrot.lane.b32.xlu0 %v2627, 106
        %v2633 = vpop.permute.xlu0 %2632
        %2634 = vrot.lane.b32.xlu0 %v2631, 106
        %v2635 = vpop.permute.xlu0 %2634
        %2636 = vrot.lane.b32.xlu0 %v2628, 106
        %v2637 = vpop.permute.xlu0 %2636
        %vm2638 = vcmask 867328
        %v2639 = vsel %vm2638, %v2633, %v2635
        %v2640 = vsel %vm2638, %v2635, %v2637
        %v2643 = vadd.f32 %v2420, %v2639
        %v2644 = vadd.f32 %v2421, %v2640
        %v2645 = vld [vmem:[#allocation3] sm:$0xff]
        %v2646 = vld [vmem:[#allocation3 + $0x8] sm:$0xf]
        %2647 = vset.pattern.permute.xlu0 6
        %2648 = vperm.xlu0 %2647, %v1324
        %v2649 = vpop.permute.xlu0 %2648
        %v2651 = vunpack.c.l.s4 839922192
        %v2652 = vunpack.c.0.s8 %v2651
        %v2653 = vlaneseq
        %v2654 = vshrl.u32 %v2653, 7
        %v2655 = vsub.s32 %v2652, %v2654
        %v2656 = vrot.slane %v2649, %v2655
        %v2658 = vmul.f32 %v2645, %v2656
        %v2659 = vmul.f32 %v2646, %v2656
        %v2660 = vadd.f32 %v2658, 0.0
        %v2661 = vadd.f32 %v2659, 0.0
        %2662 = vset.pattern.permute.xlu0 13
        %2663 = vperm.xlu0 %2662, %v1324
        %v2664 = vpop.permute.xlu0 %2663
        %v2666 = vunpack.c.l.s4 839922192
        %v2667 = vunpack.c.0.s8 %v2666
        %v2668 = vlaneseq
        %v2669 = vshrl.u32 %v2668, 7
        %v2670 = vsub.s32 %v2667, %v2669
        %v2671 = vrot.slane %v2664, %v2670
        %v2673 = vmul.f32 %v2645, %v2671
        %v2674 = vmul.f32 %v2646, %v2671
        %2677 = vrot.lane.b32.xlu0 %v2673, 80
        %v2678 = vpop.permute.xlu0 %2677
        %2679 = vrot.lane.b32.xlu0 %v2674, 80
        %v2680 = vpop.permute.xlu0 %2679
        %v2681 = vrot.slane %v2678, 4
        %v2682 = vrot.slane %v2680, 4
        %v2683 = vsel %vm532, %v2681, %v2682
        %v2684 = vsel %vm590, %v2678, %v2683
        %v2687 = vadd.f32 %v2660, %v2684
        %v2688 = vadd.f32 %v2661, %v2680
        %2689 = vset.pattern.permute.xlu0 20
        %2690 = vperm.xlu0 %2689, %v1324
        %v2691 = vpop.permute.xlu0 %2690
        %v2693 = vunpack.c.l.s4 839922192
        %v2694 = vunpack.c.0.s8 %v2693
        %v2695 = vlaneseq
        %v2696 = vshrl.u32 %v2695, 7
        %v2697 = vsub.s32 %v2694, %v2696
        %v2698 = vrot.slane %v2691, %v2697
        %v2700 = vmul.f32 %v2645, %v2698
        %v2701 = vmul.f32 %v2646, %v2698
        %2704 = vrot.lane.b32.xlu0 %v2700, 32
        %v2705 = vpop.permute.xlu0 %2704
        %2706 = vrot.lane.b32.xlu0 %v2701, 32
        %v2707 = vpop.permute.xlu0 %2706
        %v2708 = vrot.slane %v2705, 4
        %v2709 = vrot.slane %v2707, 4
        %v2710 = vsel %vm532, %v2708, %v2709
        %v2711 = vsel %vm1316, %v2705, %v2710
        %v2714 = vadd.f32 %v2687, %v2711
        %v2715 = vadd.f32 %v2688, %v2707
        %v2716 = vld [vmem:[#allocation3 + $0x4] sm:$0xff]
        %v2717 = vld [vmem:[#allocation3 + $0xc] sm:$0xf]
        %2718 = vset.pattern.permute.xlu0 27
        %2719 = vperm.xlu0 %2718, %v1324
        %v2720 = vpop.permute.xlu0 %2719
        %v2722 = vunpack.c.l.s4 839922192
        %v2723 = vunpack.c.0.s8 %v2722
        %v2724 = vlaneseq
        %v2725 = vshrl.u32 %v2724, 7
        %v2726 = vsub.s32 %v2723, %v2725
        %v2727 = vrot.slane %v2720, %v2726
        %v2729 = vmul.f32 %v2716, %v2727
        %v2730 = vmul.f32 %v2717, %v2727
        %2733 = vrot.lane.b32.xlu0 %v2729, 112
        %v2734 = vpop.permute.xlu0 %2733
        %2735 = vrot.lane.b32.xlu0 %v2730, 112
        %v2736 = vpop.permute.xlu0 %2735
        %v2737 = vrot.slane %v2734, 4
        %v2738 = vrot.slane %v2736, 4
        %v2739 = vsel %vm532, %v2737, %v2738
        %v2740 = vsel %vm534, %v2734, %v2739
        %v2743 = vadd.f32 %v2714, %v2740
        %v2744 = vadd.f32 %v2715, %v2736
        %2745 = vset.pattern.permute.xlu0 34
        %2746 = vperm.xlu0 %2745, %v1324
        %v2747 = vpop.permute.xlu0 %2746
        %v2749 = vunpack.c.l.s4 839922192
        %v2750 = vunpack.c.0.s8 %v2749
        %v2751 = vlaneseq
        %v2752 = vshrl.u32 %v2751, 7
        %v2753 = vsub.s32 %v2750, %v2752
        %v2754 = vrot.slane %v2747, %v2753
        %v2756 = vmul.f32 %v2716, %v2754
        %v2757 = vmul.f32 %v2717, %v2754
        %2760 = vrot.lane.b32.xlu0 %v2756, 64
        %v2761 = vpop.permute.xlu0 %2760
        %2762 = vrot.lane.b32.xlu0 %v2757, 64
        %v2763 = vpop.permute.xlu0 %2762
        %v2764 = vrot.slane %v2761, 4
        %v2765 = vrot.slane %v2763, 4
        %v2766 = vsel %vm532, %v2764, %v2765
        %v2767 = vsel %vm618, %v2761, %v2766
        %v2770 = vadd.f32 %v2743, %v2767
        %v2771 = vadd.f32 %v2744, %v2763
        %v2772 = vld [vmem:[#allocation3 + $0x8] sm:$0xff]
        %v2773 = vld [vmem:[#allocation3 + $0x10] sm:$0xf]
        %2774 = vset.pattern.permute.xlu0 41
        %2775 = vperm.xlu0 %2774, %v1324
        %v2776 = vpop.permute.xlu0 %2775
        %v2778 = vunpack.c.l.s4 839922192
        %v2779 = vunpack.c.0.s8 %v2778
        %v2780 = vlaneseq
        %v2781 = vshrl.u32 %v2780, 7
        %v2782 = vsub.s32 %v2779, %v2781
        %v2783 = vrot.slane %v2776, %v2782
        %v2785 = vmul.f32 %v2772, %v2783
        %v2786 = vmul.f32 %v2773, %v2783
        %2789 = vrot.lane.b32.xlu0 %v2785, 16
        %v2790 = vpop.permute.xlu0 %2789
        %2791 = vrot.lane.b32.xlu0 %v2786, 16
        %v2792 = vpop.permute.xlu0 %2791
        %v2793 = vrot.slane %v2790, 4
        %v2794 = vsel %vm1482, %v2793, %v2790
        %v2795 = vsel %vm1482, %v2793, %v2792
        %v2798 = vadd.f32 %v2770, %v2794
        %v2799 = vadd.f32 %v2771, %v2795
        %2800 = vset.pattern.permute.xlu0 48
        %2801 = vperm.xlu0 %2800, %v1324
        %v2802 = vpop.permute.xlu0 %2801
        %v2804 = vunpack.c.l.s4 839922192
        %v2805 = vunpack.c.0.s8 %v2804
        %v2806 = vlaneseq
        %v2807 = vshrl.u32 %v2806, 7
        %v2808 = vsub.s32 %v2805, %v2807
        %v2809 = vrot.slane %v2802, %v2808
        %v2811 = vmul.f32 %v2772, %v2809
        %v2812 = vmul.f32 %v2773, %v2809
        %2815 = vrot.lane.b32.xlu0 %v2811, 96
        %v2816 = vpop.permute.xlu0 %2815
        %2817 = vrot.lane.b32.xlu0 %v2812, 96
        %v2818 = vpop.permute.xlu0 %2817
        %v2819 = vrot.slane %v2816, 4
        %v2820 = vrot.slane %v2818, 4
        %v2821 = vsel %vm532, %v2819, %v2820
        %v2822 = vsel %vm562, %v2816, %v2821
        %v2825 = vadd.f32 %v2798, %v2822
        %v2826 = vadd.f32 %v2799, %v2818
        %v2827 = vadd.s32 %v466, 9
        %vm2828 = vcmp.ge.s32.totalorder %v2827, 0
        %vm2829 = vcmp.lt.s32.totalorder %v2827, 16
        %vm2830 = vmand %vm2828, %vm2829
        %v2831 = vsel %vm2830, 1, 0
        %v2832 = vcvt.s32.f32 %v2831
        %v2834 = vlaneseq
        %v2835 = vshrl.u32 %v2834, 7
        %v2836 = vsub.s32 0, %v2835
        %v2837 = vrot.slane %v2832, %v2836
        %v2838 = vlaneseq
        %v2839 = vshrl.u32 %v2838, 7
        %v2840 = vsub.s32 1, %v2839
        %v2841 = vrot.slane %v2832, %v2840
        %v2842 = vcombine.low %v2837, %v2841
        %2843 = vrot.lane.b32.xlu0 %v2842, 25
        %v2844 = vpop.permute.xlu0 %2843
        %v2845 = vrot.slane %v2844, 4
        %vm2846 = vcmask 203776
        %v2847 = vsel %vm2846, %v2845, %v2844
        %v2850 = vmul.f32 %v2825, %v2847
        %v2851 = vmul.f32 %v2826, %v2845
        %v2854 = vcombine.high %v2850, %v2850
        %2855 = vrot.lane.b32.xlu0 %v2850, 103
        %v2856 = vpop.permute.xlu0 %2855
        %2857 = vrot.lane.b32.xlu0 %v2854, 103
        %v2858 = vpop.permute.xlu0 %2857
        %2859 = vrot.lane.b32.xlu0 %v2851, 103
        %v2860 = vpop.permute.xlu0 %2859
        %vm2861 = vcmask 842752
        %v2862 = vsel %vm2861, %v2856, %v2858
        %v2863 = vsel %vm2861, %v2858, %v2860
        %v2866 = vadd.f32 %v2643, %v2862
        %v2867 = vadd.f32 %v2644, %v2863
        %v2868 = vld [vmem:[%s6] sm:$0x3]
        %v2869 = vld [vmem:[%s7] sm:$0x3]
        %2871 = vset.pattern.permute.xlu0 0
        %2872 = vperm.xlu0 %2871, %v2869
        %v2873 = vpop.permute.xlu0 %2872
        %vm2875 = vcmask 31744
        %v2877 = vsel %vm2875, %v2868, 0
        %v2879 = vsel %vm532, %v1301, 0
        %v2881 = vsel %vm532, %v1302, 0
        %2883 = vmatprep.subr.mxu0 0.0
        %2884 = vmatpush1.msra.mxu0 0.0
        %2885 = vmatprep.subr.mxu0 0.0
        %2886 = vmatpush1.msra.mxu0 0.0
        %2887 = vmatprep.subr.mxu0 0.0
        %2888 = vmatpush1.msra.mxu0 0.0
        %2889 = vmatprep.subr.mxu0 0.0
        %2890 = vmatpush1.msra.mxu0 0.0
        %2891 = vmatprep.subr.mxu0 0.0
        %2892 = vmatpush1.msra.mxu0 0.0
        %2893 = vmatprep.subr.mxu0 0.0
        %2894 = vmatpush1.msra.mxu0 0.0
        %2895 = vmatprep.subr.mxu0 0.0
        %2896 = vmatpush1.msra.mxu0 0.0
        %2897 = vmatprep.subr.mxu0 0.0
        %2898 = vmatpush1.msra.mxu0 0.0
        %2899 = vmatprep.subr.mxu0 0.0
        %2900 = vmatpush1.msra.mxu0 0.0
        %2901 = vmatprep.subr.mxu0 0.0
        %2902 = vmatpush1.msra.mxu0 0.0
        %2903 = vmatprep.subr.mxu0 0.0
        %2904 = vmatpush1.msra.mxu0 0.0
        %2905 = vmatprep.subr.mxu0 0.0
        %2906 = vmatpush1.msra.mxu0 0.0
        %2907 = vmatprep.subr.mxu0 0.0
        %2908 = vmatpush1.msra.mxu0 0.0
        %2909 = vmatprep.subr.mxu0 0.0
        %2910 = vmatpush1.msra.mxu0 0.0
        %2911 = vmatprep.subr.mxu0 0.0
        %2912 = vmatpush1.msra.mxu0 0.0
        %v2913 = vand.u32 %v2881, 4294901760
        %2914 = vmatprep.subr.mxu0 %v2913
        %v2915 = vand.u32 %v2879, 4294901760
        %2916 = vmatpush1.msra.mxu0 %v2915
        %2917 = vmatprep.subr.mxu0 0.0
        %2918 = vmatpush2.msra.mxu0 0.0
        %2919 = vmatprep.subr.mxu0 0.0
        %2920 = vmatpush2.msra.mxu0 0.0
        %2921 = vmatprep.subr.mxu0 0.0
        %2922 = vmatpush2.msra.mxu0 0.0
        %2923 = vmatprep.subr.mxu0 0.0
        %2924 = vmatpush2.msra.mxu0 0.0
        %2925 = vmatprep.subr.mxu0 0.0
        %2926 = vmatpush2.msra.mxu0 0.0
        %2927 = vmatprep.subr.mxu0 0.0
        %2928 = vmatpush2.msra.mxu0 0.0
        %2929 = vmatprep.subr.mxu0 0.0
        %2930 = vmatpush2.msra.mxu0 0.0
        %2931 = vmatprep.subr.mxu0 0.0
        %2932 = vmatpush2.msra.mxu0 0.0
        %2933 = vmatprep.subr.mxu0 0.0
        %2934 = vmatpush2.msra.mxu0 0.0
        %2935 = vmatprep.subr.mxu0 0.0
        %2936 = vmatpush2.msra.mxu0 0.0
        %2937 = vmatprep.subr.mxu0 0.0
        %2938 = vmatpush2.msra.mxu0 0.0
        %2939 = vmatprep.subr.mxu0 0.0
        %2940 = vmatpush2.msra.mxu0 0.0
        %2941 = vmatprep.subr.mxu0 0.0
        %2942 = vmatpush2.msra.mxu0 0.0
        %2943 = vmatprep.subr.mxu0 0.0
        %2944 = vmatpush2.msra.mxu0 0.0
        %2945 = vmatprep.subr.mxu0 0.0
        %2946 = vmatpush2.msra.mxu0 0.0
        %2947 = vmatprep.subr.mxu0 0.0
        %2948 = vmatpush2.msra.mxu0 0.0
        %2949 = vmatprep.mubr.f32.mxu0 0.0
        %v2950 = vand.u32 %v2877, 4294901760
        %v2951 = vsub.f32 %v2877, %v2950
        %v2952 = vand.u32 %v2951, 4294901760
        %v2953 = vsub.f32 %v2951, %v2952
        %v2954 = vand.u32 %v2953, 4294901760
        %2955 = vmatmul.mubr.f32.gmra.mxu0 %v2954
        %v2956 = vpop.f32.mrf.mxu0
        %v2957 = vadd.f32 %v2873, %v2956
        %v2958 = vpop.f32.mrf.mxu0
        %v2959 = vadd.f32 %v2873, %v2958
        %2960 = vdwg.mxu0
        %2961 = vmatprep.subr.mxu0 0.0
        %2962 = vmatpush1.msra.mxu0 0.0
        %2963 = vmatprep.subr.mxu0 0.0
        %2964 = vmatpush1.msra.mxu0 0.0
        %2965 = vmatprep.subr.mxu0 0.0
        %2966 = vmatpush1.msra.mxu0 0.0
        %2967 = vmatprep.subr.mxu0 0.0
        %2968 = vmatpush1.msra.mxu0 0.0
        %2969 = vmatprep.subr.mxu0 0.0
        %2970 = vmatpush1.msra.mxu0 0.0
        %2971 = vmatprep.subr.mxu0 0.0
        %2972 = vmatpush1.msra.mxu0 0.0
        %2973 = vmatprep.subr.mxu0 0.0
        %2974 = vmatpush1.msra.mxu0 0.0
        %2975 = vmatprep.subr.mxu0 0.0
        %2976 = vmatpush1.msra.mxu0 0.0
        %2977 = vmatprep.subr.mxu0 0.0
        %2978 = vmatpush1.msra.mxu0 0.0
        %2979 = vmatprep.subr.mxu0 0.0
        %2980 = vmatpush1.msra.mxu0 0.0
        %2981 = vmatprep.subr.mxu0 0.0
        %2982 = vmatpush1.msra.mxu0 0.0
        %2983 = vmatprep.subr.mxu0 0.0
        %2984 = vmatpush1.msra.mxu0 0.0
        %2985 = vmatprep.subr.mxu0 0.0
        %2986 = vmatpush1.msra.mxu0 0.0
        %2987 = vmatprep.subr.mxu0 0.0
        %2988 = vmatpush1.msra.mxu0 0.0
        %2989 = vmatprep.subr.mxu0 0.0
        %2990 = vmatpush1.msra.mxu0 0.0
        %v2991 = vand.u32 %v2881, 4294901760
        %v2992 = vsub.f32 %v2881, %v2991
        %v2993 = vand.u32 %v2992, 4294901760
        %v2994 = vsub.f32 %v2992, %v2993
        %v2995 = vand.u32 %v2994, 4294901760
        %2996 = vmatprep.subr.mxu0 %v2995
        %v2997 = vand.u32 %v2879, 4294901760
        %v2998 = vsub.f32 %v2879, %v2997
        %v2999 = vand.u32 %v2998, 4294901760
        %v3000 = vsub.f32 %v2998, %v2999
        %v3001 = vand.u32 %v3000, 4294901760
        %3002 = vmatpush1.msra.mxu0 %v3001
        %3003 = vmatprep.subr.mxu0 0.0
        %3004 = vmatpush2.msra.mxu0 0.0
        %3005 = vmatprep.subr.mxu0 0.0
        %3006 = vmatpush2.msra.mxu0 0.0
        %3007 = vmatprep.subr.mxu0 0.0
        %3008 = vmatpush2.msra.mxu0 0.0
        %3009 = vmatprep.subr.mxu0 0.0
        %3010 = vmatpush2.msra.mxu0 0.0
        %3011 = vmatprep.subr.mxu0 0.0
        %3012 = vmatpush2.msra.mxu0 0.0
        %3013 = vmatprep.subr.mxu0 0.0
        %3014 = vmatpush2.msra.mxu0 0.0
        %3015 = vmatprep.subr.mxu0 0.0
        %3016 = vmatpush2.msra.mxu0 0.0
        %3017 = vmatprep.subr.mxu0 0.0
        %3018 = vmatpush2.msra.mxu0 0.0
        %3019 = vmatprep.subr.mxu0 0.0
        %3020 = vmatpush2.msra.mxu0 0.0
        %3021 = vmatprep.subr.mxu0 0.0
        %3022 = vmatpush2.msra.mxu0 0.0
        %3023 = vmatprep.subr.mxu0 0.0
        %3024 = vmatpush2.msra.mxu0 0.0
        %3025 = vmatprep.subr.mxu0 0.0
        %3026 = vmatpush2.msra.mxu0 0.0
        %3027 = vmatprep.subr.mxu0 0.0
        %3028 = vmatpush2.msra.mxu0 0.0
        %3029 = vmatprep.subr.mxu0 0.0
        %3030 = vmatpush2.msra.mxu0 0.0
        %3031 = vmatprep.subr.mxu0 0.0
        %3032 = vmatpush2.msra.mxu0 0.0
        %3033 = vmatprep.subr.mxu0 0.0
        %3034 = vmatpush2.msra.mxu0 0.0
        %3035 = vmatprep.mubr.f32.mxu0 0.0
        %v3036 = vand.u32 %v2877, 4294901760
        %3037 = vmatmul.mubr.f32.gmra.mxu0 %v3036
        %v3038 = vpop.f32.mrf.mxu0
        %v3039 = vadd.f32 %v2957, %v3038
        %v3040 = vpop.f32.mrf.mxu0
        %v3041 = vadd.f32 %v2959, %v3040
        %3042 = vdwg.mxu0
        %3043 = vmatprep.subr.mxu0 0.0
        %3044 = vmatpush1.msra.mxu0 0.0
        %3045 = vmatprep.subr.mxu0 0.0
        %3046 = vmatpush1.msra.mxu0 0.0
        %3047 = vmatprep.subr.mxu0 0.0
        %3048 = vmatpush1.msra.mxu0 0.0
        %3049 = vmatprep.subr.mxu0 0.0
        %3050 = vmatpush1.msra.mxu0 0.0
        %3051 = vmatprep.subr.mxu0 0.0
        %3052 = vmatpush1.msra.mxu0 0.0
        %3053 = vmatprep.subr.mxu0 0.0
        %3054 = vmatpush1.msra.mxu0 0.0
        %3055 = vmatprep.subr.mxu0 0.0
        %3056 = vmatpush1.msra.mxu0 0.0
        %3057 = vmatprep.subr.mxu0 0.0
        %3058 = vmatpush1.msra.mxu0 0.0
        %3059 = vmatprep.subr.mxu0 0.0
        %3060 = vmatpush1.msra.mxu0 0.0
        %3061 = vmatprep.subr.mxu0 0.0
        %3062 = vmatpush1.msra.mxu0 0.0
        %3063 = vmatprep.subr.mxu0 0.0
        %3064 = vmatpush1.msra.mxu0 0.0
        %3065 = vmatprep.subr.mxu0 0.0
        %3066 = vmatpush1.msra.mxu0 0.0
        %3067 = vmatprep.subr.mxu0 0.0
        %3068 = vmatpush1.msra.mxu0 0.0
        %3069 = vmatprep.subr.mxu0 0.0
        %3070 = vmatpush1.msra.mxu0 0.0
        %3071 = vmatprep.subr.mxu0 0.0
        %3072 = vmatpush1.msra.mxu0 0.0
        %v3073 = vand.u32 %v2881, 4294901760
        %v3074 = vsub.f32 %v2881, %v3073
        %3075 = vmatprep.subr.mxu0 %v3074
        %v3076 = vand.u32 %v2879, 4294901760
        %v3077 = vsub.f32 %v2879, %v3076
        %3078 = vmatpush1.msra.mxu0 %v3077
        %3079 = vmatprep.subr.mxu0 0.0
        %3080 = vmatpush2.msra.mxu0 0.0
        %3081 = vmatprep.subr.mxu0 0.0
        %3082 = vmatpush2.msra.mxu0 0.0
        %3083 = vmatprep.subr.mxu0 0.0
        %3084 = vmatpush2.msra.mxu0 0.0
        %3085 = vmatprep.subr.mxu0 0.0
        %3086 = vmatpush2.msra.mxu0 0.0
        %3087 = vmatprep.subr.mxu0 0.0
        %3088 = vmatpush2.msra.mxu0 0.0
        %3089 = vmatprep.subr.mxu0 0.0
        %3090 = vmatpush2.msra.mxu0 0.0
        %3091 = vmatprep.subr.mxu0 0.0
        %3092 = vmatpush2.msra.mxu0 0.0
        %3093 = vmatprep.subr.mxu0 0.0
        %3094 = vmatpush2.msra.mxu0 0.0
        %3095 = vmatprep.subr.mxu0 0.0
        %3096 = vmatpush2.msra.mxu0 0.0
        %3097 = vmatprep.subr.mxu0 0.0
        %3098 = vmatpush2.msra.mxu0 0.0
        %3099 = vmatprep.subr.mxu0 0.0
        %3100 = vmatpush2.msra.mxu0 0.0
        %3101 = vmatprep.subr.mxu0 0.0
        %3102 = vmatpush2.msra.mxu0 0.0
        %3103 = vmatprep.subr.mxu0 0.0
        %3104 = vmatpush2.msra.mxu0 0.0
        %3105 = vmatprep.subr.mxu0 0.0
        %3106 = vmatpush2.msra.mxu0 0.0
        %3107 = vmatprep.subr.mxu0 0.0
        %3108 = vmatpush2.msra.mxu0 0.0
        %3109 = vmatprep.subr.mxu0 0.0
        %3110 = vmatpush2.msra.mxu0 0.0
        %3111 = vmatprep.mubr.f32.mxu0 0.0
        %v3112 = vand.u32 %v2877, 4294901760
        %v3113 = vsub.f32 %v2877, %v3112
        %3114 = vmatmul.mubr.f32.gmra.mxu0 %v3113
        %v3115 = vpop.f32.mrf.mxu0
        %v3116 = vadd.f32 %v3039, %v3115
        %v3117 = vpop.f32.mrf.mxu0
        %v3118 = vadd.f32 %v3041, %v3117
        %3119 = vdwg.mxu0
        %3120 = vmatprep.subr.mxu0 0.0
        %3121 = vmatpush1.msra.mxu0 0.0
        %3122 = vmatprep.subr.mxu0 0.0
        %3123 = vmatpush1.msra.mxu0 0.0
        %3124 = vmatprep.subr.mxu0 0.0
        %3125 = vmatpush1.msra.mxu0 0.0
        %3126 = vmatprep.subr.mxu0 0.0
        %3127 = vmatpush1.msra.mxu0 0.0
        %3128 = vmatprep.subr.mxu0 0.0
        %3129 = vmatpush1.msra.mxu0 0.0
        %3130 = vmatprep.subr.mxu0 0.0
        %3131 = vmatpush1.msra.mxu0 0.0
        %3132 = vmatprep.subr.mxu0 0.0
        %3133 = vmatpush1.msra.mxu0 0.0
        %3134 = vmatprep.subr.mxu0 0.0
        %3135 = vmatpush1.msra.mxu0 0.0
        %3136 = vmatprep.subr.mxu0 0.0
        %3137 = vmatpush1.msra.mxu0 0.0
        %3138 = vmatprep.subr.mxu0 0.0
        %3139 = vmatpush1.msra.mxu0 0.0
        %3140 = vmatprep.subr.mxu0 0.0
        %3141 = vmatpush1.msra.mxu0 0.0
        %3142 = vmatprep.subr.mxu0 0.0
        %3143 = vmatpush1.msra.mxu0 0.0
        %3144 = vmatprep.subr.mxu0 0.0
        %3145 = vmatpush1.msra.mxu0 0.0
        %3146 = vmatprep.subr.mxu0 0.0
        %3147 = vmatpush1.msra.mxu0 0.0
        %3148 = vmatprep.subr.mxu0 0.0
        %3149 = vmatpush1.msra.mxu0 0.0
        %v3150 = vand.u32 %v2881, 4294901760
        %3151 = vmatprep.subr.mxu0 %v3150
        %v3152 = vand.u32 %v2879, 4294901760
        %3153 = vmatpush1.msra.mxu0 %v3152
        %3154 = vmatprep.subr.mxu0 0.0
        %3155 = vmatpush2.msra.mxu0 0.0
        %3156 = vmatprep.subr.mxu0 0.0
        %3157 = vmatpush2.msra.mxu0 0.0
        %3158 = vmatprep.subr.mxu0 0.0
        %3159 = vmatpush2.msra.mxu0 0.0
        %3160 = vmatprep.subr.mxu0 0.0
        %3161 = vmatpush2.msra.mxu0 0.0
        %3162 = vmatprep.subr.mxu0 0.0
        %3163 = vmatpush2.msra.mxu0 0.0
        %3164 = vmatprep.subr.mxu0 0.0
        %3165 = vmatpush2.msra.mxu0 0.0
        %3166 = vmatprep.subr.mxu0 0.0
        %3167 = vmatpush2.msra.mxu0 0.0
        %3168 = vmatprep.subr.mxu0 0.0
        %3169 = vmatpush2.msra.mxu0 0.0
        %3170 = vmatprep.subr.mxu0 0.0
        %3171 = vmatpush2.msra.mxu0 0.0
        %3172 = vmatprep.subr.mxu0 0.0
        %3173 = vmatpush2.msra.mxu0 0.0
        %3174 = vmatprep.subr.mxu0 0.0
        %3175 = vmatpush2.msra.mxu0 0.0
        %3176 = vmatprep.subr.mxu0 0.0
        %3177 = vmatpush2.msra.mxu0 0.0
        %3178 = vmatprep.subr.mxu0 0.0
        %3179 = vmatpush2.msra.mxu0 0.0
        %3180 = vmatprep.subr.mxu0 0.0
        %3181 = vmatpush2.msra.mxu0 0.0
        %3182 = vmatprep.subr.mxu0 0.0
        %3183 = vmatpush2.msra.mxu0 0.0
        %3184 = vmatprep.subr.mxu0 0.0
        %3185 = vmatpush2.msra.mxu0 0.0
        %3186 = vmatprep.mubr.f32.mxu0 0.0
        %v3187 = vand.u32 %v2877, 4294901760
        %v3188 = vsub.f32 %v2877, %v3187
        %v3189 = vand.u32 %v3188, 4294901760
        %3190 = vmatmul.mubr.f32.gmra.mxu0 %v3189
        %v3191 = vpop.f32.mrf.mxu0
        %v3192 = vadd.f32 %v3116, %v3191
        %v3193 = vpop.f32.mrf.mxu0
        %v3194 = vadd.f32 %v3118, %v3193
        %3195 = vdwg.mxu0
        %3196 = vmatprep.subr.mxu0 0.0
        %3197 = vmatpush1.msra.mxu0 0.0
        %3198 = vmatprep.subr.mxu0 0.0
        %3199 = vmatpush1.msra.mxu0 0.0
        %3200 = vmatprep.subr.mxu0 0.0
        %3201 = vmatpush1.msra.mxu0 0.0
        %3202 = vmatprep.subr.mxu0 0.0
        %3203 = vmatpush1.msra.mxu0 0.0
        %3204 = vmatprep.subr.mxu0 0.0
        %3205 = vmatpush1.msra.mxu0 0.0
        %3206 = vmatprep.subr.mxu0 0.0
        %3207 = vmatpush1.msra.mxu0 0.0
        %3208 = vmatprep.subr.mxu0 0.0
        %3209 = vmatpush1.msra.mxu0 0.0
        %3210 = vmatprep.subr.mxu0 0.0
        %3211 = vmatpush1.msra.mxu0 0.0
        %3212 = vmatprep.subr.mxu0 0.0
        %3213 = vmatpush1.msra.mxu0 0.0
        %3214 = vmatprep.subr.mxu0 0.0
        %3215 = vmatpush1.msra.mxu0 0.0
        %3216 = vmatprep.subr.mxu0 0.0
        %3217 = vmatpush1.msra.mxu0 0.0
        %3218 = vmatprep.subr.mxu0 0.0
        %3219 = vmatpush1.msra.mxu0 0.0
        %3220 = vmatprep.subr.mxu0 0.0
        %3221 = vmatpush1.msra.mxu0 0.0
        %3222 = vmatprep.subr.mxu0 0.0
        %3223 = vmatpush1.msra.mxu0 0.0
        %3224 = vmatprep.subr.mxu0 0.0
        %3225 = vmatpush1.msra.mxu0 0.0
        %v3226 = vand.u32 %v2881, 4294901760
        %v3227 = vsub.f32 %v2881, %v3226
        %v3228 = vand.u32 %v3227, 4294901760
        %3229 = vmatprep.subr.mxu0 %v3228
        %v3230 = vand.u32 %v2879, 4294901760
        %v3231 = vsub.f32 %v2879, %v3230
        %v3232 = vand.u32 %v3231, 4294901760
        %3233 = vmatpush1.msra.mxu0 %v3232
        %3234 = vmatprep.subr.mxu0 0.0
        %3235 = vmatpush2.msra.mxu0 0.0
        %3236 = vmatprep.subr.mxu0 0.0
        %3237 = vmatpush2.msra.mxu0 0.0
        %3238 = vmatprep.subr.mxu0 0.0
        %3239 = vmatpush2.msra.mxu0 0.0
        %3240 = vmatprep.subr.mxu0 0.0
        %3241 = vmatpush2.msra.mxu0 0.0
        %3242 = vmatprep.subr.mxu0 0.0
        %3243 = vmatpush2.msra.mxu0 0.0
        %3244 = vmatprep.subr.mxu0 0.0
        %3245 = vmatpush2.msra.mxu0 0.0
        %3246 = vmatprep.subr.mxu0 0.0
        %3247 = vmatpush2.msra.mxu0 0.0
        %3248 = vmatprep.subr.mxu0 0.0
        %3249 = vmatpush2.msra.mxu0 0.0
        %3250 = vmatprep.subr.mxu0 0.0
        %3251 = vmatpush2.msra.mxu0 0.0
        %3252 = vmatprep.subr.mxu0 0.0
        %3253 = vmatpush2.msra.mxu0 0.0
        %3254 = vmatprep.subr.mxu0 0.0
        %3255 = vmatpush2.msra.mxu0 0.0
        %3256 = vmatprep.subr.mxu0 0.0
        %3257 = vmatpush2.msra.mxu0 0.0
        %3258 = vmatprep.subr.mxu0 0.0
        %3259 = vmatpush2.msra.mxu0 0.0
        %3260 = vmatprep.subr.mxu0 0.0
        %3261 = vmatpush2.msra.mxu0 0.0
        %3262 = vmatprep.subr.mxu0 0.0
        %3263 = vmatpush2.msra.mxu0 0.0
        %3264 = vmatprep.subr.mxu0 0.0
        %3265 = vmatpush2.msra.mxu0 0.0
        %3266 = vmatprep.mubr.f32.mxu0 0.0
        %v3267 = vand.u32 %v2877, 4294901760
        %3268 = vmatmul.mubr.f32.gmra.mxu0 %v3267
        %v3269 = vpop.f32.mrf.mxu0
        %v3270 = vadd.f32 %v3192, %v3269
        %v3271 = vpop.f32.mrf.mxu0
        %v3272 = vadd.f32 %v3194, %v3271
        %3273 = vdwg.mxu0
        %3274 = vmatprep.subr.mxu0 0.0
        %3275 = vmatpush1.msra.mxu0 0.0
        %3276 = vmatprep.subr.mxu0 0.0
        %3277 = vmatpush1.msra.mxu0 0.0
        %3278 = vmatprep.subr.mxu0 0.0
        %3279 = vmatpush1.msra.mxu0 0.0
        %3280 = vmatprep.subr.mxu0 0.0
        %3281 = vmatpush1.msra.mxu0 0.0
        %3282 = vmatprep.subr.mxu0 0.0
        %3283 = vmatpush1.msra.mxu0 0.0
        %3284 = vmatprep.subr.mxu0 0.0
        %3285 = vmatpush1.msra.mxu0 0.0
        %3286 = vmatprep.subr.mxu0 0.0
        %3287 = vmatpush1.msra.mxu0 0.0
        %3288 = vmatprep.subr.mxu0 0.0
        %3289 = vmatpush1.msra.mxu0 0.0
        %3290 = vmatprep.subr.mxu0 0.0
        %3291 = vmatpush1.msra.mxu0 0.0
        %3292 = vmatprep.subr.mxu0 0.0
        %3293 = vmatpush1.msra.mxu0 0.0
        %3294 = vmatprep.subr.mxu0 0.0
        %3295 = vmatpush1.msra.mxu0 0.0
        %3296 = vmatprep.subr.mxu0 0.0
        %3297 = vmatpush1.msra.mxu0 0.0
        %3298 = vmatprep.subr.mxu0 0.0
        %3299 = vmatpush1.msra.mxu0 0.0
        %3300 = vmatprep.subr.mxu0 0.0
        %3301 = vmatpush1.msra.mxu0 0.0
        %3302 = vmatprep.subr.mxu0 0.0
        %3303 = vmatpush1.msra.mxu0 0.0
        %v3304 = vand.u32 %v2881, 4294901760
        %3305 = vmatprep.subr.mxu0 %v3304
        %v3306 = vand.u32 %v2879, 4294901760
        %3307 = vmatpush1.msra.mxu0 %v3306
        %3308 = vmatprep.subr.mxu0 0.0
        %3309 = vmatpush2.msra.mxu0 0.0
        %3310 = vmatprep.subr.mxu0 0.0
        %3311 = vmatpush2.msra.mxu0 0.0
        %3312 = vmatprep.subr.mxu0 0.0
        %3313 = vmatpush2.msra.mxu0 0.0
        %3314 = vmatprep.subr.mxu0 0.0
        %3315 = vmatpush2.msra.mxu0 0.0
        %3316 = vmatprep.subr.mxu0 0.0
        %3317 = vmatpush2.msra.mxu0 0.0
        %3318 = vmatprep.subr.mxu0 0.0
        %3319 = vmatpush2.msra.mxu0 0.0
        %3320 = vmatprep.subr.mxu0 0.0
        %3321 = vmatpush2.msra.mxu0 0.0
        %3322 = vmatprep.subr.mxu0 0.0
        %3323 = vmatpush2.msra.mxu0 0.0
        %3324 = vmatprep.subr.mxu0 0.0
        %3325 = vmatpush2.msra.mxu0 0.0
        %3326 = vmatprep.subr.mxu0 0.0
        %3327 = vmatpush2.msra.mxu0 0.0
        %3328 = vmatprep.subr.mxu0 0.0
        %3329 = vmatpush2.msra.mxu0 0.0
        %3330 = vmatprep.subr.mxu0 0.0
        %3331 = vmatpush2.msra.mxu0 0.0
        %3332 = vmatprep.subr.mxu0 0.0
        %3333 = vmatpush2.msra.mxu0 0.0
        %3334 = vmatprep.subr.mxu0 0.0
        %3335 = vmatpush2.msra.mxu0 0.0
        %3336 = vmatprep.subr.mxu0 0.0
        %3337 = vmatpush2.msra.mxu0 0.0
        %3338 = vmatprep.subr.mxu0 0.0
        %3339 = vmatpush2.msra.mxu0 0.0
        %3340 = vmatprep.mubr.f32.mxu0 0.0
        %v3341 = vand.u32 %v2877, 4294901760
        %3342 = vmatmul.mubr.f32.gmra.mxu0 %v3341
        %v3343 = vpop.f32.mrf.mxu0
        %v3344 = vadd.f32 %v3270, %v3343
        %v3345 = vpop.f32.mrf.mxu0
        %v3346 = vadd.f32 %v3272, %v3345
        %3347 = vdwg.mxu0
        %v3348 = vld [vmem:[%s8] sm:$0x3]
        %v3349 = vld [vmem:[%s9] sm:$0x3]
        %3351 = vset.pattern.permute.xlu0 0
        %3352 = vperm.xlu0 %3351, %v3349
        %v3353 = vpop.permute.xlu0 %3352
        %v3356 = vsel %vm2875, %v3348, 0
        %v3359 = vsel %vm532, %v2866, 0
        %v3362 = vsel %vm532, %v2867, 0
        %3364 = vmatprep.subr.mxu0 0.0
        %3365 = vmatpush1.msra.mxu0 0.0
        %3366 = vmatprep.subr.mxu0 0.0
        %3367 = vmatpush1.msra.mxu0 0.0
        %3368 = vmatprep.subr.mxu0 0.0
        %3369 = vmatpush1.msra.mxu0 0.0
        %3370 = vmatprep.subr.mxu0 0.0
        %3371 = vmatpush1.msra.mxu0 0.0
        %3372 = vmatprep.subr.mxu0 0.0
        %3373 = vmatpush1.msra.mxu0 0.0
        %3374 = vmatprep.subr.mxu0 0.0
        %3375 = vmatpush1.msra.mxu0 0.0
        %3376 = vmatprep.subr.mxu0 0.0
        %3377 = vmatpush1.msra.mxu0 0.0
        %3378 = vmatprep.subr.mxu0 0.0
        %3379 = vmatpush1.msra.mxu0 0.0
        %3380 = vmatprep.subr.mxu0 0.0
        %3381 = vmatpush1.msra.mxu0 0.0
        %3382 = vmatprep.subr.mxu0 0.0
        %3383 = vmatpush1.msra.mxu0 0.0
        %3384 = vmatprep.subr.mxu0 0.0
        %3385 = vmatpush1.msra.mxu0 0.0
        %3386 = vmatprep.subr.mxu0 0.0
        %3387 = vmatpush1.msra.mxu0 0.0
        %3388 = vmatprep.subr.mxu0 0.0
        %3389 = vmatpush1.msra.mxu0 0.0
        %3390 = vmatprep.subr.mxu0 0.0
        %3391 = vmatpush1.msra.mxu0 0.0
        %3392 = vmatprep.subr.mxu0 0.0
        %3393 = vmatpush1.msra.mxu0 0.0
        %v3394 = vand.u32 %v3362, 4294901760
        %3395 = vmatprep.subr.mxu0 %v3394
        %v3396 = vand.u32 %v3359, 4294901760
        %3397 = vmatpush1.msra.mxu0 %v3396
        %3398 = vmatprep.subr.mxu0 0.0
        %3399 = vmatpush2.msra.mxu0 0.0
        %3400 = vmatprep.subr.mxu0 0.0
        %3401 = vmatpush2.msra.mxu0 0.0
        %3402 = vmatprep.subr.mxu0 0.0
        %3403 = vmatpush2.msra.mxu0 0.0
        %3404 = vmatprep.subr.mxu0 0.0
        %3405 = vmatpush2.msra.mxu0 0.0
        %3406 = vmatprep.subr.mxu0 0.0
        %3407 = vmatpush2.msra.mxu0 0.0
        %3408 = vmatprep.subr.mxu0 0.0
        %3409 = vmatpush2.msra.mxu0 0.0
        %3410 = vmatprep.subr.mxu0 0.0
        %3411 = vmatpush2.msra.mxu0 0.0
        %3412 = vmatprep.subr.mxu0 0.0
        %3413 = vmatpush2.msra.mxu0 0.0
        %3414 = vmatprep.subr.mxu0 0.0
        %3415 = vmatpush2.msra.mxu0 0.0
        %3416 = vmatprep.subr.mxu0 0.0
        %3417 = vmatpush2.msra.mxu0 0.0
        %3418 = vmatprep.subr.mxu0 0.0
        %3419 = vmatpush2.msra.mxu0 0.0
        %3420 = vmatprep.subr.mxu0 0.0
        %3421 = vmatpush2.msra.mxu0 0.0
        %3422 = vmatprep.subr.mxu0 0.0
        %3423 = vmatpush2.msra.mxu0 0.0
        %3424 = vmatprep.subr.mxu0 0.0
        %3425 = vmatpush2.msra.mxu0 0.0
        %3426 = vmatprep.subr.mxu0 0.0
        %3427 = vmatpush2.msra.mxu0 0.0
        %3428 = vmatprep.subr.mxu0 0.0
        %3429 = vmatpush2.msra.mxu0 0.0
        %3430 = vmatprep.mubr.f32.mxu0 0.0
        %v3431 = vand.u32 %v3356, 4294901760
        %v3432 = vsub.f32 %v3356, %v3431
        %v3433 = vand.u32 %v3432, 4294901760
        %v3434 = vsub.f32 %v3432, %v3433
        %v3435 = vand.u32 %v3434, 4294901760
        %3436 = vmatmul.mubr.f32.gmra.mxu0 %v3435
        %v3437 = vpop.f32.mrf.mxu0
        %v3438 = vadd.f32 %v3353, %v3437
        %v3439 = vpop.f32.mrf.mxu0
        %v3440 = vadd.f32 %v3353, %v3439
        %3441 = vdwg.mxu0
        %3442 = vmatprep.subr.mxu0 0.0
        %3443 = vmatpush1.msra.mxu0 0.0
        %3444 = vmatprep.subr.mxu0 0.0
        %3445 = vmatpush1.msra.mxu0 0.0
        %3446 = vmatprep.subr.mxu0 0.0
        %3447 = vmatpush1.msra.mxu0 0.0
        %3448 = vmatprep.subr.mxu0 0.0
        %3449 = vmatpush1.msra.mxu0 0.0
        %3450 = vmatprep.subr.mxu0 0.0
        %3451 = vmatpush1.msra.mxu0 0.0
        %3452 = vmatprep.subr.mxu0 0.0
        %3453 = vmatpush1.msra.mxu0 0.0
        %3454 = vmatprep.subr.mxu0 0.0
        %3455 = vmatpush1.msra.mxu0 0.0
        %3456 = vmatprep.subr.mxu0 0.0
        %3457 = vmatpush1.msra.mxu0 0.0
        %3458 = vmatprep.subr.mxu0 0.0
        %3459 = vmatpush1.msra.mxu0 0.0
        %3460 = vmatprep.subr.mxu0 0.0
        %3461 = vmatpush1.msra.mxu0 0.0
        %3462 = vmatprep.subr.mxu0 0.0
        %3463 = vmatpush1.msra.mxu0 0.0
        %3464 = vmatprep.subr.mxu0 0.0
        %3465 = vmatpush1.msra.mxu0 0.0
        %3466 = vmatprep.subr.mxu0 0.0
        %3467 = vmatpush1.msra.mxu0 0.0
        %3468 = vmatprep.subr.mxu0 0.0
        %3469 = vmatpush1.msra.mxu0 0.0
        %3470 = vmatprep.subr.mxu0 0.0
        %3471 = vmatpush1.msra.mxu0 0.0
        %v3472 = vand.u32 %v3362, 4294901760
        %v3473 = vsub.f32 %v3362, %v3472
        %v3474 = vand.u32 %v3473, 4294901760
        %v3475 = vsub.f32 %v3473, %v3474
        %v3476 = vand.u32 %v3475, 4294901760
        %3477 = vmatprep.subr.mxu0 %v3476
        %v3478 = vand.u32 %v3359, 4294901760
        %v3479 = vsub.f32 %v3359, %v3478
        %v3480 = vand.u32 %v3479, 4294901760
        %v3481 = vsub.f32 %v3479, %v3480
        %v3482 = vand.u32 %v3481, 4294901760
        %3483 = vmatpush1.msra.mxu0 %v3482
        %3484 = vmatprep.subr.mxu0 0.0
        %3485 = vmatpush2.msra.mxu0 0.0
        %3486 = vmatprep.subr.mxu0 0.0
        %3487 = vmatpush2.msra.mxu0 0.0
        %3488 = vmatprep.subr.mxu0 0.0
        %3489 = vmatpush2.msra.mxu0 0.0
        %3490 = vmatprep.subr.mxu0 0.0
        %3491 = vmatpush2.msra.mxu0 0.0
        %3492 = vmatprep.subr.mxu0 0.0
        %3493 = vmatpush2.msra.mxu0 0.0
        %3494 = vmatprep.subr.mxu0 0.0
        %3495 = vmatpush2.msra.mxu0 0.0
        %3496 = vmatprep.subr.mxu0 0.0
        %3497 = vmatpush2.msra.mxu0 0.0
        %3498 = vmatprep.subr.mxu0 0.0
        %3499 = vmatpush2.msra.mxu0 0.0
        %3500 = vmatprep.subr.mxu0 0.0
        %3501 = vmatpush2.msra.mxu0 0.0
        %3502 = vmatprep.subr.mxu0 0.0
        %3503 = vmatpush2.msra.mxu0 0.0
        %3504 = vmatprep.subr.mxu0 0.0
        %3505 = vmatpush2.msra.mxu0 0.0
        %3506 = vmatprep.subr.mxu0 0.0
        %3507 = vmatpush2.msra.mxu0 0.0
        %3508 = vmatprep.subr.mxu0 0.0
        %3509 = vmatpush2.msra.mxu0 0.0
        %3510 = vmatprep.subr.mxu0 0.0
        %3511 = vmatpush2.msra.mxu0 0.0
        %3512 = vmatprep.subr.mxu0 0.0
        %3513 = vmatpush2.msra.mxu0 0.0
        %3514 = vmatprep.subr.mxu0 0.0
        %3515 = vmatpush2.msra.mxu0 0.0
        %3516 = vmatprep.mubr.f32.mxu0 0.0
        %v3517 = vand.u32 %v3356, 4294901760
        %3518 = vmatmul.mubr.f32.gmra.mxu0 %v3517
        %v3519 = vpop.f32.mrf.mxu0
        %v3520 = vadd.f32 %v3438, %v3519
        %v3521 = vpop.f32.mrf.mxu0
        %v3522 = vadd.f32 %v3440, %v3521
        %3523 = vdwg.mxu0
        %3524 = vmatprep.subr.mxu0 0.0
        %3525 = vmatpush1.msra.mxu0 0.0
        %3526 = vmatprep.subr.mxu0 0.0
        %3527 = vmatpush1.msra.mxu0 0.0
        %3528 = vmatprep.subr.mxu0 0.0
        %3529 = vmatpush1.msra.mxu0 0.0
        %3530 = vmatprep.subr.mxu0 0.0
        %3531 = vmatpush1.msra.mxu0 0.0
        %3532 = vmatprep.subr.mxu0 0.0
        %3533 = vmatpush1.msra.mxu0 0.0
        %3534 = vmatprep.subr.mxu0 0.0
        %3535 = vmatpush1.msra.mxu0 0.0
        %3536 = vmatprep.subr.mxu0 0.0
        %3537 = vmatpush1.msra.mxu0 0.0
        %3538 = vmatprep.subr.mxu0 0.0
        %3539 = vmatpush1.msra.mxu0 0.0
        %3540 = vmatprep.subr.mxu0 0.0
        %3541 = vmatpush1.msra.mxu0 0.0
        %3542 = vmatprep.subr.mxu0 0.0
        %3543 = vmatpush1.msra.mxu0 0.0
        %3544 = vmatprep.subr.mxu0 0.0
        %3545 = vmatpush1.msra.mxu0 0.0
        %3546 = vmatprep.subr.mxu0 0.0
        %3547 = vmatpush1.msra.mxu0 0.0
        %3548 = vmatprep.subr.mxu0 0.0
        %3549 = vmatpush1.msra.mxu0 0.0
        %3550 = vmatprep.subr.mxu0 0.0
        %3551 = vmatpush1.msra.mxu0 0.0
        %3552 = vmatprep.subr.mxu0 0.0
        %3553 = vmatpush1.msra.mxu0 0.0
        %v3554 = vand.u32 %v3362, 4294901760
        %v3555 = vsub.f32 %v3362, %v3554
        %3556 = vmatprep.subr.mxu0 %v3555
        %v3557 = vand.u32 %v3359, 4294901760
        %v3558 = vsub.f32 %v3359, %v3557
        %3559 = vmatpush1.msra.mxu0 %v3558
        %3560 = vmatprep.subr.mxu0 0.0
        %3561 = vmatpush2.msra.mxu0 0.0
        %3562 = vmatprep.subr.mxu0 0.0
        %3563 = vmatpush2.msra.mxu0 0.0
        %3564 = vmatprep.subr.mxu0 0.0
        %3565 = vmatpush2.msra.mxu0 0.0
        %3566 = vmatprep.subr.mxu0 0.0
        %3567 = vmatpush2.msra.mxu0 0.0
        %3568 = vmatprep.subr.mxu0 0.0
        %3569 = vmatpush2.msra.mxu0 0.0
        %3570 = vmatprep.subr.mxu0 0.0
        %3571 = vmatpush2.msra.mxu0 0.0
        %3572 = vmatprep.subr.mxu0 0.0
        %3573 = vmatpush2.msra.mxu0 0.0
        %3574 = vmatprep.subr.mxu0 0.0
        %3575 = vmatpush2.msra.mxu0 0.0
        %3576 = vmatprep.subr.mxu0 0.0
        %3577 = vmatpush2.msra.mxu0 0.0
        %3578 = vmatprep.subr.mxu0 0.0
        %3579 = vmatpush2.msra.mxu0 0.0
        %3580 = vmatprep.subr.mxu0 0.0
        %3581 = vmatpush2.msra.mxu0 0.0
        %3582 = vmatprep.subr.mxu0 0.0
        %3583 = vmatpush2.msra.mxu0 0.0
        %3584 = vmatprep.subr.mxu0 0.0
        %3585 = vmatpush2.msra.mxu0 0.0
        %3586 = vmatprep.subr.mxu0 0.0
        %3587 = vmatpush2.msra.mxu0 0.0
        %3588 = vmatprep.subr.mxu0 0.0
        %3589 = vmatpush2.msra.mxu0 0.0
        %3590 = vmatprep.subr.mxu0 0.0
        %3591 = vmatpush2.msra.mxu0 0.0
        %3592 = vmatprep.mubr.f32.mxu0 0.0
        %v3593 = vand.u32 %v3356, 4294901760
        %v3594 = vsub.f32 %v3356, %v3593
        %3595 = vmatmul.mubr.f32.gmra.mxu0 %v3594
        %v3596 = vpop.f32.mrf.mxu0
        %v3597 = vadd.f32 %v3520, %v3596
        %v3598 = vpop.f32.mrf.mxu0
        %v3599 = vadd.f32 %v3522, %v3598
        %3600 = vdwg.mxu0
        %3601 = vmatprep.subr.mxu0 0.0
        %3602 = vmatpush1.msra.mxu0 0.0
        %3603 = vmatprep.subr.mxu0 0.0
        %3604 = vmatpush1.msra.mxu0 0.0
        %3605 = vmatprep.subr.mxu0 0.0
        %3606 = vmatpush1.msra.mxu0 0.0
        %3607 = vmatprep.subr.mxu0 0.0
        %3608 = vmatpush1.msra.mxu0 0.0
        %3609 = vmatprep.subr.mxu0 0.0
        %3610 = vmatpush1.msra.mxu0 0.0
        %3611 = vmatprep.subr.mxu0 0.0
        %3612 = vmatpush1.msra.mxu0 0.0
        %3613 = vmatprep.subr.mxu0 0.0
        %3614 = vmatpush1.msra.mxu0 0.0
        %3615 = vmatprep.subr.mxu0 0.0
        %3616 = vmatpush1.msra.mxu0 0.0
        %3617 = vmatprep.subr.mxu0 0.0
        %3618 = vmatpush1.msra.mxu0 0.0
        %3619 = vmatprep.subr.mxu0 0.0
        %3620 = vmatpush1.msra.mxu0 0.0
        %3621 = vmatprep.subr.mxu0 0.0
        %3622 = vmatpush1.msra.mxu0 0.0
        %3623 = vmatprep.subr.mxu0 0.0
        %3624 = vmatpush1.msra.mxu0 0.0
        %3625 = vmatprep.subr.mxu0 0.0
        %3626 = vmatpush1.msra.mxu0 0.0
        %3627 = vmatprep.subr.mxu0 0.0
        %3628 = vmatpush1.msra.mxu0 0.0
        %3629 = vmatprep.subr.mxu0 0.0
        %3630 = vmatpush1.msra.mxu0 0.0
        %v3631 = vand.u32 %v3362, 4294901760
        %3632 = vmatprep.subr.mxu0 %v3631
        %v3633 = vand.u32 %v3359, 4294901760
        %3634 = vmatpush1.msra.mxu0 %v3633
        %3635 = vmatprep.subr.mxu0 0.0
        %3636 = vmatpush2.msra.mxu0 0.0
        %3637 = vmatprep.subr.mxu0 0.0
        %3638 = vmatpush2.msra.mxu0 0.0
        %3639 = vmatprep.subr.mxu0 0.0
        %3640 = vmatpush2.msra.mxu0 0.0
        %3641 = vmatprep.subr.mxu0 0.0
        %3642 = vmatpush2.msra.mxu0 0.0
        %3643 = vmatprep.subr.mxu0 0.0
        %3644 = vmatpush2.msra.mxu0 0.0
        %3645 = vmatprep.subr.mxu0 0.0
        %3646 = vmatpush2.msra.mxu0 0.0
        %3647 = vmatprep.subr.mxu0 0.0
        %3648 = vmatpush2.msra.mxu0 0.0
        %3649 = vmatprep.subr.mxu0 0.0
        %3650 = vmatpush2.msra.mxu0 0.0
        %3651 = vmatprep.subr.mxu0 0.0
        %3652 = vmatpush2.msra.mxu0 0.0
        %3653 = vmatprep.subr.mxu0 0.0
        %3654 = vmatpush2.msra.mxu0 0.0
        %3655 = vmatprep.subr.mxu0 0.0
        %3656 = vmatpush2.msra.mxu0 0.0
        %3657 = vmatprep.subr.mxu0 0.0
        %3658 = vmatpush2.msra.mxu0 0.0
        %3659 = vmatprep.subr.mxu0 0.0
        %3660 = vmatpush2.msra.mxu0 0.0
        %3661 = vmatprep.subr.mxu0 0.0
        %3662 = vmatpush2.msra.mxu0 0.0
        %3663 = vmatprep.subr.mxu0 0.0
        %3664 = vmatpush2.msra.mxu0 0.0
        %3665 = vmatprep.subr.mxu0 0.0
        %3666 = vmatpush2.msra.mxu0 0.0
        %3667 = vmatprep.mubr.f32.mxu0 0.0
        %v3668 = vand.u32 %v3356, 4294901760
        %v3669 = vsub.f32 %v3356, %v3668
        %v3670 = vand.u32 %v3669, 4294901760
        %3671 = vmatmul.mubr.f32.gmra.mxu0 %v3670
        %v3672 = vpop.f32.mrf.mxu0
        %v3673 = vadd.f32 %v3597, %v3672
        %v3674 = vpop.f32.mrf.mxu0
        %v3675 = vadd.f32 %v3599, %v3674
        %3676 = vdwg.mxu0
        %3677 = vmatprep.subr.mxu0 0.0
        %3678 = vmatpush1.msra.mxu0 0.0
        %3679 = vmatprep.subr.mxu0 0.0
        %3680 = vmatpush1.msra.mxu0 0.0
        %3681 = vmatprep.subr.mxu0 0.0
        %3682 = vmatpush1.msra.mxu0 0.0
        %3683 = vmatprep.subr.mxu0 0.0
        %3684 = vmatpush1.msra.mxu0 0.0
        %3685 = vmatprep.subr.mxu0 0.0
        %3686 = vmatpush1.msra.mxu0 0.0
        %3687 = vmatprep.subr.mxu0 0.0
        %3688 = vmatpush1.msra.mxu0 0.0
        %3689 = vmatprep.subr.mxu0 0.0
        %3690 = vmatpush1.msra.mxu0 0.0
        %3691 = vmatprep.subr.mxu0 0.0
        %3692 = vmatpush1.msra.mxu0 0.0
        %3693 = vmatprep.subr.mxu0 0.0
        %3694 = vmatpush1.msra.mxu0 0.0
        %3695 = vmatprep.subr.mxu0 0.0
        %3696 = vmatpush1.msra.mxu0 0.0
        %3697 = vmatprep.subr.mxu0 0.0
        %3698 = vmatpush1.msra.mxu0 0.0
        %3699 = vmatprep.subr.mxu0 0.0
        %3700 = vmatpush1.msra.mxu0 0.0
        %3701 = vmatprep.subr.mxu0 0.0
        %3702 = vmatpush1.msra.mxu0 0.0
        %3703 = vmatprep.subr.mxu0 0.0
        %3704 = vmatpush1.msra.mxu0 0.0
        %3705 = vmatprep.subr.mxu0 0.0
        %3706 = vmatpush1.msra.mxu0 0.0
        %v3707 = vand.u32 %v3362, 4294901760
        %v3708 = vsub.f32 %v3362, %v3707
        %v3709 = vand.u32 %v3708, 4294901760
        %3710 = vmatprep.subr.mxu0 %v3709
        %v3711 = vand.u32 %v3359, 4294901760
        %v3712 = vsub.f32 %v3359, %v3711
        %v3713 = vand.u32 %v3712, 4294901760
        %3714 = vmatpush1.msra.mxu0 %v3713
        %3715 = vmatprep.subr.mxu0 0.0
        %3716 = vmatpush2.msra.mxu0 0.0
        %3717 = vmatprep.subr.mxu0 0.0
        %3718 = vmatpush2.msra.mxu0 0.0
        %3719 = vmatprep.subr.mxu0 0.0
        %3720 = vmatpush2.msra.mxu0 0.0
        %3721 = vmatprep.subr.mxu0 0.0
        %3722 = vmatpush2.msra.mxu0 0.0
        %3723 = vmatprep.subr.mxu0 0.0
        %3724 = vmatpush2.msra.mxu0 0.0
        %3725 = vmatprep.subr.mxu0 0.0
        %3726 = vmatpush2.msra.mxu0 0.0
        %3727 = vmatprep.subr.mxu0 0.0
        %3728 = vmatpush2.msra.mxu0 0.0
        %3729 = vmatprep.subr.mxu0 0.0
        %3730 = vmatpush2.msra.mxu0 0.0
        %3731 = vmatprep.subr.mxu0 0.0
        %3732 = vmatpush2.msra.mxu0 0.0
        %3733 = vmatprep.subr.mxu0 0.0
        %3734 = vmatpush2.msra.mxu0 0.0
        %3735 = vmatprep.subr.mxu0 0.0
        %3736 = vmatpush2.msra.mxu0 0.0
        %3737 = vmatprep.subr.mxu0 0.0
        %3738 = vmatpush2.msra.mxu0 0.0
        %3739 = vmatprep.subr.mxu0 0.0
        %3740 = vmatpush2.msra.mxu0 0.0
        %3741 = vmatprep.subr.mxu0 0.0
        %3742 = vmatpush2.msra.mxu0 0.0
        %3743 = vmatprep.subr.mxu0 0.0
        %3744 = vmatpush2.msra.mxu0 0.0
        %3745 = vmatprep.subr.mxu0 0.0
        %3746 = vmatpush2.msra.mxu0 0.0
        %3747 = vmatprep.mubr.f32.mxu0 0.0
        %v3748 = vand.u32 %v3356, 4294901760
        %3749 = vmatmul.mubr.f32.gmra.mxu0 %v3748
        %v3750 = vpop.f32.mrf.mxu0
        %v3751 = vadd.f32 %v3673, %v3750
        %v3752 = vpop.f32.mrf.mxu0
        %v3753 = vadd.f32 %v3675, %v3752
        %3754 = vdwg.mxu0
        %3755 = vmatprep.subr.mxu0 0.0
        %3756 = vmatpush1.msra.mxu0 0.0
        %3757 = vmatprep.subr.mxu0 0.0
        %3758 = vmatpush1.msra.mxu0 0.0
        %3759 = vmatprep.subr.mxu0 0.0
        %3760 = vmatpush1.msra.mxu0 0.0
        %3761 = vmatprep.subr.mxu0 0.0
        %3762 = vmatpush1.msra.mxu0 0.0
        %3763 = vmatprep.subr.mxu0 0.0
        %3764 = vmatpush1.msra.mxu0 0.0
        %3765 = vmatprep.subr.mxu0 0.0
        %3766 = vmatpush1.msra.mxu0 0.0
        %3767 = vmatprep.subr.mxu0 0.0
        %3768 = vmatpush1.msra.mxu0 0.0
        %3769 = vmatprep.subr.mxu0 0.0
        %3770 = vmatpush1.msra.mxu0 0.0
        %3771 = vmatprep.subr.mxu0 0.0
        %3772 = vmatpush1.msra.mxu0 0.0
        %3773 = vmatprep.subr.mxu0 0.0
        %3774 = vmatpush1.msra.mxu0 0.0
        %3775 = vmatprep.subr.mxu0 0.0
        %3776 = vmatpush1.msra.mxu0 0.0
        %3777 = vmatprep.subr.mxu0 0.0
        %3778 = vmatpush1.msra.mxu0 0.0
        %3779 = vmatprep.subr.mxu0 0.0
        %3780 = vmatpush1.msra.mxu0 0.0
        %3781 = vmatprep.subr.mxu0 0.0
        %3782 = vmatpush1.msra.mxu0 0.0
        %3783 = vmatprep.subr.mxu0 0.0
        %3784 = vmatpush1.msra.mxu0 0.0
        %v3785 = vand.u32 %v3362, 4294901760
        %3786 = vmatprep.subr.mxu0 %v3785
        %v3787 = vand.u32 %v3359, 4294901760
        %3788 = vmatpush1.msra.mxu0 %v3787
        %3789 = vmatprep.subr.mxu0 0.0
        %3790 = vmatpush2.msra.mxu0 0.0
        %3791 = vmatprep.subr.mxu0 0.0
        %3792 = vmatpush2.msra.mxu0 0.0
        %3793 = vmatprep.subr.mxu0 0.0
        %3794 = vmatpush2.msra.mxu0 0.0
        %3795 = vmatprep.subr.mxu0 0.0
        %3796 = vmatpush2.msra.mxu0 0.0
        %3797 = vmatprep.subr.mxu0 0.0
        %3798 = vmatpush2.msra.mxu0 0.0
        %3799 = vmatprep.subr.mxu0 0.0
        %3800 = vmatpush2.msra.mxu0 0.0
        %3801 = vmatprep.subr.mxu0 0.0
        %3802 = vmatpush2.msra.mxu0 0.0
        %3803 = vmatprep.subr.mxu0 0.0
        %3804 = vmatpush2.msra.mxu0 0.0
        %3805 = vmatprep.subr.mxu0 0.0
        %3806 = vmatpush2.msra.mxu0 0.0
        %3807 = vmatprep.subr.mxu0 0.0
        %3808 = vmatpush2.msra.mxu0 0.0
        %3809 = vmatprep.subr.mxu0 0.0
        %3810 = vmatpush2.msra.mxu0 0.0
        %3811 = vmatprep.subr.mxu0 0.0
        %3812 = vmatpush2.msra.mxu0 0.0
        %3813 = vmatprep.subr.mxu0 0.0
        %3814 = vmatpush2.msra.mxu0 0.0
        %3815 = vmatprep.subr.mxu0 0.0
        %3816 = vmatpush2.msra.mxu0 0.0
        %3817 = vmatprep.subr.mxu0 0.0
        %3818 = vmatpush2.msra.mxu0 0.0
        %3819 = vmatprep.subr.mxu0 0.0
        %3820 = vmatpush2.msra.mxu0 0.0
        %3821 = vmatprep.mubr.f32.mxu0 0.0
        %v3822 = vand.u32 %v3356, 4294901760
        %3823 = vmatmul.mubr.f32.gmra.mxu0 %v3822
        %v3824 = vpop.f32.mrf.mxu0
        %v3825 = vadd.f32 %v3751, %v3824
        %v3826 = vpop.f32.mrf.mxu0
        %v3827 = vadd.f32 %v3753, %v3826
        %3828 = vdwg.mxu0
        %vm3829 = vcmask 1041408
        %v3830 = vsel %vm3829, %v3344, 0.0
        %v3831 = vrot.slane %v3830, 4
        %v3832 = vadd.f32 %v3830, %v3831
        %v3833 = vrot.slane %v3832, 2
        %v3834 = vadd.f32 %v3832, %v3833
        %v3835 = vrot.slane %v3834, 1
        %v3836 = vadd.f32 %v3834, %v3835
        %v3837 = vsel %vm3829, %v3346, 0.0
        %v3838 = vrot.slane %v3837, 4
        %v3839 = vadd.f32 %v3837, %v3838
        %v3840 = vrot.slane %v3839, 2
        %v3841 = vadd.f32 %v3839, %v3840
        %v3842 = vrot.slane %v3841, 1
        %v3843 = vadd.f32 %v3841, %v3842
        %v3844 = vsel %vm3829, %v3825, 0.0
        %v3845 = vrot.slane %v3844, 4
        %v3846 = vadd.f32 %v3844, %v3845
        %v3847 = vrot.slane %v3846, 2
        %v3848 = vadd.f32 %v3846, %v3847
        %v3849 = vrot.slane %v3848, 1
        %v3850 = vadd.f32 %v3848, %v3849
        %v3851 = vsel %vm3829, %v3827, 0.0
        %v3852 = vrot.slane %v3851, 4
        %v3853 = vadd.f32 %v3851, %v3852
        %v3854 = vrot.slane %v3853, 2
        %v3855 = vadd.f32 %v3853, %v3854
        %v3856 = vrot.slane %v3855, 1
        %v3857 = vadd.f32 %v3855, %v3856
        %v3858 = vadd.f32 %v3836, %v3850
        %v3859 = vadd.f32 %v3843, %v3857
        %v3860 = vmul.f32 %v3858, 0.25
        %v3861 = vmul.f32 %v3859, 0.25
        %v3862 = vsel %vm3829, %v3344, -inf
        %v3863 = vrot.slane %v3862, 4
        %v3864 = vmax.f32 %v3862, %v3863
        %v3865 = vrot.slane %v3864, 2
        %v3866 = vmax.f32 %v3864, %v3865
        %v3867 = vrot.slane %v3866, 1
        %v3868 = vmax.f32 %v3866, %v3867
        %v3869 = vsel %vm3829, %v3346, -inf
        %v3870 = vrot.slane %v3869, 4
        %v3871 = vmax.f32 %v3869, %v3870
        %v3872 = vrot.slane %v3871, 2
        %v3873 = vmax.f32 %v3871, %v3872
        %v3874 = vrot.slane %v3873, 1
        %v3875 = vmax.f32 %v3873, %v3874
        %v3876 = vsel %vm3829, %v3825, -inf
        %v3877 = vrot.slane %v3876, 4
        %v3878 = vmax.f32 %v3876, %v3877
        %v3879 = vrot.slane %v3878, 2
        %v3880 = vmax.f32 %v3878, %v3879
        %v3881 = vrot.slane %v3880, 1
        %v3882 = vmax.f32 %v3880, %v3881
        %v3883 = vsel %vm3829, %v3827, -inf
        %v3884 = vrot.slane %v3883, 4
        %v3885 = vmax.f32 %v3883, %v3884
        %v3886 = vrot.slane %v3885, 2
        %v3887 = vmax.f32 %v3885, %v3886
        %v3888 = vrot.slane %v3887, 1
        %v3889 = vmax.f32 %v3887, %v3888
        %v3890 = vmax.f32 %v3868, %v3882
        %v3891 = vmax.f32 %v3875, %v3889
        %vm3892 = vcmask 517120
        %3893 = vst.msk [vmem:[#allocation4] sm:$0x3] %vm3892, 0.0
        %vm3894 = vcmask 1041920
        %3895 = vst.msk [vmem:[#allocation4 + $0x4] sm:$0x3] %vm3894, 0.0
        %v3898 = vcombine.low %v3860, %v3861
        %v3900 = vunpack.c.l.s4 1966171168
        %v3901 = vunpack.c.0.s8 %v3900
        %v3902 = vlaneseq
        %v3903 = vshrl.u32 %v3902, 7
        %v3904 = vsub.s32 %v3901, %v3903
        %v3905 = vrot.slane %v3898, %v3904
        %v3907 = vunpack.c.l.s4 1966171168
        %v3908 = vunpack.c.0.s8 %v3907
        %v3909 = vlaneseq
        %v3910 = vshrl.u32 %v3909, 7
        %v3911 = vsub.s32 %v3908, %v3910
        %v3912 = vrot.slane %v3905, %v3911
        %3913 = vrot.lane.b32.xlu0 %v3912, 64
        %v3914 = vpop.permute.xlu0 %3913
        %v3915 = vrot.slane %v3914, 7
        %v3916 = vsel %vm618, %v3915, %v3914
        %v3918 = vlaneseq
        %vm3919 = vcmp.ge.s32.totalorder %v3918, 64
        %vm3920 = vcmp.lt.s32.totalorder %v3918, 320
        %vm3921 = vmand %vm3919, %vm3920
        %3922 = vst.msk [vmem:[#allocation4] ss:$2 sm:$0x7] %vm3921, %v3916
        %v3925 = vcombine.low %v3890, %v3891
        %v3927 = vunpack.c.l.s4 1966171168
        %v3928 = vunpack.c.0.s8 %v3927
        %v3929 = vlaneseq
        %v3930 = vshrl.u32 %v3929, 7
        %v3931 = vsub.s32 %v3928, %v3930
        %v3932 = vrot.slane %v3925, %v3931
        %v3934 = vunpack.c.l.s4 1966171168
        %v3935 = vunpack.c.0.s8 %v3934
        %v3936 = vlaneseq
        %v3937 = vshrl.u32 %v3936, 7
        %v3938 = vsub.s32 %v3935, %v3937
        %v3939 = vrot.slane %v3932, %v3938
        %3940 = vrot.lane.b32.xlu0 %v3939, 64
        %v3941 = vpop.permute.xlu0 %3940
        %v3942 = vrot.slane %v3941, 7
        %v3943 = vsel %vm618, %v3942, %v3941
        %s3945 = scalar_lea.vmem [#allocation4], 1
        %3946 = vst.msk [vmem:[%s3945] ss:$2 sm:$0x7] %vm3921, %v3943
        %v3947 = vld [vmem:[%s10] sm:$0x3]
        %v3948 = vld [vmem:[%s11] sm:$0x3]
        %3950 = vset.pattern.permute.xlu0 0
        %3951 = vperm.xlu0 %3950, %v3948
        %v3952 = vpop.permute.xlu0 %3951
        %v3954 = vadd.f32 %v3952, 0.0
        %v3955 = vld [vmem:[#allocation4] ss:$2 sm:$0x7]
        %v3957 = vlaneseq
        %v3958 = vshrl.u32 %v3957, 7
        %v3959 = vsub.s32 0, %v3958
        %v3960 = vrot.slane %v3955, %v3959
        %v3961 = vlaneseq
        %v3962 = vshrl.u32 %v3961, 7
        %v3963 = vsub.s32 1, %v3962
        %v3964 = vrot.slane %v3955, %v3963
        %v3965 = vlaneseq
        %v3966 = vshrl.u32 %v3965, 7
        %v3967 = vsub.s32 2, %v3966
        %v3968 = vrot.slane %v3955, %v3967
        %3973 = vset.pattern.permute.xlu0 0
        %3974 = vperm.xlu0 %3973, %v3947
        %v3975 = vpop.permute.xlu0 %3974
        %v3977 = vmul.f32 %v3960, %v3975
        %v3978 = vmul.f32 %v3964, %v3975
        %v3979 = vmul.f32 %v3968, %v3975
        %v3980 = vadd.f32 %v3977, 0.0
        %v3981 = vadd.f32 %v3978, 0.0
        %v3982 = vadd.f32 %v3979, 0.0
        %v3983 = vld [vmem:[%s3945] ss:$2 sm:$0x7]
        %v3985 = vlaneseq
        %v3986 = vshrl.u32 %v3985, 7
        %v3987 = vsub.s32 0, %v3986
        %v3988 = vrot.slane %v3983, %v3987
        %v3989 = vlaneseq
        %v3990 = vshrl.u32 %v3989, 7
        %v3991 = vsub.s32 1, %v3990
        %v3992 = vrot.slane %v3983, %v3991
        %v3993 = vlaneseq
        %v3994 = vshrl.u32 %v3993, 7
        %v3995 = vsub.s32 2, %v3994
        %v3996 = vrot.slane %v3983, %v3995
        %4000 = vset.pattern.permute.xlu0 49
        %4001 = vperm.xlu0 %4000, %v3947
        %v4002 = vpop.permute.xlu0 %4001
        %v4004 = vmul.f32 %v3988, %v4002
        %v4005 = vmul.f32 %v3992, %v4002
        %v4006 = vmul.f32 %v3996, %v4002
        %v4007 = vadd.f32 %v3980, %v4004
        %v4008 = vadd.f32 %v3981, %v4005
        %v4009 = vadd.f32 %v3982, %v4006
        %4010 = vset.pattern.permute.xlu0 7
        %4011 = vperm.xlu0 %4010, %v3947
        %v4012 = vpop.permute.xlu0 %4011
        %v4014 = vmul.f32 %v3960, %v4012
        %v4015 = vmul.f32 %v3964, %v4012
        %v4016 = vmul.f32 %v3968, %v4012
        %4020 = vrot.lane.b32.xlu0 %v4014, 112
        %v4021 = vpop.permute.xlu0 %4020
        %4022 = vrot.lane.b32.xlu0 %v4015, 112
        %v4023 = vpop.permute.xlu0 %4022
        %4024 = vrot.lane.b32.xlu0 %v4016, 112
        %v4025 = vpop.permute.xlu0 %4024
        %v4026 = vsel %vm534, %v4021, %v4023
        %v4027 = vsel %vm534, %v4023, %v4025
        %v4031 = vadd.f32 %v4007, %v4026
        %v4032 = vadd.f32 %v4008, %v4027
        %v4033 = vadd.f32 %v4009, %v4025
        %4034 = vset.pattern.permute.xlu0 56
        %4035 = vperm.xlu0 %4034, %v3947
        %v4036 = vpop.permute.xlu0 %4035
        %v4038 = vmul.f32 %v3988, %v4036
        %v4039 = vmul.f32 %v3992, %v4036
        %v4040 = vmul.f32 %v3996, %v4036
        %4044 = vrot.lane.b32.xlu0 %v4038, 112
        %v4045 = vpop.permute.xlu0 %4044
        %4046 = vrot.lane.b32.xlu0 %v4039, 112
        %v4047 = vpop.permute.xlu0 %4046
        %4048 = vrot.lane.b32.xlu0 %v4040, 112
        %v4049 = vpop.permute.xlu0 %4048
        %v4050 = vsel %vm534, %v4045, %v4047
        %v4051 = vsel %vm534, %v4047, %v4049
        %v4055 = vadd.f32 %v4031, %v4050
        %v4056 = vadd.f32 %v4032, %v4051
        %v4057 = vadd.f32 %v4033, %v4049
        %4058 = vset.pattern.permute.xlu0 14
        %4059 = vperm.xlu0 %4058, %v3947
        %v4060 = vpop.permute.xlu0 %4059
        %v4062 = vmul.f32 %v3960, %v4060
        %v4063 = vmul.f32 %v3964, %v4060
        %v4064 = vmul.f32 %v3968, %v4060
        %4068 = vrot.lane.b32.xlu0 %v4062, 96
        %v4069 = vpop.permute.xlu0 %4068
        %4070 = vrot.lane.b32.xlu0 %v4063, 96
        %v4071 = vpop.permute.xlu0 %4070
        %4072 = vrot.lane.b32.xlu0 %v4064, 96
        %v4073 = vpop.permute.xlu0 %4072
        %v4074 = vsel %vm562, %v4069, %v4071
        %v4075 = vsel %vm562, %v4071, %v4073
        %v4079 = vadd.f32 %v4055, %v4074
        %v4080 = vadd.f32 %v4056, %v4075
        %v4081 = vadd.f32 %v4057, %v4073
        %4082 = vset.pattern.permute.xlu0 63
        %4083 = vperm.xlu0 %4082, %v3947
        %v4084 = vpop.permute.xlu0 %4083
        %v4086 = vmul.f32 %v3988, %v4084
        %v4087 = vmul.f32 %v3992, %v4084
        %v4088 = vmul.f32 %v3996, %v4084
        %4092 = vrot.lane.b32.xlu0 %v4086, 96
        %v4093 = vpop.permute.xlu0 %4092
        %4094 = vrot.lane.b32.xlu0 %v4087, 96
        %v4095 = vpop.permute.xlu0 %4094
        %4096 = vrot.lane.b32.xlu0 %v4088, 96
        %v4097 = vpop.permute.xlu0 %4096
        %v4098 = vsel %vm562, %v4093, %v4095
        %v4099 = vsel %vm562, %v4095, %v4097
        %v4103 = vadd.f32 %v4079, %v4098
        %v4104 = vadd.f32 %v4080, %v4099
        %v4105 = vadd.f32 %v4081, %v4097
        %4106 = vset.pattern.permute.xlu0 21
        %4107 = vperm.xlu0 %4106, %v3947
        %v4108 = vpop.permute.xlu0 %4107
        %v4110 = vmul.f32 %v3960, %v4108
        %v4111 = vmul.f32 %v3964, %v4108
        %v4112 = vmul.f32 %v3968, %v4108
        %4116 = vrot.lane.b32.xlu0 %v4110, 80
        %v4117 = vpop.permute.xlu0 %4116
        %4118 = vrot.lane.b32.xlu0 %v4111, 80
        %v4119 = vpop.permute.xlu0 %4118
        %4120 = vrot.lane.b32.xlu0 %v4112, 80
        %v4121 = vpop.permute.xlu0 %4120
        %v4122 = vsel %vm590, %v4117, %v4119
        %v4123 = vsel %vm590, %v4119, %v4121
        %v4127 = vadd.f32 %v4103, %v4122
        %v4128 = vadd.f32 %v4104, %v4123
        %v4129 = vadd.f32 %v4105, %v4121
        %4130 = vset.pattern.permute.xlu0 70
        %4131 = vperm.xlu0 %4130, %v3947
        %v4132 = vpop.permute.xlu0 %4131
        %v4134 = vmul.f32 %v3988, %v4132
        %v4135 = vmul.f32 %v3992, %v4132
        %v4136 = vmul.f32 %v3996, %v4132
        %4140 = vrot.lane.b32.xlu0 %v4134, 80
        %v4141 = vpop.permute.xlu0 %4140
        %4142 = vrot.lane.b32.xlu0 %v4135, 80
        %v4143 = vpop.permute.xlu0 %4142
        %4144 = vrot.lane.b32.xlu0 %v4136, 80
        %v4145 = vpop.permute.xlu0 %4144
        %v4146 = vsel %vm590, %v4141, %v4143
        %v4147 = vsel %vm590, %v4143, %v4145
        %v4151 = vadd.f32 %v4127, %v4146
        %v4152 = vadd.f32 %v4128, %v4147
        %v4153 = vadd.f32 %v4129, %v4145
        %4154 = vset.pattern.permute.xlu0 28
        %4155 = vperm.xlu0 %4154, %v3947
        %v4156 = vpop.permute.xlu0 %4155
        %v4158 = vmul.f32 %v3960, %v4156
        %v4159 = vmul.f32 %v3964, %v4156
        %v4160 = vmul.f32 %v3968, %v4156
        %4164 = vrot.lane.b32.xlu0 %v4158, 64
        %v4165 = vpop.permute.xlu0 %4164
        %4166 = vrot.lane.b32.xlu0 %v4159, 64
        %v4167 = vpop.permute.xlu0 %4166
        %4168 = vrot.lane.b32.xlu0 %v4160, 64
        %v4169 = vpop.permute.xlu0 %4168
        %v4170 = vsel %vm618, %v4165, %v4167
        %v4171 = vsel %vm618, %v4167, %v4169
        %v4175 = vadd.f32 %v4151, %v4170
        %v4176 = vadd.f32 %v4152, %v4171
        %v4177 = vadd.f32 %v4153, %v4169
        %4178 = vset.pattern.permute.xlu0 77
        %4179 = vperm.xlu0 %4178, %v3947
        %v4180 = vpop.permute.xlu0 %4179
        %v4182 = vmul.f32 %v3988, %v4180
        %v4183 = vmul.f32 %v3992, %v4180
        %v4184 = vmul.f32 %v3996, %v4180
        %4188 = vrot.lane.b32.xlu0 %v4182, 64
        %v4189 = vpop.permute.xlu0 %4188
        %4190 = vrot.lane.b32.xlu0 %v4183, 64
        %v4191 = vpop.permute.xlu0 %4190
        %4192 = vrot.lane.b32.xlu0 %v4184, 64
        %v4193 = vpop.permute.xlu0 %4192
        %v4194 = vsel %vm618, %v4189, %v4191
        %v4195 = vsel %vm618, %v4191, %v4193
        %v4199 = vadd.f32 %v4175, %v4194
        %v4200 = vadd.f32 %v4176, %v4195
        %v4201 = vadd.f32 %v4177, %v4193
        %4202 = vset.pattern.permute.xlu0 35
        %4203 = vperm.xlu0 %4202, %v3947
        %v4204 = vpop.permute.xlu0 %4203
        %v4206 = vmul.f32 %v3960, %v4204
        %v4207 = vmul.f32 %v3964, %v4204
        %v4208 = vmul.f32 %v3968, %v4204
        %4212 = vrot.lane.b32.xlu0 %v4206, 48
        %v4213 = vpop.permute.xlu0 %4212
        %4214 = vrot.lane.b32.xlu0 %v4207, 48
        %v4215 = vpop.permute.xlu0 %4214
        %4216 = vrot.lane.b32.xlu0 %v4208, 48
        %v4217 = vpop.permute.xlu0 %4216
        %v4218 = vsel %vm476, %v4213, %v4215
        %v4219 = vsel %vm476, %v4215, %v4217
        %v4223 = vadd.f32 %v4199, %v4218
        %v4224 = vadd.f32 %v4200, %v4219
        %v4225 = vadd.f32 %v4201, %v4217
        %4226 = vset.pattern.permute.xlu0 84
        %4227 = vperm.xlu0 %4226, %v3947
        %v4228 = vpop.permute.xlu0 %4227
        %v4230 = vmul.f32 %v3988, %v4228
        %v4231 = vmul.f32 %v3992, %v4228
        %v4232 = vmul.f32 %v3996, %v4228
        %4236 = vrot.lane.b32.xlu0 %v4230, 48
        %v4237 = vpop.permute.xlu0 %4236
        %4238 = vrot.lane.b32.xlu0 %v4231, 48
        %v4239 = vpop.permute.xlu0 %4238
        %4240 = vrot.lane.b32.xlu0 %v4232, 48
        %v4241 = vpop.permute.xlu0 %4240
        %v4242 = vsel %vm476, %v4237, %v4239
        %v4243 = vsel %vm476, %v4239, %v4241
        %v4247 = vadd.f32 %v4223, %v4242
        %v4248 = vadd.f32 %v4224, %v4243
        %v4249 = vadd.f32 %v4225, %v4241
        %4250 = vset.pattern.permute.xlu0 42
        %4251 = vperm.xlu0 %4250, %v3947
        %v4252 = vpop.permute.xlu0 %4251
        %v4254 = vmul.f32 %v3960, %v4252
        %v4255 = vmul.f32 %v3964, %v4252
        %v4256 = vmul.f32 %v3968, %v4252
        %4260 = vrot.lane.b32.xlu0 %v4254, 32
        %v4261 = vpop.permute.xlu0 %4260
        %4262 = vrot.lane.b32.xlu0 %v4255, 32
        %v4263 = vpop.permute.xlu0 %4262
        %4264 = vrot.lane.b32.xlu0 %v4256, 32
        %v4265 = vpop.permute.xlu0 %4264
        %v4266 = vsel %vm1316, %v4261, %v4263
        %v4267 = vsel %vm1316, %v4263, %v4265
        %v4271 = vadd.f32 %v4247, %v4266
        %v4272 = vadd.f32 %v4248, %v4267
        %v4273 = vadd.f32 %v4249, %v4265
        %4274 = vset.pattern.permute.xlu0 91
        %4275 = vperm.xlu0 %4274, %v3947
        %v4276 = vpop.permute.xlu0 %4275
        %v4278 = vmul.f32 %v3988, %v4276
        %v4279 = vmul.f32 %v3992, %v4276
        %v4280 = vmul.f32 %v3996, %v4276
        %4284 = vrot.lane.b32.xlu0 %v4278, 32
        %v4285 = vpop.permute.xlu0 %4284
        %4286 = vrot.lane.b32.xlu0 %v4279, 32
        %v4287 = vpop.permute.xlu0 %4286
        %4288 = vrot.lane.b32.xlu0 %v4280, 32
        %v4289 = vpop.permute.xlu0 %4288
        %v4290 = vsel %vm1316, %v4285, %v4287
        %v4291 = vsel %vm1316, %v4287, %v4289
        %v4295 = vadd.f32 %v4271, %v4290
        %v4296 = vadd.f32 %v4272, %v4291
        %v4297 = vadd.f32 %v4273, %v4289
        %4298 = vrot.lane.b32.xlu0 %v1975, 13
        %v4299 = vpop.permute.xlu0 %4298
        %4300 = vrot.lane.b32.xlu0 %v1979, 13
        %v4301 = vpop.permute.xlu0 %4300
        %v4302 = vsel %vm1984, %v4299, %v4301
        %v4306 = vmul.f32 %v4295, %v4299
        %v4307 = vmul.f32 %v4296, %v4302
        %v4308 = vmul.f32 %v4297, %v4301
        %v4309 = vadd.f32 %v3954, %v4306
        %v4310 = vadd.f32 %v3954, %v4307
        %v4311 = vadd.f32 %v3954, %v4308
        %4312 = vset.pattern.permute.xlu0 1
        %4313 = vperm.xlu0 %4312, %v3947
        %v4314 = vpop.permute.xlu0 %4313
        %v4316 = vmul.f32 %v3960, %v4314
        %v4317 = vmul.f32 %v3964, %v4314
        %v4318 = vmul.f32 %v3968, %v4314
        %v4319 = vadd.f32 %v4316, 0.0
        %v4320 = vadd.f32 %v4317, 0.0
        %v4321 = vadd.f32 %v4318, 0.0
        %4322 = vset.pattern.permute.xlu0 50
        %4323 = vperm.xlu0 %4322, %v3947
        %v4324 = vpop.permute.xlu0 %4323
        %v4326 = vmul.f32 %v3988, %v4324
        %v4327 = vmul.f32 %v3992, %v4324
        %v4328 = vmul.f32 %v3996, %v4324
        %v4329 = vadd.f32 %v4319, %v4326
        %v4330 = vadd.f32 %v4320, %v4327
        %v4331 = vadd.f32 %v4321, %v4328
        %4332 = vset.pattern.permute.xlu0 8
        %4333 = vperm.xlu0 %4332, %v3947
        %v4334 = vpop.permute.xlu0 %4333
        %v4336 = vmul.f32 %v3960, %v4334
        %v4337 = vmul.f32 %v3964, %v4334
        %v4338 = vmul.f32 %v3968, %v4334
        %4342 = vrot.lane.b32.xlu0 %v4336, 112
        %v4343 = vpop.permute.xlu0 %4342
        %4344 = vrot.lane.b32.xlu0 %v4337, 112
        %v4345 = vpop.permute.xlu0 %4344
        %4346 = vrot.lane.b32.xlu0 %v4338, 112
        %v4347 = vpop.permute.xlu0 %4346
        %v4348 = vsel %vm534, %v4343, %v4345
        %v4349 = vsel %vm534, %v4345, %v4347
        %v4353 = vadd.f32 %v4329, %v4348
        %v4354 = vadd.f32 %v4330, %v4349
        %v4355 = vadd.f32 %v4331, %v4347
        %4356 = vset.pattern.permute.xlu0 57
        %4357 = vperm.xlu0 %4356, %v3947
        %v4358 = vpop.permute.xlu0 %4357
        %v4360 = vmul.f32 %v3988, %v4358
        %v4361 = vmul.f32 %v3992, %v4358
        %v4362 = vmul.f32 %v3996, %v4358
        %4366 = vrot.lane.b32.xlu0 %v4360, 112
        %v4367 = vpop.permute.xlu0 %4366
        %4368 = vrot.lane.b32.xlu0 %v4361, 112
        %v4369 = vpop.permute.xlu0 %4368
        %4370 = vrot.lane.b32.xlu0 %v4362, 112
        %v4371 = vpop.permute.xlu0 %4370
        %v4372 = vsel %vm534, %v4367, %v4369
        %v4373 = vsel %vm534, %v4369, %v4371
        %v4377 = vadd.f32 %v4353, %v4372
        %v4378 = vadd.f32 %v4354, %v4373
        %v4379 = vadd.f32 %v4355, %v4371
        %4380 = vset.pattern.permute.xlu0 15
        %4381 = vperm.xlu0 %4380, %v3947
        %v4382 = vpop.permute.xlu0 %4381
        %v4384 = vmul.f32 %v3960, %v4382
        %v4385 = vmul.f32 %v3964, %v4382
        %v4386 = vmul.f32 %v3968, %v4382
        %4390 = vrot.lane.b32.xlu0 %v4384, 96
        %v4391 = vpop.permute.xlu0 %4390
        %4392 = vrot.lane.b32.xlu0 %v4385, 96
        %v4393 = vpop.permute.xlu0 %4392
        %4394 = vrot.lane.b32.xlu0 %v4386, 96
        %v4395 = vpop.permute.xlu0 %4394
        %v4396 = vsel %vm562, %v4391, %v4393
        %v4397 = vsel %vm562, %v4393, %v4395
        %v4401 = vadd.f32 %v4377, %v4396
        %v4402 = vadd.f32 %v4378, %v4397
        %v4403 = vadd.f32 %v4379, %v4395
        %4404 = vset.pattern.permute.xlu0 64
        %4405 = vperm.xlu0 %4404, %v3947
        %v4406 = vpop.permute.xlu0 %4405
        %v4408 = vmul.f32 %v3988, %v4406
        %v4409 = vmul.f32 %v3992, %v4406
        %v4410 = vmul.f32 %v3996, %v4406
        %4414 = vrot.lane.b32.xlu0 %v4408, 96
        %v4415 = vpop.permute.xlu0 %4414
        %4416 = vrot.lane.b32.xlu0 %v4409, 96
        %v4417 = vpop.permute.xlu0 %4416
        %4418 = vrot.lane.b32.xlu0 %v4410, 96
        %v4419 = vpop.permute.xlu0 %4418
        %v4420 = vsel %vm562, %v4415, %v4417
        %v4421 = vsel %vm562, %v4417, %v4419
        %v4425 = vadd.f32 %v4401, %v4420
        %v4426 = vadd.f32 %v4402, %v4421
        %v4427 = vadd.f32 %v4403, %v4419
        %4428 = vset.pattern.permute.xlu0 22
        %4429 = vperm.xlu0 %4428, %v3947
        %v4430 = vpop.permute.xlu0 %4429
        %v4432 = vmul.f32 %v3960, %v4430
        %v4433 = vmul.f32 %v3964, %v4430
        %v4434 = vmul.f32 %v3968, %v4430
        %4438 = vrot.lane.b32.xlu0 %v4432, 80
        %v4439 = vpop.permute.xlu0 %4438
        %4440 = vrot.lane.b32.xlu0 %v4433, 80
        %v4441 = vpop.permute.xlu0 %4440
        %4442 = vrot.lane.b32.xlu0 %v4434, 80
        %v4443 = vpop.permute.xlu0 %4442
        %v4444 = vsel %vm590, %v4439, %v4441
        %v4445 = vsel %vm590, %v4441, %v4443
        %v4449 = vadd.f32 %v4425, %v4444
        %v4450 = vadd.f32 %v4426, %v4445
        %v4451 = vadd.f32 %v4427, %v4443
        %4452 = vset.pattern.permute.xlu0 71
        %4453 = vperm.xlu0 %4452, %v3947
        %v4454 = vpop.permute.xlu0 %4453
        %v4456 = vmul.f32 %v3988, %v4454
        %v4457 = vmul.f32 %v3992, %v4454
        %v4458 = vmul.f32 %v3996, %v4454
        %4462 = vrot.lane.b32.xlu0 %v4456, 80
        %v4463 = vpop.permute.xlu0 %4462
        %4464 = vrot.lane.b32.xlu0 %v4457, 80
        %v4465 = vpop.permute.xlu0 %4464
        %4466 = vrot.lane.b32.xlu0 %v4458, 80
        %v4467 = vpop.permute.xlu0 %4466
        %v4468 = vsel %vm590, %v4463, %v4465
        %v4469 = vsel %vm590, %v4465, %v4467
        %v4473 = vadd.f32 %v4449, %v4468
        %v4474 = vadd.f32 %v4450, %v4469
        %v4475 = vadd.f32 %v4451, %v4467
        %4476 = vset.pattern.permute.xlu0 29
        %4477 = vperm.xlu0 %4476, %v3947
        %v4478 = vpop.permute.xlu0 %4477
        %v4480 = vmul.f32 %v3960, %v4478
        %v4481 = vmul.f32 %v3964, %v4478
        %v4482 = vmul.f32 %v3968, %v4478
        %4486 = vrot.lane.b32.xlu0 %v4480, 64
        %v4487 = vpop.permute.xlu0 %4486
        %4488 = vrot.lane.b32.xlu0 %v4481, 64
        %v4489 = vpop.permute.xlu0 %4488
        %4490 = vrot.lane.b32.xlu0 %v4482, 64
        %v4491 = vpop.permute.xlu0 %4490
        %v4492 = vsel %vm618, %v4487, %v4489
        %v4493 = vsel %vm618, %v4489, %v4491
        %v4497 = vadd.f32 %v4473, %v4492
        %v4498 = vadd.f32 %v4474, %v4493
        %v4499 = vadd.f32 %v4475, %v4491
        %4500 = vset.pattern.permute.xlu0 78
        %4501 = vperm.xlu0 %4500, %v3947
        %v4502 = vpop.permute.xlu0 %4501
        %v4504 = vmul.f32 %v3988, %v4502
        %v4505 = vmul.f32 %v3992, %v4502
        %v4506 = vmul.f32 %v3996, %v4502
        %4510 = vrot.lane.b32.xlu0 %v4504, 64
        %v4511 = vpop.permute.xlu0 %4510
        %4512 = vrot.lane.b32.xlu0 %v4505, 64
        %v4513 = vpop.permute.xlu0 %4512
        %4514 = vrot.lane.b32.xlu0 %v4506, 64
        %v4515 = vpop.permute.xlu0 %4514
        %v4516 = vsel %vm618, %v4511, %v4513
        %v4517 = vsel %vm618, %v4513, %v4515
        %v4521 = vadd.f32 %v4497, %v4516
        %v4522 = vadd.f32 %v4498, %v4517
        %v4523 = vadd.f32 %v4499, %v4515
        %4524 = vset.pattern.permute.xlu0 36
        %4525 = vperm.xlu0 %4524, %v3947
        %v4526 = vpop.permute.xlu0 %4525
        %v4528 = vmul.f32 %v3960, %v4526
        %v4529 = vmul.f32 %v3964, %v4526
        %v4530 = vmul.f32 %v3968, %v4526
        %4534 = vrot.lane.b32.xlu0 %v4528, 48
        %v4535 = vpop.permute.xlu0 %4534
        %4536 = vrot.lane.b32.xlu0 %v4529, 48
        %v4537 = vpop.permute.xlu0 %4536
        %4538 = vrot.lane.b32.xlu0 %v4530, 48
        %v4539 = vpop.permute.xlu0 %4538
        %v4540 = vsel %vm476, %v4535, %v4537
        %v4541 = vsel %vm476, %v4537, %v4539
        %v4545 = vadd.f32 %v4521, %v4540
        %v4546 = vadd.f32 %v4522, %v4541
        %v4547 = vadd.f32 %v4523, %v4539
        %4548 = vset.pattern.permute.xlu0 85
        %4549 = vperm.xlu0 %4548, %v3947
        %v4550 = vpop.permute.xlu0 %4549
        %v4552 = vmul.f32 %v3988, %v4550
        %v4553 = vmul.f32 %v3992, %v4550
        %v4554 = vmul.f32 %v3996, %v4550
        %4558 = vrot.lane.b32.xlu0 %v4552, 48
        %v4559 = vpop.permute.xlu0 %4558
        %4560 = vrot.lane.b32.xlu0 %v4553, 48
        %v4561 = vpop.permute.xlu0 %4560
        %4562 = vrot.lane.b32.xlu0 %v4554, 48
        %v4563 = vpop.permute.xlu0 %4562
        %v4564 = vsel %vm476, %v4559, %v4561
        %v4565 = vsel %vm476, %v4561, %v4563
        %v4569 = vadd.f32 %v4545, %v4564
        %v4570 = vadd.f32 %v4546, %v4565
        %v4571 = vadd.f32 %v4547, %v4563
        %4572 = vset.pattern.permute.xlu0 43
        %4573 = vperm.xlu0 %4572, %v3947
        %v4574 = vpop.permute.xlu0 %4573
        %v4576 = vmul.f32 %v3960, %v4574
        %v4577 = vmul.f32 %v3964, %v4574
        %v4578 = vmul.f32 %v3968, %v4574
        %4582 = vrot.lane.b32.xlu0 %v4576, 32
        %v4583 = vpop.permute.xlu0 %4582
        %4584 = vrot.lane.b32.xlu0 %v4577, 32
        %v4585 = vpop.permute.xlu0 %4584
        %4586 = vrot.lane.b32.xlu0 %v4578, 32
        %v4587 = vpop.permute.xlu0 %4586
        %v4588 = vsel %vm1316, %v4583, %v4585
        %v4589 = vsel %vm1316, %v4585, %v4587
        %v4593 = vadd.f32 %v4569, %v4588
        %v4594 = vadd.f32 %v4570, %v4589
        %v4595 = vadd.f32 %v4571, %v4587
        %4596 = vset.pattern.permute.xlu0 92
        %4597 = vperm.xlu0 %4596, %v3947
        %v4598 = vpop.permute.xlu0 %4597
        %v4600 = vmul.f32 %v3988, %v4598
        %v4601 = vmul.f32 %v3992, %v4598
        %v4602 = vmul.f32 %v3996, %v4598
        %4606 = vrot.lane.b32.xlu0 %v4600, 32
        %v4607 = vpop.permute.xlu0 %4606
        %4608 = vrot.lane.b32.xlu0 %v4601, 32
        %v4609 = vpop.permute.xlu0 %4608
        %4610 = vrot.lane.b32.xlu0 %v4602, 32
        %v4611 = vpop.permute.xlu0 %4610
        %v4612 = vsel %vm1316, %v4607, %v4609
        %v4613 = vsel %vm1316, %v4609, %v4611
        %v4617 = vadd.f32 %v4593, %v4612
        %v4618 = vadd.f32 %v4594, %v4613
        %v4619 = vadd.f32 %v4595, %v4611
        %4620 = vrot.lane.b32.xlu0 %v634, 14
        %v4621 = vpop.permute.xlu0 %4620
        %4622 = vrot.lane.b32.xlu0 %v638, 14
        %v4623 = vpop.permute.xlu0 %4622
        %v4624 = vsel %vm643, %v4621, %v4623
        %v4628 = vmul.f32 %v4617, %v4621
        %v4629 = vmul.f32 %v4618, %v4624
        %v4630 = vmul.f32 %v4619, %v4623
        %4634 = vrot.lane.b32.xlu0 %v4628, 127
        %v4635 = vpop.permute.xlu0 %4634
        %4636 = vrot.lane.b32.xlu0 %v4629, 127
        %v4637 = vpop.permute.xlu0 %4636
        %4638 = vrot.lane.b32.xlu0 %v4630, 127
        %v4639 = vpop.permute.xlu0 %4638
        %vm4640 = vcmask 1039360
        %v4641 = vsel %vm4640, %v4635, %v4637
        %v4642 = vsel %vm4640, %v4637, %v4639
        %v4646 = vadd.f32 %v4309, %v4641
        %v4647 = vadd.f32 %v4310, %v4642
        %v4648 = vadd.f32 %v4311, %v4639
        %4649 = vset.pattern.permute.xlu0 2
        %4650 = vperm.xlu0 %4649, %v3947
        %v4651 = vpop.permute.xlu0 %4650
        %v4653 = vmul.f32 %v3960, %v4651
        %v4654 = vmul.f32 %v3964, %v4651
        %v4655 = vmul.f32 %v3968, %v4651
        %v4656 = vadd.f32 %v4653, 0.0
        %v4657 = vadd.f32 %v4654, 0.0
        %v4658 = vadd.f32 %v4655, 0.0
        %4659 = vset.pattern.permute.xlu0 51
        %4660 = vperm.xlu0 %4659, %v3947
        %v4661 = vpop.permute.xlu0 %4660
        %v4663 = vmul.f32 %v3988, %v4661
        %v4664 = vmul.f32 %v3992, %v4661
        %v4665 = vmul.f32 %v3996, %v4661
        %v4666 = vadd.f32 %v4656, %v4663
        %v4667 = vadd.f32 %v4657, %v4664
        %v4668 = vadd.f32 %v4658, %v4665
        %4669 = vset.pattern.permute.xlu0 9
        %4670 = vperm.xlu0 %4669, %v3947
        %v4671 = vpop.permute.xlu0 %4670
        %v4673 = vmul.f32 %v3960, %v4671
        %v4674 = vmul.f32 %v3964, %v4671
        %v4675 = vmul.f32 %v3968, %v4671
        %4679 = vrot.lane.b32.xlu0 %v4673, 112
        %v4680 = vpop.permute.xlu0 %4679
        %4681 = vrot.lane.b32.xlu0 %v4674, 112
        %v4682 = vpop.permute.xlu0 %4681
        %4683 = vrot.lane.b32.xlu0 %v4675, 112
        %v4684 = vpop.permute.xlu0 %4683
        %v4685 = vsel %vm534, %v4680, %v4682
        %v4686 = vsel %vm534, %v4682, %v4684
        %v4690 = vadd.f32 %v4666, %v4685
        %v4691 = vadd.f32 %v4667, %v4686
        %v4692 = vadd.f32 %v4668, %v4684
        %4693 = vset.pattern.permute.xlu0 58
        %4694 = vperm.xlu0 %4693, %v3947
        %v4695 = vpop.permute.xlu0 %4694
        %v4697 = vmul.f32 %v3988, %v4695
        %v4698 = vmul.f32 %v3992, %v4695
        %v4699 = vmul.f32 %v3996, %v4695
        %4703 = vrot.lane.b32.xlu0 %v4697, 112
        %v4704 = vpop.permute.xlu0 %4703
        %4705 = vrot.lane.b32.xlu0 %v4698, 112
        %v4706 = vpop.permute.xlu0 %4705
        %4707 = vrot.lane.b32.xlu0 %v4699, 112
        %v4708 = vpop.permute.xlu0 %4707
        %v4709 = vsel %vm534, %v4704, %v4706
        %v4710 = vsel %vm534, %v4706, %v4708
        %v4714 = vadd.f32 %v4690, %v4709
        %v4715 = vadd.f32 %v4691, %v4710
        %v4716 = vadd.f32 %v4692, %v4708
        %4717 = vset.pattern.permute.xlu0 16
        %4718 = vperm.xlu0 %4717, %v3947
        %v4719 = vpop.permute.xlu0 %4718
        %v4721 = vmul.f32 %v3960, %v4719
        %v4722 = vmul.f32 %v3964, %v4719
        %v4723 = vmul.f32 %v3968, %v4719
        %4727 = vrot.lane.b32.xlu0 %v4721, 96
        %v4728 = vpop.permute.xlu0 %4727
        %4729 = vrot.lane.b32.xlu0 %v4722, 96
        %v4730 = vpop.permute.xlu0 %4729
        %4731 = vrot.lane.b32.xlu0 %v4723, 96
        %v4732 = vpop.permute.xlu0 %4731
        %v4733 = vsel %vm562, %v4728, %v4730
        %v4734 = vsel %vm562, %v4730, %v4732
        %v4738 = vadd.f32 %v4714, %v4733
        %v4739 = vadd.f32 %v4715, %v4734
        %v4740 = vadd.f32 %v4716, %v4732
        %4741 = vset.pattern.permute.xlu0 65
        %4742 = vperm.xlu0 %4741, %v3947
        %v4743 = vpop.permute.xlu0 %4742
        %v4745 = vmul.f32 %v3988, %v4743
        %v4746 = vmul.f32 %v3992, %v4743
        %v4747 = vmul.f32 %v3996, %v4743
        %4751 = vrot.lane.b32.xlu0 %v4745, 96
        %v4752 = vpop.permute.xlu0 %4751
        %4753 = vrot.lane.b32.xlu0 %v4746, 96
        %v4754 = vpop.permute.xlu0 %4753
        %4755 = vrot.lane.b32.xlu0 %v4747, 96
        %v4756 = vpop.permute.xlu0 %4755
        %v4757 = vsel %vm562, %v4752, %v4754
        %v4758 = vsel %vm562, %v4754, %v4756
        %v4762 = vadd.f32 %v4738, %v4757
        %v4763 = vadd.f32 %v4739, %v4758
        %v4764 = vadd.f32 %v4740, %v4756
        %4765 = vset.pattern.permute.xlu0 23
        %4766 = vperm.xlu0 %4765, %v3947
        %v4767 = vpop.permute.xlu0 %4766
        %v4769 = vmul.f32 %v3960, %v4767
        %v4770 = vmul.f32 %v3964, %v4767
        %v4771 = vmul.f32 %v3968, %v4767
        %4775 = vrot.lane.b32.xlu0 %v4769, 80
        %v4776 = vpop.permute.xlu0 %4775
        %4777 = vrot.lane.b32.xlu0 %v4770, 80
        %v4778 = vpop.permute.xlu0 %4777
        %4779 = vrot.lane.b32.xlu0 %v4771, 80
        %v4780 = vpop.permute.xlu0 %4779
        %v4781 = vsel %vm590, %v4776, %v4778
        %v4782 = vsel %vm590, %v4778, %v4780
        %v4786 = vadd.f32 %v4762, %v4781
        %v4787 = vadd.f32 %v4763, %v4782
        %v4788 = vadd.f32 %v4764, %v4780
        %4789 = vset.pattern.permute.xlu0 72
        %4790 = vperm.xlu0 %4789, %v3947
        %v4791 = vpop.permute.xlu0 %4790
        %v4793 = vmul.f32 %v3988, %v4791
        %v4794 = vmul.f32 %v3992, %v4791
        %v4795 = vmul.f32 %v3996, %v4791
        %4799 = vrot.lane.b32.xlu0 %v4793, 80
        %v4800 = vpop.permute.xlu0 %4799
        %4801 = vrot.lane.b32.xlu0 %v4794, 80
        %v4802 = vpop.permute.xlu0 %4801
        %4803 = vrot.lane.b32.xlu0 %v4795, 80
        %v4804 = vpop.permute.xlu0 %4803
        %v4805 = vsel %vm590, %v4800, %v4802
        %v4806 = vsel %vm590, %v4802, %v4804
        %v4810 = vadd.f32 %v4786, %v4805
        %v4811 = vadd.f32 %v4787, %v4806
        %v4812 = vadd.f32 %v4788, %v4804
        %4813 = vset.pattern.permute.xlu0 30
        %4814 = vperm.xlu0 %4813, %v3947
        %v4815 = vpop.permute.xlu0 %4814
        %v4817 = vmul.f32 %v3960, %v4815
        %v4818 = vmul.f32 %v3964, %v4815
        %v4819 = vmul.f32 %v3968, %v4815
        %4823 = vrot.lane.b32.xlu0 %v4817, 64
        %v4824 = vpop.permute.xlu0 %4823
        %4825 = vrot.lane.b32.xlu0 %v4818, 64
        %v4826 = vpop.permute.xlu0 %4825
        %4827 = vrot.lane.b32.xlu0 %v4819, 64
        %v4828 = vpop.permute.xlu0 %4827
        %v4829 = vsel %vm618, %v4824, %v4826
        %v4830 = vsel %vm618, %v4826, %v4828
        %v4834 = vadd.f32 %v4810, %v4829
        %v4835 = vadd.f32 %v4811, %v4830
        %v4836 = vadd.f32 %v4812, %v4828
        %4837 = vset.pattern.permute.xlu0 79
        %4838 = vperm.xlu0 %4837, %v3947
        %v4839 = vpop.permute.xlu0 %4838
        %v4841 = vmul.f32 %v3988, %v4839
        %v4842 = vmul.f32 %v3992, %v4839
        %v4843 = vmul.f32 %v3996, %v4839
        %4847 = vrot.lane.b32.xlu0 %v4841, 64
        %v4848 = vpop.permute.xlu0 %4847
        %4849 = vrot.lane.b32.xlu0 %v4842, 64
        %v4850 = vpop.permute.xlu0 %4849
        %4851 = vrot.lane.b32.xlu0 %v4843, 64
        %v4852 = vpop.permute.xlu0 %4851
        %v4853 = vsel %vm618, %v4848, %v4850
        %v4854 = vsel %vm618, %v4850, %v4852
        %v4858 = vadd.f32 %v4834, %v4853
        %v4859 = vadd.f32 %v4835, %v4854
        %v4860 = vadd.f32 %v4836, %v4852
        %4861 = vset.pattern.permute.xlu0 37
        %4862 = vperm.xlu0 %4861, %v3947
        %v4863 = vpop.permute.xlu0 %4862
        %v4865 = vmul.f32 %v3960, %v4863
        %v4866 = vmul.f32 %v3964, %v4863
        %v4867 = vmul.f32 %v3968, %v4863
        %4871 = vrot.lane.b32.xlu0 %v4865, 48
        %v4872 = vpop.permute.xlu0 %4871
        %4873 = vrot.lane.b32.xlu0 %v4866, 48
        %v4874 = vpop.permute.xlu0 %4873
        %4875 = vrot.lane.b32.xlu0 %v4867, 48
        %v4876 = vpop.permute.xlu0 %4875
        %v4877 = vsel %vm476, %v4872, %v4874
        %v4878 = vsel %vm476, %v4874, %v4876
        %v4882 = vadd.f32 %v4858, %v4877
        %v4883 = vadd.f32 %v4859, %v4878
        %v4884 = vadd.f32 %v4860, %v4876
        %4885 = vset.pattern.permute.xlu0 86
        %4886 = vperm.xlu0 %4885, %v3947
        %v4887 = vpop.permute.xlu0 %4886
        %v4889 = vmul.f32 %v3988, %v4887
        %v4890 = vmul.f32 %v3992, %v4887
        %v4891 = vmul.f32 %v3996, %v4887
        %4895 = vrot.lane.b32.xlu0 %v4889, 48
        %v4896 = vpop.permute.xlu0 %4895
        %4897 = vrot.lane.b32.xlu0 %v4890, 48
        %v4898 = vpop.permute.xlu0 %4897
        %4899 = vrot.lane.b32.xlu0 %v4891, 48
        %v4900 = vpop.permute.xlu0 %4899
        %v4901 = vsel %vm476, %v4896, %v4898
        %v4902 = vsel %vm476, %v4898, %v4900
        %v4906 = vadd.f32 %v4882, %v4901
        %v4907 = vadd.f32 %v4883, %v4902
        %v4908 = vadd.f32 %v4884, %v4900
        %4909 = vset.pattern.permute.xlu0 44
        %4910 = vperm.xlu0 %4909, %v3947
        %v4911 = vpop.permute.xlu0 %4910
        %v4913 = vmul.f32 %v3960, %v4911
        %v4914 = vmul.f32 %v3964, %v4911
        %v4915 = vmul.f32 %v3968, %v4911
        %4919 = vrot.lane.b32.xlu0 %v4913, 32
        %v4920 = vpop.permute.xlu0 %4919
        %4921 = vrot.lane.b32.xlu0 %v4914, 32
        %v4922 = vpop.permute.xlu0 %4921
        %4923 = vrot.lane.b32.xlu0 %v4915, 32
        %v4924 = vpop.permute.xlu0 %4923
        %v4925 = vsel %vm1316, %v4920, %v4922
        %v4926 = vsel %vm1316, %v4922, %v4924
        %v4930 = vadd.f32 %v4906, %v4925
        %v4931 = vadd.f32 %v4907, %v4926
        %v4932 = vadd.f32 %v4908, %v4924
        %4933 = vset.pattern.permute.xlu0 93
        %4934 = vperm.xlu0 %4933, %v3947
        %v4935 = vpop.permute.xlu0 %4934
        %v4937 = vmul.f32 %v3988, %v4935
        %v4938 = vmul.f32 %v3992, %v4935
        %v4939 = vmul.f32 %v3996, %v4935
        %4943 = vrot.lane.b32.xlu0 %v4937, 32
        %v4944 = vpop.permute.xlu0 %4943
        %4945 = vrot.lane.b32.xlu0 %v4938, 32
        %v4946 = vpop.permute.xlu0 %4945
        %4947 = vrot.lane.b32.xlu0 %v4939, 32
        %v4948 = vpop.permute.xlu0 %4947
        %v4949 = vsel %vm1316, %v4944, %v4946
        %v4950 = vsel %vm1316, %v4946, %v4948
        %v4954 = vadd.f32 %v4930, %v4949
        %v4955 = vadd.f32 %v4931, %v4950
        %v4956 = vadd.f32 %v4932, %v4948
        %4957 = vrot.lane.b32.xlu0 %v800, 15
        %v4958 = vpop.permute.xlu0 %4957
        %4959 = vrot.lane.b32.xlu0 %v804, 15
        %v4960 = vpop.permute.xlu0 %4959
        %v4961 = vsel %vm809, %v4958, %v4960
        %v4965 = vmul.f32 %v4954, %v4958
        %v4966 = vmul.f32 %v4955, %v4961
        %v4967 = vmul.f32 %v4956, %v4960
        %4971 = vrot.lane.b32.xlu0 %v4965, 126
        %v4972 = vpop.permute.xlu0 %4971
        %4973 = vrot.lane.b32.xlu0 %v4966, 126
        %v4974 = vpop.permute.xlu0 %4973
        %4975 = vrot.lane.b32.xlu0 %v4967, 126
        %v4976 = vpop.permute.xlu0 %4975
        %vm4977 = vcmask 1031168
        %v4978 = vsel %vm4977, %v4972, %v4974
        %v4979 = vsel %vm4977, %v4974, %v4976
        %v4983 = vadd.f32 %v4646, %v4978
        %v4984 = vadd.f32 %v4647, %v4979
        %v4985 = vadd.f32 %v4648, %v4976
        %4986 = vset.pattern.permute.xlu0 3
        %4987 = vperm.xlu0 %4986, %v3947
        %v4988 = vpop.permute.xlu0 %4987
        %v4990 = vmul.f32 %v3960, %v4988
        %v4991 = vmul.f32 %v3964, %v4988
        %v4992 = vmul.f32 %v3968, %v4988
        %v4993 = vadd.f32 %v4990, 0.0
        %v4994 = vadd.f32 %v4991, 0.0
        %v4995 = vadd.f32 %v4992, 0.0
        %4996 = vset.pattern.permute.xlu0 52
        %4997 = vperm.xlu0 %4996, %v3947
        %v4998 = vpop.permute.xlu0 %4997
        %v5000 = vmul.f32 %v3988, %v4998
        %v5001 = vmul.f32 %v3992, %v4998
        %v5002 = vmul.f32 %v3996, %v4998
        %v5003 = vadd.f32 %v4993, %v5000
        %v5004 = vadd.f32 %v4994, %v5001
        %v5005 = vadd.f32 %v4995, %v5002
        %5006 = vset.pattern.permute.xlu0 10
        %5007 = vperm.xlu0 %5006, %v3947
        %v5008 = vpop.permute.xlu0 %5007
        %v5010 = vmul.f32 %v3960, %v5008
        %v5011 = vmul.f32 %v3964, %v5008
        %v5012 = vmul.f32 %v3968, %v5008
        %5016 = vrot.lane.b32.xlu0 %v5010, 112
        %v5017 = vpop.permute.xlu0 %5016
        %5018 = vrot.lane.b32.xlu0 %v5011, 112
        %v5019 = vpop.permute.xlu0 %5018
        %5020 = vrot.lane.b32.xlu0 %v5012, 112
        %v5021 = vpop.permute.xlu0 %5020
        %v5022 = vsel %vm534, %v5017, %v5019
        %v5023 = vsel %vm534, %v5019, %v5021
        %v5027 = vadd.f32 %v5003, %v5022
        %v5028 = vadd.f32 %v5004, %v5023
        %v5029 = vadd.f32 %v5005, %v5021
        %5030 = vset.pattern.permute.xlu0 59
        %5031 = vperm.xlu0 %5030, %v3947
        %v5032 = vpop.permute.xlu0 %5031
        %v5034 = vmul.f32 %v3988, %v5032
        %v5035 = vmul.f32 %v3992, %v5032
        %v5036 = vmul.f32 %v3996, %v5032
        %5040 = vrot.lane.b32.xlu0 %v5034, 112
        %v5041 = vpop.permute.xlu0 %5040
        %5042 = vrot.lane.b32.xlu0 %v5035, 112
        %v5043 = vpop.permute.xlu0 %5042
        %5044 = vrot.lane.b32.xlu0 %v5036, 112
        %v5045 = vpop.permute.xlu0 %5044
        %v5046 = vsel %vm534, %v5041, %v5043
        %v5047 = vsel %vm534, %v5043, %v5045
        %v5051 = vadd.f32 %v5027, %v5046
        %v5052 = vadd.f32 %v5028, %v5047
        %v5053 = vadd.f32 %v5029, %v5045
        %5054 = vset.pattern.permute.xlu0 17
        %5055 = vperm.xlu0 %5054, %v3947
        %v5056 = vpop.permute.xlu0 %5055
        %v5058 = vmul.f32 %v3960, %v5056
        %v5059 = vmul.f32 %v3964, %v5056
        %v5060 = vmul.f32 %v3968, %v5056
        %5064 = vrot.lane.b32.xlu0 %v5058, 96
        %v5065 = vpop.permute.xlu0 %5064
        %5066 = vrot.lane.b32.xlu0 %v5059, 96
        %v5067 = vpop.permute.xlu0 %5066
        %5068 = vrot.lane.b32.xlu0 %v5060, 96
        %v5069 = vpop.permute.xlu0 %5068
        %v5070 = vsel %vm562, %v5065, %v5067
        %v5071 = vsel %vm562, %v5067, %v5069
        %v5075 = vadd.f32 %v5051, %v5070
        %v5076 = vadd.f32 %v5052, %v5071
        %v5077 = vadd.f32 %v5053, %v5069
        %5078 = vset.pattern.permute.xlu0 66
        %5079 = vperm.xlu0 %5078, %v3947
        %v5080 = vpop.permute.xlu0 %5079
        %v5082 = vmul.f32 %v3988, %v5080
        %v5083 = vmul.f32 %v3992, %v5080
        %v5084 = vmul.f32 %v3996, %v5080
        %5088 = vrot.lane.b32.xlu0 %v5082, 96
        %v5089 = vpop.permute.xlu0 %5088
        %5090 = vrot.lane.b32.xlu0 %v5083, 96
        %v5091 = vpop.permute.xlu0 %5090
        %5092 = vrot.lane.b32.xlu0 %v5084, 96
        %v5093 = vpop.permute.xlu0 %5092
        %v5094 = vsel %vm562, %v5089, %v5091
        %v5095 = vsel %vm562, %v5091, %v5093
        %v5099 = vadd.f32 %v5075, %v5094
        %v5100 = vadd.f32 %v5076, %v5095
        %v5101 = vadd.f32 %v5077, %v5093
        %5102 = vset.pattern.permute.xlu0 24
        %5103 = vperm.xlu0 %5102, %v3947
        %v5104 = vpop.permute.xlu0 %5103
        %v5106 = vmul.f32 %v3960, %v5104
        %v5107 = vmul.f32 %v3964, %v5104
        %v5108 = vmul.f32 %v3968, %v5104
        %5112 = vrot.lane.b32.xlu0 %v5106, 80
        %v5113 = vpop.permute.xlu0 %5112
        %5114 = vrot.lane.b32.xlu0 %v5107, 80
        %v5115 = vpop.permute.xlu0 %5114
        %5116 = vrot.lane.b32.xlu0 %v5108, 80
        %v5117 = vpop.permute.xlu0 %5116
        %v5118 = vsel %vm590, %v5113, %v5115
        %v5119 = vsel %vm590, %v5115, %v5117
        %v5123 = vadd.f32 %v5099, %v5118
        %v5124 = vadd.f32 %v5100, %v5119
        %v5125 = vadd.f32 %v5101, %v5117
        %5126 = vset.pattern.permute.xlu0 73
        %5127 = vperm.xlu0 %5126, %v3947
        %v5128 = vpop.permute.xlu0 %5127
        %v5130 = vmul.f32 %v3988, %v5128
        %v5131 = vmul.f32 %v3992, %v5128
        %v5132 = vmul.f32 %v3996, %v5128
        %5136 = vrot.lane.b32.xlu0 %v5130, 80
        %v5137 = vpop.permute.xlu0 %5136
        %5138 = vrot.lane.b32.xlu0 %v5131, 80
        %v5139 = vpop.permute.xlu0 %5138
        %5140 = vrot.lane.b32.xlu0 %v5132, 80
        %v5141 = vpop.permute.xlu0 %5140
        %v5142 = vsel %vm590, %v5137, %v5139
        %v5143 = vsel %vm590, %v5139, %v5141
        %v5147 = vadd.f32 %v5123, %v5142
        %v5148 = vadd.f32 %v5124, %v5143
        %v5149 = vadd.f32 %v5125, %v5141
        %5150 = vset.pattern.permute.xlu0 31
        %5151 = vperm.xlu0 %5150, %v3947
        %v5152 = vpop.permute.xlu0 %5151
        %v5154 = vmul.f32 %v3960, %v5152
        %v5155 = vmul.f32 %v3964, %v5152
        %v5156 = vmul.f32 %v3968, %v5152
        %5160 = vrot.lane.b32.xlu0 %v5154, 64
        %v5161 = vpop.permute.xlu0 %5160
        %5162 = vrot.lane.b32.xlu0 %v5155, 64
        %v5163 = vpop.permute.xlu0 %5162
        %5164 = vrot.lane.b32.xlu0 %v5156, 64
        %v5165 = vpop.permute.xlu0 %5164
        %v5166 = vsel %vm618, %v5161, %v5163
        %v5167 = vsel %vm618, %v5163, %v5165
        %v5171 = vadd.f32 %v5147, %v5166
        %v5172 = vadd.f32 %v5148, %v5167
        %v5173 = vadd.f32 %v5149, %v5165
        %5174 = vset.pattern.permute.xlu0 80
        %5175 = vperm.xlu0 %5174, %v3947
        %v5176 = vpop.permute.xlu0 %5175
        %v5178 = vmul.f32 %v3988, %v5176
        %v5179 = vmul.f32 %v3992, %v5176
        %v5180 = vmul.f32 %v3996, %v5176
        %5184 = vrot.lane.b32.xlu0 %v5178, 64
        %v5185 = vpop.permute.xlu0 %5184
        %5186 = vrot.lane.b32.xlu0 %v5179, 64
        %v5187 = vpop.permute.xlu0 %5186
        %5188 = vrot.lane.b32.xlu0 %v5180, 64
        %v5189 = vpop.permute.xlu0 %5188
        %v5190 = vsel %vm618, %v5185, %v5187
        %v5191 = vsel %vm618, %v5187, %v5189
        %v5195 = vadd.f32 %v5171, %v5190
        %v5196 = vadd.f32 %v5172, %v5191
        %v5197 = vadd.f32 %v5173, %v5189
        %5198 = vset.pattern.permute.xlu0 38
        %5199 = vperm.xlu0 %5198, %v3947
        %v5200 = vpop.permute.xlu0 %5199
        %v5202 = vmul.f32 %v3960, %v5200
        %v5203 = vmul.f32 %v3964, %v5200
        %v5204 = vmul.f32 %v3968, %v5200
        %5208 = vrot.lane.b32.xlu0 %v5202, 48
        %v5209 = vpop.permute.xlu0 %5208
        %5210 = vrot.lane.b32.xlu0 %v5203, 48
        %v5211 = vpop.permute.xlu0 %5210
        %5212 = vrot.lane.b32.xlu0 %v5204, 48
        %v5213 = vpop.permute.xlu0 %5212
        %v5214 = vsel %vm476, %v5209, %v5211
        %v5215 = vsel %vm476, %v5211, %v5213
        %v5219 = vadd.f32 %v5195, %v5214
        %v5220 = vadd.f32 %v5196, %v5215
        %v5221 = vadd.f32 %v5197, %v5213
        %5222 = vset.pattern.permute.xlu0 87
        %5223 = vperm.xlu0 %5222, %v3947
        %v5224 = vpop.permute.xlu0 %5223
        %v5226 = vmul.f32 %v3988, %v5224
        %v5227 = vmul.f32 %v3992, %v5224
        %v5228 = vmul.f32 %v3996, %v5224
        %5232 = vrot.lane.b32.xlu0 %v5226, 48
        %v5233 = vpop.permute.xlu0 %5232
        %5234 = vrot.lane.b32.xlu0 %v5227, 48
        %v5235 = vpop.permute.xlu0 %5234
        %5236 = vrot.lane.b32.xlu0 %v5228, 48
        %v5237 = vpop.permute.xlu0 %5236
        %v5238 = vsel %vm476, %v5233, %v5235
        %v5239 = vsel %vm476, %v5235, %v5237
        %v5243 = vadd.f32 %v5219, %v5238
        %v5244 = vadd.f32 %v5220, %v5239
        %v5245 = vadd.f32 %v5221, %v5237
        %5246 = vset.pattern.permute.xlu0 45
        %5247 = vperm.xlu0 %5246, %v3947
        %v5248 = vpop.permute.xlu0 %5247
        %v5250 = vmul.f32 %v3960, %v5248
        %v5251 = vmul.f32 %v3964, %v5248
        %v5252 = vmul.f32 %v3968, %v5248
        %5256 = vrot.lane.b32.xlu0 %v5250, 32
        %v5257 = vpop.permute.xlu0 %5256
        %5258 = vrot.lane.b32.xlu0 %v5251, 32
        %v5259 = vpop.permute.xlu0 %5258
        %5260 = vrot.lane.b32.xlu0 %v5252, 32
        %v5261 = vpop.permute.xlu0 %5260
        %v5262 = vsel %vm1316, %v5257, %v5259
        %v5263 = vsel %vm1316, %v5259, %v5261
        %v5267 = vadd.f32 %v5243, %v5262
        %v5268 = vadd.f32 %v5244, %v5263
        %v5269 = vadd.f32 %v5245, %v5261
        %5270 = vset.pattern.permute.xlu0 94
        %5271 = vperm.xlu0 %5270, %v3947
        %v5272 = vpop.permute.xlu0 %5271
        %v5274 = vmul.f32 %v3988, %v5272
        %v5275 = vmul.f32 %v3992, %v5272
        %v5276 = vmul.f32 %v3996, %v5272
        %5280 = vrot.lane.b32.xlu0 %v5274, 32
        %v5281 = vpop.permute.xlu0 %5280
        %5282 = vrot.lane.b32.xlu0 %v5275, 32
        %v5283 = vpop.permute.xlu0 %5282
        %5284 = vrot.lane.b32.xlu0 %v5276, 32
        %v5285 = vpop.permute.xlu0 %5284
        %v5286 = vsel %vm1316, %v5281, %v5283
        %v5287 = vsel %vm1316, %v5283, %v5285
        %v5291 = vadd.f32 %v5267, %v5286
        %v5292 = vadd.f32 %v5268, %v5287
        %v5293 = vadd.f32 %v5269, %v5285
        %5297 = vrot.lane.b32.xlu0 %v5291, 125
        %v5298 = vpop.permute.xlu0 %5297
        %5299 = vrot.lane.b32.xlu0 %v5292, 125
        %v5300 = vpop.permute.xlu0 %5299
        %5301 = vrot.lane.b32.xlu0 %v5293, 125
        %v5302 = vpop.permute.xlu0 %5301
        %vm5303 = vcmask 1022976
        %v5304 = vsel %vm5303, %v5298, %v5300
        %v5305 = vsel %vm5303, %v5300, %v5302
        %v5309 = vadd.f32 %v4983, %v5304
        %v5310 = vadd.f32 %v4984, %v5305
        %v5311 = vadd.f32 %v4985, %v5302
        %5312 = vset.pattern.permute.xlu0 4
        %5313 = vperm.xlu0 %5312, %v3947
        %v5314 = vpop.permute.xlu0 %5313
        %v5316 = vmul.f32 %v3960, %v5314
        %v5317 = vmul.f32 %v3964, %v5314
        %v5318 = vmul.f32 %v3968, %v5314
        %v5319 = vadd.f32 %v5316, 0.0
        %v5320 = vadd.f32 %v5317, 0.0
        %v5321 = vadd.f32 %v5318, 0.0
        %5322 = vset.pattern.permute.xlu0 53
        %5323 = vperm.xlu0 %5322, %v3947
        %v5324 = vpop.permute.xlu0 %5323
        %v5326 = vmul.f32 %v3988, %v5324
        %v5327 = vmul.f32 %v3992, %v5324
        %v5328 = vmul.f32 %v3996, %v5324
        %v5329 = vadd.f32 %v5319, %v5326
        %v5330 = vadd.f32 %v5320, %v5327
        %v5331 = vadd.f32 %v5321, %v5328
        %5332 = vset.pattern.permute.xlu0 11
        %5333 = vperm.xlu0 %5332, %v3947
        %v5334 = vpop.permute.xlu0 %5333
        %v5336 = vmul.f32 %v3960, %v5334
        %v5337 = vmul.f32 %v3964, %v5334
        %v5338 = vmul.f32 %v3968, %v5334
        %5342 = vrot.lane.b32.xlu0 %v5336, 112
        %v5343 = vpop.permute.xlu0 %5342
        %5344 = vrot.lane.b32.xlu0 %v5337, 112
        %v5345 = vpop.permute.xlu0 %5344
        %5346 = vrot.lane.b32.xlu0 %v5338, 112
        %v5347 = vpop.permute.xlu0 %5346
        %v5348 = vsel %vm534, %v5343, %v5345
        %v5349 = vsel %vm534, %v5345, %v5347
        %v5353 = vadd.f32 %v5329, %v5348
        %v5354 = vadd.f32 %v5330, %v5349
        %v5355 = vadd.f32 %v5331, %v5347
        %5356 = vset.pattern.permute.xlu0 60
        %5357 = vperm.xlu0 %5356, %v3947
        %v5358 = vpop.permute.xlu0 %5357
        %v5360 = vmul.f32 %v3988, %v5358
        %v5361 = vmul.f32 %v3992, %v5358
        %v5362 = vmul.f32 %v3996, %v5358
        %5366 = vrot.lane.b32.xlu0 %v5360, 112
        %v5367 = vpop.permute.xlu0 %5366
        %5368 = vrot.lane.b32.xlu0 %v5361, 112
        %v5369 = vpop.permute.xlu0 %5368
        %5370 = vrot.lane.b32.xlu0 %v5362, 112
        %v5371 = vpop.permute.xlu0 %5370
        %v5372 = vsel %vm534, %v5367, %v5369
        %v5373 = vsel %vm534, %v5369, %v5371
        %v5377 = vadd.f32 %v5353, %v5372
        %v5378 = vadd.f32 %v5354, %v5373
        %v5379 = vadd.f32 %v5355, %v5371
        %5380 = vset.pattern.permute.xlu0 18
        %5381 = vperm.xlu0 %5380, %v3947
        %v5382 = vpop.permute.xlu0 %5381
        %v5384 = vmul.f32 %v3960, %v5382
        %v5385 = vmul.f32 %v3964, %v5382
        %v5386 = vmul.f32 %v3968, %v5382
        %5390 = vrot.lane.b32.xlu0 %v5384, 96
        %v5391 = vpop.permute.xlu0 %5390
        %5392 = vrot.lane.b32.xlu0 %v5385, 96
        %v5393 = vpop.permute.xlu0 %5392
        %5394 = vrot.lane.b32.xlu0 %v5386, 96
        %v5395 = vpop.permute.xlu0 %5394
        %v5396 = vsel %vm562, %v5391, %v5393
        %v5397 = vsel %vm562, %v5393, %v5395
        %v5401 = vadd.f32 %v5377, %v5396
        %v5402 = vadd.f32 %v5378, %v5397
        %v5403 = vadd.f32 %v5379, %v5395
        %5404 = vset.pattern.permute.xlu0 67
        %5405 = vperm.xlu0 %5404, %v3947
        %v5406 = vpop.permute.xlu0 %5405
        %v5408 = vmul.f32 %v3988, %v5406
        %v5409 = vmul.f32 %v3992, %v5406
        %v5410 = vmul.f32 %v3996, %v5406
        %5414 = vrot.lane.b32.xlu0 %v5408, 96
        %v5415 = vpop.permute.xlu0 %5414
        %5416 = vrot.lane.b32.xlu0 %v5409, 96
        %v5417 = vpop.permute.xlu0 %5416
        %5418 = vrot.lane.b32.xlu0 %v5410, 96
        %v5419 = vpop.permute.xlu0 %5418
        %v5420 = vsel %vm562, %v5415, %v5417
        %v5421 = vsel %vm562, %v5417, %v5419
        %v5425 = vadd.f32 %v5401, %v5420
        %v5426 = vadd.f32 %v5402, %v5421
        %v5427 = vadd.f32 %v5403, %v5419
        %5428 = vset.pattern.permute.xlu0 25
        %5429 = vperm.xlu0 %5428, %v3947
        %v5430 = vpop.permute.xlu0 %5429
        %v5432 = vmul.f32 %v3960, %v5430
        %v5433 = vmul.f32 %v3964, %v5430
        %v5434 = vmul.f32 %v3968, %v5430
        %5438 = vrot.lane.b32.xlu0 %v5432, 80
        %v5439 = vpop.permute.xlu0 %5438
        %5440 = vrot.lane.b32.xlu0 %v5433, 80
        %v5441 = vpop.permute.xlu0 %5440
        %5442 = vrot.lane.b32.xlu0 %v5434, 80
        %v5443 = vpop.permute.xlu0 %5442
        %v5444 = vsel %vm590, %v5439, %v5441
        %v5445 = vsel %vm590, %v5441, %v5443
        %v5449 = vadd.f32 %v5425, %v5444
        %v5450 = vadd.f32 %v5426, %v5445
        %v5451 = vadd.f32 %v5427, %v5443
        %5452 = vset.pattern.permute.xlu0 74
        %5453 = vperm.xlu0 %5452, %v3947
        %v5454 = vpop.permute.xlu0 %5453
        %v5456 = vmul.f32 %v3988, %v5454
        %v5457 = vmul.f32 %v3992, %v5454
        %v5458 = vmul.f32 %v3996, %v5454
        %5462 = vrot.lane.b32.xlu0 %v5456, 80
        %v5463 = vpop.permute.xlu0 %5462
        %5464 = vrot.lane.b32.xlu0 %v5457, 80
        %v5465 = vpop.permute.xlu0 %5464
        %5466 = vrot.lane.b32.xlu0 %v5458, 80
        %v5467 = vpop.permute.xlu0 %5466
        %v5468 = vsel %vm590, %v5463, %v5465
        %v5469 = vsel %vm590, %v5465, %v5467
        %v5473 = vadd.f32 %v5449, %v5468
        %v5474 = vadd.f32 %v5450, %v5469
        %v5475 = vadd.f32 %v5451, %v5467
        %5476 = vset.pattern.permute.xlu0 32
        %5477 = vperm.xlu0 %5476, %v3947
        %v5478 = vpop.permute.xlu0 %5477
        %v5480 = vmul.f32 %v3960, %v5478
        %v5481 = vmul.f32 %v3964, %v5478
        %v5482 = vmul.f32 %v3968, %v5478
        %5486 = vrot.lane.b32.xlu0 %v5480, 64
        %v5487 = vpop.permute.xlu0 %5486
        %5488 = vrot.lane.b32.xlu0 %v5481, 64
        %v5489 = vpop.permute.xlu0 %5488
        %5490 = vrot.lane.b32.xlu0 %v5482, 64
        %v5491 = vpop.permute.xlu0 %5490
        %v5492 = vsel %vm618, %v5487, %v5489
        %v5493 = vsel %vm618, %v5489, %v5491
        %v5497 = vadd.f32 %v5473, %v5492
        %v5498 = vadd.f32 %v5474, %v5493
        %v5499 = vadd.f32 %v5475, %v5491
        %5500 = vset.pattern.permute.xlu0 81
        %5501 = vperm.xlu0 %5500, %v3947
        %v5502 = vpop.permute.xlu0 %5501
        %v5504 = vmul.f32 %v3988, %v5502
        %v5505 = vmul.f32 %v3992, %v5502
        %v5506 = vmul.f32 %v3996, %v5502
        %5510 = vrot.lane.b32.xlu0 %v5504, 64
        %v5511 = vpop.permute.xlu0 %5510
        %5512 = vrot.lane.b32.xlu0 %v5505, 64
        %v5513 = vpop.permute.xlu0 %5512
        %5514 = vrot.lane.b32.xlu0 %v5506, 64
        %v5515 = vpop.permute.xlu0 %5514
        %v5516 = vsel %vm618, %v5511, %v5513
        %v5517 = vsel %vm618, %v5513, %v5515
        %v5521 = vadd.f32 %v5497, %v5516
        %v5522 = vadd.f32 %v5498, %v5517
        %v5523 = vadd.f32 %v5499, %v5515
        %5524 = vset.pattern.permute.xlu0 39
        %5525 = vperm.xlu0 %5524, %v3947
        %v5526 = vpop.permute.xlu0 %5525
        %v5528 = vmul.f32 %v3960, %v5526
        %v5529 = vmul.f32 %v3964, %v5526
        %v5530 = vmul.f32 %v3968, %v5526
        %5534 = vrot.lane.b32.xlu0 %v5528, 48
        %v5535 = vpop.permute.xlu0 %5534
        %5536 = vrot.lane.b32.xlu0 %v5529, 48
        %v5537 = vpop.permute.xlu0 %5536
        %5538 = vrot.lane.b32.xlu0 %v5530, 48
        %v5539 = vpop.permute.xlu0 %5538
        %v5540 = vsel %vm476, %v5535, %v5537
        %v5541 = vsel %vm476, %v5537, %v5539
        %v5545 = vadd.f32 %v5521, %v5540
        %v5546 = vadd.f32 %v5522, %v5541
        %v5547 = vadd.f32 %v5523, %v5539
        %5548 = vset.pattern.permute.xlu0 88
        %5549 = vperm.xlu0 %5548, %v3947
        %v5550 = vpop.permute.xlu0 %5549
        %v5552 = vmul.f32 %v3988, %v5550
        %v5553 = vmul.f32 %v3992, %v5550
        %v5554 = vmul.f32 %v3996, %v5550
        %5558 = vrot.lane.b32.xlu0 %v5552, 48
        %v5559 = vpop.permute.xlu0 %5558
        %5560 = vrot.lane.b32.xlu0 %v5553, 48
        %v5561 = vpop.permute.xlu0 %5560
        %5562 = vrot.lane.b32.xlu0 %v5554, 48
        %v5563 = vpop.permute.xlu0 %5562
        %v5564 = vsel %vm476, %v5559, %v5561
        %v5565 = vsel %vm476, %v5561, %v5563
        %v5569 = vadd.f32 %v5545, %v5564
        %v5570 = vadd.f32 %v5546, %v5565
        %v5571 = vadd.f32 %v5547, %v5563
        %5572 = vset.pattern.permute.xlu0 46
        %5573 = vperm.xlu0 %5572, %v3947
        %v5574 = vpop.permute.xlu0 %5573
        %v5576 = vmul.f32 %v3960, %v5574
        %v5577 = vmul.f32 %v3964, %v5574
        %v5578 = vmul.f32 %v3968, %v5574
        %5582 = vrot.lane.b32.xlu0 %v5576, 32
        %v5583 = vpop.permute.xlu0 %5582
        %5584 = vrot.lane.b32.xlu0 %v5577, 32
        %v5585 = vpop.permute.xlu0 %5584
        %5586 = vrot.lane.b32.xlu0 %v5578, 32
        %v5587 = vpop.permute.xlu0 %5586
        %v5588 = vsel %vm1316, %v5583, %v5585
        %v5589 = vsel %vm1316, %v5585, %v5587
        %v5593 = vadd.f32 %v5569, %v5588
        %v5594 = vadd.f32 %v5570, %v5589
        %v5595 = vadd.f32 %v5571, %v5587
        %5596 = vset.pattern.permute.xlu0 95
        %5597 = vperm.xlu0 %5596, %v3947
        %v5598 = vpop.permute.xlu0 %5597
        %v5600 = vmul.f32 %v3988, %v5598
        %v5601 = vmul.f32 %v3992, %v5598
        %v5602 = vmul.f32 %v3996, %v5598
        %5606 = vrot.lane.b32.xlu0 %v5600, 32
        %v5607 = vpop.permute.xlu0 %5606
        %5608 = vrot.lane.b32.xlu0 %v5601, 32
        %v5609 = vpop.permute.xlu0 %5608
        %5610 = vrot.lane.b32.xlu0 %v5602, 32
        %v5611 = vpop.permute.xlu0 %5610
        %v5612 = vsel %vm1316, %v5607, %v5609
        %v5613 = vsel %vm1316, %v5609, %v5611
        %v5617 = vadd.f32 %v5593, %v5612
        %v5618 = vadd.f32 %v5594, %v5613
        %v5619 = vadd.f32 %v5595, %v5611
        %5620 = vrot.lane.b32.xlu0 %v1106, 17
        %v5621 = vpop.permute.xlu0 %5620
        %5622 = vrot.lane.b32.xlu0 %v1110, 17
        %v5623 = vpop.permute.xlu0 %5622
        %v5624 = vsel %vm1115, %v5621, %v5623
        %v5628 = vmul.f32 %v5617, %v5621
        %v5629 = vmul.f32 %v5618, %v5624
        %v5630 = vmul.f32 %v5619, %v5623
        %5634 = vrot.lane.b32.xlu0 %v5628, 124
        %v5635 = vpop.permute.xlu0 %5634
        %5636 = vrot.lane.b32.xlu0 %v5629, 124
        %v5637 = vpop.permute.xlu0 %5636
        %5638 = vrot.lane.b32.xlu0 %v5630, 124
        %v5639 = vpop.permute.xlu0 %5638
        %vm5640 = vcmask 1014784
        %v5641 = vsel %vm5640, %v5635, %v5637
        %v5642 = vsel %vm5640, %v5637, %v5639
        %v5646 = vadd.f32 %v5309, %v5641
        %v5647 = vadd.f32 %v5310, %v5642
        %v5648 = vadd.f32 %v5311, %v5639
        %5649 = vset.pattern.permute.xlu0 5
        %5650 = vperm.xlu0 %5649, %v3947
        %v5651 = vpop.permute.xlu0 %5650
        %v5653 = vmul.f32 %v3960, %v5651
        %v5654 = vmul.f32 %v3964, %v5651
        %v5655 = vmul.f32 %v3968, %v5651
        %v5656 = vadd.f32 %v5653, 0.0
        %v5657 = vadd.f32 %v5654, 0.0
        %v5658 = vadd.f32 %v5655, 0.0
        %5659 = vset.pattern.permute.xlu0 54
        %5660 = vperm.xlu0 %5659, %v3947
        %v5661 = vpop.permute.xlu0 %5660
        %v5663 = vmul.f32 %v3988, %v5661
        %v5664 = vmul.f32 %v3992, %v5661
        %v5665 = vmul.f32 %v3996, %v5661
        %v5666 = vadd.f32 %v5656, %v5663
        %v5667 = vadd.f32 %v5657, %v5664
        %v5668 = vadd.f32 %v5658, %v5665
        %5669 = vset.pattern.permute.xlu0 12
        %5670 = vperm.xlu0 %5669, %v3947
        %v5671 = vpop.permute.xlu0 %5670
        %v5673 = vmul.f32 %v3960, %v5671
        %v5674 = vmul.f32 %v3964, %v5671
        %v5675 = vmul.f32 %v3968, %v5671
        %5679 = vrot.lane.b32.xlu0 %v5673, 112
        %v5680 = vpop.permute.xlu0 %5679
        %5681 = vrot.lane.b32.xlu0 %v5674, 112
        %v5682 = vpop.permute.xlu0 %5681
        %5683 = vrot.lane.b32.xlu0 %v5675, 112
        %v5684 = vpop.permute.xlu0 %5683
        %v5685 = vsel %vm534, %v5680, %v5682
        %v5686 = vsel %vm534, %v5682, %v5684
        %v5690 = vadd.f32 %v5666, %v5685
        %v5691 = vadd.f32 %v5667, %v5686
        %v5692 = vadd.f32 %v5668, %v5684
        %5693 = vset.pattern.permute.xlu0 61
        %5694 = vperm.xlu0 %5693, %v3947
        %v5695 = vpop.permute.xlu0 %5694
        %v5697 = vmul.f32 %v3988, %v5695
        %v5698 = vmul.f32 %v3992, %v5695
        %v5699 = vmul.f32 %v3996, %v5695
        %5703 = vrot.lane.b32.xlu0 %v5697, 112
        %v5704 = vpop.permute.xlu0 %5703
        %5705 = vrot.lane.b32.xlu0 %v5698, 112
        %v5706 = vpop.permute.xlu0 %5705
        %5707 = vrot.lane.b32.xlu0 %v5699, 112
        %v5708 = vpop.permute.xlu0 %5707
        %v5709 = vsel %vm534, %v5704, %v5706
        %v5710 = vsel %vm534, %v5706, %v5708
        %v5714 = vadd.f32 %v5690, %v5709
        %v5715 = vadd.f32 %v5691, %v5710
        %v5716 = vadd.f32 %v5692, %v5708
        %5717 = vset.pattern.permute.xlu0 19
        %5718 = vperm.xlu0 %5717, %v3947
        %v5719 = vpop.permute.xlu0 %5718
        %v5721 = vmul.f32 %v3960, %v5719
        %v5722 = vmul.f32 %v3964, %v5719
        %v5723 = vmul.f32 %v3968, %v5719
        %5727 = vrot.lane.b32.xlu0 %v5721, 96
        %v5728 = vpop.permute.xlu0 %5727
        %5729 = vrot.lane.b32.xlu0 %v5722, 96
        %v5730 = vpop.permute.xlu0 %5729
        %5731 = vrot.lane.b32.xlu0 %v5723, 96
        %v5732 = vpop.permute.xlu0 %5731
        %v5733 = vsel %vm562, %v5728, %v5730
        %v5734 = vsel %vm562, %v5730, %v5732
        %v5738 = vadd.f32 %v5714, %v5733
        %v5739 = vadd.f32 %v5715, %v5734
        %v5740 = vadd.f32 %v5716, %v5732
        %5741 = vset.pattern.permute.xlu0 68
        %5742 = vperm.xlu0 %5741, %v3947
        %v5743 = vpop.permute.xlu0 %5742
        %v5745 = vmul.f32 %v3988, %v5743
        %v5746 = vmul.f32 %v3992, %v5743
        %v5747 = vmul.f32 %v3996, %v5743
        %5751 = vrot.lane.b32.xlu0 %v5745, 96
        %v5752 = vpop.permute.xlu0 %5751
        %5753 = vrot.lane.b32.xlu0 %v5746, 96
        %v5754 = vpop.permute.xlu0 %5753
        %5755 = vrot.lane.b32.xlu0 %v5747, 96
        %v5756 = vpop.permute.xlu0 %5755
        %v5757 = vsel %vm562, %v5752, %v5754
        %v5758 = vsel %vm562, %v5754, %v5756
        %v5762 = vadd.f32 %v5738, %v5757
        %v5763 = vadd.f32 %v5739, %v5758
        %v5764 = vadd.f32 %v5740, %v5756
        %5765 = vset.pattern.permute.xlu0 26
        %5766 = vperm.xlu0 %5765, %v3947
        %v5767 = vpop.permute.xlu0 %5766
        %v5769 = vmul.f32 %v3960, %v5767
        %v5770 = vmul.f32 %v3964, %v5767
        %v5771 = vmul.f32 %v3968, %v5767
        %5775 = vrot.lane.b32.xlu0 %v5769, 80
        %v5776 = vpop.permute.xlu0 %5775
        %5777 = vrot.lane.b32.xlu0 %v5770, 80
        %v5778 = vpop.permute.xlu0 %5777
        %5779 = vrot.lane.b32.xlu0 %v5771, 80
        %v5780 = vpop.permute.xlu0 %5779
        %v5781 = vsel %vm590, %v5776, %v5778
        %v5782 = vsel %vm590, %v5778, %v5780
        %v5786 = vadd.f32 %v5762, %v5781
        %v5787 = vadd.f32 %v5763, %v5782
        %v5788 = vadd.f32 %v5764, %v5780
        %5789 = vset.pattern.permute.xlu0 75
        %5790 = vperm.xlu0 %5789, %v3947
        %v5791 = vpop.permute.xlu0 %5790
        %v5793 = vmul.f32 %v3988, %v5791
        %v5794 = vmul.f32 %v3992, %v5791
        %v5795 = vmul.f32 %v3996, %v5791
        %5799 = vrot.lane.b32.xlu0 %v5793, 80
        %v5800 = vpop.permute.xlu0 %5799
        %5801 = vrot.lane.b32.xlu0 %v5794, 80
        %v5802 = vpop.permute.xlu0 %5801
        %5803 = vrot.lane.b32.xlu0 %v5795, 80
        %v5804 = vpop.permute.xlu0 %5803
        %v5805 = vsel %vm590, %v5800, %v5802
        %v5806 = vsel %vm590, %v5802, %v5804
        %v5810 = vadd.f32 %v5786, %v5805
        %v5811 = vadd.f32 %v5787, %v5806
        %v5812 = vadd.f32 %v5788, %v5804
        %5813 = vset.pattern.permute.xlu0 33
        %5814 = vperm.xlu0 %5813, %v3947
        %v5815 = vpop.permute.xlu0 %5814
        %v5817 = vmul.f32 %v3960, %v5815
        %v5818 = vmul.f32 %v3964, %v5815
        %v5819 = vmul.f32 %v3968, %v5815
        %5823 = vrot.lane.b32.xlu0 %v5817, 64
        %v5824 = vpop.permute.xlu0 %5823
        %5825 = vrot.lane.b32.xlu0 %v5818, 64
        %v5826 = vpop.permute.xlu0 %5825
        %5827 = vrot.lane.b32.xlu0 %v5819, 64
        %v5828 = vpop.permute.xlu0 %5827
        %v5829 = vsel %vm618, %v5824, %v5826
        %v5830 = vsel %vm618, %v5826, %v5828
        %v5834 = vadd.f32 %v5810, %v5829
        %v5835 = vadd.f32 %v5811, %v5830
        %v5836 = vadd.f32 %v5812, %v5828
        %5837 = vset.pattern.permute.xlu0 82
        %5838 = vperm.xlu0 %5837, %v3947
        %v5839 = vpop.permute.xlu0 %5838
        %v5841 = vmul.f32 %v3988, %v5839
        %v5842 = vmul.f32 %v3992, %v5839
        %v5843 = vmul.f32 %v3996, %v5839
        %5847 = vrot.lane.b32.xlu0 %v5841, 64
        %v5848 = vpop.permute.xlu0 %5847
        %5849 = vrot.lane.b32.xlu0 %v5842, 64
        %v5850 = vpop.permute.xlu0 %5849
        %5851 = vrot.lane.b32.xlu0 %v5843, 64
        %v5852 = vpop.permute.xlu0 %5851
        %v5853 = vsel %vm618, %v5848, %v5850
        %v5854 = vsel %vm618, %v5850, %v5852
        %v5858 = vadd.f32 %v5834, %v5853
        %v5859 = vadd.f32 %v5835, %v5854
        %v5860 = vadd.f32 %v5836, %v5852
        %5861 = vset.pattern.permute.xlu0 40
        %5862 = vperm.xlu0 %5861, %v3947
        %v5863 = vpop.permute.xlu0 %5862
        %v5865 = vmul.f32 %v3960, %v5863
        %v5866 = vmul.f32 %v3964, %v5863
        %v5867 = vmul.f32 %v3968, %v5863
        %5871 = vrot.lane.b32.xlu0 %v5865, 48
        %v5872 = vpop.permute.xlu0 %5871
        %5873 = vrot.lane.b32.xlu0 %v5866, 48
        %v5874 = vpop.permute.xlu0 %5873
        %5875 = vrot.lane.b32.xlu0 %v5867, 48
        %v5876 = vpop.permute.xlu0 %5875
        %v5877 = vsel %vm476, %v5872, %v5874
        %v5878 = vsel %vm476, %v5874, %v5876
        %v5882 = vadd.f32 %v5858, %v5877
        %v5883 = vadd.f32 %v5859, %v5878
        %v5884 = vadd.f32 %v5860, %v5876
        %5885 = vset.pattern.permute.xlu0 89
        %5886 = vperm.xlu0 %5885, %v3947
        %v5887 = vpop.permute.xlu0 %5886
        %v5889 = vmul.f32 %v3988, %v5887
        %v5890 = vmul.f32 %v3992, %v5887
        %v5891 = vmul.f32 %v3996, %v5887
        %5895 = vrot.lane.b32.xlu0 %v5889, 48
        %v5896 = vpop.permute.xlu0 %5895
        %5897 = vrot.lane.b32.xlu0 %v5890, 48
        %v5898 = vpop.permute.xlu0 %5897
        %5899 = vrot.lane.b32.xlu0 %v5891, 48
        %v5900 = vpop.permute.xlu0 %5899
        %v5901 = vsel %vm476, %v5896, %v5898
        %v5902 = vsel %vm476, %v5898, %v5900
        %v5906 = vadd.f32 %v5882, %v5901
        %v5907 = vadd.f32 %v5883, %v5902
        %v5908 = vadd.f32 %v5884, %v5900
        %5909 = vset.pattern.permute.xlu0 47
        %5910 = vperm.xlu0 %5909, %v3947
        %v5911 = vpop.permute.xlu0 %5910
        %v5913 = vmul.f32 %v3960, %v5911
        %v5914 = vmul.f32 %v3964, %v5911
        %v5915 = vmul.f32 %v3968, %v5911
        %5919 = vrot.lane.b32.xlu0 %v5913, 32
        %v5920 = vpop.permute.xlu0 %5919
        %5921 = vrot.lane.b32.xlu0 %v5914, 32
        %v5922 = vpop.permute.xlu0 %5921
        %5923 = vrot.lane.b32.xlu0 %v5915, 32
        %v5924 = vpop.permute.xlu0 %5923
        %v5925 = vsel %vm1316, %v5920, %v5922
        %v5926 = vsel %vm1316, %v5922, %v5924
        %v5930 = vadd.f32 %v5906, %v5925
        %v5931 = vadd.f32 %v5907, %v5926
        %v5932 = vadd.f32 %v5908, %v5924
        %5933 = vset.pattern.permute.xlu0 96
        %5934 = vperm.xlu0 %5933, %v3947
        %v5935 = vpop.permute.xlu0 %5934
        %v5937 = vmul.f32 %v3988, %v5935
        %v5938 = vmul.f32 %v3992, %v5935
        %v5939 = vmul.f32 %v3996, %v5935
        %5943 = vrot.lane.b32.xlu0 %v5937, 32
        %v5944 = vpop.permute.xlu0 %5943
        %5945 = vrot.lane.b32.xlu0 %v5938, 32
        %v5946 = vpop.permute.xlu0 %5945
        %5947 = vrot.lane.b32.xlu0 %v5939, 32
        %v5948 = vpop.permute.xlu0 %5947
        %v5949 = vsel %vm1316, %v5944, %v5946
        %v5950 = vsel %vm1316, %v5946, %v5948
        %v5954 = vadd.f32 %v5930, %v5949
        %v5955 = vadd.f32 %v5931, %v5950
        %v5956 = vadd.f32 %v5932, %v5948
        %5957 = vrot.lane.b32.xlu0 %v1272, 18
        %v5958 = vpop.permute.xlu0 %5957
        %5959 = vrot.lane.b32.xlu0 %v1276, 18
        %v5960 = vpop.permute.xlu0 %5959
        %v5961 = vsel %vm1281, %v5958, %v5960
        %v5965 = vmul.f32 %v5954, %v5958
        %v5966 = vmul.f32 %v5955, %v5961
        %v5967 = vmul.f32 %v5956, %v5960
        %5971 = vrot.lane.b32.xlu0 %v5965, 123
        %v5972 = vpop.permute.xlu0 %5971
        %5973 = vrot.lane.b32.xlu0 %v5966, 123
        %v5974 = vpop.permute.xlu0 %5973
        %5975 = vrot.lane.b32.xlu0 %v5967, 123
        %v5976 = vpop.permute.xlu0 %5975
        %vm5977 = vcmask 1006592
        %v5978 = vsel %vm5977, %v5972, %v5974
        %v5979 = vsel %vm5977, %v5974, %v5976
        %v5983 = vadd.f32 %v5646, %v5978
        %v5984 = vadd.f32 %v5647, %v5979
        %v5985 = vadd.f32 %v5648, %v5976
        %5986 = vset.pattern.permute.xlu0 6
        %5987 = vperm.xlu0 %5986, %v3947
        %v5988 = vpop.permute.xlu0 %5987
        %v5990 = vmul.f32 %v3960, %v5988
        %v5991 = vmul.f32 %v3964, %v5988
        %v5992 = vmul.f32 %v3968, %v5988
        %v5993 = vadd.f32 %v5990, 0.0
        %v5994 = vadd.f32 %v5991, 0.0
        %v5995 = vadd.f32 %v5992, 0.0
        %5996 = vset.pattern.permute.xlu0 55
        %5997 = vperm.xlu0 %5996, %v3947
        %v5998 = vpop.permute.xlu0 %5997
        %v6000 = vmul.f32 %v3988, %v5998
        %v6001 = vmul.f32 %v3992, %v5998
        %v6002 = vmul.f32 %v3996, %v5998
        %v6003 = vadd.f32 %v5993, %v6000
        %v6004 = vadd.f32 %v5994, %v6001
        %v6005 = vadd.f32 %v5995, %v6002
        %6006 = vset.pattern.permute.xlu0 13
        %6007 = vperm.xlu0 %6006, %v3947
        %v6008 = vpop.permute.xlu0 %6007
        %v6010 = vmul.f32 %v3960, %v6008
        %v6011 = vmul.f32 %v3964, %v6008
        %v6012 = vmul.f32 %v3968, %v6008
        %6016 = vrot.lane.b32.xlu0 %v6010, 112
        %v6017 = vpop.permute.xlu0 %6016
        %6018 = vrot.lane.b32.xlu0 %v6011, 112
        %v6019 = vpop.permute.xlu0 %6018
        %6020 = vrot.lane.b32.xlu0 %v6012, 112
        %v6021 = vpop.permute.xlu0 %6020
        %v6022 = vsel %vm534, %v6017, %v6019
        %v6023 = vsel %vm534, %v6019, %v6021
        %v6027 = vadd.f32 %v6003, %v6022
        %v6028 = vadd.f32 %v6004, %v6023
        %v6029 = vadd.f32 %v6005, %v6021
        %6030 = vset.pattern.permute.xlu0 62
        %6031 = vperm.xlu0 %6030, %v3947
        %v6032 = vpop.permute.xlu0 %6031
        %v6034 = vmul.f32 %v3988, %v6032
        %v6035 = vmul.f32 %v3992, %v6032
        %v6036 = vmul.f32 %v3996, %v6032
        %6040 = vrot.lane.b32.xlu0 %v6034, 112
        %v6041 = vpop.permute.xlu0 %6040
        %6042 = vrot.lane.b32.xlu0 %v6035, 112
        %v6043 = vpop.permute.xlu0 %6042
        %6044 = vrot.lane.b32.xlu0 %v6036, 112
        %v6045 = vpop.permute.xlu0 %6044
        %v6046 = vsel %vm534, %v6041, %v6043
        %v6047 = vsel %vm534, %v6043, %v6045
        %v6051 = vadd.f32 %v6027, %v6046
        %v6052 = vadd.f32 %v6028, %v6047
        %v6053 = vadd.f32 %v6029, %v6045
        %6054 = vset.pattern.permute.xlu0 20
        %6055 = vperm.xlu0 %6054, %v3947
        %v6056 = vpop.permute.xlu0 %6055
        %v6058 = vmul.f32 %v3960, %v6056
        %v6059 = vmul.f32 %v3964, %v6056
        %v6060 = vmul.f32 %v3968, %v6056
        %6064 = vrot.lane.b32.xlu0 %v6058, 96
        %v6065 = vpop.permute.xlu0 %6064
        %6066 = vrot.lane.b32.xlu0 %v6059, 96
        %v6067 = vpop.permute.xlu0 %6066
        %6068 = vrot.lane.b32.xlu0 %v6060, 96
        %v6069 = vpop.permute.xlu0 %6068
        %v6070 = vsel %vm562, %v6065, %v6067
        %v6071 = vsel %vm562, %v6067, %v6069
        %v6075 = vadd.f32 %v6051, %v6070
        %v6076 = vadd.f32 %v6052, %v6071
        %v6077 = vadd.f32 %v6053, %v6069
        %6078 = vset.pattern.permute.xlu0 69
        %6079 = vperm.xlu0 %6078, %v3947
        %v6080 = vpop.permute.xlu0 %6079
        %v6082 = vmul.f32 %v3988, %v6080
        %v6083 = vmul.f32 %v3992, %v6080
        %v6084 = vmul.f32 %v3996, %v6080
        %6088 = vrot.lane.b32.xlu0 %v6082, 96
        %v6089 = vpop.permute.xlu0 %6088
        %6090 = vrot.lane.b32.xlu0 %v6083, 96
        %v6091 = vpop.permute.xlu0 %6090
        %6092 = vrot.lane.b32.xlu0 %v6084, 96
        %v6093 = vpop.permute.xlu0 %6092
        %v6094 = vsel %vm562, %v6089, %v6091
        %v6095 = vsel %vm562, %v6091, %v6093
        %v6099 = vadd.f32 %v6075, %v6094
        %v6100 = vadd.f32 %v6076, %v6095
        %v6101 = vadd.f32 %v6077, %v6093
        %6102 = vset.pattern.permute.xlu0 27
        %6103 = vperm.xlu0 %6102, %v3947
        %v6104 = vpop.permute.xlu0 %6103
        %v6106 = vmul.f32 %v3960, %v6104
        %v6107 = vmul.f32 %v3964, %v6104
        %v6108 = vmul.f32 %v3968, %v6104
        %6112 = vrot.lane.b32.xlu0 %v6106, 80
        %v6113 = vpop.permute.xlu0 %6112
        %6114 = vrot.lane.b32.xlu0 %v6107, 80
        %v6115 = vpop.permute.xlu0 %6114
        %6116 = vrot.lane.b32.xlu0 %v6108, 80
        %v6117 = vpop.permute.xlu0 %6116
        %v6118 = vsel %vm590, %v6113, %v6115
        %v6119 = vsel %vm590, %v6115, %v6117
        %v6123 = vadd.f32 %v6099, %v6118
        %v6124 = vadd.f32 %v6100, %v6119
        %v6125 = vadd.f32 %v6101, %v6117
        %6126 = vset.pattern.permute.xlu0 76
        %6127 = vperm.xlu0 %6126, %v3947
        %v6128 = vpop.permute.xlu0 %6127
        %v6130 = vmul.f32 %v3988, %v6128
        %v6131 = vmul.f32 %v3992, %v6128
        %v6132 = vmul.f32 %v3996, %v6128
        %6136 = vrot.lane.b32.xlu0 %v6130, 80
        %v6137 = vpop.permute.xlu0 %6136
        %6138 = vrot.lane.b32.xlu0 %v6131, 80
        %v6139 = vpop.permute.xlu0 %6138
        %6140 = vrot.lane.b32.xlu0 %v6132, 80
        %v6141 = vpop.permute.xlu0 %6140
        %v6142 = vsel %vm590, %v6137, %v6139
        %v6143 = vsel %vm590, %v6139, %v6141
        %v6147 = vadd.f32 %v6123, %v6142
        %v6148 = vadd.f32 %v6124, %v6143
        %v6149 = vadd.f32 %v6125, %v6141
        %6150 = vset.pattern.permute.xlu0 34
        %6151 = vperm.xlu0 %6150, %v3947
        %v6152 = vpop.permute.xlu0 %6151
        %v6154 = vmul.f32 %v3960, %v6152
        %v6155 = vmul.f32 %v3964, %v6152
        %v6156 = vmul.f32 %v3968, %v6152
        %6160 = vrot.lane.b32.xlu0 %v6154, 64
        %v6161 = vpop.permute.xlu0 %6160
        %6162 = vrot.lane.b32.xlu0 %v6155, 64
        %v6163 = vpop.permute.xlu0 %6162
        %6164 = vrot.lane.b32.xlu0 %v6156, 64
        %v6165 = vpop.permute.xlu0 %6164
        %v6166 = vsel %vm618, %v6161, %v6163
        %v6167 = vsel %vm618, %v6163, %v6165
        %v6171 = vadd.f32 %v6147, %v6166
        %v6172 = vadd.f32 %v6148, %v6167
        %v6173 = vadd.f32 %v6149, %v6165
        %6174 = vset.pattern.permute.xlu0 83
        %6175 = vperm.xlu0 %6174, %v3947
        %v6176 = vpop.permute.xlu0 %6175
        %v6178 = vmul.f32 %v3988, %v6176
        %v6179 = vmul.f32 %v3992, %v6176
        %v6180 = vmul.f32 %v3996, %v6176
        %6184 = vrot.lane.b32.xlu0 %v6178, 64
        %v6185 = vpop.permute.xlu0 %6184
        %6186 = vrot.lane.b32.xlu0 %v6179, 64
        %v6187 = vpop.permute.xlu0 %6186
        %6188 = vrot.lane.b32.xlu0 %v6180, 64
        %v6189 = vpop.permute.xlu0 %6188
        %v6190 = vsel %vm618, %v6185, %v6187
        %v6191 = vsel %vm618, %v6187, %v6189
        %v6195 = vadd.f32 %v6171, %v6190
        %v6196 = vadd.f32 %v6172, %v6191
        %v6197 = vadd.f32 %v6173, %v6189
        %6198 = vset.pattern.permute.xlu0 41
        %6199 = vperm.xlu0 %6198, %v3947
        %v6200 = vpop.permute.xlu0 %6199
        %v6202 = vmul.f32 %v3960, %v6200
        %v6203 = vmul.f32 %v3964, %v6200
        %v6204 = vmul.f32 %v3968, %v6200
        %6208 = vrot.lane.b32.xlu0 %v6202, 48
        %v6209 = vpop.permute.xlu0 %6208
        %6210 = vrot.lane.b32.xlu0 %v6203, 48
        %v6211 = vpop.permute.xlu0 %6210
        %6212 = vrot.lane.b32.xlu0 %v6204, 48
        %v6213 = vpop.permute.xlu0 %6212
        %v6214 = vsel %vm476, %v6209, %v6211
        %v6215 = vsel %vm476, %v6211, %v6213
        %v6219 = vadd.f32 %v6195, %v6214
        %v6220 = vadd.f32 %v6196, %v6215
        %v6221 = vadd.f32 %v6197, %v6213
        %6222 = vset.pattern.permute.xlu0 90
        %6223 = vperm.xlu0 %6222, %v3947
        %v6224 = vpop.permute.xlu0 %6223
        %v6226 = vmul.f32 %v3988, %v6224
        %v6227 = vmul.f32 %v3992, %v6224
        %v6228 = vmul.f32 %v3996, %v6224
        %6232 = vrot.lane.b32.xlu0 %v6226, 48
        %v6233 = vpop.permute.xlu0 %6232
        %6234 = vrot.lane.b32.xlu0 %v6227, 48
        %v6235 = vpop.permute.xlu0 %6234
        %6236 = vrot.lane.b32.xlu0 %v6228, 48
        %v6237 = vpop.permute.xlu0 %6236
        %v6238 = vsel %vm476, %v6233, %v6235
        %v6239 = vsel %vm476, %v6235, %v6237
        %v6243 = vadd.f32 %v6219, %v6238
        %v6244 = vadd.f32 %v6220, %v6239
        %v6245 = vadd.f32 %v6221, %v6237
        %6246 = vset.pattern.permute.xlu0 48
        %6247 = vperm.xlu0 %6246, %v3947
        %v6248 = vpop.permute.xlu0 %6247
        %v6250 = vmul.f32 %v3960, %v6248
        %v6251 = vmul.f32 %v3964, %v6248
        %v6252 = vmul.f32 %v3968, %v6248
        %6256 = vrot.lane.b32.xlu0 %v6250, 32
        %v6257 = vpop.permute.xlu0 %6256
        %6258 = vrot.lane.b32.xlu0 %v6251, 32
        %v6259 = vpop.permute.xlu0 %6258
        %6260 = vrot.lane.b32.xlu0 %v6252, 32
        %v6261 = vpop.permute.xlu0 %6260
        %v6262 = vsel %vm1316, %v6257, %v6259
        %v6263 = vsel %vm1316, %v6259, %v6261
        %v6267 = vadd.f32 %v6243, %v6262
        %v6268 = vadd.f32 %v6244, %v6263
        %v6269 = vadd.f32 %v6245, %v6261
        %6270 = vset.pattern.permute.xlu0 97
        %6271 = vperm.xlu0 %6270, %v3947
        %v6272 = vpop.permute.xlu0 %6271
        %v6274 = vmul.f32 %v3988, %v6272
        %v6275 = vmul.f32 %v3992, %v6272
        %v6276 = vmul.f32 %v3996, %v6272
        %6280 = vrot.lane.b32.xlu0 %v6274, 32
        %v6281 = vpop.permute.xlu0 %6280
        %6282 = vrot.lane.b32.xlu0 %v6275, 32
        %v6283 = vpop.permute.xlu0 %6282
        %6284 = vrot.lane.b32.xlu0 %v6276, 32
        %v6285 = vpop.permute.xlu0 %6284
        %v6286 = vsel %vm1316, %v6281, %v6283
        %v6287 = vsel %vm1316, %v6283, %v6285
        %v6291 = vadd.f32 %v6267, %v6286
        %v6292 = vadd.f32 %v6268, %v6287
        %v6293 = vadd.f32 %v6269, %v6285
        %6294 = vrot.lane.b32.xlu0 %v2391, 19
        %v6295 = vpop.permute.xlu0 %6294
        %6296 = vrot.lane.b32.xlu0 %v2395, 19
        %v6297 = vpop.permute.xlu0 %6296
        %v6298 = vsel %vm2400, %v6295, %v6297
        %v6302 = vmul.f32 %v6291, %v6295
        %v6303 = vmul.f32 %v6292, %v6298
        %v6304 = vmul.f32 %v6293, %v6297
        %6308 = vrot.lane.b32.xlu0 %v6302, 122
        %v6309 = vpop.permute.xlu0 %6308
        %6310 = vrot.lane.b32.xlu0 %v6303, 122
        %v6311 = vpop.permute.xlu0 %6310
        %6312 = vrot.lane.b32.xlu0 %v6304, 122
        %v6313 = vpop.permute.xlu0 %6312
        %vm6314 = vcmask 998400
        %v6315 = vsel %vm6314, %v6309, %v6311
        %v6316 = vsel %vm6314, %v6311, %v6313
        %v6320 = vadd.f32 %v5983, %v6315
        %v6321 = vadd.f32 %v5984, %v6316
        %v6322 = vadd.f32 %v5985, %v6313
        %v6323 = vsub.f32 0.0, %v6320
        %v6324 = vsub.f32 0.0, %v6321
        %v6325 = vsub.f32 0.0, %v6322
        %v6326 = vmul.f32 %v6323, 1.442695
        %v6327 = vpow.pop %v6326
        %v6328 = vmul.f32 %v6324, 1.442695
        %v6329 = vpow.pop %v6328
        %v6330 = vmul.f32 %v6325, 1.442695
        %v6331 = vpow.pop %v6330
        %v6332 = vadd.f32 %v6327, 1.0
        %v6333 = vadd.f32 %v6329, 1.0
        %v6334 = vadd.f32 %v6331, 1.0
        %v6335 = vrcp.pop %v6332
        %v6336 = vmul.f32 1.0, %v6335
        %v6337 = vrcp.pop %v6333
        %v6338 = vmul.f32 1.0, %v6337
        %v6339 = vrcp.pop %v6334
        %v6340 = vmul.f32 1.0, %v6339
        %v6341 = vlaneseq
        %v6342 = vshrl.u32 %v6341, 7
        %v6343 = vsub.s32 0, %v6342
        %v6344 = vrot.slane %v6336, %v6343
        %v6345 = vlaneseq
        %v6346 = vshrl.u32 %v6345, 7
        %v6347 = vsub.s32 0, %v6346
        %v6348 = vrot.slane %v6338, %v6347
        %v6349 = vlaneseq
        %v6350 = vshrl.u32 %v6349, 7
        %v6351 = vsub.s32 0, %v6350
        %v6352 = vrot.slane %v6340, %v6351
        %6356 = vrot.lane.b32.xlu0 %v6344, 115
        %v6357 = vpop.permute.xlu0 %6356
        %6358 = vrot.lane.b32.xlu0 %v6348, 115
        %v6359 = vpop.permute.xlu0 %6358
        %6360 = vrot.lane.b32.xlu0 %v6352, 115
        %v6361 = vpop.permute.xlu0 %6360
        %v6362 = vsel %vm1999, %v6357, %v6359
        %v6363 = vsel %vm1999, %v6359, %v6361
        %v6366 = vmul.f32 %v3344, %v6362
        %v6367 = vmul.f32 %v3346, %v6363
        %v6368 = vlaneseq
        %v6369 = vshrl.u32 %v6368, 7
        %v6370 = vsub.s32 1, %v6369
        %v6371 = vrot.slane %v6336, %v6370
        %v6372 = vlaneseq
        %v6373 = vshrl.u32 %v6372, 7
        %v6374 = vsub.s32 1, %v6373
        %v6375 = vrot.slane %v6338, %v6374
        %v6376 = vlaneseq
        %v6377 = vshrl.u32 %v6376, 7
        %v6378 = vsub.s32 1, %v6377
        %v6379 = vrot.slane %v6340, %v6378
        %6383 = vrot.lane.b32.xlu0 %v6371, 115
        %v6384 = vpop.permute.xlu0 %6383
        %6385 = vrot.lane.b32.xlu0 %v6375, 115
        %v6386 = vpop.permute.xlu0 %6385
        %6387 = vrot.lane.b32.xlu0 %v6379, 115
        %v6388 = vpop.permute.xlu0 %6387
        %v6389 = vsel %vm1999, %v6384, %v6386
        %v6390 = vsel %vm1999, %v6386, %v6388
        %v6393 = vmul.f32 %v3825, %v6389
        %v6394 = vmul.f32 %v3827, %v6390
        %v6395 = vadd.f32 %v6366, %v6393
        %v6396 = vadd.f32 %v6367, %v6394
        %v6397 = vld [vmem:[%s12] sm:$0xf]
        %v6398 = vld [vmem:[%s13] sm:$0xf]
        %6400 = vset.pattern.permute.xlu0 0
        %6401 = vperm.xlu0 %6400, %v6398
        %v6402 = vpop.permute.xlu0 %6401
        %vm6404 = vcmask 15360
        %v6406 = vsel %vm6404, %v6397, 0
        %v6409 = vsel %vm3829, %v6395, 0
        %v6412 = vsel %vm3829, %v6396, 0
        %6414 = vmatprep.subr.mxu0 0.0
        %6415 = vmatpush1.msra.mxu0 0.0
        %6416 = vmatprep.subr.mxu0 0.0
        %6417 = vmatpush1.msra.mxu0 0.0
        %6418 = vmatprep.subr.mxu0 0.0
        %6419 = vmatpush1.msra.mxu0 0.0
        %6420 = vmatprep.subr.mxu0 0.0
        %6421 = vmatpush1.msra.mxu0 0.0
        %6422 = vmatprep.subr.mxu0 0.0
        %6423 = vmatpush1.msra.mxu0 0.0
        %6424 = vmatprep.subr.mxu0 0.0
        %6425 = vmatpush1.msra.mxu0 0.0
        %6426 = vmatprep.subr.mxu0 0.0
        %6427 = vmatpush1.msra.mxu0 0.0
        %6428 = vmatprep.subr.mxu0 0.0
        %6429 = vmatpush1.msra.mxu0 0.0
        %6430 = vmatprep.subr.mxu0 0.0
        %6431 = vmatpush1.msra.mxu0 0.0
        %6432 = vmatprep.subr.mxu0 0.0
        %6433 = vmatpush1.msra.mxu0 0.0
        %6434 = vmatprep.subr.mxu0 0.0
        %6435 = vmatpush1.msra.mxu0 0.0
        %6436 = vmatprep.subr.mxu0 0.0
        %6437 = vmatpush1.msra.mxu0 0.0
        %6438 = vmatprep.subr.mxu0 0.0
        %6439 = vmatpush1.msra.mxu0 0.0
        %6440 = vmatprep.subr.mxu0 0.0
        %6441 = vmatpush1.msra.mxu0 0.0
        %6442 = vmatprep.subr.mxu0 0.0
        %6443 = vmatpush1.msra.mxu0 0.0
        %v6444 = vand.u32 %v6412, 4294901760
        %6445 = vmatprep.subr.mxu0 %v6444
        %v6446 = vand.u32 %v6409, 4294901760
        %6447 = vmatpush1.msra.mxu0 %v6446
        %6448 = vmatprep.subr.mxu0 0.0
        %6449 = vmatpush2.msra.mxu0 0.0
        %6450 = vmatprep.subr.mxu0 0.0
        %6451 = vmatpush2.msra.mxu0 0.0
        %6452 = vmatprep.subr.mxu0 0.0
        %6453 = vmatpush2.msra.mxu0 0.0
        %6454 = vmatprep.subr.mxu0 0.0
        %6455 = vmatpush2.msra.mxu0 0.0
        %6456 = vmatprep.subr.mxu0 0.0
        %6457 = vmatpush2.msra.mxu0 0.0
        %6458 = vmatprep.subr.mxu0 0.0
        %6459 = vmatpush2.msra.mxu0 0.0
        %6460 = vmatprep.subr.mxu0 0.0
        %6461 = vmatpush2.msra.mxu0 0.0
        %6462 = vmatprep.subr.mxu0 0.0
        %6463 = vmatpush2.msra.mxu0 0.0
        %6464 = vmatprep.subr.mxu0 0.0
        %6465 = vmatpush2.msra.mxu0 0.0
        %6466 = vmatprep.subr.mxu0 0.0
        %6467 = vmatpush2.msra.mxu0 0.0
        %6468 = vmatprep.subr.mxu0 0.0
        %6469 = vmatpush2.msra.mxu0 0.0
        %6470 = vmatprep.subr.mxu0 0.0
        %6471 = vmatpush2.msra.mxu0 0.0
        %6472 = vmatprep.subr.mxu0 0.0
        %6473 = vmatpush2.msra.mxu0 0.0
        %6474 = vmatprep.subr.mxu0 0.0
        %6475 = vmatpush2.msra.mxu0 0.0
        %6476 = vmatprep.subr.mxu0 0.0
        %6477 = vmatpush2.msra.mxu0 0.0
        %6478 = vmatprep.subr.mxu0 0.0
        %6479 = vmatpush2.msra.mxu0 0.0
        %6480 = vmatprep.mubr.f32.mxu0 0.0
        %v6481 = vand.u32 %v6406, 4294901760
        %v6482 = vsub.f32 %v6406, %v6481
        %v6483 = vand.u32 %v6482, 4294901760
        %v6484 = vsub.f32 %v6482, %v6483
        %v6485 = vand.u32 %v6484, 4294901760
        %6486 = vmatmul.mubr.f32.gmra.mxu0 %v6485
        %v6487 = vpop.f32.mrf.mxu0
        %v6488 = vadd.f32 %v6402, %v6487
        %v6489 = vpop.f32.mrf.mxu0
        %v6490 = vadd.f32 %v6402, %v6489
        %6491 = vdwg.mxu0
        %6492 = vmatprep.subr.mxu0 0.0
        %6493 = vmatpush1.msra.mxu0 0.0
        %6494 = vmatprep.subr.mxu0 0.0
        %6495 = vmatpush1.msra.mxu0 0.0
        %6496 = vmatprep.subr.mxu0 0.0
        %6497 = vmatpush1.msra.mxu0 0.0
        %6498 = vmatprep.subr.mxu0 0.0
        %6499 = vmatpush1.msra.mxu0 0.0
        %6500 = vmatprep.subr.mxu0 0.0
        %6501 = vmatpush1.msra.mxu0 0.0
        %6502 = vmatprep.subr.mxu0 0.0
        %6503 = vmatpush1.msra.mxu0 0.0
        %6504 = vmatprep.subr.mxu0 0.0
        %6505 = vmatpush1.msra.mxu0 0.0
        %6506 = vmatprep.subr.mxu0 0.0
        %6507 = vmatpush1.msra.mxu0 0.0
        %6508 = vmatprep.subr.mxu0 0.0
        %6509 = vmatpush1.msra.mxu0 0.0
        %6510 = vmatprep.subr.mxu0 0.0
        %6511 = vmatpush1.msra.mxu0 0.0
        %6512 = vmatprep.subr.mxu0 0.0
        %6513 = vmatpush1.msra.mxu0 0.0
        %6514 = vmatprep.subr.mxu0 0.0
        %6515 = vmatpush1.msra.mxu0 0.0
        %6516 = vmatprep.subr.mxu0 0.0
        %6517 = vmatpush1.msra.mxu0 0.0
        %6518 = vmatprep.subr.mxu0 0.0
        %6519 = vmatpush1.msra.mxu0 0.0
        %6520 = vmatprep.subr.mxu0 0.0
        %6521 = vmatpush1.msra.mxu0 0.0
        %v6522 = vand.u32 %v6412, 4294901760
        %v6523 = vsub.f32 %v6412, %v6522
        %v6524 = vand.u32 %v6523, 4294901760
        %v6525 = vsub.f32 %v6523, %v6524
        %v6526 = vand.u32 %v6525, 4294901760
        %6527 = vmatprep.subr.mxu0 %v6526
        %v6528 = vand.u32 %v6409, 4294901760
        %v6529 = vsub.f32 %v6409, %v6528
        %v6530 = vand.u32 %v6529, 4294901760
        %v6531 = vsub.f32 %v6529, %v6530
        %v6532 = vand.u32 %v6531, 4294901760
        %6533 = vmatpush1.msra.mxu0 %v6532
        %6534 = vmatprep.subr.mxu0 0.0
        %6535 = vmatpush2.msra.mxu0 0.0
        %6536 = vmatprep.subr.mxu0 0.0
        %6537 = vmatpush2.msra.mxu0 0.0
        %6538 = vmatprep.subr.mxu0 0.0
        %6539 = vmatpush2.msra.mxu0 0.0
        %6540 = vmatprep.subr.mxu0 0.0
        %6541 = vmatpush2.msra.mxu0 0.0
        %6542 = vmatprep.subr.mxu0 0.0
        %6543 = vmatpush2.msra.mxu0 0.0
        %6544 = vmatprep.subr.mxu0 0.0
        %6545 = vmatpush2.msra.mxu0 0.0
        %6546 = vmatprep.subr.mxu0 0.0
        %6547 = vmatpush2.msra.mxu0 0.0
        %6548 = vmatprep.subr.mxu0 0.0
        %6549 = vmatpush2.msra.mxu0 0.0
        %6550 = vmatprep.subr.mxu0 0.0
        %6551 = vmatpush2.msra.mxu0 0.0
        %6552 = vmatprep.subr.mxu0 0.0
        %6553 = vmatpush2.msra.mxu0 0.0
        %6554 = vmatprep.subr.mxu0 0.0
        %6555 = vmatpush2.msra.mxu0 0.0
        %6556 = vmatprep.subr.mxu0 0.0
        %6557 = vmatpush2.msra.mxu0 0.0
        %6558 = vmatprep.subr.mxu0 0.0
        %6559 = vmatpush2.msra.mxu0 0.0
        %6560 = vmatprep.subr.mxu0 0.0
        %6561 = vmatpush2.msra.mxu0 0.0
        %6562 = vmatprep.subr.mxu0 0.0
        %6563 = vmatpush2.msra.mxu0 0.0
        %6564 = vmatprep.subr.mxu0 0.0
        %6565 = vmatpush2.msra.mxu0 0.0
        %6566 = vmatprep.mubr.f32.mxu0 0.0
        %v6567 = vand.u32 %v6406, 4294901760
        %6568 = vmatmul.mubr.f32.gmra.mxu0 %v6567
        %v6569 = vpop.f32.mrf.mxu0
        %v6570 = vadd.f32 %v6488, %v6569
        %v6571 = vpop.f32.mrf.mxu0
        %v6572 = vadd.f32 %v6490, %v6571
        %6573 = vdwg.mxu0
        %6574 = vmatprep.subr.mxu0 0.0
        %6575 = vmatpush1.msra.mxu0 0.0
        %6576 = vmatprep.subr.mxu0 0.0
        %6577 = vmatpush1.msra.mxu0 0.0
        %6578 = vmatprep.subr.mxu0 0.0
        %6579 = vmatpush1.msra.mxu0 0.0
        %6580 = vmatprep.subr.mxu0 0.0
        %6581 = vmatpush1.msra.mxu0 0.0
        %6582 = vmatprep.subr.mxu0 0.0
        %6583 = vmatpush1.msra.mxu0 0.0
        %6584 = vmatprep.subr.mxu0 0.0
        %6585 = vmatpush1.msra.mxu0 0.0
        %6586 = vmatprep.subr.mxu0 0.0
        %6587 = vmatpush1.msra.mxu0 0.0
        %6588 = vmatprep.subr.mxu0 0.0
        %6589 = vmatpush1.msra.mxu0 0.0
        %6590 = vmatprep.subr.mxu0 0.0
        %6591 = vmatpush1.msra.mxu0 0.0
        %6592 = vmatprep.subr.mxu0 0.0
        %6593 = vmatpush1.msra.mxu0 0.0
        %6594 = vmatprep.subr.mxu0 0.0
        %6595 = vmatpush1.msra.mxu0 0.0
        %6596 = vmatprep.subr.mxu0 0.0
        %6597 = vmatpush1.msra.mxu0 0.0
        %6598 = vmatprep.subr.mxu0 0.0
        %6599 = vmatpush1.msra.mxu0 0.0
        %6600 = vmatprep.subr.mxu0 0.0
        %6601 = vmatpush1.msra.mxu0 0.0
        %6602 = vmatprep.subr.mxu0 0.0
        %6603 = vmatpush1.msra.mxu0 0.0
        %v6604 = vand.u32 %v6412, 4294901760
        %v6605 = vsub.f32 %v6412, %v6604
        %6606 = vmatprep.subr.mxu0 %v6605
        %v6607 = vand.u32 %v6409, 4294901760
        %v6608 = vsub.f32 %v6409, %v6607
        %6609 = vmatpush1.msra.mxu0 %v6608
        %6610 = vmatprep.subr.mxu0 0.0
        %6611 = vmatpush2.msra.mxu0 0.0
        %6612 = vmatprep.subr.mxu0 0.0
        %6613 = vmatpush2.msra.mxu0 0.0
        %6614 = vmatprep.subr.mxu0 0.0
        %6615 = vmatpush2.msra.mxu0 0.0
        %6616 = vmatprep.subr.mxu0 0.0
        %6617 = vmatpush2.msra.mxu0 0.0
        %6618 = vmatprep.subr.mxu0 0.0
        %6619 = vmatpush2.msra.mxu0 0.0
        %6620 = vmatprep.subr.mxu0 0.0
        %6621 = vmatpush2.msra.mxu0 0.0
        %6622 = vmatprep.subr.mxu0 0.0
        %6623 = vmatpush2.msra.mxu0 0.0
        %6624 = vmatprep.subr.mxu0 0.0
        %6625 = vmatpush2.msra.mxu0 0.0
        %6626 = vmatprep.subr.mxu0 0.0
        %6627 = vmatpush2.msra.mxu0 0.0
        %6628 = vmatprep.subr.mxu0 0.0
        %6629 = vmatpush2.msra.mxu0 0.0
        %6630 = vmatprep.subr.mxu0 0.0
        %6631 = vmatpush2.msra.mxu0 0.0
        %6632 = vmatprep.subr.mxu0 0.0
        %6633 = vmatpush2.msra.mxu0 0.0
        %6634 = vmatprep.subr.mxu0 0.0
        %6635 = vmatpush2.msra.mxu0 0.0
        %6636 = vmatprep.subr.mxu0 0.0
        %6637 = vmatpush2.msra.mxu0 0.0
        %6638 = vmatprep.subr.mxu0 0.0
        %6639 = vmatpush2.msra.mxu0 0.0
        %6640 = vmatprep.subr.mxu0 0.0
        %6641 = vmatpush2.msra.mxu0 0.0
        %6642 = vmatprep.mubr.f32.mxu0 0.0
        %v6643 = vand.u32 %v6406, 4294901760
        %v6644 = vsub.f32 %v6406, %v6643
        %6645 = vmatmul.mubr.f32.gmra.mxu0 %v6644
        %v6646 = vpop.f32.mrf.mxu0
        %v6647 = vadd.f32 %v6570, %v6646
        %v6648 = vpop.f32.mrf.mxu0
        %v6649 = vadd.f32 %v6572, %v6648
        %6650 = vdwg.mxu0
        %6651 = vmatprep.subr.mxu0 0.0
        %6652 = vmatpush1.msra.mxu0 0.0
        %6653 = vmatprep.subr.mxu0 0.0
        %6654 = vmatpush1.msra.mxu0 0.0
        %6655 = vmatprep.subr.mxu0 0.0
        %6656 = vmatpush1.msra.mxu0 0.0
        %6657 = vmatprep.subr.mxu0 0.0
        %6658 = vmatpush1.msra.mxu0 0.0
        %6659 = vmatprep.subr.mxu0 0.0
        %6660 = vmatpush1.msra.mxu0 0.0
        %6661 = vmatprep.subr.mxu0 0.0
        %6662 = vmatpush1.msra.mxu0 0.0
        %6663 = vmatprep.subr.mxu0 0.0
        %6664 = vmatpush1.msra.mxu0 0.0
        %6665 = vmatprep.subr.mxu0 0.0
        %6666 = vmatpush1.msra.mxu0 0.0
        %6667 = vmatprep.subr.mxu0 0.0
        %6668 = vmatpush1.msra.mxu0 0.0
        %6669 = vmatprep.subr.mxu0 0.0
        %6670 = vmatpush1.msra.mxu0 0.0
        %6671 = vmatprep.subr.mxu0 0.0
        %6672 = vmatpush1.msra.mxu0 0.0
        %6673 = vmatprep.subr.mxu0 0.0
        %6674 = vmatpush1.msra.mxu0 0.0
        %6675 = vmatprep.subr.mxu0 0.0
        %6676 = vmatpush1.msra.mxu0 0.0
        %6677 = vmatprep.subr.mxu0 0.0
        %6678 = vmatpush1.msra.mxu0 0.0
        %6679 = vmatprep.subr.mxu0 0.0
        %6680 = vmatpush1.msra.mxu0 0.0
        %v6681 = vand.u32 %v6412, 4294901760
        %6682 = vmatprep.subr.mxu0 %v6681
        %v6683 = vand.u32 %v6409, 4294901760
        %6684 = vmatpush1.msra.mxu0 %v6683
        %6685 = vmatprep.subr.mxu0 0.0
        %6686 = vmatpush2.msra.mxu0 0.0
        %6687 = vmatprep.subr.mxu0 0.0
        %6688 = vmatpush2.msra.mxu0 0.0
        %6689 = vmatprep.subr.mxu0 0.0
        %6690 = vmatpush2.msra.mxu0 0.0
        %6691 = vmatprep.subr.mxu0 0.0
        %6692 = vmatpush2.msra.mxu0 0.0
        %6693 = vmatprep.subr.mxu0 0.0
        %6694 = vmatpush2.msra.mxu0 0.0
        %6695 = vmatprep.subr.mxu0 0.0
        %6696 = vmatpush2.msra.mxu0 0.0
        %6697 = vmatprep.subr.mxu0 0.0
        %6698 = vmatpush2.msra.mxu0 0.0
        %6699 = vmatprep.subr.mxu0 0.0
        %6700 = vmatpush2.msra.mxu0 0.0
        %6701 = vmatprep.subr.mxu0 0.0
        %6702 = vmatpush2.msra.mxu0 0.0
        %6703 = vmatprep.subr.mxu0 0.0
        %6704 = vmatpush2.msra.mxu0 0.0
        %6705 = vmatprep.subr.mxu0 0.0
        %6706 = vmatpush2.msra.mxu0 0.0
        %6707 = vmatprep.subr.mxu0 0.0
        %6708 = vmatpush2.msra.mxu0 0.0
        %6709 = vmatprep.subr.mxu0 0.0
        %6710 = vmatpush2.msra.mxu0 0.0
        %6711 = vmatprep.subr.mxu0 0.0
        %6712 = vmatpush2.msra.mxu0 0.0
        %6713 = vmatprep.subr.mxu0 0.0
        %6714 = vmatpush2.msra.mxu0 0.0
        %6715 = vmatprep.subr.mxu0 0.0
        %6716 = vmatpush2.msra.mxu0 0.0
        %6717 = vmatprep.mubr.f32.mxu0 0.0
        %v6718 = vand.u32 %v6406, 4294901760
        %v6719 = vsub.f32 %v6406, %v6718
        %v6720 = vand.u32 %v6719, 4294901760
        %6721 = vmatmul.mubr.f32.gmra.mxu0 %v6720
        %v6722 = vpop.f32.mrf.mxu0
        %v6723 = vadd.f32 %v6647, %v6722
        %v6724 = vpop.f32.mrf.mxu0
        %v6725 = vadd.f32 %v6649, %v6724
        %6726 = vdwg.mxu0
        %6727 = vmatprep.subr.mxu0 0.0
        %6728 = vmatpush1.msra.mxu0 0.0
        %6729 = vmatprep.subr.mxu0 0.0
        %6730 = vmatpush1.msra.mxu0 0.0
        %6731 = vmatprep.subr.mxu0 0.0
        %6732 = vmatpush1.msra.mxu0 0.0
        %6733 = vmatprep.subr.mxu0 0.0
        %6734 = vmatpush1.msra.mxu0 0.0
        %6735 = vmatprep.subr.mxu0 0.0
        %6736 = vmatpush1.msra.mxu0 0.0
        %6737 = vmatprep.subr.mxu0 0.0
        %6738 = vmatpush1.msra.mxu0 0.0
        %6739 = vmatprep.subr.mxu0 0.0
        %6740 = vmatpush1.msra.mxu0 0.0
        %6741 = vmatprep.subr.mxu0 0.0
        %6742 = vmatpush1.msra.mxu0 0.0
        %6743 = vmatprep.subr.mxu0 0.0
        %6744 = vmatpush1.msra.mxu0 0.0
        %6745 = vmatprep.subr.mxu0 0.0
        %6746 = vmatpush1.msra.mxu0 0.0
        %6747 = vmatprep.subr.mxu0 0.0
        %6748 = vmatpush1.msra.mxu0 0.0
        %6749 = vmatprep.subr.mxu0 0.0
        %6750 = vmatpush1.msra.mxu0 0.0
        %6751 = vmatprep.subr.mxu0 0.0
        %6752 = vmatpush1.msra.mxu0 0.0
        %6753 = vmatprep.subr.mxu0 0.0
        %6754 = vmatpush1.msra.mxu0 0.0
        %6755 = vmatprep.subr.mxu0 0.0
        %6756 = vmatpush1.msra.mxu0 0.0
        %v6757 = vand.u32 %v6412, 4294901760
        %v6758 = vsub.f32 %v6412, %v6757
        %v6759 = vand.u32 %v6758, 4294901760
        %6760 = vmatprep.subr.mxu0 %v6759
        %v6761 = vand.u32 %v6409, 4294901760
        %v6762 = vsub.f32 %v6409, %v6761
        %v6763 = vand.u32 %v6762, 4294901760
        %6764 = vmatpush1.msra.mxu0 %v6763
        %6765 = vmatprep.subr.mxu0 0.0
        %6766 = vmatpush2.msra.mxu0 0.0
        %6767 = vmatprep.subr.mxu0 0.0
        %6768 = vmatpush2.msra.mxu0 0.0
        %6769 = vmatprep.subr.mxu0 0.0
        %6770 = vmatpush2.msra.mxu0 0.0
        %6771 = vmatprep.subr.mxu0 0.0
        %6772 = vmatpush2.msra.mxu0 0.0
        %6773 = vmatprep.subr.mxu0 0.0
        %6774 = vmatpush2.msra.mxu0 0.0
        %6775 = vmatprep.subr.mxu0 0.0
        %6776 = vmatpush2.msra.mxu0 0.0
        %6777 = vmatprep.subr.mxu0 0.0
        %6778 = vmatpush2.msra.mxu0 0.0
        %6779 = vmatprep.subr.mxu0 0.0
        %6780 = vmatpush2.msra.mxu0 0.0
        %6781 = vmatprep.subr.mxu0 0.0
        %6782 = vmatpush2.msra.mxu0 0.0
        %6783 = vmatprep.subr.mxu0 0.0
        %6784 = vmatpush2.msra.mxu0 0.0
        %6785 = vmatprep.subr.mxu0 0.0
        %6786 = vmatpush2.msra.mxu0 0.0
        %6787 = vmatprep.subr.mxu0 0.0
        %6788 = vmatpush2.msra.mxu0 0.0
        %6789 = vmatprep.subr.mxu0 0.0
        %6790 = vmatpush2.msra.mxu0 0.0
        %6791 = vmatprep.subr.mxu0 0.0
        %6792 = vmatpush2.msra.mxu0 0.0
        %6793 = vmatprep.subr.mxu0 0.0
        %6794 = vmatpush2.msra.mxu0 0.0
        %6795 = vmatprep.subr.mxu0 0.0
        %6796 = vmatpush2.msra.mxu0 0.0
        %6797 = vmatprep.mubr.f32.mxu0 0.0
        %v6798 = vand.u32 %v6406, 4294901760
        %6799 = vmatmul.mubr.f32.gmra.mxu0 %v6798
        %v6800 = vpop.f32.mrf.mxu0
        %v6801 = vadd.f32 %v6723, %v6800
        %v6802 = vpop.f32.mrf.mxu0
        %v6803 = vadd.f32 %v6725, %v6802
        %6804 = vdwg.mxu0
        %6805 = vmatprep.subr.mxu0 0.0
        %6806 = vmatpush1.msra.mxu0 0.0
        %6807 = vmatprep.subr.mxu0 0.0
        %6808 = vmatpush1.msra.mxu0 0.0
        %6809 = vmatprep.subr.mxu0 0.0
        %6810 = vmatpush1.msra.mxu0 0.0
        %6811 = vmatprep.subr.mxu0 0.0
        %6812 = vmatpush1.msra.mxu0 0.0
        %6813 = vmatprep.subr.mxu0 0.0
        %6814 = vmatpush1.msra.mxu0 0.0
        %6815 = vmatprep.subr.mxu0 0.0
        %6816 = vmatpush1.msra.mxu0 0.0
        %6817 = vmatprep.subr.mxu0 0.0
        %6818 = vmatpush1.msra.mxu0 0.0
        %6819 = vmatprep.subr.mxu0 0.0
        %6820 = vmatpush1.msra.mxu0 0.0
        %6821 = vmatprep.subr.mxu0 0.0
        %6822 = vmatpush1.msra.mxu0 0.0
        %6823 = vmatprep.subr.mxu0 0.0
        %6824 = vmatpush1.msra.mxu0 0.0
        %6825 = vmatprep.subr.mxu0 0.0
        %6826 = vmatpush1.msra.mxu0 0.0
        %6827 = vmatprep.subr.mxu0 0.0
        %6828 = vmatpush1.msra.mxu0 0.0
        %6829 = vmatprep.subr.mxu0 0.0
        %6830 = vmatpush1.msra.mxu0 0.0
        %6831 = vmatprep.subr.mxu0 0.0
        %6832 = vmatpush1.msra.mxu0 0.0
        %6833 = vmatprep.subr.mxu0 0.0
        %6834 = vmatpush1.msra.mxu0 0.0
        %v6835 = vand.u32 %v6412, 4294901760
        %6836 = vmatprep.subr.mxu0 %v6835
        %v6837 = vand.u32 %v6409, 4294901760
        %6838 = vmatpush1.msra.mxu0 %v6837
        %6839 = vmatprep.subr.mxu0 0.0
        %6840 = vmatpush2.msra.mxu0 0.0
        %6841 = vmatprep.subr.mxu0 0.0
        %6842 = vmatpush2.msra.mxu0 0.0
        %6843 = vmatprep.subr.mxu0 0.0
        %6844 = vmatpush2.msra.mxu0 0.0
        %6845 = vmatprep.subr.mxu0 0.0
        %6846 = vmatpush2.msra.mxu0 0.0
        %6847 = vmatprep.subr.mxu0 0.0
        %6848 = vmatpush2.msra.mxu0 0.0
        %6849 = vmatprep.subr.mxu0 0.0
        %6850 = vmatpush2.msra.mxu0 0.0
        %6851 = vmatprep.subr.mxu0 0.0
        %6852 = vmatpush2.msra.mxu0 0.0
        %6853 = vmatprep.subr.mxu0 0.0
        %6854 = vmatpush2.msra.mxu0 0.0
        %6855 = vmatprep.subr.mxu0 0.0
        %6856 = vmatpush2.msra.mxu0 0.0
        %6857 = vmatprep.subr.mxu0 0.0
        %6858 = vmatpush2.msra.mxu0 0.0
        %6859 = vmatprep.subr.mxu0 0.0
        %6860 = vmatpush2.msra.mxu0 0.0
        %6861 = vmatprep.subr.mxu0 0.0
        %6862 = vmatpush2.msra.mxu0 0.0
        %6863 = vmatprep.subr.mxu0 0.0
        %6864 = vmatpush2.msra.mxu0 0.0
        %6865 = vmatprep.subr.mxu0 0.0
        %6866 = vmatpush2.msra.mxu0 0.0
        %6867 = vmatprep.subr.mxu0 0.0
        %6868 = vmatpush2.msra.mxu0 0.0
        %6869 = vmatprep.subr.mxu0 0.0
        %6870 = vmatpush2.msra.mxu0 0.0
        %6871 = vmatprep.mubr.f32.mxu0 0.0
        %v6872 = vand.u32 %v6406, 4294901760
        %6873 = vmatmul.mubr.f32.gmra.mxu0 %v6872
        %v6874 = vpop.f32.mrf.mxu0
        %v6875 = vadd.f32 %v6801, %v6874
        %v6876 = vpop.f32.mrf.mxu0
        %v6877 = vadd.f32 %v6803, %v6876
        %6878 = vdwg.mxu0
        %v6881 = vcombine.low %v6875, %v6877
        %v6883 = vmul.f32 %v467, %v6881
        %6884 = vst [vmem:[%s460] sm:$0xff] %v6883
        %s6885 = sand.u32 %s335, 1
        %s6886 = scalar_lea.sflag [#allocation6], %s6885
        %s6887 = sand.u32 %s335, 1
        %s6888 = smul.addr %s6887, 8
        %s6889 = scalar_lea.vmem [#allocation5], %s6888
        // Predicated region
        $region77: #{tpu_custom_call.1} parent=75 // pred_check
          %p6890 = pneg %p345
        $region78: #{tpu_custom_call.1} parent=75 // pred_check_branch
          %6892 = sbr.rel (%p6890) target = $region80
        $region79: #{tpu_custom_call.1} parent=75 // pred_region
          %s6894 = ssub.s32 128, 128
          %6895 = vsyncadd %s6886, %s6894
          %s6896 = smul.addr %s28, 2
          %s6897 = smul.addr %s6896, 64
          %s6898 = scalar_lea.hbm %s14, %s6897
          %s6900 = sshll.u32 %s6889, 4
          %s6901 = int_to_ptr.vmem [resolvable:$true] %s6900
          %6903 = dma.vmem_to_hbm [thread:$0]  %s6901, 128, %s6898, %s6886
        $region80: #{tpu_custom_call.1} parent=75 // pred_fallthru
          _
      $region76: #{tpu_custom_call.1} parent=5 // pred_fallthru
        _
      %p6904 = scmp.le.s32.totalorder 2, %s23
      // Predicated region
      $region81: #{tpu_custom_call.1} parent=5 // pred_check
        %p6905 = pneg %p6904
      $region82: #{tpu_custom_call.1} parent=5 // pred_check_branch
        %6907 = sbr.rel (%p6905) target = $region84
      $region83: #{tpu_custom_call.1} parent=5 // pred_region
        %s6908 = ssub.s32 %s23, 2
        // Predicated region
        $region85: #{tpu_custom_call.1} parent=83 // pred_check
          %p6909 = pneg %p351
        $region86: #{tpu_custom_call.1} parent=83 // pred_check_branch
          %6911 = sbr.rel (%p6909) target = $region88
        $region87: #{tpu_custom_call.1} parent=83 // pred_region
          %s6912 = sand.u32 %s336, 1
          %s6913 = scalar_lea.sflag [#allocation6], %s6912
          %s6914 = sand.u32 %s336, 1
          %s6915 = smul.addr %s6914, 8
          %s6916 = scalar_lea.vmem [#allocation5], %s6915
          %6917 = dma.done %s6913, 128
        $region88: #{tpu_custom_call.1} parent=83 // pred_fallthru
          _
      $region84: #{tpu_custom_call.1} parent=5 // pred_fallthru
        _
    $region6: #{tpu_custom_call.1} parent=1 // loop_footer
      %s27 = sadd.s32 1, %s23
    $region7: #{tpu_custom_call.1} parent=1 // loop_footer_branch
      %22 = sbr.rel target = $region3
    $region8: #{tpu_custom_call.1} parent=1 // loop_exit
      _
    %6918 = vsyncpa [#allocation6], 1
    %s6919 = scalar_lea.sflag [#allocation6], 1
    %6920 = vsyncpa %s6919, 1

</llo_original>
